<compile_context>
chip_gen: v7x
topology: tpu7x:2x2x1
jax: 0.10.0
libtpu: 0.0.40
codegen_flags: <defaults>
</compile_context>

<pallas_src>
import math
import functools

import jax
import jax.numpy as jnp
from jax.experimental import pallas as pl
from jax.experimental.pallas import tpu as pltpu  # noqa: F401  (TPU backend)


# ----------------------------------------------------------------------------
# In-kernel helpers (operate on values, not refs)
# ----------------------------------------------------------------------------
def _ln(x, g, b, eps):
    mu = jnp.mean(x, axis=-1, keepdims=True)
    var = jnp.mean(jnp.square(x - mu), axis=-1, keepdims=True)
    return (x - mu) * jax.lax.rsqrt(var + eps) * g + b


def _softmax(x):
    x = x - jnp.max(x, axis=-1, keepdims=True)
    e = jnp.exp(x)
    return e * pl.reciprocal(jnp.sum(e, axis=-1, keepdims=True), approx=True)


# ----------------------------------------------------------------------------
# The single fused kernel
# ----------------------------------------------------------------------------
def _fused_kernel(segs_ref, mlp_wt_ref, pe_ref,
                  wqkv_ref, wo_ref, w1_ref, w2_ref, evec_ref,
                  s1w1_ref, s1w2_ref,
                  s2w1_ref, s2w2_ref, s2w3_ref, s2vec_ref,
                  fw1_ref, fw2_ref, fw3_ref, fw4_ref, fvec_ref,
                  sup2_ref, cls_ref,
                  *, nsb, batch, n_seg, num_layers, num_heads, head_dim, eps):
    S, D = pe_ref.shape                       # S = Compact_L, D = d_model
    ff = w1_ref.shape[2]
    C2 = s1w2_ref.shape[0]
    m0 = s2w1_ref.shape[1]
    m1 = s2w2_ref.shape[1]
    nc = s2w3_ref.shape[1]
    fA = fw1_ref.shape[1]
    fB = fw2_ref.shape[1]
    fC = fw3_ref.shape[1]
    H, hd = num_heads, head_dim
    scale = 1.0 / math.sqrt(hd)
    f32 = jnp.float32

    # ---- stage 1: input MLP (Wm @ seg) + positional encoding, all items packed
    #      along the sublane / matmul-M dimension -> x_flat [nsb*S, D] ----
    pe = pe_ref[...]
    mlp_wt = mlp_wt_ref[...]
    x_flat = jnp.concatenate(
        [jnp.dot(mlp_wt, segs_ref[b], preferred_element_type=f32) + pe
         for b in range(nsb)], axis=0)                               # [nsb*S, D]

    # ---- transformer encoder layers (post-norm, relu FFN) ----
    for l in range(num_layers):
        ev = evec_ref[l]                                             # [1, 3D + 6D + ff]
        o = 0
        bqkv = ev[:, o:o + 3 * D]; o += 3 * D
        bo = ev[:, o:o + D]; o += D
        g1 = ev[:, o:o + D]; o += D
        be1 = ev[:, o:o + D]; o += D
        bf1 = ev[:, o:o + ff]; o += ff
        bf2 = ev[:, o:o + D]; o += D
        g2 = ev[:, o:o + D]; o += D
        be2 = ev[:, o:o + D]

        # Fused QKV projection: one MXU matmul with M = nsb*S.
        qkv = jnp.dot(x_flat, wqkv_ref[l], preferred_element_type=f32) + bqkv  # [nsb*S, 3D]

        # Per-(item, head) attention, batched over nsb*H in one 3-D einsum pair.
        q = jnp.stack([qkv[b * S:(b + 1) * S, h * hd:(h + 1) * hd]
                       for b in range(nsb) for h in range(H)], axis=0)
        k = jnp.stack([qkv[b * S:(b + 1) * S, D + h * hd:D + (h + 1) * hd]
                       for b in range(nsb) for h in range(H)], axis=0)
        v = jnp.stack([qkv[b * S:(b + 1) * S, 2 * D + h * hd:2 * D + (h + 1) * hd]
                       for b in range(nsb) for h in range(H)], axis=0)
        s = jnp.einsum('nqe,nke->nqk', q, k, preferred_element_type=f32) * scale
        s = s - jnp.max(s, axis=-1, keepdims=True)
        p = jnp.exp(s)
        p = p * pl.reciprocal(jnp.sum(p, axis=-1, keepdims=True), approx=True)
        ctx = jnp.einsum('nqk,nke->nqe', p, v, preferred_element_type=f32)      # [nsb*H, S, hd]

        # Concat heads per item, re-pack items along rows -> [nsb*S, D], then
        # a single concat-heads output projection matmul.
        ctx_flat = jnp.concatenate(
            [jnp.concatenate([ctx[b * H + h] for h in range(H)], axis=-1)
             for b in range(nsb)], axis=0)
        attn = jnp.dot(ctx_flat, wo_ref[l], preferred_element_type=f32) + bo

        x_flat = _ln(x_flat + attn, g1, be1, eps)
        hmid = jnp.maximum(
            jnp.dot(x_flat, w1_ref[l], preferred_element_type=f32) + bf1, 0.0)
        ffo = jnp.dot(hmid, w2_ref[l], preferred_element_type=f32) + bf2
        x_flat = _ln(x_flat + ffo, g2, be2, eps)

    # ---- MLP_sup1 (bias-free, transposed-space math) + Flatten(1, 2) ----
    # PyTorch flat[b, d*C2 + c] = relu(W2 @ relu(W1 @ x_b))[c, d]; we emit the
    # c-major permutation flat2[b, c*D + d].  The downstream weight rows
    # (s2w1 / fw1) are stored pre-permuted to match -> identical math.
    s1w1 = s1w1_ref[...]
    s1w2 = s1w2_ref[...]
    rows = []
    for b in range(nsb):
        xb = x_flat[b * S:(b + 1) * S, :]                                       # [S, D]
        h1 = jnp.maximum(jnp.dot(s1w1, xb, preferred_element_type=f32), 0.0)    # [C1, D]
        h2 = jnp.maximum(jnp.dot(s1w2, h1, preferred_element_type=f32), 0.0)    # [C2, D]
        rows.append(jnp.concatenate([h2[c:c + 1, :] for c in range(C2)], axis=-1))
    flat2 = jnp.concatenate(rows, axis=0)                                       # [nsb, C2*D]

    # ---- MLP_sup2: lin -> LN -> relu -> lin -> LN -> relu -> lin -> softmax ----
    sv = s2vec_ref[...]
    o = 0
    s2b1 = sv[:, o:o + m0]; o += m0
    s2g1 = sv[:, o:o + m0]; o += m0
    s2e1 = sv[:, o:o + m0]; o += m0
    s2b2 = sv[:, o:o + m1]; o += m1
    s2g2 = sv[:, o:o + m1]; o += m1
    s2e2 = sv[:, o:o + m1]; o += m1
    s2b3 = sv[:, o:o + nc]
    y = jnp.dot(flat2, s2w1_ref[...], preferred_element_type=f32) + s2b1
    y = jnp.maximum(_ln(y, s2g1, s2e1, eps), 0.0)
    y = jnp.dot(y, s2w2_ref[...], preferred_element_type=f32) + s2b2
    y = jnp.maximum(_ln(y, s2g2, s2e2, eps), 0.0)
    y = jnp.dot(y, s2w3_ref[...], preferred_element_type=f32) + s2b3
    sup2_ref[...] = _softmax(y).astype(sup2_ref.dtype)

    # ---- MLP_final on the concatenation of all segments' flattened features ----
    total1 = jnp.concatenate(
        [jnp.concatenate([rows[j * batch + b] for j in range(n_seg)], axis=-1)
         for b in range(batch)], axis=0)                                        # [batch, n_seg*C2*D]
    fv = fvec_ref[...]
    o = 0
    fb1 = fv[:, o:o + fA]; o += fA
    fg1 = fv[:, o:o + fA]; o += fA
    fe1 = fv[:, o:o + fA]; o += fA
    fb2 = fv[:, o:o + fB]; o += fB
    fg2 = fv[:, o:o + fB]; o += fB
    fe2 = fv[:, o:o + fB]; o += fB
    fb3 = fv[:, o:o + fC]; o += fC
    fg3 = fv[:, o:o + fC]; o += fC
    fe3 = fv[:, o:o + fC]
    z = jnp.dot(total1, fw1_ref[...], preferred_element_type=f32) + fb1
    z = jnp.maximum(_ln(z, fg1, fe1, eps), 0.0)
    z = jnp.dot(z, fw2_ref[...], preferred_element_type=f32) + fb2
    z = jnp.maximum(_ln(z, fg2, fe2, eps), 0.0)
    z = jnp.dot(z, fw3_ref[...], preferred_element_type=f32) + fb3
    z = jnp.maximum(_ln(z, fg3, fe3, eps), 0.0)
    z = jnp.dot(z, fw4_ref[...], preferred_element_type=f32)
    cls_ref[...] = _softmax(z).astype(cls_ref.dtype)


def fused_forward(segs_flat, p, cfg):
    """segs_flat: [NS*B, L1, C] -> (sup2 softmax [NS*B, nc], class softmax [B, nc])."""
    NSB = segs_flat.shape[0]
    B = cfg["batchsize"]
    NS = cfg["slide_N"]
    nc = cfg["n_class"]
    kernel = functools.partial(
        _fused_kernel, nsb=NSB, batch=B, n_seg=NS,
        num_layers=cfg["num_transformer_block"],
        num_heads=cfg["num_heads"],
        head_dim=cfg["d_model"] // cfg["num_heads"],
        eps=1e-5)
    return pl.pallas_call(
        kernel,
        out_shape=(jax.ShapeDtypeStruct((NSB, nc), jnp.float32),
                   jax.ShapeDtypeStruct((B, nc), jnp.float32)),
    )(segs_flat, p["mlp_wt"], p["pe"],
      p["wqkv"], p["wo"], p["w1"], p["w2"], p["evec"],
      p["s1w1"], p["s1w2"],
      p["s2w1"], p["s2w2"], p["s2w3"], p["s2vec"],
      p["fw1"], p["fw2"], p["fw3"], p["fw4"], p["fvec"])


# ----------------------------------------------------------------------------
# Forward: segment stacking (XLA slicing glue) + ONE fused kernel
# ----------------------------------------------------------------------------
def build_segments(inputs, cfg):
    B, T, C = inputs.shape
    L1 = cfg["L1"]
    sN = cfg["slide_N"]
    W = T // sN
    # The module's Linear(83, Compact_L) requires every sliding-window segment
    # to have length L1; stacking them lets one kernel process all items.
    assert W == L1, "floor(T / slide_N) must equal L1 (as the PyTorch module assumes)"
    seg_list = [inputs[:, 0:L1, :]]
    for j in range(sN - 1):
        seg_list.append(inputs[:, j * W:(j + 1) * W, :])
    return jnp.stack(seg_list, axis=0)                  # [NS, B, L1, C]


def forward(params, cfg, inputs):
    B = inputs.shape[0]
    NS = cfg["slide_N"]
    nc = cfg["n_class"]
    L1 = cfg["L1"]
    C = cfg["d_model"]

    segs = build_segments(inputs.astype(jnp.float32), cfg)       # [NS, B, L1, C]
    segs_flat = segs.reshape(NS * B, L1, C)

    y_sup2, cls = fused_forward(segs_flat, params, cfg)          # [NS*B, nc], [B, nc]

    # PyTorch concatenation order for the per-segment softmax outputs.
    total2 = jnp.transpose(y_sup2.reshape(NS, B, nc), (1, 2, 0))  # [B, nc, NS]
    return total2, cls


# ----------------------------------------------------------------------------
# Deterministic synthetic parameters (shapes from __init__, kernel-friendly layouts)
# ----------------------------------------------------------------------------
def init_params(key, cfg):
    keys = iter(jax.random.split(key, 64))

    def w(shape, scale=0.1):
        return jax.random.normal(next(keys), shape, jnp.float32) * scale

    L1, CL, D = cfg["L1"], cfg["Compact_L"], cfg["d_model"]
    NL = cfg["num_transformer_block"]
    f2 = cfg["factor2"]
    C1, C2 = CL // f2, CL // f2 // f2
    ff = cfg["ff_dim"]
    m0, m1 = cfg["mlp_units"]
    nc = cfg["n_class"]
    NS = cfg["slide_N"]
    fs = D * C2 * NS                                              # final_seq
    f = cfg["factor"]
    fA, fB, fC = fs // f, fs // f // f, fs // f // f // f

    p = {"mlp_wt": w((CL, L1))}                                   # Linear(L1->CL), [out, in]

    # PositionalEncoding buffer (module's exact, non-standard formula; dropout p=0).
    pos = jnp.arange(L1, dtype=jnp.float32)[:, None]
    div1 = jnp.exp(jnp.arange(0, D, 2, dtype=jnp.float32) * (-math.log(10000.0) / D))
    div2 = jnp.exp(jnp.arange(1, D, 2, dtype=jnp.float32) * (-math.log(10000.0) / D))
    pe = jnp.zeros((L1, D), jnp.float32)
    pe = pe.at[:, 0::2].set(jnp.sin(pos * div1))
    pe = pe.at[:, 1::2].set(jnp.cos(pos * div2))
    p["pe"] = pe[:CL, :]

    # Encoder layers: fused QKV weight (== in_proj_weight.T), concat-heads
    # out-proj (== out_proj.weight.T), FFN weights stored [in, out].
    p["wqkv"] = w((NL, D, 3 * D))
    p["wo"] = w((NL, D, D))
    p["w1"] = w((NL, D, ff))
    p["w2"] = w((NL, ff, D))
    ones_d = jnp.ones((NL, 1, D), jnp.float32)
    zeros_d = jnp.zeros((NL, 1, D), jnp.float32)
    # Packed per-layer vectors: [qkv bias | out-proj bias | LN1 g | LN1 b |
    #                            FFN lin1 bias | FFN lin2 bias | LN2 g | LN2 b]
    p["evec"] = jnp.concatenate(
        [w((NL, 1, 3 * D), 0.01), w((NL, 1, D), 0.01),
         ones_d, zeros_d,
         w((NL, 1, ff), 0.01), w((NL, 1, D), 0.01),
         ones_d, zeros_d], axis=-1)                               # [NL, 1, 9D + ff]

    # MLP_sup1 (bias-free), PyTorch [out, in] layout (kernel uses W @ x form).
    p["s1w1"] = w((C1, CL))
    p["s1w2"] = w((C2, C1))

    # MLP_sup2.  Input rows laid out in the kernel's c-major flatten order
    # flat2[b, c*D + d]; a PyTorch checkpoint weight would be loaded as
    #   W.T.reshape(D, C2, m0).transpose(1, 0, 2).reshape(C2*D, m0).
    p["s2w1"] = w((C2 * D, m0))
    p["s2w2"] = w((m0, m1))
    p["s2w3"] = w((m1, nc))
    p["s2vec"] = jnp.concatenate(
        [w((1, m0), 0.01), jnp.ones((1, m0), jnp.float32), jnp.zeros((1, m0), jnp.float32),
         w((1, m1), 0.01), jnp.ones((1, m1), jnp.float32), jnp.zeros((1, m1), jnp.float32),
         w((1, nc), 0.01)], axis=-1)

    # MLP_final.  fw1 rows follow the kernel's segment-major / c-major layout of
    # total1 (same permutation note as s2w1).
    p["fw1"] = w((fs, fA))
    p["fw2"] = w((fA, fB))
    p["fw3"] = w((fB, fC))
    p["fw4"] = w((fC, nc))
    p["fvec"] = jnp.concatenate(
        [w((1, fA), 0.01), jnp.ones((1, fA), jnp.float32), jnp.zeros((1, fA), jnp.float32),
         w((1, fB), 0.01), jnp.ones((1, fB), jnp.float32), jnp.zeros((1, fB), jnp.float32),
         w((1, fC), 0.01), jnp.ones((1, fC), jnp.float32), jnp.zeros((1, fC), jnp.float32)],
        axis=-1)
    return p


# ----------------------------------------------------------------------------
# main
# ----------------------------------------------------------------------------
if __name__ == "__main__":
    cfg = dict(
        batchsize=2,
        slide_N=2,
        d_model=8,            # == input_shape[1] (channel count)
        num_heads=2,
        ff_dim=16,
        num_transformer_block=2,
        mlp_units=[16, 8],
        n_class=3,
        factor=2,             # sub_factor
        factor2=4,            # scaled-down from hard-coded 16 (see header note)
        L1=32,                # scaled-down from hard-coded 83 (see header note)
        Compact_L=32,
    )
    # TODO(synk): dropout layers (identity at p=0 / eval) and the unused
    # self.self_attention module (dead code in forward) are not represented.

    B = cfg["batchsize"]
    T = cfg["slide_N"] * cfg["L1"]        # so floor(T / slide_N) == L1 as the module assumes
    C = cfg["d_model"]

    key = jax.random.PRNGKey(0)
    k_inp, k_par = jax.random.split(key)
    inputs = jax.random.normal(k_inp, (B, T, C), jnp.float32)
    params = init_params(k_par, cfg)

    run = jax.jit(lambda x: forward(params, cfg, x))
    total2, cls = run(inputs)
    jax.block_until_ready((total2, cls))

    assert total2.shape == (B, cfg["n_class"], cfg["slide_N"])
    assert cls.shape == (B, cfg["n_class"])
    assert bool(jnp.all(jnp.isfinite(total2))) and bool(jnp.all(jnp.isfinite(cls)))
    print("KERNEL_OK")
</pallas_src>

<mosaic_0001>
module attributes {stable_mosaic.version = 11 : i64} {
  func.func @_fused_kernel(%arg0: memref<4x32x8xf32, #tpu.memory_space<vmem>>, %arg1: memref<32x32xf32, #tpu.memory_space<vmem>>, %arg2: memref<32x8xf32, #tpu.memory_space<vmem>>, %arg3: memref<2x8x24xf32, #tpu.memory_space<vmem>>, %arg4: memref<2x8x8xf32, #tpu.memory_space<vmem>>, %arg5: memref<2x8x16xf32, #tpu.memory_space<vmem>>, %arg6: memref<2x16x8xf32, #tpu.memory_space<vmem>>, %arg7: memref<2x1x88xf32, #tpu.memory_space<vmem>>, %arg8: memref<8x32xf32, #tpu.memory_space<vmem>>, %arg9: memref<2x8xf32, #tpu.memory_space<vmem>>, %arg10: memref<16x16xf32, #tpu.memory_space<vmem>>, %arg11: memref<16x8xf32, #tpu.memory_space<vmem>>, %arg12: memref<8x3xf32, #tpu.memory_space<vmem>>, %arg13: memref<1x75xf32, #tpu.memory_space<vmem>>, %arg14: memref<32x16xf32, #tpu.memory_space<vmem>>, %arg15: memref<16x8xf32, #tpu.memory_space<vmem>>, %arg16: memref<8x4xf32, #tpu.memory_space<vmem>>, %arg17: memref<4x3xf32, #tpu.memory_space<vmem>>, %arg18: memref<1x84xf32, #tpu.memory_space<vmem>>, %arg19: memref<4x3xf32, #tpu.memory_space<vmem>>, %arg20: memref<2x3xf32, #tpu.memory_space<vmem>>) attributes {dimension_semantics = [], scalar_prefetch = 0 : i64, scratch_operands = 0 : i64, tpu.core_type = #tpu.core_type<tc>} {
    %c0 = arith.constant 0 : index
    %c0_0 = arith.constant 0 : index
    %0 = vector.load %arg2[%c0, %c0_0] : memref<32x8xf32, #tpu.memory_space<vmem>>, vector<32x8xf32>
    %c0_1 = arith.constant 0 : index
    %c0_2 = arith.constant 0 : index
    %1 = vector.load %arg1[%c0_1, %c0_2] : memref<32x32xf32, #tpu.memory_space<vmem>>, vector<32x32xf32>
    %c0_3 = arith.constant 0 : index
    %c0_4 = arith.constant 0 : index
    %c0_5 = arith.constant 0 : index
    %2 = vector.load %arg0[%c0_3, %c0_4, %c0_5] : memref<4x32x8xf32, #tpu.memory_space<vmem>>, vector<1x32x8xf32>
    %3 = vector.shape_cast %2 : vector<1x32x8xf32> to vector<32x8xf32>
    %cst = arith.constant dense<0.000000e+00> : vector<32x8xf32>
    %4 = tpu.matmul %1, %3, %cst {dimension_numbers = #tpu.dot_dimension_numbers<[1], [0], [0], [1], [0, 0, 1, 1], [], []>} : vector<32x32xf32>, vector<32x8xf32>, vector<32x8xf32> -> vector<32x8xf32>
    %5 = arith.addf %4, %0 : vector<32x8xf32>
    %c1 = arith.constant 1 : index
    %c0_6 = arith.constant 0 : index
    %c0_7 = arith.constant 0 : index
    %6 = vector.load %arg0[%c1, %c0_6, %c0_7] : memref<4x32x8xf32, #tpu.memory_space<vmem>>, vector<1x32x8xf32>
    %7 = vector.shape_cast %6 : vector<1x32x8xf32> to vector<32x8xf32>
    %cst_8 = arith.constant dense<0.000000e+00> : vector<32x8xf32>
    %8 = tpu.matmul %1, %7, %cst_8 {dimension_numbers = #tpu.dot_dimension_numbers<[1], [0], [0], [1], [0, 0, 1, 1], [], []>} : vector<32x32xf32>, vector<32x8xf32>, vector<32x8xf32> -> vector<32x8xf32>
    %9 = arith.addf %8, %0 : vector<32x8xf32>
    %c2 = arith.constant 2 : index
    %c0_9 = arith.constant 0 : index
    %c0_10 = arith.constant 0 : index
    %10 = vector.load %arg0[%c2, %c0_9, %c0_10] : memref<4x32x8xf32, #tpu.memory_space<vmem>>, vector<1x32x8xf32>
    %11 = vector.shape_cast %10 : vector<1x32x8xf32> to vector<32x8xf32>
    %cst_11 = arith.constant dense<0.000000e+00> : vector<32x8xf32>
    %12 = tpu.matmul %1, %11, %cst_11 {dimension_numbers = #tpu.dot_dimension_numbers<[1], [0], [0], [1], [0, 0, 1, 1], [], []>} : vector<32x32xf32>, vector<32x8xf32>, vector<32x8xf32> -> vector<32x8xf32>
    %13 = arith.addf %12, %0 : vector<32x8xf32>
    %c3 = arith.constant 3 : index
    %c0_12 = arith.constant 0 : index
    %c0_13 = arith.constant 0 : index
    %14 = vector.load %arg0[%c3, %c0_12, %c0_13] : memref<4x32x8xf32, #tpu.memory_space<vmem>>, vector<1x32x8xf32>
    %15 = vector.shape_cast %14 : vector<1x32x8xf32> to vector<32x8xf32>
    %cst_14 = arith.constant dense<0.000000e+00> : vector<32x8xf32>
    %16 = tpu.matmul %1, %15, %cst_14 {dimension_numbers = #tpu.dot_dimension_numbers<[1], [0], [0], [1], [0, 0, 1, 1], [], []>} : vector<32x32xf32>, vector<32x8xf32>, vector<32x8xf32> -> vector<32x8xf32>
    %17 = arith.addf %16, %0 : vector<32x8xf32>
    %18 = tpu.concatenate %5, %9, %13, %17 in 0 : vector<32x8xf32>, vector<32x8xf32>, vector<32x8xf32>, vector<32x8xf32> -> vector<128x8xf32>
    %c0_15 = arith.constant 0 : index
    %c0_16 = arith.constant 0 : index
    %c0_17 = arith.constant 0 : index
    %19 = vector.load %arg7[%c0_15, %c0_16, %c0_17] : memref<2x1x88xf32, #tpu.memory_space<vmem>>, vector<1x1x88xf32>
    %20 = vector.shape_cast %19 : vector<1x1x88xf32> to vector<1x88xf32>
    %21 = vector.extract_strided_slice %20 {offsets = [0, 0], sizes = [1, 24], strides = [1, 1]} : vector<1x88xf32> to vector<1x24xf32>
    %22 = vector.extract_strided_slice %20 {offsets = [0, 24], sizes = [1, 8], strides = [1, 1]} : vector<1x88xf32> to vector<1x8xf32>
    %23 = vector.extract_strided_slice %20 {offsets = [0, 32], sizes = [1, 8], strides = [1, 1]} : vector<1x88xf32> to vector<1x8xf32>
    %24 = vector.extract_strided_slice %20 {offsets = [0, 40], sizes = [1, 8], strides = [1, 1]} : vector<1x88xf32> to vector<1x8xf32>
    %25 = vector.extract_strided_slice %20 {offsets = [0, 48], sizes = [1, 16], strides = [1, 1]} : vector<1x88xf32> to vector<1x16xf32>
    %26 = vector.extract_strided_slice %20 {offsets = [0, 64], sizes = [1, 8], strides = [1, 1]} : vector<1x88xf32> to vector<1x8xf32>
    %27 = vector.extract_strided_slice %20 {offsets = [0, 72], sizes = [1, 8], strides = [1, 1]} : vector<1x88xf32> to vector<1x8xf32>
    %28 = vector.extract_strided_slice %20 {offsets = [0, 80], sizes = [1, 8], strides = [1, 1]} : vector<1x88xf32> to vector<1x8xf32>
    %c0_18 = arith.constant 0 : index
    %c0_19 = arith.constant 0 : index
    %c0_20 = arith.constant 0 : index
    %29 = vector.load %arg3[%c0_18, %c0_19, %c0_20] : memref<2x8x24xf32, #tpu.memory_space<vmem>>, vector<1x8x24xf32>
    %30 = vector.shape_cast %29 : vector<1x8x24xf32> to vector<8x24xf32>
    %cst_21 = arith.constant dense<0.000000e+00> : vector<128x24xf32>
    %31 = tpu.matmul %18, %30, %cst_21 {dimension_numbers = #tpu.dot_dimension_numbers<[1], [0], [0], [1], [0, 0, 1, 1], [], []>} : vector<128x8xf32>, vector<8x24xf32>, vector<128x24xf32> -> vector<128x24xf32>
    %32 = vector.broadcast %21 : vector<1x24xf32> to vector<128x24xf32>
    %33 = arith.addf %31, %32 : vector<128x24xf32>
    %34 = vector.extract_strided_slice %33 {offsets = [0, 0], sizes = [32, 4], strides = [1, 1]} : vector<128x24xf32> to vector<32x4xf32>
    %35 = vector.extract_strided_slice %33 {offsets = [0, 4], sizes = [32, 4], strides = [1, 1]} : vector<128x24xf32> to vector<32x4xf32>
    %36 = vector.extract_strided_slice %33 {offsets = [32, 0], sizes = [32, 4], strides = [1, 1]} : vector<128x24xf32> to vector<32x4xf32>
    %37 = vector.extract_strided_slice %33 {offsets = [32, 4], sizes = [32, 4], strides = [1, 1]} : vector<128x24xf32> to vector<32x4xf32>
    %38 = vector.extract_strided_slice %33 {offsets = [64, 0], sizes = [32, 4], strides = [1, 1]} : vector<128x24xf32> to vector<32x4xf32>
    %39 = vector.extract_strided_slice %33 {offsets = [64, 4], sizes = [32, 4], strides = [1, 1]} : vector<128x24xf32> to vector<32x4xf32>
    %40 = vector.extract_strided_slice %33 {offsets = [96, 0], sizes = [32, 4], strides = [1, 1]} : vector<128x24xf32> to vector<32x4xf32>
    %41 = vector.extract_strided_slice %33 {offsets = [96, 4], sizes = [32, 4], strides = [1, 1]} : vector<128x24xf32> to vector<32x4xf32>
    %42 = vector.shape_cast %34 : vector<32x4xf32> to vector<1x32x4xf32>
    %43 = vector.shape_cast %35 : vector<32x4xf32> to vector<1x32x4xf32>
    %44 = vector.shape_cast %36 : vector<32x4xf32> to vector<1x32x4xf32>
    %45 = vector.shape_cast %37 : vector<32x4xf32> to vector<1x32x4xf32>
    %46 = vector.shape_cast %38 : vector<32x4xf32> to vector<1x32x4xf32>
    %47 = vector.shape_cast %39 : vector<32x4xf32> to vector<1x32x4xf32>
    %48 = vector.shape_cast %40 : vector<32x4xf32> to vector<1x32x4xf32>
    %49 = vector.shape_cast %41 : vector<32x4xf32> to vector<1x32x4xf32>
    %50 = tpu.concatenate %42, %43, %44, %45, %46, %47, %48, %49 in 0 : vector<1x32x4xf32>, vector<1x32x4xf32>, vector<1x32x4xf32>, vector<1x32x4xf32>, vector<1x32x4xf32>, vector<1x32x4xf32>, vector<1x32x4xf32>, vector<1x32x4xf32> -> vector<8x32x4xf32>
    %51 = vector.extract_strided_slice %33 {offsets = [0, 8], sizes = [32, 4], strides = [1, 1]} : vector<128x24xf32> to vector<32x4xf32>
    %52 = vector.extract_strided_slice %33 {offsets = [0, 12], sizes = [32, 4], strides = [1, 1]} : vector<128x24xf32> to vector<32x4xf32>
    %53 = vector.extract_strided_slice %33 {offsets = [32, 8], sizes = [32, 4], strides = [1, 1]} : vector<128x24xf32> to vector<32x4xf32>
    %54 = vector.extract_strided_slice %33 {offsets = [32, 12], sizes = [32, 4], strides = [1, 1]} : vector<128x24xf32> to vector<32x4xf32>
    %55 = vector.extract_strided_slice %33 {offsets = [64, 8], sizes = [32, 4], strides = [1, 1]} : vector<128x24xf32> to vector<32x4xf32>
    %56 = vector.extract_strided_slice %33 {offsets = [64, 12], sizes = [32, 4], strides = [1, 1]} : vector<128x24xf32> to vector<32x4xf32>
    %57 = vector.extract_strided_slice %33 {offsets = [96, 8], sizes = [32, 4], strides = [1, 1]} : vector<128x24xf32> to vector<32x4xf32>
    %58 = vector.extract_strided_slice %33 {offsets = [96, 12], sizes = [32, 4], strides = [1, 1]} : vector<128x24xf32> to vector<32x4xf32>
    %59 = vector.shape_cast %51 : vector<32x4xf32> to vector<1x32x4xf32>
    %60 = vector.shape_cast %52 : vector<32x4xf32> to vector<1x32x4xf32>
    %61 = vector.shape_cast %53 : vector<32x4xf32> to vector<1x32x4xf32>
    %62 = vector.shape_cast %54 : vector<32x4xf32> to vector<1x32x4xf32>
    %63 = vector.shape_cast %55 : vector<32x4xf32> to vector<1x32x4xf32>
    %64 = vector.shape_cast %56 : vector<32x4xf32> to vector<1x32x4xf32>
    %65 = vector.shape_cast %57 : vector<32x4xf32> to vector<1x32x4xf32>
    %66 = vector.shape_cast %58 : vector<32x4xf32> to vector<1x32x4xf32>
    %67 = tpu.concatenate %59, %60, %61, %62, %63, %64, %65, %66 in 0 : vector<1x32x4xf32>, vector<1x32x4xf32>, vector<1x32x4xf32>, vector<1x32x4xf32>, vector<1x32x4xf32>, vector<1x32x4xf32>, vector<1x32x4xf32>, vector<1x32x4xf32> -> vector<8x32x4xf32>
    %68 = vector.extract_strided_slice %33 {offsets = [0, 16], sizes = [32, 4], strides = [1, 1]} : vector<128x24xf32> to vector<32x4xf32>
    %69 = vector.extract_strided_slice %33 {offsets = [0, 20], sizes = [32, 4], strides = [1, 1]} : vector<128x24xf32> to vector<32x4xf32>
    %70 = vector.extract_strided_slice %33 {offsets = [32, 16], sizes = [32, 4], strides = [1, 1]} : vector<128x24xf32> to vector<32x4xf32>
    %71 = vector.extract_strided_slice %33 {offsets = [32, 20], sizes = [32, 4], strides = [1, 1]} : vector<128x24xf32> to vector<32x4xf32>
    %72 = vector.extract_strided_slice %33 {offsets = [64, 16], sizes = [32, 4], strides = [1, 1]} : vector<128x24xf32> to vector<32x4xf32>
    %73 = vector.extract_strided_slice %33 {offsets = [64, 20], sizes = [32, 4], strides = [1, 1]} : vector<128x24xf32> to vector<32x4xf32>
    %74 = vector.extract_strided_slice %33 {offsets = [96, 16], sizes = [32, 4], strides = [1, 1]} : vector<128x24xf32> to vector<32x4xf32>
    %75 = vector.extract_strided_slice %33 {offsets = [96, 20], sizes = [32, 4], strides = [1, 1]} : vector<128x24xf32> to vector<32x4xf32>
    %76 = vector.shape_cast %68 : vector<32x4xf32> to vector<1x32x4xf32>
    %77 = vector.shape_cast %69 : vector<32x4xf32> to vector<1x32x4xf32>
    %78 = vector.shape_cast %70 : vector<32x4xf32> to vector<1x32x4xf32>
    %79 = vector.shape_cast %71 : vector<32x4xf32> to vector<1x32x4xf32>
    %80 = vector.shape_cast %72 : vector<32x4xf32> to vector<1x32x4xf32>
    %81 = vector.shape_cast %73 : vector<32x4xf32> to vector<1x32x4xf32>
    %82 = vector.shape_cast %74 : vector<32x4xf32> to vector<1x32x4xf32>
    %83 = vector.shape_cast %75 : vector<32x4xf32> to vector<1x32x4xf32>
    %84 = tpu.concatenate %76, %77, %78, %79, %80, %81, %82, %83 in 0 : vector<1x32x4xf32>, vector<1x32x4xf32>, vector<1x32x4xf32>, vector<1x32x4xf32>, vector<1x32x4xf32>, vector<1x32x4xf32>, vector<1x32x4xf32>, vector<1x32x4xf32> -> vector<8x32x4xf32>
    "tpu.trace_start"() <{level = 10 : i32, message = "nqe,nke->nqk"}> : () -> ()
    %cst_22 = arith.constant dense<0.000000e+00> : vector<8x32x32xf32>
    %85 = tpu.matmul %50, %67, %cst_22 {dimension_numbers = #tpu.dot_dimension_numbers<[2], [2], [1], [1], [0, 0, 0, 1, 1, 1], [0], [0]>} : vector<8x32x4xf32>, vector<8x32x4xf32>, vector<8x32x32xf32> -> vector<8x32x32xf32>
    "tpu.trace_stop"() : () -> ()
    %cst_23 = arith.constant 5.000000e-01 : f32
    %86 = vector.broadcast %cst_23 : f32 to vector<8x32x32xf32>
    %87 = arith.mulf %85, %86 : vector<8x32x32xf32>
    %cst_24 = arith.constant dense<0xFF800000> : vector<8x32xf32>
    %88 = vector.multi_reduction <maximumf>, %87, %cst_24 [2] : vector<8x32x32xf32> to vector<8x32xf32>
    %89 = vector.shape_cast %88 : vector<8x32xf32> to vector<8x32x1xf32>
    %90 = vector.broadcast %89 : vector<8x32x1xf32> to vector<8x32x32xf32>
    %91 = arith.subf %87, %90 : vector<8x32x32xf32>
    %92 = math.exp %91 : vector<8x32x32xf32>
    %cst_25 = arith.constant dense<0.000000e+00> : vector<8x32xf32>
    %93 = vector.multi_reduction <add>, %92, %cst_25 [2] : vector<8x32x32xf32> to vector<8x32xf32>
    %94 = vector.shape_cast %93 : vector<8x32xf32> to vector<8x32x1xf32>
    %95 = tpu.reciprocal %94 {approx = true} : vector<8x32x1xf32> -> vector<8x32x1xf32>
    %96 = vector.broadcast %95 : vector<8x32x1xf32> to vector<8x32x32xf32>
    %97 = arith.mulf %92, %96 : vector<8x32x32xf32>
    "tpu.trace_start"() <{level = 10 : i32, message = "nqk,nke->nqe"}> : () -> ()
    %cst_26 = arith.constant dense<0.000000e+00> : vector<8x32x4xf32>
    %98 = tpu.matmul %97, %84, %cst_26 {dimension_numbers = #tpu.dot_dimension_numbers<[2], [1], [1], [2], [0, 0, 0, 1, 1, 2], [0], [0]>} : vector<8x32x32xf32>, vector<8x32x4xf32>, vector<8x32x4xf32> -> vector<8x32x4xf32>
    "tpu.trace_stop"() : () -> ()
    %99 = vector.extract_strided_slice %98 {offsets = [0, 0, 0], sizes = [1, 32, 4], strides = [1, 1, 1]} : vector<8x32x4xf32> to vector<1x32x4xf32>
    %100 = vector.shape_cast %99 : vector<1x32x4xf32> to vector<32x4xf32>
    %101 = vector.extract_strided_slice %98 {offsets = [1, 0, 0], sizes = [1, 32, 4], strides = [1, 1, 1]} : vector<8x32x4xf32> to vector<1x32x4xf32>
    %102 = vector.shape_cast %101 : vector<1x32x4xf32> to vector<32x4xf32>
    %103 = tpu.concatenate %100, %102 in 1 : vector<32x4xf32>, vector<32x4xf32> -> vector<32x8xf32>
    %104 = vector.extract_strided_slice %98 {offsets = [2, 0, 0], sizes = [1, 32, 4], strides = [1, 1, 1]} : vector<8x32x4xf32> to vector<1x32x4xf32>
    %105 = vector.shape_cast %104 : vector<1x32x4xf32> to vector<32x4xf32>
    %106 = vector.extract_strided_slice %98 {offsets = [3, 0, 0], sizes = [1, 32, 4], strides = [1, 1, 1]} : vector<8x32x4xf32> to vector<1x32x4xf32>
    %107 = vector.shape_cast %106 : vector<1x32x4xf32> to vector<32x4xf32>
    %108 = tpu.concatenate %105, %107 in 1 : vector<32x4xf32>, vector<32x4xf32> -> vector<32x8xf32>
    %109 = vector.extract_strided_slice %98 {offsets = [4, 0, 0], sizes = [1, 32, 4], strides = [1, 1, 1]} : vector<8x32x4xf32> to vector<1x32x4xf32>
    %110 = vector.shape_cast %109 : vector<1x32x4xf32> to vector<32x4xf32>
    %111 = vector.extract_strided_slice %98 {offsets = [5, 0, 0], sizes = [1, 32, 4], strides = [1, 1, 1]} : vector<8x32x4xf32> to vector<1x32x4xf32>
    %112 = vector.shape_cast %111 : vector<1x32x4xf32> to vector<32x4xf32>
    %113 = tpu.concatenate %110, %112 in 1 : vector<32x4xf32>, vector<32x4xf32> -> vector<32x8xf32>
    %114 = vector.extract_strided_slice %98 {offsets = [6, 0, 0], sizes = [1, 32, 4], strides = [1, 1, 1]} : vector<8x32x4xf32> to vector<1x32x4xf32>
    %115 = vector.shape_cast %114 : vector<1x32x4xf32> to vector<32x4xf32>
    %116 = vector.extract_strided_slice %98 {offsets = [7, 0, 0], sizes = [1, 32, 4], strides = [1, 1, 1]} : vector<8x32x4xf32> to vector<1x32x4xf32>
    %117 = vector.shape_cast %116 : vector<1x32x4xf32> to vector<32x4xf32>
    %118 = tpu.concatenate %115, %117 in 1 : vector<32x4xf32>, vector<32x4xf32> -> vector<32x8xf32>
    %119 = tpu.concatenate %103, %108, %113, %118 in 0 : vector<32x8xf32>, vector<32x8xf32>, vector<32x8xf32>, vector<32x8xf32> -> vector<128x8xf32>
    %c0_27 = arith.constant 0 : index
    %c0_28 = arith.constant 0 : index
    %c0_29 = arith.constant 0 : index
    %120 = vector.load %arg4[%c0_27, %c0_28, %c0_29] : memref<2x8x8xf32, #tpu.memory_space<vmem>>, vector<1x8x8xf32>
    %121 = vector.shape_cast %120 : vector<1x8x8xf32> to vector<8x8xf32>
    %cst_30 = arith.constant dense<0.000000e+00> : vector<128x8xf32>
    %122 = tpu.matmul %119, %121, %cst_30 {dimension_numbers = #tpu.dot_dimension_numbers<[1], [0], [0], [1], [0, 0, 1, 1], [], []>} : vector<128x8xf32>, vector<8x8xf32>, vector<128x8xf32> -> vector<128x8xf32>
    %123 = vector.broadcast %22 : vector<1x8xf32> to vector<128x8xf32>
    %124 = arith.addf %122, %123 : vector<128x8xf32>
    %125 = arith.addf %18, %124 : vector<128x8xf32>
    %cst_31 = arith.constant dense<0.000000e+00> : vector<128xf32>
    %126 = vector.multi_reduction <add>, %125, %cst_31 [1] : vector<128x8xf32> to vector<128xf32>
    %127 = vector.shape_cast %126 : vector<128xf32> to vector<128x1xf32>
    %cst_32 = arith.constant 8.000000e+00 : f32
    %128 = vector.broadcast %cst_32 : f32 to vector<128x1xf32>
    %129 = arith.divf %127, %128 : vector<128x1xf32>
    %130 = vector.broadcast %129 : vector<128x1xf32> to vector<128x8xf32>
    %131 = arith.subf %125, %130 : vector<128x8xf32>
    %132 = arith.mulf %131, %131 : vector<128x8xf32>
    %cst_33 = arith.constant dense<0.000000e+00> : vector<128xf32>
    %133 = vector.multi_reduction <add>, %132, %cst_33 [1] : vector<128x8xf32> to vector<128xf32>
    %134 = vector.shape_cast %133 : vector<128xf32> to vector<128x1xf32>
    %cst_34 = arith.constant 8.000000e+00 : f32
    %135 = vector.broadcast %cst_34 : f32 to vector<128x1xf32>
    %136 = arith.divf %134, %135 : vector<128x1xf32>
    %137 = vector.broadcast %129 : vector<128x1xf32> to vector<128x8xf32>
    %138 = arith.subf %125, %137 : vector<128x8xf32>
    %cst_35 = arith.constant 9.99999974E-6 : f32
    %139 = vector.broadcast %cst_35 : f32 to vector<128x1xf32>
    %140 = arith.addf %136, %139 : vector<128x1xf32>
    %141 = math.rsqrt %140 : vector<128x1xf32>
    %142 = vector.broadcast %141 : vector<128x1xf32> to vector<128x8xf32>
    %143 = arith.mulf %138, %142 : vector<128x8xf32>
    %144 = vector.broadcast %23 : vector<1x8xf32> to vector<128x8xf32>
    %145 = arith.mulf %143, %144 : vector<128x8xf32>
    %146 = vector.broadcast %24 : vector<1x8xf32> to vector<128x8xf32>
    %147 = arith.addf %145, %146 : vector<128x8xf32>
    %c0_36 = arith.constant 0 : index
    %c0_37 = arith.constant 0 : index
    %c0_38 = arith.constant 0 : index
    %148 = vector.load %arg5[%c0_36, %c0_37, %c0_38] : memref<2x8x16xf32, #tpu.memory_space<vmem>>, vector<1x8x16xf32>
    %149 = vector.shape_cast %148 : vector<1x8x16xf32> to vector<8x16xf32>
    %cst_39 = arith.constant dense<0.000000e+00> : vector<128x16xf32>
    %150 = tpu.matmul %147, %149, %cst_39 {dimension_numbers = #tpu.dot_dimension_numbers<[1], [0], [0], [1], [0, 0, 1, 1], [], []>} : vector<128x8xf32>, vector<8x16xf32>, vector<128x16xf32> -> vector<128x16xf32>
    %151 = vector.broadcast %25 : vector<1x16xf32> to vector<128x16xf32>
    %152 = arith.addf %150, %151 : vector<128x16xf32>
    %cst_40 = arith.constant 0.000000e+00 : f32
    %153 = vector.broadcast %cst_40 : f32 to vector<128x16xf32>
    %154 = arith.maximumf %152, %153 : vector<128x16xf32>
    %c0_41 = arith.constant 0 : index
    %c0_42 = arith.constant 0 : index
    %c0_43 = arith.constant 0 : index
    %155 = vector.load %arg6[%c0_41, %c0_42, %c0_43] : memref<2x16x8xf32, #tpu.memory_space<vmem>>, vector<1x16x8xf32>
    %156 = vector.shape_cast %155 : vector<1x16x8xf32> to vector<16x8xf32>
    %cst_44 = arith.constant dense<0.000000e+00> : vector<128x8xf32>
    %157 = tpu.matmul %154, %156, %cst_44 {dimension_numbers = #tpu.dot_dimension_numbers<[1], [0], [0], [1], [0, 0, 1, 1], [], []>} : vector<128x16xf32>, vector<16x8xf32>, vector<128x8xf32> -> vector<128x8xf32>
    %158 = vector.broadcast %26 : vector<1x8xf32> to vector<128x8xf32>
    %159 = arith.addf %157, %158 : vector<128x8xf32>
    %160 = arith.addf %147, %159 : vector<128x8xf32>
    %cst_45 = arith.constant dense<0.000000e+00> : vector<128xf32>
    %161 = vector.multi_reduction <add>, %160, %cst_45 [1] : vector<128x8xf32> to vector<128xf32>
    %162 = vector.shape_cast %161 : vector<128xf32> to vector<128x1xf32>
    %cst_46 = arith.constant 8.000000e+00 : f32
    %163 = vector.broadcast %cst_46 : f32 to vector<128x1xf32>
    %164 = arith.divf %162, %163 : vector<128x1xf32>
    %165 = vector.broadcast %164 : vector<128x1xf32> to vector<128x8xf32>
    %166 = arith.subf %160, %165 : vector<128x8xf32>
    %167 = arith.mulf %166, %166 : vector<128x8xf32>
    %cst_47 = arith.constant dense<0.000000e+00> : vector<128xf32>
    %168 = vector.multi_reduction <add>, %167, %cst_47 [1] : vector<128x8xf32> to vector<128xf32>
    %169 = vector.shape_cast %168 : vector<128xf32> to vector<128x1xf32>
    %cst_48 = arith.constant 8.000000e+00 : f32
    %170 = vector.broadcast %cst_48 : f32 to vector<128x1xf32>
    %171 = arith.divf %169, %170 : vector<128x1xf32>
    %172 = vector.broadcast %164 : vector<128x1xf32> to vector<128x8xf32>
    %173 = arith.subf %160, %172 : vector<128x8xf32>
    %cst_49 = arith.constant 9.99999974E-6 : f32
    %174 = vector.broadcast %cst_49 : f32 to vector<128x1xf32>
    %175 = arith.addf %171, %174 : vector<128x1xf32>
    %176 = math.rsqrt %175 : vector<128x1xf32>
    %177 = vector.broadcast %176 : vector<128x1xf32> to vector<128x8xf32>
    %178 = arith.mulf %173, %177 : vector<128x8xf32>
    %179 = vector.broadcast %27 : vector<1x8xf32> to vector<128x8xf32>
    %180 = arith.mulf %178, %179 : vector<128x8xf32>
    %181 = vector.broadcast %28 : vector<1x8xf32> to vector<128x8xf32>
    %182 = arith.addf %180, %181 : vector<128x8xf32>
    %c1_50 = arith.constant 1 : index
    %c0_51 = arith.constant 0 : index
    %c0_52 = arith.constant 0 : index
    %183 = vector.load %arg7[%c1_50, %c0_51, %c0_52] : memref<2x1x88xf32, #tpu.memory_space<vmem>>, vector<1x1x88xf32>
    %184 = vector.shape_cast %183 : vector<1x1x88xf32> to vector<1x88xf32>
    %185 = vector.extract_strided_slice %184 {offsets = [0, 0], sizes = [1, 24], strides = [1, 1]} : vector<1x88xf32> to vector<1x24xf32>
    %186 = vector.extract_strided_slice %184 {offsets = [0, 24], sizes = [1, 8], strides = [1, 1]} : vector<1x88xf32> to vector<1x8xf32>
    %187 = vector.extract_strided_slice %184 {offsets = [0, 32], sizes = [1, 8], strides = [1, 1]} : vector<1x88xf32> to vector<1x8xf32>
    %188 = vector.extract_strided_slice %184 {offsets = [0, 40], sizes = [1, 8], strides = [1, 1]} : vector<1x88xf32> to vector<1x8xf32>
    %189 = vector.extract_strided_slice %184 {offsets = [0, 48], sizes = [1, 16], strides = [1, 1]} : vector<1x88xf32> to vector<1x16xf32>
    %190 = vector.extract_strided_slice %184 {offsets = [0, 64], sizes = [1, 8], strides = [1, 1]} : vector<1x88xf32> to vector<1x8xf32>
    %191 = vector.extract_strided_slice %184 {offsets = [0, 72], sizes = [1, 8], strides = [1, 1]} : vector<1x88xf32> to vector<1x8xf32>
    %192 = vector.extract_strided_slice %184 {offsets = [0, 80], sizes = [1, 8], strides = [1, 1]} : vector<1x88xf32> to vector<1x8xf32>
    %c1_53 = arith.constant 1 : index
    %c0_54 = arith.constant 0 : index
    %c0_55 = arith.constant 0 : index
    %193 = vector.load %arg3[%c1_53, %c0_54, %c0_55] : memref<2x8x24xf32, #tpu.memory_space<vmem>>, vector<1x8x24xf32>
    %194 = vector.shape_cast %193 : vector<1x8x24xf32> to vector<8x24xf32>
    %cst_56 = arith.constant dense<0.000000e+00> : vector<128x24xf32>
    %195 = tpu.matmul %182, %194, %cst_56 {dimension_numbers = #tpu.dot_dimension_numbers<[1], [0], [0], [1], [0, 0, 1, 1], [], []>} : vector<128x8xf32>, vector<8x24xf32>, vector<128x24xf32> -> vector<128x24xf32>
    %196 = vector.broadcast %185 : vector<1x24xf32> to vector<128x24xf32>
    %197 = arith.addf %195, %196 : vector<128x24xf32>
    %198 = vector.extract_strided_slice %197 {offsets = [0, 0], sizes = [32, 4], strides = [1, 1]} : vector<128x24xf32> to vector<32x4xf32>
    %199 = vector.extract_strided_slice %197 {offsets = [0, 4], sizes = [32, 4], strides = [1, 1]} : vector<128x24xf32> to vector<32x4xf32>
    %200 = vector.extract_strided_slice %197 {offsets = [32, 0], sizes = [32, 4], strides = [1, 1]} : vector<128x24xf32> to vector<32x4xf32>
    %201 = vector.extract_strided_slice %197 {offsets = [32, 4], sizes = [32, 4], strides = [1, 1]} : vector<128x24xf32> to vector<32x4xf32>
    %202 = vector.extract_strided_slice %197 {offsets = [64, 0], sizes = [32, 4], strides = [1, 1]} : vector<128x24xf32> to vector<32x4xf32>
    %203 = vector.extract_strided_slice %197 {offsets = [64, 4], sizes = [32, 4], strides = [1, 1]} : vector<128x24xf32> to vector<32x4xf32>
    %204 = vector.extract_strided_slice %197 {offsets = [96, 0], sizes = [32, 4], strides = [1, 1]} : vector<128x24xf32> to vector<32x4xf32>
    %205 = vector.extract_strided_slice %197 {offsets = [96, 4], sizes = [32, 4], strides = [1, 1]} : vector<128x24xf32> to vector<32x4xf32>
    %206 = vector.shape_cast %198 : vector<32x4xf32> to vector<1x32x4xf32>
    %207 = vector.shape_cast %199 : vector<32x4xf32> to vector<1x32x4xf32>
    %208 = vector.shape_cast %200 : vector<32x4xf32> to vector<1x32x4xf32>
    %209 = vector.shape_cast %201 : vector<32x4xf32> to vector<1x32x4xf32>
    %210 = vector.shape_cast %202 : vector<32x4xf32> to vector<1x32x4xf32>
    %211 = vector.shape_cast %203 : vector<32x4xf32> to vector<1x32x4xf32>
    %212 = vector.shape_cast %204 : vector<32x4xf32> to vector<1x32x4xf32>
    %213 = vector.shape_cast %205 : vector<32x4xf32> to vector<1x32x4xf32>
    %214 = tpu.concatenate %206, %207, %208, %209, %210, %211, %212, %213 in 0 : vector<1x32x4xf32>, vector<1x32x4xf32>, vector<1x32x4xf32>, vector<1x32x4xf32>, vector<1x32x4xf32>, vector<1x32x4xf32>, vector<1x32x4xf32>, vector<1x32x4xf32> -> vector<8x32x4xf32>
    %215 = vector.extract_strided_slice %197 {offsets = [0, 8], sizes = [32, 4], strides = [1, 1]} : vector<128x24xf32> to vector<32x4xf32>
    %216 = vector.extract_strided_slice %197 {offsets = [0, 12], sizes = [32, 4], strides = [1, 1]} : vector<128x24xf32> to vector<32x4xf32>
    %217 = vector.extract_strided_slice %197 {offsets = [32, 8], sizes = [32, 4], strides = [1, 1]} : vector<128x24xf32> to vector<32x4xf32>
    %218 = vector.extract_strided_slice %197 {offsets = [32, 12], sizes = [32, 4], strides = [1, 1]} : vector<128x24xf32> to vector<32x4xf32>
    %219 = vector.extract_strided_slice %197 {offsets = [64, 8], sizes = [32, 4], strides = [1, 1]} : vector<128x24xf32> to vector<32x4xf32>
    %220 = vector.extract_strided_slice %197 {offsets = [64, 12], sizes = [32, 4], strides = [1, 1]} : vector<128x24xf32> to vector<32x4xf32>
    %221 = vector.extract_strided_slice %197 {offsets = [96, 8], sizes = [32, 4], strides = [1, 1]} : vector<128x24xf32> to vector<32x4xf32>
    %222 = vector.extract_strided_slice %197 {offsets = [96, 12], sizes = [32, 4], strides = [1, 1]} : vector<128x24xf32> to vector<32x4xf32>
    %223 = vector.shape_cast %215 : vector<32x4xf32> to vector<1x32x4xf32>
    %224 = vector.shape_cast %216 : vector<32x4xf32> to vector<1x32x4xf32>
    %225 = vector.shape_cast %217 : vector<32x4xf32> to vector<1x32x4xf32>
    %226 = vector.shape_cast %218 : vector<32x4xf32> to vector<1x32x4xf32>
    %227 = vector.shape_cast %219 : vector<32x4xf32> to vector<1x32x4xf32>
    %228 = vector.shape_cast %220 : vector<32x4xf32> to vector<1x32x4xf32>
    %229 = vector.shape_cast %221 : vector<32x4xf32> to vector<1x32x4xf32>
    %230 = vector.shape_cast %222 : vector<32x4xf32> to vector<1x32x4xf32>
    %231 = tpu.concatenate %223, %224, %225, %226, %227, %228, %229, %230 in 0 : vector<1x32x4xf32>, vector<1x32x4xf32>, vector<1x32x4xf32>, vector<1x32x4xf32>, vector<1x32x4xf32>, vector<1x32x4xf32>, vector<1x32x4xf32>, vector<1x32x4xf32> -> vector<8x32x4xf32>
    %232 = vector.extract_strided_slice %197 {offsets = [0, 16], sizes = [32, 4], strides = [1, 1]} : vector<128x24xf32> to vector<32x4xf32>
    %233 = vector.extract_strided_slice %197 {offsets = [0, 20], sizes = [32, 4], strides = [1, 1]} : vector<128x24xf32> to vector<32x4xf32>
    %234 = vector.extract_strided_slice %197 {offsets = [32, 16], sizes = [32, 4], strides = [1, 1]} : vector<128x24xf32> to vector<32x4xf32>
    %235 = vector.extract_strided_slice %197 {offsets = [32, 20], sizes = [32, 4], strides = [1, 1]} : vector<128x24xf32> to vector<32x4xf32>
    %236 = vector.extract_strided_slice %197 {offsets = [64, 16], sizes = [32, 4], strides = [1, 1]} : vector<128x24xf32> to vector<32x4xf32>
    %237 = vector.extract_strided_slice %197 {offsets = [64, 20], sizes = [32, 4], strides = [1, 1]} : vector<128x24xf32> to vector<32x4xf32>
    %238 = vector.extract_strided_slice %197 {offsets = [96, 16], sizes = [32, 4], strides = [1, 1]} : vector<128x24xf32> to vector<32x4xf32>
    %239 = vector.extract_strided_slice %197 {offsets = [96, 20], sizes = [32, 4], strides = [1, 1]} : vector<128x24xf32> to vector<32x4xf32>
    %240 = vector.shape_cast %232 : vector<32x4xf32> to vector<1x32x4xf32>
    %241 = vector.shape_cast %233 : vector<32x4xf32> to vector<1x32x4xf32>
    %242 = vector.shape_cast %234 : vector<32x4xf32> to vector<1x32x4xf32>
    %243 = vector.shape_cast %235 : vector<32x4xf32> to vector<1x32x4xf32>
    %244 = vector.shape_cast %236 : vector<32x4xf32> to vector<1x32x4xf32>
    %245 = vector.shape_cast %237 : vector<32x4xf32> to vector<1x32x4xf32>
    %246 = vector.shape_cast %238 : vector<32x4xf32> to vector<1x32x4xf32>
    %247 = vector.shape_cast %239 : vector<32x4xf32> to vector<1x32x4xf32>
    %248 = tpu.concatenate %240, %241, %242, %243, %244, %245, %246, %247 in 0 : vector<1x32x4xf32>, vector<1x32x4xf32>, vector<1x32x4xf32>, vector<1x32x4xf32>, vector<1x32x4xf32>, vector<1x32x4xf32>, vector<1x32x4xf32>, vector<1x32x4xf32> -> vector<8x32x4xf32>
    "tpu.trace_start"() <{level = 10 : i32, message = "nqe,nke->nqk"}> : () -> ()
    %cst_57 = arith.constant dense<0.000000e+00> : vector<8x32x32xf32>
    %249 = tpu.matmul %214, %231, %cst_57 {dimension_numbers = #tpu.dot_dimension_numbers<[2], [2], [1], [1], [0, 0, 0, 1, 1, 1], [0], [0]>} : vector<8x32x4xf32>, vector<8x32x4xf32>, vector<8x32x32xf32> -> vector<8x32x32xf32>
    "tpu.trace_stop"() : () -> ()
    %cst_58 = arith.constant 5.000000e-01 : f32
    %250 = vector.broadcast %cst_58 : f32 to vector<8x32x32xf32>
    %251 = arith.mulf %249, %250 : vector<8x32x32xf32>
    %cst_59 = arith.constant dense<0xFF800000> : vector<8x32xf32>
    %252 = vector.multi_reduction <maximumf>, %251, %cst_59 [2] : vector<8x32x32xf32> to vector<8x32xf32>
    %253 = vector.shape_cast %252 : vector<8x32xf32> to vector<8x32x1xf32>
    %254 = vector.broadcast %253 : vector<8x32x1xf32> to vector<8x32x32xf32>
    %255 = arith.subf %251, %254 : vector<8x32x32xf32>
    %256 = math.exp %255 : vector<8x32x32xf32>
    %cst_60 = arith.constant dense<0.000000e+00> : vector<8x32xf32>
    %257 = vector.multi_reduction <add>, %256, %cst_60 [2] : vector<8x32x32xf32> to vector<8x32xf32>
    %258 = vector.shape_cast %257 : vector<8x32xf32> to vector<8x32x1xf32>
    %259 = tpu.reciprocal %258 {approx = true} : vector<8x32x1xf32> -> vector<8x32x1xf32>
    %260 = vector.broadcast %259 : vector<8x32x1xf32> to vector<8x32x32xf32>
    %261 = arith.mulf %256, %260 : vector<8x32x32xf32>
    "tpu.trace_start"() <{level = 10 : i32, message = "nqk,nke->nqe"}> : () -> ()
    %cst_61 = arith.constant dense<0.000000e+00> : vector<8x32x4xf32>
    %262 = tpu.matmul %261, %248, %cst_61 {dimension_numbers = #tpu.dot_dimension_numbers<[2], [1], [1], [2], [0, 0, 0, 1, 1, 2], [0], [0]>} : vector<8x32x32xf32>, vector<8x32x4xf32>, vector<8x32x4xf32> -> vector<8x32x4xf32>
    "tpu.trace_stop"() : () -> ()
    %263 = vector.extract_strided_slice %262 {offsets = [0, 0, 0], sizes = [1, 32, 4], strides = [1, 1, 1]} : vector<8x32x4xf32> to vector<1x32x4xf32>
    %264 = vector.shape_cast %263 : vector<1x32x4xf32> to vector<32x4xf32>
    %265 = vector.extract_strided_slice %262 {offsets = [1, 0, 0], sizes = [1, 32, 4], strides = [1, 1, 1]} : vector<8x32x4xf32> to vector<1x32x4xf32>
    %266 = vector.shape_cast %265 : vector<1x32x4xf32> to vector<32x4xf32>
    %267 = tpu.concatenate %264, %266 in 1 : vector<32x4xf32>, vector<32x4xf32> -> vector<32x8xf32>
    %268 = vector.extract_strided_slice %262 {offsets = [2, 0, 0], sizes = [1, 32, 4], strides = [1, 1, 1]} : vector<8x32x4xf32> to vector<1x32x4xf32>
    %269 = vector.shape_cast %268 : vector<1x32x4xf32> to vector<32x4xf32>
    %270 = vector.extract_strided_slice %262 {offsets = [3, 0, 0], sizes = [1, 32, 4], strides = [1, 1, 1]} : vector<8x32x4xf32> to vector<1x32x4xf32>
    %271 = vector.shape_cast %270 : vector<1x32x4xf32> to vector<32x4xf32>
    %272 = tpu.concatenate %269, %271 in 1 : vector<32x4xf32>, vector<32x4xf32> -> vector<32x8xf32>
    %273 = vector.extract_strided_slice %262 {offsets = [4, 0, 0], sizes = [1, 32, 4], strides = [1, 1, 1]} : vector<8x32x4xf32> to vector<1x32x4xf32>
    %274 = vector.shape_cast %273 : vector<1x32x4xf32> to vector<32x4xf32>
    %275 = vector.extract_strided_slice %262 {offsets = [5, 0, 0], sizes = [1, 32, 4], strides = [1, 1, 1]} : vector<8x32x4xf32> to vector<1x32x4xf32>
    %276 = vector.shape_cast %275 : vector<1x32x4xf32> to vector<32x4xf32>
    %277 = tpu.concatenate %274, %276 in 1 : vector<32x4xf32>, vector<32x4xf32> -> vector<32x8xf32>
    %278 = vector.extract_strided_slice %262 {offsets = [6, 0, 0], sizes = [1, 32, 4], strides = [1, 1, 1]} : vector<8x32x4xf32> to vector<1x32x4xf32>
    %279 = vector.shape_cast %278 : vector<1x32x4xf32> to vector<32x4xf32>
    %280 = vector.extract_strided_slice %262 {offsets = [7, 0, 0], sizes = [1, 32, 4], strides = [1, 1, 1]} : vector<8x32x4xf32> to vector<1x32x4xf32>
    %281 = vector.shape_cast %280 : vector<1x32x4xf32> to vector<32x4xf32>
    %282 = tpu.concatenate %279, %281 in 1 : vector<32x4xf32>, vector<32x4xf32> -> vector<32x8xf32>
    %283 = tpu.concatenate %267, %272, %277, %282 in 0 : vector<32x8xf32>, vector<32x8xf32>, vector<32x8xf32>, vector<32x8xf32> -> vector<128x8xf32>
    %c1_62 = arith.constant 1 : index
    %c0_63 = arith.constant 0 : index
    %c0_64 = arith.constant 0 : index
    %284 = vector.load %arg4[%c1_62, %c0_63, %c0_64] : memref<2x8x8xf32, #tpu.memory_space<vmem>>, vector<1x8x8xf32>
    %285 = vector.shape_cast %284 : vector<1x8x8xf32> to vector<8x8xf32>
    %cst_65 = arith.constant dense<0.000000e+00> : vector<128x8xf32>
    %286 = tpu.matmul %283, %285, %cst_65 {dimension_numbers = #tpu.dot_dimension_numbers<[1], [0], [0], [1], [0, 0, 1, 1], [], []>} : vector<128x8xf32>, vector<8x8xf32>, vector<128x8xf32> -> vector<128x8xf32>
    %287 = vector.broadcast %186 : vector<1x8xf32> to vector<128x8xf32>
    %288 = arith.addf %286, %287 : vector<128x8xf32>
    %289 = arith.addf %182, %288 : vector<128x8xf32>
    %cst_66 = arith.constant dense<0.000000e+00> : vector<128xf32>
    %290 = vector.multi_reduction <add>, %289, %cst_66 [1] : vector<128x8xf32> to vector<128xf32>
    %291 = vector.shape_cast %290 : vector<128xf32> to vector<128x1xf32>
    %cst_67 = arith.constant 8.000000e+00 : f32
    %292 = vector.broadcast %cst_67 : f32 to vector<128x1xf32>
    %293 = arith.divf %291, %292 : vector<128x1xf32>
    %294 = vector.broadcast %293 : vector<128x1xf32> to vector<128x8xf32>
    %295 = arith.subf %289, %294 : vector<128x8xf32>
    %296 = arith.mulf %295, %295 : vector<128x8xf32>
    %cst_68 = arith.constant dense<0.000000e+00> : vector<128xf32>
    %297 = vector.multi_reduction <add>, %296, %cst_68 [1] : vector<128x8xf32> to vector<128xf32>
    %298 = vector.shape_cast %297 : vector<128xf32> to vector<128x1xf32>
    %cst_69 = arith.constant 8.000000e+00 : f32
    %299 = vector.broadcast %cst_69 : f32 to vector<128x1xf32>
    %300 = arith.divf %298, %299 : vector<128x1xf32>
    %301 = vector.broadcast %293 : vector<128x1xf32> to vector<128x8xf32>
    %302 = arith.subf %289, %301 : vector<128x8xf32>
    %cst_70 = arith.constant 9.99999974E-6 : f32
    %303 = vector.broadcast %cst_70 : f32 to vector<128x1xf32>
    %304 = arith.addf %300, %303 : vector<128x1xf32>
    %305 = math.rsqrt %304 : vector<128x1xf32>
    %306 = vector.broadcast %305 : vector<128x1xf32> to vector<128x8xf32>
    %307 = arith.mulf %302, %306 : vector<128x8xf32>
    %308 = vector.broadcast %187 : vector<1x8xf32> to vector<128x8xf32>
    %309 = arith.mulf %307, %308 : vector<128x8xf32>
    %310 = vector.broadcast %188 : vector<1x8xf32> to vector<128x8xf32>
    %311 = arith.addf %309, %310 : vector<128x8xf32>
    %c1_71 = arith.constant 1 : index
    %c0_72 = arith.constant 0 : index
    %c0_73 = arith.constant 0 : index
    %312 = vector.load %arg5[%c1_71, %c0_72, %c0_73] : memref<2x8x16xf32, #tpu.memory_space<vmem>>, vector<1x8x16xf32>
    %313 = vector.shape_cast %312 : vector<1x8x16xf32> to vector<8x16xf32>
    %cst_74 = arith.constant dense<0.000000e+00> : vector<128x16xf32>
    %314 = tpu.matmul %311, %313, %cst_74 {dimension_numbers = #tpu.dot_dimension_numbers<[1], [0], [0], [1], [0, 0, 1, 1], [], []>} : vector<128x8xf32>, vector<8x16xf32>, vector<128x16xf32> -> vector<128x16xf32>
    %315 = vector.broadcast %189 : vector<1x16xf32> to vector<128x16xf32>
    %316 = arith.addf %314, %315 : vector<128x16xf32>
    %cst_75 = arith.constant 0.000000e+00 : f32
    %317 = vector.broadcast %cst_75 : f32 to vector<128x16xf32>
    %318 = arith.maximumf %316, %317 : vector<128x16xf32>
    %c1_76 = arith.constant 1 : index
    %c0_77 = arith.constant 0 : index
    %c0_78 = arith.constant 0 : index
    %319 = vector.load %arg6[%c1_76, %c0_77, %c0_78] : memref<2x16x8xf32, #tpu.memory_space<vmem>>, vector<1x16x8xf32>
    %320 = vector.shape_cast %319 : vector<1x16x8xf32> to vector<16x8xf32>
    %cst_79 = arith.constant dense<0.000000e+00> : vector<128x8xf32>
    %321 = tpu.matmul %318, %320, %cst_79 {dimension_numbers = #tpu.dot_dimension_numbers<[1], [0], [0], [1], [0, 0, 1, 1], [], []>} : vector<128x16xf32>, vector<16x8xf32>, vector<128x8xf32> -> vector<128x8xf32>
    %322 = vector.broadcast %190 : vector<1x8xf32> to vector<128x8xf32>
    %323 = arith.addf %321, %322 : vector<128x8xf32>
    %324 = arith.addf %311, %323 : vector<128x8xf32>
    %cst_80 = arith.constant dense<0.000000e+00> : vector<128xf32>
    %325 = vector.multi_reduction <add>, %324, %cst_80 [1] : vector<128x8xf32> to vector<128xf32>
    %326 = vector.shape_cast %325 : vector<128xf32> to vector<128x1xf32>
    %cst_81 = arith.constant 8.000000e+00 : f32
    %327 = vector.broadcast %cst_81 : f32 to vector<128x1xf32>
    %328 = arith.divf %326, %327 : vector<128x1xf32>
    %329 = vector.broadcast %328 : vector<128x1xf32> to vector<128x8xf32>
    %330 = arith.subf %324, %329 : vector<128x8xf32>
    %331 = arith.mulf %330, %330 : vector<128x8xf32>
    %cst_82 = arith.constant dense<0.000000e+00> : vector<128xf32>
    %332 = vector.multi_reduction <add>, %331, %cst_82 [1] : vector<128x8xf32> to vector<128xf32>
    %333 = vector.shape_cast %332 : vector<128xf32> to vector<128x1xf32>
    %cst_83 = arith.constant 8.000000e+00 : f32
    %334 = vector.broadcast %cst_83 : f32 to vector<128x1xf32>
    %335 = arith.divf %333, %334 : vector<128x1xf32>
    %336 = vector.broadcast %328 : vector<128x1xf32> to vector<128x8xf32>
    %337 = arith.subf %324, %336 : vector<128x8xf32>
    %cst_84 = arith.constant 9.99999974E-6 : f32
    %338 = vector.broadcast %cst_84 : f32 to vector<128x1xf32>
    %339 = arith.addf %335, %338 : vector<128x1xf32>
    %340 = math.rsqrt %339 : vector<128x1xf32>
    %341 = vector.broadcast %340 : vector<128x1xf32> to vector<128x8xf32>
    %342 = arith.mulf %337, %341 : vector<128x8xf32>
    %343 = vector.broadcast %191 : vector<1x8xf32> to vector<128x8xf32>
    %344 = arith.mulf %342, %343 : vector<128x8xf32>
    %345 = vector.broadcast %192 : vector<1x8xf32> to vector<128x8xf32>
    %346 = arith.addf %344, %345 : vector<128x8xf32>
    %c0_85 = arith.constant 0 : index
    %c0_86 = arith.constant 0 : index
    %347 = vector.load %arg8[%c0_85, %c0_86] : memref<8x32xf32, #tpu.memory_space<vmem>>, vector<8x32xf32>
    %c0_87 = arith.constant 0 : index
    %c0_88 = arith.constant 0 : index
    %348 = vector.load %arg9[%c0_87, %c0_88] : memref<2x8xf32, #tpu.memory_space<vmem>>, vector<2x8xf32>
    %349 = vector.extract_strided_slice %346 {offsets = [0, 0], sizes = [32, 8], strides = [1, 1]} : vector<128x8xf32> to vector<32x8xf32>
    %cst_89 = arith.constant dense<0.000000e+00> : vector<8x8xf32>
    %350 = tpu.matmul %347, %349, %cst_89 {dimension_numbers = #tpu.dot_dimension_numbers<[1], [0], [0], [1], [0, 0, 1, 1], [], []>} : vector<8x32xf32>, vector<32x8xf32>, vector<8x8xf32> -> vector<8x8xf32>
    %cst_90 = arith.constant 0.000000e+00 : f32
    %351 = vector.broadcast %cst_90 : f32 to vector<8x8xf32>
    %352 = arith.maximumf %350, %351 : vector<8x8xf32>
    %cst_91 = arith.constant dense<0.000000e+00> : vector<2x8xf32>
    %353 = tpu.matmul %348, %352, %cst_91 {dimension_numbers = #tpu.dot_dimension_numbers<[1], [0], [0], [1], [0, 0, 1, 1], [], []>} : vector<2x8xf32>, vector<8x8xf32>, vector<2x8xf32> -> vector<2x8xf32>
    %cst_92 = arith.constant 0.000000e+00 : f32
    %354 = vector.broadcast %cst_92 : f32 to vector<2x8xf32>
    %355 = arith.maximumf %353, %354 : vector<2x8xf32>
    %356 = vector.extract_strided_slice %355 {offsets = [0, 0], sizes = [1, 8], strides = [1, 1]} : vector<2x8xf32> to vector<1x8xf32>
    %357 = vector.extract_strided_slice %355 {offsets = [1, 0], sizes = [1, 8], strides = [1, 1]} : vector<2x8xf32> to vector<1x8xf32>
    %358 = tpu.concatenate %356, %357 in 1 : vector<1x8xf32>, vector<1x8xf32> -> vector<1x16xf32>
    %359 = vector.extract_strided_slice %346 {offsets = [32, 0], sizes = [32, 8], strides = [1, 1]} : vector<128x8xf32> to vector<32x8xf32>
    %cst_93 = arith.constant dense<0.000000e+00> : vector<8x8xf32>
    %360 = tpu.matmul %347, %359, %cst_93 {dimension_numbers = #tpu.dot_dimension_numbers<[1], [0], [0], [1], [0, 0, 1, 1], [], []>} : vector<8x32xf32>, vector<32x8xf32>, vector<8x8xf32> -> vector<8x8xf32>
    %cst_94 = arith.constant 0.000000e+00 : f32
    %361 = vector.broadcast %cst_94 : f32 to vector<8x8xf32>
    %362 = arith.maximumf %360, %361 : vector<8x8xf32>
    %cst_95 = arith.constant dense<0.000000e+00> : vector<2x8xf32>
    %363 = tpu.matmul %348, %362, %cst_95 {dimension_numbers = #tpu.dot_dimension_numbers<[1], [0], [0], [1], [0, 0, 1, 1], [], []>} : vector<2x8xf32>, vector<8x8xf32>, vector<2x8xf32> -> vector<2x8xf32>
    %cst_96 = arith.constant 0.000000e+00 : f32
    %364 = vector.broadcast %cst_96 : f32 to vector<2x8xf32>
    %365 = arith.maximumf %363, %364 : vector<2x8xf32>
    %366 = vector.extract_strided_slice %365 {offsets = [0, 0], sizes = [1, 8], strides = [1, 1]} : vector<2x8xf32> to vector<1x8xf32>
    %367 = vector.extract_strided_slice %365 {offsets = [1, 0], sizes = [1, 8], strides = [1, 1]} : vector<2x8xf32> to vector<1x8xf32>
    %368 = tpu.concatenate %366, %367 in 1 : vector<1x8xf32>, vector<1x8xf32> -> vector<1x16xf32>
    %369 = vector.extract_strided_slice %346 {offsets = [64, 0], sizes = [32, 8], strides = [1, 1]} : vector<128x8xf32> to vector<32x8xf32>
    %cst_97 = arith.constant dense<0.000000e+00> : vector<8x8xf32>
    %370 = tpu.matmul %347, %369, %cst_97 {dimension_numbers = #tpu.dot_dimension_numbers<[1], [0], [0], [1], [0, 0, 1, 1], [], []>} : vector<8x32xf32>, vector<32x8xf32>, vector<8x8xf32> -> vector<8x8xf32>
    %cst_98 = arith.constant 0.000000e+00 : f32
    %371 = vector.broadcast %cst_98 : f32 to vector<8x8xf32>
    %372 = arith.maximumf %370, %371 : vector<8x8xf32>
    %cst_99 = arith.constant dense<0.000000e+00> : vector<2x8xf32>
    %373 = tpu.matmul %348, %372, %cst_99 {dimension_numbers = #tpu.dot_dimension_numbers<[1], [0], [0], [1], [0, 0, 1, 1], [], []>} : vector<2x8xf32>, vector<8x8xf32>, vector<2x8xf32> -> vector<2x8xf32>
    %cst_100 = arith.constant 0.000000e+00 : f32
    %374 = vector.broadcast %cst_100 : f32 to vector<2x8xf32>
    %375 = arith.maximumf %373, %374 : vector<2x8xf32>
    %376 = vector.extract_strided_slice %375 {offsets = [0, 0], sizes = [1, 8], strides = [1, 1]} : vector<2x8xf32> to vector<1x8xf32>
    %377 = vector.extract_strided_slice %375 {offsets = [1, 0], sizes = [1, 8], strides = [1, 1]} : vector<2x8xf32> to vector<1x8xf32>
    %378 = tpu.concatenate %376, %377 in 1 : vector<1x8xf32>, vector<1x8xf32> -> vector<1x16xf32>
    %379 = vector.extract_strided_slice %346 {offsets = [96, 0], sizes = [32, 8], strides = [1, 1]} : vector<128x8xf32> to vector<32x8xf32>
    %cst_101 = arith.constant dense<0.000000e+00> : vector<8x8xf32>
    %380 = tpu.matmul %347, %379, %cst_101 {dimension_numbers = #tpu.dot_dimension_numbers<[1], [0], [0], [1], [0, 0, 1, 1], [], []>} : vector<8x32xf32>, vector<32x8xf32>, vector<8x8xf32> -> vector<8x8xf32>
    %cst_102 = arith.constant 0.000000e+00 : f32
    %381 = vector.broadcast %cst_102 : f32 to vector<8x8xf32>
    %382 = arith.maximumf %380, %381 : vector<8x8xf32>
    %cst_103 = arith.constant dense<0.000000e+00> : vector<2x8xf32>
    %383 = tpu.matmul %348, %382, %cst_103 {dimension_numbers = #tpu.dot_dimension_numbers<[1], [0], [0], [1], [0, 0, 1, 1], [], []>} : vector<2x8xf32>, vector<8x8xf32>, vector<2x8xf32> -> vector<2x8xf32>
    %cst_104 = arith.constant 0.000000e+00 : f32
    %384 = vector.broadcast %cst_104 : f32 to vector<2x8xf32>
    %385 = arith.maximumf %383, %384 : vector<2x8xf32>
    %386 = vector.extract_strided_slice %385 {offsets = [0, 0], sizes = [1, 8], strides = [1, 1]} : vector<2x8xf32> to vector<1x8xf32>
    %387 = vector.extract_strided_slice %385 {offsets = [1, 0], sizes = [1, 8], strides = [1, 1]} : vector<2x8xf32> to vector<1x8xf32>
    %388 = tpu.concatenate %386, %387 in 1 : vector<1x8xf32>, vector<1x8xf32> -> vector<1x16xf32>
    %389 = tpu.concatenate %358, %368, %378, %388 in 0 : vector<1x16xf32>, vector<1x16xf32>, vector<1x16xf32>, vector<1x16xf32> -> vector<4x16xf32>
    %c0_105 = arith.constant 0 : index
    %c0_106 = arith.constant 0 : index
    %390 = vector.load %arg13[%c0_105, %c0_106] : memref<1x75xf32, #tpu.memory_space<vmem>>, vector<1x75xf32>
    %391 = vector.extract_strided_slice %390 {offsets = [0, 0], sizes = [1, 16], strides = [1, 1]} : vector<1x75xf32> to vector<1x16xf32>
    %392 = vector.extract_strided_slice %390 {offsets = [0, 16], sizes = [1, 16], strides = [1, 1]} : vector<1x75xf32> to vector<1x16xf32>
    %393 = vector.extract_strided_slice %390 {offsets = [0, 32], sizes = [1, 16], strides = [1, 1]} : vector<1x75xf32> to vector<1x16xf32>
    %394 = vector.extract_strided_slice %390 {offsets = [0, 48], sizes = [1, 8], strides = [1, 1]} : vector<1x75xf32> to vector<1x8xf32>
    %395 = vector.extract_strided_slice %390 {offsets = [0, 56], sizes = [1, 8], strides = [1, 1]} : vector<1x75xf32> to vector<1x8xf32>
    %396 = vector.extract_strided_slice %390 {offsets = [0, 64], sizes = [1, 8], strides = [1, 1]} : vector<1x75xf32> to vector<1x8xf32>
    %397 = vector.extract_strided_slice %390 {offsets = [0, 72], sizes = [1, 3], strides = [1, 1]} : vector<1x75xf32> to vector<1x3xf32>
    %c0_107 = arith.constant 0 : index
    %c0_108 = arith.constant 0 : index
    %398 = vector.load %arg10[%c0_107, %c0_108] : memref<16x16xf32, #tpu.memory_space<vmem>>, vector<16x16xf32>
    %cst_109 = arith.constant dense<0.000000e+00> : vector<4x16xf32>
    %399 = tpu.matmul %389, %398, %cst_109 {dimension_numbers = #tpu.dot_dimension_numbers<[1], [0], [0], [1], [0, 0, 1, 1], [], []>} : vector<4x16xf32>, vector<16x16xf32>, vector<4x16xf32> -> vector<4x16xf32>
    %400 = vector.broadcast %391 : vector<1x16xf32> to vector<4x16xf32>
    %401 = arith.addf %399, %400 : vector<4x16xf32>
    %cst_110 = arith.constant dense<0.000000e+00> : vector<4xf32>
    %402 = vector.multi_reduction <add>, %401, %cst_110 [1] : vector<4x16xf32> to vector<4xf32>
    %403 = vector.shape_cast %402 : vector<4xf32> to vector<4x1xf32>
    %cst_111 = arith.constant 1.600000e+01 : f32
    %404 = vector.broadcast %cst_111 : f32 to vector<4x1xf32>
    %405 = arith.divf %403, %404 : vector<4x1xf32>
    %406 = vector.broadcast %405 : vector<4x1xf32> to vector<4x16xf32>
    %407 = arith.subf %401, %406 : vector<4x16xf32>
    %408 = arith.mulf %407, %407 : vector<4x16xf32>
    %cst_112 = arith.constant dense<0.000000e+00> : vector<4xf32>
    %409 = vector.multi_reduction <add>, %408, %cst_112 [1] : vector<4x16xf32> to vector<4xf32>
    %410 = vector.shape_cast %409 : vector<4xf32> to vector<4x1xf32>
    %cst_113 = arith.constant 1.600000e+01 : f32
    %411 = vector.broadcast %cst_113 : f32 to vector<4x1xf32>
    %412 = arith.divf %410, %411 : vector<4x1xf32>
    %413 = vector.broadcast %405 : vector<4x1xf32> to vector<4x16xf32>
    %414 = arith.subf %401, %413 : vector<4x16xf32>
    %cst_114 = arith.constant 9.99999974E-6 : f32
    %415 = vector.broadcast %cst_114 : f32 to vector<4x1xf32>
    %416 = arith.addf %412, %415 : vector<4x1xf32>
    %417 = math.rsqrt %416 : vector<4x1xf32>
    %418 = vector.broadcast %417 : vector<4x1xf32> to vector<4x16xf32>
    %419 = arith.mulf %414, %418 : vector<4x16xf32>
    %420 = vector.broadcast %392 : vector<1x16xf32> to vector<4x16xf32>
    %421 = arith.mulf %419, %420 : vector<4x16xf32>
    %422 = vector.broadcast %393 : vector<1x16xf32> to vector<4x16xf32>
    %423 = arith.addf %421, %422 : vector<4x16xf32>
    %cst_115 = arith.constant 0.000000e+00 : f32
    %424 = vector.broadcast %cst_115 : f32 to vector<4x16xf32>
    %425 = arith.maximumf %423, %424 : vector<4x16xf32>
    %c0_116 = arith.constant 0 : index
    %c0_117 = arith.constant 0 : index
    %426 = vector.load %arg11[%c0_116, %c0_117] : memref<16x8xf32, #tpu.memory_space<vmem>>, vector<16x8xf32>
    %cst_118 = arith.constant dense<0.000000e+00> : vector<4x8xf32>
    %427 = tpu.matmul %425, %426, %cst_118 {dimension_numbers = #tpu.dot_dimension_numbers<[1], [0], [0], [1], [0, 0, 1, 1], [], []>} : vector<4x16xf32>, vector<16x8xf32>, vector<4x8xf32> -> vector<4x8xf32>
    %428 = vector.broadcast %394 : vector<1x8xf32> to vector<4x8xf32>
    %429 = arith.addf %427, %428 : vector<4x8xf32>
    %cst_119 = arith.constant dense<0.000000e+00> : vector<4xf32>
    %430 = vector.multi_reduction <add>, %429, %cst_119 [1] : vector<4x8xf32> to vector<4xf32>
    %431 = vector.shape_cast %430 : vector<4xf32> to vector<4x1xf32>
    %cst_120 = arith.constant 8.000000e+00 : f32
    %432 = vector.broadcast %cst_120 : f32 to vector<4x1xf32>
    %433 = arith.divf %431, %432 : vector<4x1xf32>
    %434 = vector.broadcast %433 : vector<4x1xf32> to vector<4x8xf32>
    %435 = arith.subf %429, %434 : vector<4x8xf32>
    %436 = arith.mulf %435, %435 : vector<4x8xf32>
    %cst_121 = arith.constant dense<0.000000e+00> : vector<4xf32>
    %437 = vector.multi_reduction <add>, %436, %cst_121 [1] : vector<4x8xf32> to vector<4xf32>
    %438 = vector.shape_cast %437 : vector<4xf32> to vector<4x1xf32>
    %cst_122 = arith.constant 8.000000e+00 : f32
    %439 = vector.broadcast %cst_122 : f32 to vector<4x1xf32>
    %440 = arith.divf %438, %439 : vector<4x1xf32>
    %441 = vector.broadcast %433 : vector<4x1xf32> to vector<4x8xf32>
    %442 = arith.subf %429, %441 : vector<4x8xf32>
    %cst_123 = arith.constant 9.99999974E-6 : f32
    %443 = vector.broadcast %cst_123 : f32 to vector<4x1xf32>
    %444 = arith.addf %440, %443 : vector<4x1xf32>
    %445 = math.rsqrt %444 : vector<4x1xf32>
    %446 = vector.broadcast %445 : vector<4x1xf32> to vector<4x8xf32>
    %447 = arith.mulf %442, %446 : vector<4x8xf32>
    %448 = vector.broadcast %395 : vector<1x8xf32> to vector<4x8xf32>
    %449 = arith.mulf %447, %448 : vector<4x8xf32>
    %450 = vector.broadcast %396 : vector<1x8xf32> to vector<4x8xf32>
    %451 = arith.addf %449, %450 : vector<4x8xf32>
    %cst_124 = arith.constant 0.000000e+00 : f32
    %452 = vector.broadcast %cst_124 : f32 to vector<4x8xf32>
    %453 = arith.maximumf %451, %452 : vector<4x8xf32>
    %c0_125 = arith.constant 0 : index
    %c0_126 = arith.constant 0 : index
    %454 = vector.load %arg12[%c0_125, %c0_126] : memref<8x3xf32, #tpu.memory_space<vmem>>, vector<8x3xf32>
    %cst_127 = arith.constant dense<0.000000e+00> : vector<4x3xf32>
    %455 = tpu.matmul %453, %454, %cst_127 {dimension_numbers = #tpu.dot_dimension_numbers<[1], [0], [0], [1], [0, 0, 1, 1], [], []>} : vector<4x8xf32>, vector<8x3xf32>, vector<4x3xf32> -> vector<4x3xf32>
    %456 = vector.broadcast %397 : vector<1x3xf32> to vector<4x3xf32>
    %457 = arith.addf %455, %456 : vector<4x3xf32>
    %cst_128 = arith.constant dense<0xFF800000> : vector<4xf32>
    %458 = vector.multi_reduction <maximumf>, %457, %cst_128 [1] : vector<4x3xf32> to vector<4xf32>
    %459 = vector.shape_cast %458 : vector<4xf32> to vector<4x1xf32>
    %460 = vector.broadcast %459 : vector<4x1xf32> to vector<4x3xf32>
    %461 = arith.subf %457, %460 : vector<4x3xf32>
    %462 = math.exp %461 : vector<4x3xf32>
    %cst_129 = arith.constant dense<0.000000e+00> : vector<4xf32>
    %463 = vector.multi_reduction <add>, %462, %cst_129 [1] : vector<4x3xf32> to vector<4xf32>
    %464 = vector.shape_cast %463 : vector<4xf32> to vector<4x1xf32>
    %465 = tpu.reciprocal %464 {approx = true} : vector<4x1xf32> -> vector<4x1xf32>
    %466 = vector.broadcast %465 : vector<4x1xf32> to vector<4x3xf32>
    %467 = arith.mulf %462, %466 : vector<4x3xf32>
    %c0_130 = arith.constant 0 : index
    %c0_131 = arith.constant 0 : index
    %468 = vector.load %arg19[%c0_130, %c0_131] : memref<4x3xf32, #tpu.memory_space<vmem>>, vector<4x3xf32>
    tpu.vector_store %arg19[%c0_130, %c0_131], %467 {strides = array<i32>} : memref<4x3xf32, #tpu.memory_space<vmem>>, vector<4x3xf32>,
    %469 = tpu.concatenate %358, %378 in 1 : vector<1x16xf32>, vector<1x16xf32> -> vector<1x32xf32>
    %470 = tpu.concatenate %368, %388 in 1 : vector<1x16xf32>, vector<1x16xf32> -> vector<1x32xf32>
    %471 = tpu.concatenate %469, %470 in 0 : vector<1x32xf32>, vector<1x32xf32> -> vector<2x32xf32>
    %c0_132 = arith.constant 0 : index
    %c0_133 = arith.constant 0 : index
    %472 = vector.load %arg18[%c0_132, %c0_133] : memref<1x84xf32, #tpu.memory_space<vmem>>, vector<1x84xf32>
    %473 = vector.extract_strided_slice %472 {offsets = [0, 0], sizes = [1, 16], strides = [1, 1]} : vector<1x84xf32> to vector<1x16xf32>
    %474 = vector.extract_strided_slice %472 {offsets = [0, 16], sizes = [1, 16], strides = [1, 1]} : vector<1x84xf32> to vector<1x16xf32>
    %475 = vector.extract_strided_slice %472 {offsets = [0, 32], sizes = [1, 16], strides = [1, 1]} : vector<1x84xf32> to vector<1x16xf32>
    %476 = vector.extract_strided_slice %472 {offsets = [0, 48], sizes = [1, 8], strides = [1, 1]} : vector<1x84xf32> to vector<1x8xf32>
    %477 = vector.extract_strided_slice %472 {offsets = [0, 56], sizes = [1, 8], strides = [1, 1]} : vector<1x84xf32> to vector<1x8xf32>
    %478 = vector.extract_strided_slice %472 {offsets = [0, 64], sizes = [1, 8], strides = [1, 1]} : vector<1x84xf32> to vector<1x8xf32>
    %479 = vector.extract_strided_slice %472 {offsets = [0, 72], sizes = [1, 4], strides = [1, 1]} : vector<1x84xf32> to vector<1x4xf32>
    %480 = vector.extract_strided_slice %472 {offsets = [0, 76], sizes = [1, 4], strides = [1, 1]} : vector<1x84xf32> to vector<1x4xf32>
    %481 = vector.extract_strided_slice %472 {offsets = [0, 80], sizes = [1, 4], strides = [1, 1]} : vector<1x84xf32> to vector<1x4xf32>
    %c0_134 = arith.constant 0 : index
    %c0_135 = arith.constant 0 : index
    %482 = vector.load %arg14[%c0_134, %c0_135] : memref<32x16xf32, #tpu.memory_space<vmem>>, vector<32x16xf32>
    %cst_136 = arith.constant dense<0.000000e+00> : vector<2x16xf32>
    %483 = tpu.matmul %471, %482, %cst_136 {dimension_numbers = #tpu.dot_dimension_numbers<[1], [0], [0], [1], [0, 0, 1, 1], [], []>} : vector<2x32xf32>, vector<32x16xf32>, vector<2x16xf32> -> vector<2x16xf32>
    %484 = vector.broadcast %473 : vector<1x16xf32> to vector<2x16xf32>
    %485 = arith.addf %483, %484 : vector<2x16xf32>
    %cst_137 = arith.constant dense<0.000000e+00> : vector<2xf32>
    %486 = vector.multi_reduction <add>, %485, %cst_137 [1] : vector<2x16xf32> to vector<2xf32>
    %487 = vector.shape_cast %486 : vector<2xf32> to vector<2x1xf32>
    %cst_138 = arith.constant 1.600000e+01 : f32
    %488 = vector.broadcast %cst_138 : f32 to vector<2x1xf32>
    %489 = arith.divf %487, %488 : vector<2x1xf32>
    %490 = vector.broadcast %489 : vector<2x1xf32> to vector<2x16xf32>
    %491 = arith.subf %485, %490 : vector<2x16xf32>
    %492 = arith.mulf %491, %491 : vector<2x16xf32>
    %cst_139 = arith.constant dense<0.000000e+00> : vector<2xf32>
    %493 = vector.multi_reduction <add>, %492, %cst_139 [1] : vector<2x16xf32> to vector<2xf32>
    %494 = vector.shape_cast %493 : vector<2xf32> to vector<2x1xf32>
    %cst_140 = arith.constant 1.600000e+01 : f32
    %495 = vector.broadcast %cst_140 : f32 to vector<2x1xf32>
    %496 = arith.divf %494, %495 : vector<2x1xf32>
    %497 = vector.broadcast %489 : vector<2x1xf32> to vector<2x16xf32>
    %498 = arith.subf %485, %497 : vector<2x16xf32>
    %cst_141 = arith.constant 9.99999974E-6 : f32
    %499 = vector.broadcast %cst_141 : f32 to vector<2x1xf32>
    %500 = arith.addf %496, %499 : vector<2x1xf32>
    %501 = math.rsqrt %500 : vector<2x1xf32>
    %502 = vector.broadcast %501 : vector<2x1xf32> to vector<2x16xf32>
    %503 = arith.mulf %498, %502 : vector<2x16xf32>
    %504 = vector.broadcast %474 : vector<1x16xf32> to vector<2x16xf32>
    %505 = arith.mulf %503, %504 : vector<2x16xf32>
    %506 = vector.broadcast %475 : vector<1x16xf32> to vector<2x16xf32>
    %507 = arith.addf %505, %506 : vector<2x16xf32>
    %cst_142 = arith.constant 0.000000e+00 : f32
    %508 = vector.broadcast %cst_142 : f32 to vector<2x16xf32>
    %509 = arith.maximumf %507, %508 : vector<2x16xf32>
    %c0_143 = arith.constant 0 : index
    %c0_144 = arith.constant 0 : index
    %510 = vector.load %arg15[%c0_143, %c0_144] : memref<16x8xf32, #tpu.memory_space<vmem>>, vector<16x8xf32>
    %cst_145 = arith.constant dense<0.000000e+00> : vector<2x8xf32>
    %511 = tpu.matmul %509, %510, %cst_145 {dimension_numbers = #tpu.dot_dimension_numbers<[1], [0], [0], [1], [0, 0, 1, 1], [], []>} : vector<2x16xf32>, vector<16x8xf32>, vector<2x8xf32> -> vector<2x8xf32>
    %512 = vector.broadcast %476 : vector<1x8xf32> to vector<2x8xf32>
    %513 = arith.addf %511, %512 : vector<2x8xf32>
    %cst_146 = arith.constant dense<0.000000e+00> : vector<2xf32>
    %514 = vector.multi_reduction <add>, %513, %cst_146 [1] : vector<2x8xf32> to vector<2xf32>
    %515 = vector.shape_cast %514 : vector<2xf32> to vector<2x1xf32>
    %cst_147 = arith.constant 8.000000e+00 : f32
    %516 = vector.broadcast %cst_147 : f32 to vector<2x1xf32>
    %517 = arith.divf %515, %516 : vector<2x1xf32>
    %518 = vector.broadcast %517 : vector<2x1xf32> to vector<2x8xf32>
    %519 = arith.subf %513, %518 : vector<2x8xf32>
    %520 = arith.mulf %519, %519 : vector<2x8xf32>
    %cst_148 = arith.constant dense<0.000000e+00> : vector<2xf32>
    %521 = vector.multi_reduction <add>, %520, %cst_148 [1] : vector<2x8xf32> to vector<2xf32>
    %522 = vector.shape_cast %521 : vector<2xf32> to vector<2x1xf32>
    %cst_149 = arith.constant 8.000000e+00 : f32
    %523 = vector.broadcast %cst_149 : f32 to vector<2x1xf32>
    %524 = arith.divf %522, %523 : vector<2x1xf32>
    %525 = vector.broadcast %517 : vector<2x1xf32> to vector<2x8xf32>
    %526 = arith.subf %513, %525 : vector<2x8xf32>
    %cst_150 = arith.constant 9.99999974E-6 : f32
    %527 = vector.broadcast %cst_150 : f32 to vector<2x1xf32>
    %528 = arith.addf %524, %527 : vector<2x1xf32>
    %529 = math.rsqrt %528 : vector<2x1xf32>
    %530 = vector.broadcast %529 : vector<2x1xf32> to vector<2x8xf32>
    %531 = arith.mulf %526, %530 : vector<2x8xf32>
    %532 = vector.broadcast %477 : vector<1x8xf32> to vector<2x8xf32>
    %533 = arith.mulf %531, %532 : vector<2x8xf32>
    %534 = vector.broadcast %478 : vector<1x8xf32> to vector<2x8xf32>
    %535 = arith.addf %533, %534 : vector<2x8xf32>
    %cst_151 = arith.constant 0.000000e+00 : f32
    %536 = vector.broadcast %cst_151 : f32 to vector<2x8xf32>
    %537 = arith.maximumf %535, %536 : vector<2x8xf32>
    %c0_152 = arith.constant 0 : index
    %c0_153 = arith.constant 0 : index
    %538 = vector.load %arg16[%c0_152, %c0_153] : memref<8x4xf32, #tpu.memory_space<vmem>>, vector<8x4xf32>
    %cst_154 = arith.constant dense<0.000000e+00> : vector<2x4xf32>
    %539 = tpu.matmul %537, %538, %cst_154 {dimension_numbers = #tpu.dot_dimension_numbers<[1], [0], [0], [1], [0, 0, 1, 1], [], []>} : vector<2x8xf32>, vector<8x4xf32>, vector<2x4xf32> -> vector<2x4xf32>
    %540 = vector.broadcast %479 : vector<1x4xf32> to vector<2x4xf32>
    %541 = arith.addf %539, %540 : vector<2x4xf32>
    %cst_155 = arith.constant dense<0.000000e+00> : vector<2xf32>
    %542 = vector.multi_reduction <add>, %541, %cst_155 [1] : vector<2x4xf32> to vector<2xf32>
    %543 = vector.shape_cast %542 : vector<2xf32> to vector<2x1xf32>
    %cst_156 = arith.constant 4.000000e+00 : f32
    %544 = vector.broadcast %cst_156 : f32 to vector<2x1xf32>
    %545 = arith.divf %543, %544 : vector<2x1xf32>
    %546 = vector.broadcast %545 : vector<2x1xf32> to vector<2x4xf32>
    %547 = arith.subf %541, %546 : vector<2x4xf32>
    %548 = arith.mulf %547, %547 : vector<2x4xf32>
    %cst_157 = arith.constant dense<0.000000e+00> : vector<2xf32>
    %549 = vector.multi_reduction <add>, %548, %cst_157 [1] : vector<2x4xf32> to vector<2xf32>
    %550 = vector.shape_cast %549 : vector<2xf32> to vector<2x1xf32>
    %cst_158 = arith.constant 4.000000e+00 : f32
    %551 = vector.broadcast %cst_158 : f32 to vector<2x1xf32>
    %552 = arith.divf %550, %551 : vector<2x1xf32>
    %553 = vector.broadcast %545 : vector<2x1xf32> to vector<2x4xf32>
    %554 = arith.subf %541, %553 : vector<2x4xf32>
    %cst_159 = arith.constant 9.99999974E-6 : f32
    %555 = vector.broadcast %cst_159 : f32 to vector<2x1xf32>
    %556 = arith.addf %552, %555 : vector<2x1xf32>
    %557 = math.rsqrt %556 : vector<2x1xf32>
    %558 = vector.broadcast %557 : vector<2x1xf32> to vector<2x4xf32>
    %559 = arith.mulf %554, %558 : vector<2x4xf32>
    %560 = vector.broadcast %480 : vector<1x4xf32> to vector<2x4xf32>
    %561 = arith.mulf %559, %560 : vector<2x4xf32>
    %562 = vector.broadcast %481 : vector<1x4xf32> to vector<2x4xf32>
    %563 = arith.addf %561, %562 : vector<2x4xf32>
    %cst_160 = arith.constant 0.000000e+00 : f32
    %564 = vector.broadcast %cst_160 : f32 to vector<2x4xf32>
    %565 = arith.maximumf %563, %564 : vector<2x4xf32>
    %c0_161 = arith.constant 0 : index
    %c0_162 = arith.constant 0 : index
    %566 = vector.load %arg17[%c0_161, %c0_162] : memref<4x3xf32, #tpu.memory_space<vmem>>, vector<4x3xf32>
    %cst_163 = arith.constant dense<0.000000e+00> : vector<2x3xf32>
    %567 = tpu.matmul %565, %566, %cst_163 {dimension_numbers = #tpu.dot_dimension_numbers<[1], [0], [0], [1], [0, 0, 1, 1], [], []>} : vector<2x4xf32>, vector<4x3xf32>, vector<2x3xf32> -> vector<2x3xf32>
    %cst_164 = arith.constant dense<0xFF800000> : vector<2xf32>
    %568 = vector.multi_reduction <maximumf>, %567, %cst_164 [1] : vector<2x3xf32> to vector<2xf32>
    %569 = vector.shape_cast %568 : vector<2xf32> to vector<2x1xf32>
    %570 = vector.broadcast %569 : vector<2x1xf32> to vector<2x3xf32>
    %571 = arith.subf %567, %570 : vector<2x3xf32>
    %572 = math.exp %571 : vector<2x3xf32>
    %cst_165 = arith.constant dense<0.000000e+00> : vector<2xf32>
    %573 = vector.multi_reduction <add>, %572, %cst_165 [1] : vector<2x3xf32> to vector<2xf32>
    %574 = vector.shape_cast %573 : vector<2xf32> to vector<2x1xf32>
    %575 = tpu.reciprocal %574 {approx = true} : vector<2x1xf32> -> vector<2x1xf32>
    %576 = vector.broadcast %575 : vector<2x1xf32> to vector<2x3xf32>
    %577 = arith.mulf %572, %576 : vector<2x3xf32>
    %c0_166 = arith.constant 0 : index
    %c0_167 = arith.constant 0 : index
    %578 = vector.load %arg20[%c0_166, %c0_167] : memref<2x3xf32, #tpu.memory_space<vmem>>, vector<2x3xf32>
    tpu.vector_store %arg20[%c0_166, %c0_167], %577 {strides = array<i32>} : memref<2x3xf32, #tpu.memory_space<vmem>>, vector<2x3xf32>,
    return
  }
}

</mosaic_0001>

<llo_original>
// kernel: _lambda_.1
$region0: #{_lambda_.1}
  #allocation0 [shape = 'u32[]', space=smem, size = 0x4, offset = 0x4, fixed_abs, tag = 'smem constant byte address 0x4 - core index']
  #allocation1 [shape = 'u32[144,128]{1,0:T(1,128)}', space=vmem, size = 0x12000, scoped, tag = 'internal scratch']
  %s0 = inlined_call_operand.vmem [shape: f32[4,32,8], index: 0, kind: input, shape index: {}]
  %s1 = inlined_call_operand.vmem [shape: f32[32,32], index: 1, kind: input, shape index: {}]
  %s2 = inlined_call_operand.vmem [shape: f32[32,8], index: 2, kind: input, shape index: {}]
  %s3 = inlined_call_operand.vmem [shape: f32[2,8,24], index: 3, kind: input, shape index: {}]
  %s4 = inlined_call_operand.vmem [shape: f32[2,8,8], index: 4, kind: input, shape index: {}]
  %s5 = inlined_call_operand.vmem [shape: f32[2,8,16], index: 5, kind: input, shape index: {}]
  %s6 = inlined_call_operand.vmem [shape: f32[2,16,8], index: 6, kind: input, shape index: {}]
  %s7 = inlined_call_operand.vmem [shape: f32[2,1,88], index: 7, kind: input, shape index: {}]
  %s8 = inlined_call_operand.vmem [shape: f32[8,32], index: 8, kind: input, shape index: {}]
  %s9 = inlined_call_operand.vmem [shape: f32[2,8], index: 9, kind: input, shape index: {}]
  %s10 = inlined_call_operand.vmem [shape: f32[16,16], index: 10, kind: input, shape index: {}]
  %s11 = inlined_call_operand.vmem [shape: f32[16,8], index: 11, kind: input, shape index: {}]
  %s12 = inlined_call_operand.vmem [shape: f32[8,3], index: 12, kind: input, shape index: {}]
  %s13 = inlined_call_operand.vmem [shape: f32[1,75], index: 13, kind: input, shape index: {}]
  %s14 = inlined_call_operand.vmem [shape: f32[32,16], index: 14, kind: input, shape index: {}]
  %s15 = inlined_call_operand.vmem [shape: f32[16,8], index: 15, kind: input, shape index: {}]
  %s16 = inlined_call_operand.vmem [shape: f32[8,4], index: 16, kind: input, shape index: {}]
  %s17 = inlined_call_operand.vmem [shape: f32[4,3], index: 17, kind: input, shape index: {}]
  %s18 = inlined_call_operand.vmem [shape: f32[1,84], index: 18, kind: input, shape index: {}]
  %s19 = inlined_call_operand.vmem [shape: f32[4,3], index: 19, kind: output, shape index: {0}]
  %s20 = inlined_call_operand.hbm [shape: f32[2,3], index: 20, kind: output, shape index: {1}]
  %21 = xla_tuple %s19, %s20
  %s22 = sld [smem:[#allocation0]]
  $region94: #{_lambda_.1} parent=0
    _
  %s24 = ssub.s32 1, %s22
  %s25 = scalar_select 0, %s24, %s22
  $region1: #{_lambda_.1} parent=0
    #allocation2 [shape = 'u8[1024]{0}', space=vmem, size = 0x400, scoped, tag = 'output window, operand 1, single buffered']
    #allocation3 [shape = 's32[1]{0}', space=sflag, size = 0x4, scoped, tag = 'scoped memory for _lambda_.1']
    %26 = vsyncpa [#allocation3], 0
    // Predicated region
    $region2: #{_lambda_.1} parent=1 // pred_check
      _
    $region3: #{_lambda_.1} parent=1 // pred_check_branch
      %28 = sbr.rel (0) target = $region5
    $region4: #{_lambda_.1} parent=1 // pred_region
      _
    $region5: #{_lambda_.1} parent=1 // pred_fallthru
      _
    // Predicated region
    $region6: #{_lambda_.1} parent=1 // pred_check
      _
    $region7: #{_lambda_.1} parent=1 // pred_check_branch
      %30 = sbr.rel (0) target = $region9
    $region8: #{_lambda_.1} parent=1 // pred_region
      _
    $region9: #{_lambda_.1} parent=1 // pred_fallthru
      _
    // Predicated region
    $region10: #{_lambda_.1} parent=1 // pred_check
      _
    $region11: #{_lambda_.1} parent=1 // pred_check_branch
      %32 = sbr.rel (0) target = $region13
    $region12: #{_lambda_.1} parent=1 // pred_region
      _
    $region13: #{_lambda_.1} parent=1 // pred_fallthru
      _
    // Predicated region
    $region14: #{_lambda_.1} parent=1 // pred_check
      _
    $region15: #{_lambda_.1} parent=1 // pred_check_branch
      %34 = sbr.rel (0) target = $region17
    $region16: #{_lambda_.1} parent=1 // pred_region
      _
    $region17: #{_lambda_.1} parent=1 // pred_fallthru
      _
    // Predicated region
    $region18: #{_lambda_.1} parent=1 // pred_check
      _
    $region19: #{_lambda_.1} parent=1 // pred_check_branch
      %36 = sbr.rel (0) target = $region21
    $region20: #{_lambda_.1} parent=1 // pred_region
      _
    $region21: #{_lambda_.1} parent=1 // pred_fallthru
      _
    // Predicated region
    $region22: #{_lambda_.1} parent=1 // pred_check
      _
    $region23: #{_lambda_.1} parent=1 // pred_check_branch
      %38 = sbr.rel (0) target = $region25
    $region24: #{_lambda_.1} parent=1 // pred_region
      _
    $region25: #{_lambda_.1} parent=1 // pred_fallthru
      _
    // Predicated region
    $region26: #{_lambda_.1} parent=1 // pred_check
      _
    $region27: #{_lambda_.1} parent=1 // pred_check_branch
      %40 = sbr.rel (0) target = $region29
    $region28: #{_lambda_.1} parent=1 // pred_region
      _
    $region29: #{_lambda_.1} parent=1 // pred_fallthru
      _
    // Predicated region
    $region30: #{_lambda_.1} parent=1 // pred_check
      _
    $region31: #{_lambda_.1} parent=1 // pred_check_branch
      %42 = sbr.rel (0) target = $region33
    $region32: #{_lambda_.1} parent=1 // pred_region
      _
    $region33: #{_lambda_.1} parent=1 // pred_fallthru
      _
    // Predicated region
    $region34: #{_lambda_.1} parent=1 // pred_check
      _
    $region35: #{_lambda_.1} parent=1 // pred_check_branch
      %44 = sbr.rel (0) target = $region37
    $region36: #{_lambda_.1} parent=1 // pred_region
      _
    $region37: #{_lambda_.1} parent=1 // pred_fallthru
      _
    // Predicated region
    $region38: #{_lambda_.1} parent=1 // pred_check
      _
    $region39: #{_lambda_.1} parent=1 // pred_check_branch
      %46 = sbr.rel (0) target = $region41
    $region40: #{_lambda_.1} parent=1 // pred_region
      _
    $region41: #{_lambda_.1} parent=1 // pred_fallthru
      _
    // Predicated region
    $region42: #{_lambda_.1} parent=1 // pred_check
      _
    $region43: #{_lambda_.1} parent=1 // pred_check_branch
      %48 = sbr.rel (0) target = $region45
    $region44: #{_lambda_.1} parent=1 // pred_region
      _
    $region45: #{_lambda_.1} parent=1 // pred_fallthru
      _
    // Predicated region
    $region46: #{_lambda_.1} parent=1 // pred_check
      _
    $region47: #{_lambda_.1} parent=1 // pred_check_branch
      %50 = sbr.rel (0) target = $region49
    $region48: #{_lambda_.1} parent=1 // pred_region
      _
    $region49: #{_lambda_.1} parent=1 // pred_fallthru
      _
    // Predicated region
    $region50: #{_lambda_.1} parent=1 // pred_check
      _
    $region51: #{_lambda_.1} parent=1 // pred_check_branch
      %52 = sbr.rel (0) target = $region53
    $region52: #{_lambda_.1} parent=1 // pred_region
      _
    $region53: #{_lambda_.1} parent=1 // pred_fallthru
      _
    // Predicated region
    $region54: #{_lambda_.1} parent=1 // pred_check
      _
    $region55: #{_lambda_.1} parent=1 // pred_check_branch
      %54 = sbr.rel (0) target = $region57
    $region56: #{_lambda_.1} parent=1 // pred_region
      _
    $region57: #{_lambda_.1} parent=1 // pred_fallthru
      _
    // Predicated region
    $region58: #{_lambda_.1} parent=1 // pred_check
      _
    $region59: #{_lambda_.1} parent=1 // pred_check_branch
      %56 = sbr.rel (0) target = $region61
    $region60: #{_lambda_.1} parent=1 // pred_region
      _
    $region61: #{_lambda_.1} parent=1 // pred_fallthru
      _
    // Predicated region
    $region62: #{_lambda_.1} parent=1 // pred_check
      _
    $region63: #{_lambda_.1} parent=1 // pred_check_branch
      %58 = sbr.rel (0) target = $region65
    $region64: #{_lambda_.1} parent=1 // pred_region
      _
    $region65: #{_lambda_.1} parent=1 // pred_fallthru
      _
    // Predicated region
    $region66: #{_lambda_.1} parent=1 // pred_check
      _
    $region67: #{_lambda_.1} parent=1 // pred_check_branch
      %60 = sbr.rel (0) target = $region69
    $region68: #{_lambda_.1} parent=1 // pred_region
      _
    $region69: #{_lambda_.1} parent=1 // pred_fallthru
      _
    // Predicated region
    $region70: #{_lambda_.1} parent=1 // pred_check
      _
    $region71: #{_lambda_.1} parent=1 // pred_check_branch
      %62 = sbr.rel (0) target = $region73
    $region72: #{_lambda_.1} parent=1 // pred_region
      _
    $region73: #{_lambda_.1} parent=1 // pred_fallthru
      _
    // Predicated region
    $region74: #{_lambda_.1} parent=1 // pred_check
      _
    $region75: #{_lambda_.1} parent=1 // pred_check_branch
      %64 = sbr.rel (0) target = $region77
    $region76: #{_lambda_.1} parent=1 // pred_region
      _
    $region77: #{_lambda_.1} parent=1 // pred_fallthru
      _
    %v65 = vld [vmem:[%s2] sm:$0xff]
    %v66 = vld [vmem:[%s2 + $0x8] sm:$0xff]
    %v67 = vld [vmem:[%s2 + $0x10] sm:$0xff]
    %v68 = vld [vmem:[%s2 + $0x18] sm:$0xff]
    %v69 = vld [vmem:[%s1] sm:$0xff]
    %v70 = vld [vmem:[%s1 + $0x8] sm:$0xff]
    %v71 = vld [vmem:[%s1 + $0x10] sm:$0xff]
    %v72 = vld [vmem:[%s1 + $0x18] sm:$0xff]
    %v73 = vld [vmem:[%s0] sm:$0xff]
    %v74 = vld [vmem:[%s0 + $0x8] sm:$0xff]
    %v75 = vld [vmem:[%s0 + $0x10] sm:$0xff]
    %v76 = vld [vmem:[%s0 + $0x18] sm:$0xff]
    %vm77 = vcmask 261120
    %v79 = vsel %vm77, %v69, 0
    %v82 = vsel %vm77, %v70, 0
    %v85 = vsel %vm77, %v71, 0
    %v88 = vsel %vm77, %v72, 0
    %90 = vmatprep.subr.mxu0 0.0
    %91 = vmatpush1.msra.mxu0 %v73
    %92 = vmatprep.subr.mxu0 0.0
    %93 = vmatpush1.msra.mxu0 %v74
    %94 = vmatprep.subr.mxu0 0.0
    %95 = vmatpush1.msra.mxu0 %v75
    %96 = vmatprep.subr.mxu0 0.0
    %97 = vmatpush1.msra.mxu0 %v76
    %98 = vmatprep.subr.mxu0 0.0
    %99 = vmatpush1.msra.mxu0 0.0
    %100 = vmatprep.subr.mxu0 0.0
    %101 = vmatpush1.msra.mxu0 0.0
    %102 = vmatprep.subr.mxu0 0.0
    %103 = vmatpush1.msra.mxu0 0.0
    %104 = vmatprep.subr.mxu0 0.0
    %105 = vmatpush1.msra.mxu0 0.0
    %106 = vmatprep.subr.mxu0 0.0
    %107 = vmatpush1.msra.mxu0 0.0
    %108 = vmatprep.subr.mxu0 0.0
    %109 = vmatpush1.msra.mxu0 0.0
    %110 = vmatprep.subr.mxu0 0.0
    %111 = vmatpush1.msra.mxu0 0.0
    %112 = vmatprep.subr.mxu0 0.0
    %113 = vmatpush1.msra.mxu0 0.0
    %114 = vmatprep.subr.mxu0 0.0
    %115 = vmatpush1.msra.mxu0 0.0
    %116 = vmatprep.subr.mxu0 0.0
    %117 = vmatpush1.msra.mxu0 0.0
    %118 = vmatprep.subr.mxu0 0.0
    %119 = vmatpush1.msra.mxu0 0.0
    %120 = vmatprep.subr.mxu0 0.0
    %121 = vmatpush1.msra.mxu0 0.0
    %122 = vmatprep.subr.mxu0 0.0
    %123 = vmatpush1.msra.mxu0 0.0
    %124 = vmatprep.subr.mxu0 0.0
    %125 = vmatpush1.msra.mxu0 0.0
    %126 = vmatprep.subr.mxu0 0.0
    %127 = vmatpush1.msra.mxu0 0.0
    %128 = vmatprep.subr.mxu0 0.0
    %129 = vmatpush1.msra.mxu0 0.0
    %130 = vmatprep.subr.mxu0 0.0
    %131 = vmatpush1.msra.mxu0 0.0
    %132 = vmatprep.subr.mxu0 0.0
    %133 = vmatpush1.msra.mxu0 0.0
    %134 = vmatprep.subr.mxu0 0.0
    %135 = vmatpush1.msra.mxu0 0.0
    %136 = vmatprep.subr.mxu0 0.0
    %137 = vmatpush1.msra.mxu0 0.0
    %138 = vmatprep.subr.mxu0 0.0
    %139 = vmatpush1.msra.mxu0 0.0
    %140 = vmatprep.subr.mxu0 0.0
    %141 = vmatpush1.msra.mxu0 0.0
    %142 = vmatprep.subr.mxu0 0.0
    %143 = vmatpush1.msra.mxu0 0.0
    %144 = vmatprep.subr.mxu0 0.0
    %145 = vmatpush1.msra.mxu0 0.0
    %146 = vmatprep.subr.mxu0 0.0
    %147 = vmatpush1.msra.mxu0 0.0
    %148 = vmatprep.subr.mxu0 0.0
    %149 = vmatpush1.msra.mxu0 0.0
    %150 = vmatprep.subr.mxu0 0.0
    %151 = vmatpush1.msra.mxu0 0.0
    %152 = vmatprep.subr.mxu0 0.0
    %153 = vmatpush1.msra.mxu0 0.0
    %154 = vmatprep.mubr.f32.mxu0 0.0
    %155 = vmatmul.mubr.f32.gmra.mrb[0].mxu0 %v79
    %v156 = vpop.f32.mrb[0].mxu0
    %v157 = vadd.f32 %v65, %v156
    %v158 = vpop.f32.mrb[0].mxu0
    %159 = vmatprep.mubr.f32.mxu0 0.0
    %160 = vmatmul.mubr.f32.gmra.mrb[0].mxu0 %v82
    %v161 = vpop.f32.mrb[0].mxu0
    %v162 = vadd.f32 %v66, %v161
    %v163 = vpop.f32.mrb[0].mxu0
    %164 = vmatprep.mubr.f32.mxu0 0.0
    %165 = vmatmul.mubr.f32.gmra.mrb[0].mxu0 %v85
    %v166 = vpop.f32.mrb[0].mxu0
    %v167 = vadd.f32 %v67, %v166
    %v168 = vpop.f32.mrb[0].mxu0
    %169 = vmatprep.mubr.f32.mxu0 0.0
    %170 = vmatmul.mubr.f32.gmra.mrb[0].mxu0 %v88
    %v171 = vpop.f32.mrb[0].mxu0
    %v172 = vadd.f32 %v68, %v171
    %v173 = vpop.f32.mrb[0].mxu0
    %174 = vdwg.mxu0
    %s175 = scalar_lea.vmem %s0, 32
    %v176 = vld [vmem:[%s175] sm:$0xff]
    %v177 = vld [vmem:[%s175 + $0x8] sm:$0xff]
    %v178 = vld [vmem:[%s175 + $0x10] sm:$0xff]
    %v179 = vld [vmem:[%s175 + $0x18] sm:$0xff]
    %180 = vmatprep.subr.mxu0 0.0
    %181 = vmatpush1.msra.mxu0 %v176
    %182 = vmatprep.subr.mxu0 0.0
    %183 = vmatpush1.msra.mxu0 %v177
    %184 = vmatprep.subr.mxu0 0.0
    %185 = vmatpush1.msra.mxu0 %v178
    %186 = vmatprep.subr.mxu0 0.0
    %187 = vmatpush1.msra.mxu0 %v179
    %188 = vmatprep.subr.mxu0 0.0
    %189 = vmatpush1.msra.mxu0 0.0
    %190 = vmatprep.subr.mxu0 0.0
    %191 = vmatpush1.msra.mxu0 0.0
    %192 = vmatprep.subr.mxu0 0.0
    %193 = vmatpush1.msra.mxu0 0.0
    %194 = vmatprep.subr.mxu0 0.0
    %195 = vmatpush1.msra.mxu0 0.0
    %196 = vmatprep.subr.mxu0 0.0
    %197 = vmatpush1.msra.mxu0 0.0
    %198 = vmatprep.subr.mxu0 0.0
    %199 = vmatpush1.msra.mxu0 0.0
    %200 = vmatprep.subr.mxu0 0.0
    %201 = vmatpush1.msra.mxu0 0.0
    %202 = vmatprep.subr.mxu0 0.0
    %203 = vmatpush1.msra.mxu0 0.0
    %204 = vmatprep.subr.mxu0 0.0
    %205 = vmatpush1.msra.mxu0 0.0
    %206 = vmatprep.subr.mxu0 0.0
    %207 = vmatpush1.msra.mxu0 0.0
    %208 = vmatprep.subr.mxu0 0.0
    %209 = vmatpush1.msra.mxu0 0.0
    %210 = vmatprep.subr.mxu0 0.0
    %211 = vmatpush1.msra.mxu0 0.0
    %212 = vmatprep.subr.mxu0 0.0
    %213 = vmatpush1.msra.mxu0 0.0
    %214 = vmatprep.subr.mxu0 0.0
    %215 = vmatpush1.msra.mxu0 0.0
    %216 = vmatprep.subr.mxu0 0.0
    %217 = vmatpush1.msra.mxu0 0.0
    %218 = vmatprep.subr.mxu0 0.0
    %219 = vmatpush1.msra.mxu0 0.0
    %220 = vmatprep.subr.mxu0 0.0
    %221 = vmatpush1.msra.mxu0 0.0
    %222 = vmatprep.subr.mxu0 0.0
    %223 = vmatpush1.msra.mxu0 0.0
    %224 = vmatprep.subr.mxu0 0.0
    %225 = vmatpush1.msra.mxu0 0.0
    %226 = vmatprep.subr.mxu0 0.0
    %227 = vmatpush1.msra.mxu0 0.0
    %228 = vmatprep.subr.mxu0 0.0
    %229 = vmatpush1.msra.mxu0 0.0
    %230 = vmatprep.subr.mxu0 0.0
    %231 = vmatpush1.msra.mxu0 0.0
    %232 = vmatprep.subr.mxu0 0.0
    %233 = vmatpush1.msra.mxu0 0.0
    %234 = vmatprep.subr.mxu0 0.0
    %235 = vmatpush1.msra.mxu0 0.0
    %236 = vmatprep.subr.mxu0 0.0
    %237 = vmatpush1.msra.mxu0 0.0
    %238 = vmatprep.subr.mxu0 0.0
    %239 = vmatpush1.msra.mxu0 0.0
    %240 = vmatprep.subr.mxu0 0.0
    %241 = vmatpush1.msra.mxu0 0.0
    %242 = vmatprep.subr.mxu0 0.0
    %243 = vmatpush1.msra.mxu0 0.0
    %244 = vmatprep.mubr.f32.mxu0 0.0
    %245 = vmatmul.mubr.f32.gmra.mrb[0].mxu0 %v79
    %v246 = vpop.f32.mrb[0].mxu0
    %v247 = vadd.f32 %v65, %v246
    %v248 = vpop.f32.mrb[0].mxu0
    %249 = vmatprep.mubr.f32.mxu0 0.0
    %250 = vmatmul.mubr.f32.gmra.mrb[0].mxu0 %v82
    %v251 = vpop.f32.mrb[0].mxu0
    %v252 = vadd.f32 %v66, %v251
    %v253 = vpop.f32.mrb[0].mxu0
    %254 = vmatprep.mubr.f32.mxu0 0.0
    %255 = vmatmul.mubr.f32.gmra.mrb[0].mxu0 %v85
    %v256 = vpop.f32.mrb[0].mxu0
    %v257 = vadd.f32 %v67, %v256
    %v258 = vpop.f32.mrb[0].mxu0
    %259 = vmatprep.mubr.f32.mxu0 0.0
    %260 = vmatmul.mubr.f32.gmra.mrb[0].mxu0 %v88
    %v261 = vpop.f32.mrb[0].mxu0
    %v262 = vadd.f32 %v68, %v261
    %v263 = vpop.f32.mrb[0].mxu0
    %264 = vdwg.mxu0
    %s265 = scalar_lea.vmem %s0, 64
    %v266 = vld [vmem:[%s265] sm:$0xff]
    %v267 = vld [vmem:[%s265 + $0x8] sm:$0xff]
    %v268 = vld [vmem:[%s265 + $0x10] sm:$0xff]
    %v269 = vld [vmem:[%s265 + $0x18] sm:$0xff]
    %270 = vmatprep.subr.mxu0 0.0
    %271 = vmatpush1.msra.mxu0 %v266
    %272 = vmatprep.subr.mxu0 0.0
    %273 = vmatpush1.msra.mxu0 %v267
    %274 = vmatprep.subr.mxu0 0.0
    %275 = vmatpush1.msra.mxu0 %v268
    %276 = vmatprep.subr.mxu0 0.0
    %277 = vmatpush1.msra.mxu0 %v269
    %278 = vmatprep.subr.mxu0 0.0
    %279 = vmatpush1.msra.mxu0 0.0
    %280 = vmatprep.subr.mxu0 0.0
    %281 = vmatpush1.msra.mxu0 0.0
    %282 = vmatprep.subr.mxu0 0.0
    %283 = vmatpush1.msra.mxu0 0.0
    %284 = vmatprep.subr.mxu0 0.0
    %285 = vmatpush1.msra.mxu0 0.0
    %286 = vmatprep.subr.mxu0 0.0
    %287 = vmatpush1.msra.mxu0 0.0
    %288 = vmatprep.subr.mxu0 0.0
    %289 = vmatpush1.msra.mxu0 0.0
    %290 = vmatprep.subr.mxu0 0.0
    %291 = vmatpush1.msra.mxu0 0.0
    %292 = vmatprep.subr.mxu0 0.0
    %293 = vmatpush1.msra.mxu0 0.0
    %294 = vmatprep.subr.mxu0 0.0
    %295 = vmatpush1.msra.mxu0 0.0
    %296 = vmatprep.subr.mxu0 0.0
    %297 = vmatpush1.msra.mxu0 0.0
    %298 = vmatprep.subr.mxu0 0.0
    %299 = vmatpush1.msra.mxu0 0.0
    %300 = vmatprep.subr.mxu0 0.0
    %301 = vmatpush1.msra.mxu0 0.0
    %302 = vmatprep.subr.mxu0 0.0
    %303 = vmatpush1.msra.mxu0 0.0
    %304 = vmatprep.subr.mxu0 0.0
    %305 = vmatpush1.msra.mxu0 0.0
    %306 = vmatprep.subr.mxu0 0.0
    %307 = vmatpush1.msra.mxu0 0.0
    %308 = vmatprep.subr.mxu0 0.0
    %309 = vmatpush1.msra.mxu0 0.0
    %310 = vmatprep.subr.mxu0 0.0
    %311 = vmatpush1.msra.mxu0 0.0
    %312 = vmatprep.subr.mxu0 0.0
    %313 = vmatpush1.msra.mxu0 0.0
    %314 = vmatprep.subr.mxu0 0.0
    %315 = vmatpush1.msra.mxu0 0.0
    %316 = vmatprep.subr.mxu0 0.0
    %317 = vmatpush1.msra.mxu0 0.0
    %318 = vmatprep.subr.mxu0 0.0
    %319 = vmatpush1.msra.mxu0 0.0
    %320 = vmatprep.subr.mxu0 0.0
    %321 = vmatpush1.msra.mxu0 0.0
    %322 = vmatprep.subr.mxu0 0.0
    %323 = vmatpush1.msra.mxu0 0.0
    %324 = vmatprep.subr.mxu0 0.0
    %325 = vmatpush1.msra.mxu0 0.0
    %326 = vmatprep.subr.mxu0 0.0
    %327 = vmatpush1.msra.mxu0 0.0
    %328 = vmatprep.subr.mxu0 0.0
    %329 = vmatpush1.msra.mxu0 0.0
    %330 = vmatprep.subr.mxu0 0.0
    %331 = vmatpush1.msra.mxu0 0.0
    %332 = vmatprep.subr.mxu0 0.0
    %333 = vmatpush1.msra.mxu0 0.0
    %334 = vmatprep.mubr.f32.mxu0 0.0
    %335 = vmatmul.mubr.f32.gmra.mrb[0].mxu0 %v79
    %v336 = vpop.f32.mrb[0].mxu0
    %v337 = vadd.f32 %v65, %v336
    %v338 = vpop.f32.mrb[0].mxu0
    %339 = vmatprep.mubr.f32.mxu0 0.0
    %340 = vmatmul.mubr.f32.gmra.mrb[0].mxu0 %v82
    %v341 = vpop.f32.mrb[0].mxu0
    %v342 = vadd.f32 %v66, %v341
    %v343 = vpop.f32.mrb[0].mxu0
    %344 = vmatprep.mubr.f32.mxu0 0.0
    %345 = vmatmul.mubr.f32.gmra.mrb[0].mxu0 %v85
    %v346 = vpop.f32.mrb[0].mxu0
    %v347 = vadd.f32 %v67, %v346
    %v348 = vpop.f32.mrb[0].mxu0
    %349 = vmatprep.mubr.f32.mxu0 0.0
    %350 = vmatmul.mubr.f32.gmra.mrb[0].mxu0 %v88
    %v351 = vpop.f32.mrb[0].mxu0
    %v352 = vadd.f32 %v68, %v351
    %v353 = vpop.f32.mrb[0].mxu0
    %354 = vdwg.mxu0
    %s355 = scalar_lea.vmem %s0, 96
    %v356 = vld [vmem:[%s355] sm:$0xff]
    %v357 = vld [vmem:[%s355 + $0x8] sm:$0xff]
    %v358 = vld [vmem:[%s355 + $0x10] sm:$0xff]
    %v359 = vld [vmem:[%s355 + $0x18] sm:$0xff]
    %360 = vmatprep.subr.mxu0 0.0
    %361 = vmatpush1.msra.mxu0 %v356
    %362 = vmatprep.subr.mxu0 0.0
    %363 = vmatpush1.msra.mxu0 %v357
    %364 = vmatprep.subr.mxu0 0.0
    %365 = vmatpush1.msra.mxu0 %v358
    %366 = vmatprep.subr.mxu0 0.0
    %367 = vmatpush1.msra.mxu0 %v359
    %368 = vmatprep.subr.mxu0 0.0
    %369 = vmatpush1.msra.mxu0 0.0
    %370 = vmatprep.subr.mxu0 0.0
    %371 = vmatpush1.msra.mxu0 0.0
    %372 = vmatprep.subr.mxu0 0.0
    %373 = vmatpush1.msra.mxu0 0.0
    %374 = vmatprep.subr.mxu0 0.0
    %375 = vmatpush1.msra.mxu0 0.0
    %376 = vmatprep.subr.mxu0 0.0
    %377 = vmatpush1.msra.mxu0 0.0
    %378 = vmatprep.subr.mxu0 0.0
    %379 = vmatpush1.msra.mxu0 0.0
    %380 = vmatprep.subr.mxu0 0.0
    %381 = vmatpush1.msra.mxu0 0.0
    %382 = vmatprep.subr.mxu0 0.0
    %383 = vmatpush1.msra.mxu0 0.0
    %384 = vmatprep.subr.mxu0 0.0
    %385 = vmatpush1.msra.mxu0 0.0
    %386 = vmatprep.subr.mxu0 0.0
    %387 = vmatpush1.msra.mxu0 0.0
    %388 = vmatprep.subr.mxu0 0.0
    %389 = vmatpush1.msra.mxu0 0.0
    %390 = vmatprep.subr.mxu0 0.0
    %391 = vmatpush1.msra.mxu0 0.0
    %392 = vmatprep.subr.mxu0 0.0
    %393 = vmatpush1.msra.mxu0 0.0
    %394 = vmatprep.subr.mxu0 0.0
    %395 = vmatpush1.msra.mxu0 0.0
    %396 = vmatprep.subr.mxu0 0.0
    %397 = vmatpush1.msra.mxu0 0.0
    %398 = vmatprep.subr.mxu0 0.0
    %399 = vmatpush1.msra.mxu0 0.0
    %400 = vmatprep.subr.mxu0 0.0
    %401 = vmatpush1.msra.mxu0 0.0
    %402 = vmatprep.subr.mxu0 0.0
    %403 = vmatpush1.msra.mxu0 0.0
    %404 = vmatprep.subr.mxu0 0.0
    %405 = vmatpush1.msra.mxu0 0.0
    %406 = vmatprep.subr.mxu0 0.0
    %407 = vmatpush1.msra.mxu0 0.0
    %408 = vmatprep.subr.mxu0 0.0
    %409 = vmatpush1.msra.mxu0 0.0
    %410 = vmatprep.subr.mxu0 0.0
    %411 = vmatpush1.msra.mxu0 0.0
    %412 = vmatprep.subr.mxu0 0.0
    %413 = vmatpush1.msra.mxu0 0.0
    %414 = vmatprep.subr.mxu0 0.0
    %415 = vmatpush1.msra.mxu0 0.0
    %416 = vmatprep.subr.mxu0 0.0
    %417 = vmatpush1.msra.mxu0 0.0
    %418 = vmatprep.subr.mxu0 0.0
    %419 = vmatpush1.msra.mxu0 0.0
    %420 = vmatprep.subr.mxu0 0.0
    %421 = vmatpush1.msra.mxu0 0.0
    %422 = vmatprep.subr.mxu0 0.0
    %423 = vmatpush1.msra.mxu0 0.0
    %424 = vmatprep.mubr.f32.mxu0 0.0
    %425 = vmatmul.mubr.f32.gmra.mrb[0].mxu0 %v79
    %v426 = vpop.f32.mrb[0].mxu0
    %v427 = vadd.f32 %v65, %v426
    %v428 = vpop.f32.mrb[0].mxu0
    %429 = vmatprep.mubr.f32.mxu0 0.0
    %430 = vmatmul.mubr.f32.gmra.mrb[0].mxu0 %v82
    %v431 = vpop.f32.mrb[0].mxu0
    %v432 = vadd.f32 %v66, %v431
    %v433 = vpop.f32.mrb[0].mxu0
    %434 = vmatprep.mubr.f32.mxu0 0.0
    %435 = vmatmul.mubr.f32.gmra.mrb[0].mxu0 %v85
    %v436 = vpop.f32.mrb[0].mxu0
    %v437 = vadd.f32 %v67, %v436
    %v438 = vpop.f32.mrb[0].mxu0
    %439 = vmatprep.mubr.f32.mxu0 0.0
    %440 = vmatmul.mubr.f32.gmra.mrb[0].mxu0 %v88
    %v441 = vpop.f32.mrb[0].mxu0
    %v442 = vadd.f32 %v68, %v441
    %v443 = vpop.f32.mrb[0].mxu0
    %444 = vdwg.mxu0
    %v445 = vld [vmem:[%s7] sm:$0x1]
    %v446 = vld [vmem:[%s3] sm:$0xff]
    %v448 = vlaneseq
    %v449 = vshrl.u32 %v448, 7
    %v450 = vsub.s32 0, %v449
    %v451 = vrot.slane %v445, %v450
    %vm453 = vcmask 64512
    %v455 = vsel %vm453, %v157, 0
    %v458 = vsel %vm453, %v162, 0
    %v461 = vsel %vm453, %v167, 0
    %v464 = vsel %vm453, %v172, 0
    %v467 = vsel %vm453, %v247, 0
    %v470 = vsel %vm453, %v252, 0
    %v473 = vsel %vm453, %v257, 0
    %v476 = vsel %vm453, %v262, 0
    %v479 = vsel %vm453, %v337, 0
    %v482 = vsel %vm453, %v342, 0
    %v485 = vsel %vm453, %v347, 0
    %v488 = vsel %vm453, %v352, 0
    %v491 = vsel %vm453, %v427, 0
    %v494 = vsel %vm453, %v432, 0
    %v497 = vsel %vm453, %v437, 0
    %v500 = vsel %vm453, %v442, 0
    %502 = vmatprep.subr.mxu0 0.0
    %503 = vmatpush1.msra.mxu0 %v446
    %504 = vmatprep.subr.mxu0 0.0
    %505 = vmatpush1.msra.mxu0 0.0
    %506 = vmatprep.subr.mxu0 0.0
    %507 = vmatpush1.msra.mxu0 0.0
    %508 = vmatprep.subr.mxu0 0.0
    %509 = vmatpush1.msra.mxu0 0.0
    %510 = vmatprep.subr.mxu0 0.0
    %511 = vmatpush1.msra.mxu0 0.0
    %512 = vmatprep.subr.mxu0 0.0
    %513 = vmatpush1.msra.mxu0 0.0
    %514 = vmatprep.subr.mxu0 0.0
    %515 = vmatpush1.msra.mxu0 0.0
    %516 = vmatprep.subr.mxu0 0.0
    %517 = vmatpush1.msra.mxu0 0.0
    %518 = vmatprep.subr.mxu0 0.0
    %519 = vmatpush1.msra.mxu0 0.0
    %520 = vmatprep.subr.mxu0 0.0
    %521 = vmatpush1.msra.mxu0 0.0
    %522 = vmatprep.subr.mxu0 0.0
    %523 = vmatpush1.msra.mxu0 0.0
    %524 = vmatprep.subr.mxu0 0.0
    %525 = vmatpush1.msra.mxu0 0.0
    %526 = vmatprep.subr.mxu0 0.0
    %527 = vmatpush1.msra.mxu0 0.0
    %528 = vmatprep.subr.mxu0 0.0
    %529 = vmatpush1.msra.mxu0 0.0
    %530 = vmatprep.subr.mxu0 0.0
    %531 = vmatpush1.msra.mxu0 0.0
    %532 = vmatprep.subr.mxu0 0.0
    %533 = vmatpush1.msra.mxu0 0.0
    %534 = vmatprep.subr.mxu0 0.0
    %535 = vmatpush1.msra.mxu0 0.0
    %536 = vmatprep.subr.mxu0 0.0
    %537 = vmatpush1.msra.mxu0 0.0
    %538 = vmatprep.subr.mxu0 0.0
    %539 = vmatpush1.msra.mxu0 0.0
    %540 = vmatprep.subr.mxu0 0.0
    %541 = vmatpush1.msra.mxu0 0.0
    %542 = vmatprep.subr.mxu0 0.0
    %543 = vmatpush1.msra.mxu0 0.0
    %544 = vmatprep.subr.mxu0 0.0
    %545 = vmatpush1.msra.mxu0 0.0
    %546 = vmatprep.subr.mxu0 0.0
    %547 = vmatpush1.msra.mxu0 0.0
    %548 = vmatprep.subr.mxu0 0.0
    %549 = vmatpush1.msra.mxu0 0.0
    %550 = vmatprep.subr.mxu0 0.0
    %551 = vmatpush1.msra.mxu0 0.0
    %552 = vmatprep.subr.mxu0 0.0
    %553 = vmatpush1.msra.mxu0 0.0
    %554 = vmatprep.subr.mxu0 0.0
    %555 = vmatpush1.msra.mxu0 0.0
    %556 = vmatprep.subr.mxu0 0.0
    %557 = vmatpush1.msra.mxu0 0.0
    %558 = vmatprep.subr.mxu0 0.0
    %559 = vmatpush1.msra.mxu0 0.0
    %560 = vmatprep.subr.mxu0 0.0
    %561 = vmatpush1.msra.mxu0 0.0
    %562 = vmatprep.subr.mxu0 0.0
    %563 = vmatpush1.msra.mxu0 0.0
    %564 = vmatprep.subr.mxu0 0.0
    %565 = vmatpush1.msra.mxu0 0.0
    %566 = vmatprep.mubr.f32.mxu0 0.0
    %567 = vmatmul.mubr.f32.gmra.mrb[0].mxu0 %v455
    %v568 = vpop.f32.mrb[0].mxu0
    %v569 = vadd.f32 %v451, %v568
    %v570 = vpop.f32.mrb[0].mxu0
    %571 = vmatprep.mubr.f32.mxu0 0.0
    %572 = vmatmul.mubr.f32.gmra.mrb[0].mxu0 %v458
    %v573 = vpop.f32.mrb[0].mxu0
    %v574 = vadd.f32 %v451, %v573
    %v575 = vpop.f32.mrb[0].mxu0
    %576 = vmatprep.mubr.f32.mxu0 0.0
    %577 = vmatmul.mubr.f32.gmra.mrb[0].mxu0 %v461
    %v578 = vpop.f32.mrb[0].mxu0
    %v579 = vadd.f32 %v451, %v578
    %v580 = vpop.f32.mrb[0].mxu0
    %581 = vmatprep.mubr.f32.mxu0 0.0
    %582 = vmatmul.mubr.f32.gmra.mrb[0].mxu0 %v464
    %v583 = vpop.f32.mrb[0].mxu0
    %v584 = vadd.f32 %v451, %v583
    %v585 = vpop.f32.mrb[0].mxu0
    %586 = vmatprep.mubr.f32.mxu0 0.0
    %587 = vmatmul.mubr.f32.gmra.mrb[0].mxu0 %v467
    %v588 = vpop.f32.mrb[0].mxu0
    %v589 = vadd.f32 %v451, %v588
    %v590 = vpop.f32.mrb[0].mxu0
    %591 = vmatprep.mubr.f32.mxu0 0.0
    %592 = vmatmul.mubr.f32.gmra.mrb[0].mxu0 %v470
    %v593 = vpop.f32.mrb[0].mxu0
    %v594 = vadd.f32 %v451, %v593
    %v595 = vpop.f32.mrb[0].mxu0
    %596 = vmatprep.mubr.f32.mxu0 0.0
    %597 = vmatmul.mubr.f32.gmra.mrb[0].mxu0 %v473
    %v598 = vpop.f32.mrb[0].mxu0
    %v599 = vadd.f32 %v451, %v598
    %v600 = vpop.f32.mrb[0].mxu0
    %601 = vmatprep.mubr.f32.mxu0 0.0
    %602 = vmatmul.mubr.f32.gmra.mrb[0].mxu0 %v476
    %v603 = vpop.f32.mrb[0].mxu0
    %v604 = vadd.f32 %v451, %v603
    %v605 = vpop.f32.mrb[0].mxu0
    %606 = vmatprep.mubr.f32.mxu0 0.0
    %607 = vmatmul.mubr.f32.gmra.mrb[0].mxu0 %v479
    %v608 = vpop.f32.mrb[0].mxu0
    %v609 = vadd.f32 %v451, %v608
    %v610 = vpop.f32.mrb[0].mxu0
    %611 = vmatprep.mubr.f32.mxu0 0.0
    %612 = vmatmul.mubr.f32.gmra.mrb[0].mxu0 %v482
    %v613 = vpop.f32.mrb[0].mxu0
    %v614 = vadd.f32 %v451, %v613
    %v615 = vpop.f32.mrb[0].mxu0
    %616 = vmatprep.mubr.f32.mxu0 0.0
    %617 = vmatmul.mubr.f32.gmra.mrb[0].mxu0 %v485
    %v618 = vpop.f32.mrb[0].mxu0
    %v619 = vadd.f32 %v451, %v618
    %v620 = vpop.f32.mrb[0].mxu0
    %621 = vmatprep.mubr.f32.mxu0 0.0
    %622 = vmatmul.mubr.f32.gmra.mrb[0].mxu0 %v488
    %v623 = vpop.f32.mrb[0].mxu0
    %v624 = vadd.f32 %v451, %v623
    %v625 = vpop.f32.mrb[0].mxu0
    %626 = vmatprep.mubr.f32.mxu0 0.0
    %627 = vmatmul.mubr.f32.gmra.mrb[0].mxu0 %v491
    %v628 = vpop.f32.mrb[0].mxu0
    %v629 = vadd.f32 %v451, %v628
    %v630 = vpop.f32.mrb[0].mxu0
    %631 = vmatprep.mubr.f32.mxu0 0.0
    %632 = vmatmul.mubr.f32.gmra.mrb[0].mxu0 %v494
    %v633 = vpop.f32.mrb[0].mxu0
    %v634 = vadd.f32 %v451, %v633
    %v635 = vpop.f32.mrb[0].mxu0
    %636 = vmatprep.mubr.f32.mxu0 0.0
    %637 = vmatmul.mubr.f32.gmra.mrb[0].mxu0 %v497
    %v638 = vpop.f32.mrb[0].mxu0
    %v639 = vadd.f32 %v451, %v638
    %v640 = vpop.f32.mrb[0].mxu0
    %641 = vmatprep.mubr.f32.mxu0 0.0
    %642 = vmatmul.mubr.f32.gmra.mrb[0].mxu0 %v500
    %v643 = vpop.f32.mrb[0].mxu0
    %v644 = vadd.f32 %v451, %v643
    %v645 = vpop.f32.mrb[0].mxu0
    %646 = vdwg.mxu0
    %651 = vrot.lane.b32.xlu0 %v569, 124
    %v652 = vpop.permute.xlu0 %651
    %653 = vrot.lane.b32.xlu0 %v574, 124
    %v654 = vpop.permute.xlu0 %653
    %655 = vrot.lane.b32.xlu0 %v579, 124
    %v656 = vpop.permute.xlu0 %655
    %657 = vrot.lane.b32.xlu0 %v584, 124
    %v658 = vpop.permute.xlu0 %657
    %663 = vrot.lane.b32.xlu0 %v589, 124
    %v664 = vpop.permute.xlu0 %663
    %665 = vrot.lane.b32.xlu0 %v594, 124
    %v666 = vpop.permute.xlu0 %665
    %667 = vrot.lane.b32.xlu0 %v599, 124
    %v668 = vpop.permute.xlu0 %667
    %669 = vrot.lane.b32.xlu0 %v604, 124
    %v670 = vpop.permute.xlu0 %669
    %675 = vrot.lane.b32.xlu0 %v609, 124
    %v676 = vpop.permute.xlu0 %675
    %677 = vrot.lane.b32.xlu0 %v614, 124
    %v678 = vpop.permute.xlu0 %677
    %679 = vrot.lane.b32.xlu0 %v619, 124
    %v680 = vpop.permute.xlu0 %679
    %681 = vrot.lane.b32.xlu0 %v624, 124
    %v682 = vpop.permute.xlu0 %681
    %687 = vrot.lane.b32.xlu0 %v629, 124
    %v688 = vpop.permute.xlu0 %687
    %689 = vrot.lane.b32.xlu0 %v634, 124
    %v690 = vpop.permute.xlu0 %689
    %691 = vrot.lane.b32.xlu0 %v639, 124
    %v692 = vpop.permute.xlu0 %691
    %693 = vrot.lane.b32.xlu0 %v644, 124
    %v694 = vpop.permute.xlu0 %693
    %695 = vrot.lane.b32.xlu0 %v569, 120
    %v696 = vpop.permute.xlu0 %695
    %697 = vrot.lane.b32.xlu0 %v574, 120
    %v698 = vpop.permute.xlu0 %697
    %699 = vrot.lane.b32.xlu0 %v579, 120
    %v700 = vpop.permute.xlu0 %699
    %701 = vrot.lane.b32.xlu0 %v584, 120
    %v702 = vpop.permute.xlu0 %701
    %vm703 = vcmask 31744
    %v704 = vsel %vm703, %v569, 0
    %v706 = vsel %vm703, %v574, 0
    %v708 = vsel %vm703, %v579, 0
    %v710 = vsel %vm703, %v584, 0
    %v712 = vsel %vm703, %v696, 0
    %v714 = vsel %vm703, %v698, 0
    %v716 = vsel %vm703, %v700, 0
    %v718 = vsel %vm703, %v702, 0
    %720 = vmatprep.subr.mxu0 0.0
    %721 = vmatpush1.xpose.msra.mxu0 %v712
    %722 = vmatprep.subr.mxu0 0.0
    %723 = vmatpush1.xpose.msra.mxu0 %v714
    %724 = vmatprep.subr.mxu0 0.0
    %725 = vmatpush1.xpose.msra.mxu0 %v716
    %726 = vmatprep.subr.mxu0 0.0
    %727 = vmatpush1.xpose.msra.mxu0 %v718
    %728 = vmatprep.subr.mxu0 0.0
    %729 = vmatpush1.xpose.msra.mxu0 0.0
    %730 = vmatprep.subr.mxu0 0.0
    %731 = vmatpush1.xpose.msra.mxu0 0.0
    %732 = vmatprep.subr.mxu0 0.0
    %733 = vmatpush1.xpose.msra.mxu0 0.0
    %734 = vmatprep.subr.mxu0 0.0
    %735 = vmatpush1.xpose.msra.mxu0 0.0
    %736 = vmatprep.subr.mxu0 0.0
    %737 = vmatpush1.xpose.msra.mxu0 0.0
    %738 = vmatprep.subr.mxu0 0.0
    %739 = vmatpush1.xpose.msra.mxu0 0.0
    %740 = vmatprep.subr.mxu0 0.0
    %741 = vmatpush1.xpose.msra.mxu0 0.0
    %742 = vmatprep.subr.mxu0 0.0
    %743 = vmatpush1.xpose.msra.mxu0 0.0
    %744 = vmatprep.subr.mxu0 0.0
    %745 = vmatpush1.xpose.msra.mxu0 0.0
    %746 = vmatprep.subr.mxu0 0.0
    %747 = vmatpush1.xpose.msra.mxu0 0.0
    %748 = vmatprep.subr.mxu0 0.0
    %749 = vmatpush1.xpose.msra.mxu0 0.0
    %750 = vmatprep.subr.mxu0 0.0
    %751 = vmatpush1.xpose.msra.mxu0 0.0
    %752 = vmatprep.subr.mxu0 0.0
    %753 = vmatpush1.xpose.msra.mxu0 0.0
    %754 = vmatprep.subr.mxu0 0.0
    %755 = vmatpush1.xpose.msra.mxu0 0.0
    %756 = vmatprep.subr.mxu0 0.0
    %757 = vmatpush1.xpose.msra.mxu0 0.0
    %758 = vmatprep.subr.mxu0 0.0
    %759 = vmatpush1.xpose.msra.mxu0 0.0
    %760 = vmatprep.subr.mxu0 0.0
    %761 = vmatpush1.xpose.msra.mxu0 0.0
    %762 = vmatprep.subr.mxu0 0.0
    %763 = vmatpush1.xpose.msra.mxu0 0.0
    %764 = vmatprep.subr.mxu0 0.0
    %765 = vmatpush1.xpose.msra.mxu0 0.0
    %766 = vmatprep.subr.mxu0 0.0
    %767 = vmatpush1.xpose.msra.mxu0 0.0
    %768 = vmatprep.subr.mxu0 0.0
    %769 = vmatpush1.xpose.msra.mxu0 0.0
    %770 = vmatprep.subr.mxu0 0.0
    %771 = vmatpush1.xpose.msra.mxu0 0.0
    %772 = vmatprep.subr.mxu0 0.0
    %773 = vmatpush1.xpose.msra.mxu0 0.0
    %774 = vmatprep.subr.mxu0 0.0
    %775 = vmatpush1.xpose.msra.mxu0 0.0
    %776 = vmatprep.subr.mxu0 0.0
    %777 = vmatpush1.xpose.msra.mxu0 0.0
    %778 = vmatprep.subr.mxu0 0.0
    %779 = vmatpush1.xpose.msra.mxu0 0.0
    %780 = vmatprep.subr.mxu0 0.0
    %781 = vmatpush1.xpose.msra.mxu0 0.0
    %782 = vmatprep.subr.mxu0 0.0
    %783 = vmatpush1.xpose.msra.mxu0 0.0
    %784 = vmatprep.mubr.f32.mxu0 0.0
    %785 = vmatmul.mubr.f32.gmra.mrb[0].mxu0 %v704
    %v786 = vpop.f32.mrb[0].mxu0
    %v787 = vadd.f32 0.0, %v786
    %v788 = vpop.f32.mrb[0].mxu0
    %789 = vmatprep.mubr.f32.mxu0 0.0
    %790 = vmatmul.mubr.f32.gmra.mrb[0].mxu0 %v706
    %v791 = vpop.f32.mrb[0].mxu0
    %v792 = vadd.f32 0.0, %v791
    %v793 = vpop.f32.mrb[0].mxu0
    %794 = vmatprep.mubr.f32.mxu0 0.0
    %795 = vmatmul.mubr.f32.gmra.mrb[0].mxu0 %v708
    %v796 = vpop.f32.mrb[0].mxu0
    %v797 = vadd.f32 0.0, %v796
    %v798 = vpop.f32.mrb[0].mxu0
    %799 = vmatprep.mubr.f32.mxu0 0.0
    %800 = vmatmul.mubr.f32.gmra.mrb[0].mxu0 %v710
    %v801 = vpop.f32.mrb[0].mxu0
    %v802 = vadd.f32 0.0, %v801
    %v803 = vpop.f32.mrb[0].mxu0
    %804 = vdwg.mxu0
    %805 = vrot.lane.b32.xlu0 %v652, 120
    %v806 = vpop.permute.xlu0 %805
    %807 = vrot.lane.b32.xlu0 %v654, 120
    %v808 = vpop.permute.xlu0 %807
    %809 = vrot.lane.b32.xlu0 %v656, 120
    %v810 = vpop.permute.xlu0 %809
    %811 = vrot.lane.b32.xlu0 %v658, 120
    %v812 = vpop.permute.xlu0 %811
    %v813 = vsel %vm703, %v652, 0
    %v815 = vsel %vm703, %v654, 0
    %v817 = vsel %vm703, %v656, 0
    %v819 = vsel %vm703, %v658, 0
    %v821 = vsel %vm703, %v806, 0
    %v823 = vsel %vm703, %v808, 0
    %v825 = vsel %vm703, %v810, 0
    %v827 = vsel %vm703, %v812, 0
    %829 = vmatprep.subr.mxu0 0.0
    %830 = vmatpush1.xpose.msra.mxu0 %v821
    %831 = vmatprep.subr.mxu0 0.0
    %832 = vmatpush1.xpose.msra.mxu0 %v823
    %833 = vmatprep.subr.mxu0 0.0
    %834 = vmatpush1.xpose.msra.mxu0 %v825
    %835 = vmatprep.subr.mxu0 0.0
    %836 = vmatpush1.xpose.msra.mxu0 %v827
    %837 = vmatprep.subr.mxu0 0.0
    %838 = vmatpush1.xpose.msra.mxu0 0.0
    %839 = vmatprep.subr.mxu0 0.0
    %840 = vmatpush1.xpose.msra.mxu0 0.0
    %841 = vmatprep.subr.mxu0 0.0
    %842 = vmatpush1.xpose.msra.mxu0 0.0
    %843 = vmatprep.subr.mxu0 0.0
    %844 = vmatpush1.xpose.msra.mxu0 0.0
    %845 = vmatprep.subr.mxu0 0.0
    %846 = vmatpush1.xpose.msra.mxu0 0.0
    %847 = vmatprep.subr.mxu0 0.0
    %848 = vmatpush1.xpose.msra.mxu0 0.0
    %849 = vmatprep.subr.mxu0 0.0
    %850 = vmatpush1.xpose.msra.mxu0 0.0
    %851 = vmatprep.subr.mxu0 0.0
    %852 = vmatpush1.xpose.msra.mxu0 0.0
    %853 = vmatprep.subr.mxu0 0.0
    %854 = vmatpush1.xpose.msra.mxu0 0.0
    %855 = vmatprep.subr.mxu0 0.0
    %856 = vmatpush1.xpose.msra.mxu0 0.0
    %857 = vmatprep.subr.mxu0 0.0
    %858 = vmatpush1.xpose.msra.mxu0 0.0
    %859 = vmatprep.subr.mxu0 0.0
    %860 = vmatpush1.xpose.msra.mxu0 0.0
    %861 = vmatprep.subr.mxu0 0.0
    %862 = vmatpush1.xpose.msra.mxu0 0.0
    %863 = vmatprep.subr.mxu0 0.0
    %864 = vmatpush1.xpose.msra.mxu0 0.0
    %865 = vmatprep.subr.mxu0 0.0
    %866 = vmatpush1.xpose.msra.mxu0 0.0
    %867 = vmatprep.subr.mxu0 0.0
    %868 = vmatpush1.xpose.msra.mxu0 0.0
    %869 = vmatprep.subr.mxu0 0.0
    %870 = vmatpush1.xpose.msra.mxu0 0.0
    %871 = vmatprep.subr.mxu0 0.0
    %872 = vmatpush1.xpose.msra.mxu0 0.0
    %873 = vmatprep.subr.mxu0 0.0
    %874 = vmatpush1.xpose.msra.mxu0 0.0
    %875 = vmatprep.subr.mxu0 0.0
    %876 = vmatpush1.xpose.msra.mxu0 0.0
    %877 = vmatprep.subr.mxu0 0.0
    %878 = vmatpush1.xpose.msra.mxu0 0.0
    %879 = vmatprep.subr.mxu0 0.0
    %880 = vmatpush1.xpose.msra.mxu0 0.0
    %881 = vmatprep.subr.mxu0 0.0
    %882 = vmatpush1.xpose.msra.mxu0 0.0
    %883 = vmatprep.subr.mxu0 0.0
    %884 = vmatpush1.xpose.msra.mxu0 0.0
    %885 = vmatprep.subr.mxu0 0.0
    %886 = vmatpush1.xpose.msra.mxu0 0.0
    %887 = vmatprep.subr.mxu0 0.0
    %888 = vmatpush1.xpose.msra.mxu0 0.0
    %889 = vmatprep.subr.mxu0 0.0
    %890 = vmatpush1.xpose.msra.mxu0 0.0
    %891 = vmatprep.subr.mxu0 0.0
    %892 = vmatpush1.xpose.msra.mxu0 0.0
    %893 = vmatprep.mubr.f32.mxu0 0.0
    %894 = vmatmul.mubr.f32.gmra.mrb[0].mxu0 %v813
    %v895 = vpop.f32.mrb[0].mxu0
    %v896 = vadd.f32 0.0, %v895
    %v897 = vpop.f32.mrb[0].mxu0
    %898 = vmatprep.mubr.f32.mxu0 0.0
    %899 = vmatmul.mubr.f32.gmra.mrb[0].mxu0 %v815
    %v900 = vpop.f32.mrb[0].mxu0
    %v901 = vadd.f32 0.0, %v900
    %v902 = vpop.f32.mrb[0].mxu0
    %903 = vmatprep.mubr.f32.mxu0 0.0
    %904 = vmatmul.mubr.f32.gmra.mrb[0].mxu0 %v817
    %v905 = vpop.f32.mrb[0].mxu0
    %v906 = vadd.f32 0.0, %v905
    %v907 = vpop.f32.mrb[0].mxu0
    %908 = vmatprep.mubr.f32.mxu0 0.0
    %909 = vmatmul.mubr.f32.gmra.mrb[0].mxu0 %v819
    %v910 = vpop.f32.mrb[0].mxu0
    %v911 = vadd.f32 0.0, %v910
    %v912 = vpop.f32.mrb[0].mxu0
    %913 = vdwg.mxu0
    %914 = vrot.lane.b32.xlu0 %v589, 120
    %v915 = vpop.permute.xlu0 %914
    %916 = vrot.lane.b32.xlu0 %v594, 120
    %v917 = vpop.permute.xlu0 %916
    %918 = vrot.lane.b32.xlu0 %v599, 120
    %v919 = vpop.permute.xlu0 %918
    %920 = vrot.lane.b32.xlu0 %v604, 120
    %v921 = vpop.permute.xlu0 %920
    %v922 = vsel %vm703, %v589, 0
    %v924 = vsel %vm703, %v594, 0
    %v926 = vsel %vm703, %v599, 0
    %v928 = vsel %vm703, %v604, 0
    %v930 = vsel %vm703, %v915, 0
    %v932 = vsel %vm703, %v917, 0
    %v934 = vsel %vm703, %v919, 0
    %v936 = vsel %vm703, %v921, 0
    %938 = vmatprep.subr.mxu0 0.0
    %939 = vmatpush1.xpose.msra.mxu0 %v930
    %940 = vmatprep.subr.mxu0 0.0
    %941 = vmatpush1.xpose.msra.mxu0 %v932
    %942 = vmatprep.subr.mxu0 0.0
    %943 = vmatpush1.xpose.msra.mxu0 %v934
    %944 = vmatprep.subr.mxu0 0.0
    %945 = vmatpush1.xpose.msra.mxu0 %v936
    %946 = vmatprep.subr.mxu0 0.0
    %947 = vmatpush1.xpose.msra.mxu0 0.0
    %948 = vmatprep.subr.mxu0 0.0
    %949 = vmatpush1.xpose.msra.mxu0 0.0
    %950 = vmatprep.subr.mxu0 0.0
    %951 = vmatpush1.xpose.msra.mxu0 0.0
    %952 = vmatprep.subr.mxu0 0.0
    %953 = vmatpush1.xpose.msra.mxu0 0.0
    %954 = vmatprep.subr.mxu0 0.0
    %955 = vmatpush1.xpose.msra.mxu0 0.0
    %956 = vmatprep.subr.mxu0 0.0
    %957 = vmatpush1.xpose.msra.mxu0 0.0
    %958 = vmatprep.subr.mxu0 0.0
    %959 = vmatpush1.xpose.msra.mxu0 0.0
    %960 = vmatprep.subr.mxu0 0.0
    %961 = vmatpush1.xpose.msra.mxu0 0.0
    %962 = vmatprep.subr.mxu0 0.0
    %963 = vmatpush1.xpose.msra.mxu0 0.0
    %964 = vmatprep.subr.mxu0 0.0
    %965 = vmatpush1.xpose.msra.mxu0 0.0
    %966 = vmatprep.subr.mxu0 0.0
    %967 = vmatpush1.xpose.msra.mxu0 0.0
    %968 = vmatprep.subr.mxu0 0.0
    %969 = vmatpush1.xpose.msra.mxu0 0.0
    %970 = vmatprep.subr.mxu0 0.0
    %971 = vmatpush1.xpose.msra.mxu0 0.0
    %972 = vmatprep.subr.mxu0 0.0
    %973 = vmatpush1.xpose.msra.mxu0 0.0
    %974 = vmatprep.subr.mxu0 0.0
    %975 = vmatpush1.xpose.msra.mxu0 0.0
    %976 = vmatprep.subr.mxu0 0.0
    %977 = vmatpush1.xpose.msra.mxu0 0.0
    %978 = vmatprep.subr.mxu0 0.0
    %979 = vmatpush1.xpose.msra.mxu0 0.0
    %980 = vmatprep.subr.mxu0 0.0
    %981 = vmatpush1.xpose.msra.mxu0 0.0
    %982 = vmatprep.subr.mxu0 0.0
    %983 = vmatpush1.xpose.msra.mxu0 0.0
    %984 = vmatprep.subr.mxu0 0.0
    %985 = vmatpush1.xpose.msra.mxu0 0.0
    %986 = vmatprep.subr.mxu0 0.0
    %987 = vmatpush1.xpose.msra.mxu0 0.0
    %988 = vmatprep.subr.mxu0 0.0
    %989 = vmatpush1.xpose.msra.mxu0 0.0
    %990 = vmatprep.subr.mxu0 0.0
    %991 = vmatpush1.xpose.msra.mxu0 0.0
    %992 = vmatprep.subr.mxu0 0.0
    %993 = vmatpush1.xpose.msra.mxu0 0.0
    %994 = vmatprep.subr.mxu0 0.0
    %995 = vmatpush1.xpose.msra.mxu0 0.0
    %996 = vmatprep.subr.mxu0 0.0
    %997 = vmatpush1.xpose.msra.mxu0 0.0
    %998 = vmatprep.subr.mxu0 0.0
    %999 = vmatpush1.xpose.msra.mxu0 0.0
    %1000 = vmatprep.subr.mxu0 0.0
    %1001 = vmatpush1.xpose.msra.mxu0 0.0
    %1002 = vmatprep.mubr.f32.mxu0 0.0
    %1003 = vmatmul.mubr.f32.gmra.mrb[0].mxu0 %v922
    %v1004 = vpop.f32.mrb[0].mxu0
    %v1005 = vadd.f32 0.0, %v1004
    %v1006 = vpop.f32.mrb[0].mxu0
    %1007 = vmatprep.mubr.f32.mxu0 0.0
    %1008 = vmatmul.mubr.f32.gmra.mrb[0].mxu0 %v924
    %v1009 = vpop.f32.mrb[0].mxu0
    %v1010 = vadd.f32 0.0, %v1009
    %v1011 = vpop.f32.mrb[0].mxu0
    %1012 = vmatprep.mubr.f32.mxu0 0.0
    %1013 = vmatmul.mubr.f32.gmra.mrb[0].mxu0 %v926
    %v1014 = vpop.f32.mrb[0].mxu0
    %v1015 = vadd.f32 0.0, %v1014
    %v1016 = vpop.f32.mrb[0].mxu0
    %1017 = vmatprep.mubr.f32.mxu0 0.0
    %1018 = vmatmul.mubr.f32.gmra.mrb[0].mxu0 %v928
    %v1019 = vpop.f32.mrb[0].mxu0
    %v1020 = vadd.f32 0.0, %v1019
    %v1021 = vpop.f32.mrb[0].mxu0
    %1022 = vdwg.mxu0
    %1023 = vrot.lane.b32.xlu0 %v664, 120
    %v1024 = vpop.permute.xlu0 %1023
    %1025 = vrot.lane.b32.xlu0 %v666, 120
    %v1026 = vpop.permute.xlu0 %1025
    %1027 = vrot.lane.b32.xlu0 %v668, 120
    %v1028 = vpop.permute.xlu0 %1027
    %1029 = vrot.lane.b32.xlu0 %v670, 120
    %v1030 = vpop.permute.xlu0 %1029
    %v1031 = vsel %vm703, %v664, 0
    %v1033 = vsel %vm703, %v666, 0
    %v1035 = vsel %vm703, %v668, 0
    %v1037 = vsel %vm703, %v670, 0
    %v1039 = vsel %vm703, %v1024, 0
    %v1041 = vsel %vm703, %v1026, 0
    %v1043 = vsel %vm703, %v1028, 0
    %v1045 = vsel %vm703, %v1030, 0
    %1047 = vmatprep.subr.mxu0 0.0
    %1048 = vmatpush1.xpose.msra.mxu0 %v1039
    %1049 = vmatprep.subr.mxu0 0.0
    %1050 = vmatpush1.xpose.msra.mxu0 %v1041
    %1051 = vmatprep.subr.mxu0 0.0
    %1052 = vmatpush1.xpose.msra.mxu0 %v1043
    %1053 = vmatprep.subr.mxu0 0.0
    %1054 = vmatpush1.xpose.msra.mxu0 %v1045
    %1055 = vmatprep.subr.mxu0 0.0
    %1056 = vmatpush1.xpose.msra.mxu0 0.0
    %1057 = vmatprep.subr.mxu0 0.0
    %1058 = vmatpush1.xpose.msra.mxu0 0.0
    %1059 = vmatprep.subr.mxu0 0.0
    %1060 = vmatpush1.xpose.msra.mxu0 0.0
    %1061 = vmatprep.subr.mxu0 0.0
    %1062 = vmatpush1.xpose.msra.mxu0 0.0
    %1063 = vmatprep.subr.mxu0 0.0
    %1064 = vmatpush1.xpose.msra.mxu0 0.0
    %1065 = vmatprep.subr.mxu0 0.0
    %1066 = vmatpush1.xpose.msra.mxu0 0.0
    %1067 = vmatprep.subr.mxu0 0.0
    %1068 = vmatpush1.xpose.msra.mxu0 0.0
    %1069 = vmatprep.subr.mxu0 0.0
    %1070 = vmatpush1.xpose.msra.mxu0 0.0
    %1071 = vmatprep.subr.mxu0 0.0
    %1072 = vmatpush1.xpose.msra.mxu0 0.0
    %1073 = vmatprep.subr.mxu0 0.0
    %1074 = vmatpush1.xpose.msra.mxu0 0.0
    %1075 = vmatprep.subr.mxu0 0.0
    %1076 = vmatpush1.xpose.msra.mxu0 0.0
    %1077 = vmatprep.subr.mxu0 0.0
    %1078 = vmatpush1.xpose.msra.mxu0 0.0
    %1079 = vmatprep.subr.mxu0 0.0
    %1080 = vmatpush1.xpose.msra.mxu0 0.0
    %1081 = vmatprep.subr.mxu0 0.0
    %1082 = vmatpush1.xpose.msra.mxu0 0.0
    %1083 = vmatprep.subr.mxu0 0.0
    %1084 = vmatpush1.xpose.msra.mxu0 0.0
    %1085 = vmatprep.subr.mxu0 0.0
    %1086 = vmatpush1.xpose.msra.mxu0 0.0
    %1087 = vmatprep.subr.mxu0 0.0
    %1088 = vmatpush1.xpose.msra.mxu0 0.0
    %1089 = vmatprep.subr.mxu0 0.0
    %1090 = vmatpush1.xpose.msra.mxu0 0.0
    %1091 = vmatprep.subr.mxu0 0.0
    %1092 = vmatpush1.xpose.msra.mxu0 0.0
    %1093 = vmatprep.subr.mxu0 0.0
    %1094 = vmatpush1.xpose.msra.mxu0 0.0
    %1095 = vmatprep.subr.mxu0 0.0
    %1096 = vmatpush1.xpose.msra.mxu0 0.0
    %1097 = vmatprep.subr.mxu0 0.0
    %1098 = vmatpush1.xpose.msra.mxu0 0.0
    %1099 = vmatprep.subr.mxu0 0.0
    %1100 = vmatpush1.xpose.msra.mxu0 0.0
    %1101 = vmatprep.subr.mxu0 0.0
    %1102 = vmatpush1.xpose.msra.mxu0 0.0
    %1103 = vmatprep.subr.mxu0 0.0
    %1104 = vmatpush1.xpose.msra.mxu0 0.0
    %1105 = vmatprep.subr.mxu0 0.0
    %1106 = vmatpush1.xpose.msra.mxu0 0.0
    %1107 = vmatprep.subr.mxu0 0.0
    %1108 = vmatpush1.xpose.msra.mxu0 0.0
    %1109 = vmatprep.subr.mxu0 0.0
    %1110 = vmatpush1.xpose.msra.mxu0 0.0
    %1111 = vmatprep.mubr.f32.mxu0 0.0
    %1112 = vmatmul.mubr.f32.gmra.mrb[0].mxu0 %v1031
    %v1113 = vpop.f32.mrb[0].mxu0
    %v1114 = vadd.f32 0.0, %v1113
    %v1115 = vpop.f32.mrb[0].mxu0
    %1116 = vmatprep.mubr.f32.mxu0 0.0
    %1117 = vmatmul.mubr.f32.gmra.mrb[0].mxu0 %v1033
    %v1118 = vpop.f32.mrb[0].mxu0
    %v1119 = vadd.f32 0.0, %v1118
    %v1120 = vpop.f32.mrb[0].mxu0
    %1121 = vmatprep.mubr.f32.mxu0 0.0
    %1122 = vmatmul.mubr.f32.gmra.mrb[0].mxu0 %v1035
    %v1123 = vpop.f32.mrb[0].mxu0
    %v1124 = vadd.f32 0.0, %v1123
    %v1125 = vpop.f32.mrb[0].mxu0
    %1126 = vmatprep.mubr.f32.mxu0 0.0
    %1127 = vmatmul.mubr.f32.gmra.mrb[0].mxu0 %v1037
    %v1128 = vpop.f32.mrb[0].mxu0
    %v1129 = vadd.f32 0.0, %v1128
    %v1130 = vpop.f32.mrb[0].mxu0
    %1131 = vdwg.mxu0
    %1132 = vrot.lane.b32.xlu0 %v609, 120
    %v1133 = vpop.permute.xlu0 %1132
    %1134 = vrot.lane.b32.xlu0 %v614, 120
    %v1135 = vpop.permute.xlu0 %1134
    %1136 = vrot.lane.b32.xlu0 %v619, 120
    %v1137 = vpop.permute.xlu0 %1136
    %1138 = vrot.lane.b32.xlu0 %v624, 120
    %v1139 = vpop.permute.xlu0 %1138
    %v1140 = vsel %vm703, %v609, 0
    %v1142 = vsel %vm703, %v614, 0
    %v1144 = vsel %vm703, %v619, 0
    %v1146 = vsel %vm703, %v624, 0
    %v1148 = vsel %vm703, %v1133, 0
    %v1150 = vsel %vm703, %v1135, 0
    %v1152 = vsel %vm703, %v1137, 0
    %v1154 = vsel %vm703, %v1139, 0
    %1156 = vmatprep.subr.mxu0 0.0
    %1157 = vmatpush1.xpose.msra.mxu0 %v1148
    %1158 = vmatprep.subr.mxu0 0.0
    %1159 = vmatpush1.xpose.msra.mxu0 %v1150
    %1160 = vmatprep.subr.mxu0 0.0
    %1161 = vmatpush1.xpose.msra.mxu0 %v1152
    %1162 = vmatprep.subr.mxu0 0.0
    %1163 = vmatpush1.xpose.msra.mxu0 %v1154
    %1164 = vmatprep.subr.mxu0 0.0
    %1165 = vmatpush1.xpose.msra.mxu0 0.0
    %1166 = vmatprep.subr.mxu0 0.0
    %1167 = vmatpush1.xpose.msra.mxu0 0.0
    %1168 = vmatprep.subr.mxu0 0.0
    %1169 = vmatpush1.xpose.msra.mxu0 0.0
    %1170 = vmatprep.subr.mxu0 0.0
    %1171 = vmatpush1.xpose.msra.mxu0 0.0
    %1172 = vmatprep.subr.mxu0 0.0
    %1173 = vmatpush1.xpose.msra.mxu0 0.0
    %1174 = vmatprep.subr.mxu0 0.0
    %1175 = vmatpush1.xpose.msra.mxu0 0.0
    %1176 = vmatprep.subr.mxu0 0.0
    %1177 = vmatpush1.xpose.msra.mxu0 0.0
    %1178 = vmatprep.subr.mxu0 0.0
    %1179 = vmatpush1.xpose.msra.mxu0 0.0
    %1180 = vmatprep.subr.mxu0 0.0
    %1181 = vmatpush1.xpose.msra.mxu0 0.0
    %1182 = vmatprep.subr.mxu0 0.0
    %1183 = vmatpush1.xpose.msra.mxu0 0.0
    %1184 = vmatprep.subr.mxu0 0.0
    %1185 = vmatpush1.xpose.msra.mxu0 0.0
    %1186 = vmatprep.subr.mxu0 0.0
    %1187 = vmatpush1.xpose.msra.mxu0 0.0
    %1188 = vmatprep.subr.mxu0 0.0
    %1189 = vmatpush1.xpose.msra.mxu0 0.0
    %1190 = vmatprep.subr.mxu0 0.0
    %1191 = vmatpush1.xpose.msra.mxu0 0.0
    %1192 = vmatprep.subr.mxu0 0.0
    %1193 = vmatpush1.xpose.msra.mxu0 0.0
    %1194 = vmatprep.subr.mxu0 0.0
    %1195 = vmatpush1.xpose.msra.mxu0 0.0
    %1196 = vmatprep.subr.mxu0 0.0
    %1197 = vmatpush1.xpose.msra.mxu0 0.0
    %1198 = vmatprep.subr.mxu0 0.0
    %1199 = vmatpush1.xpose.msra.mxu0 0.0
    %1200 = vmatprep.subr.mxu0 0.0
    %1201 = vmatpush1.xpose.msra.mxu0 0.0
    %1202 = vmatprep.subr.mxu0 0.0
    %1203 = vmatpush1.xpose.msra.mxu0 0.0
    %1204 = vmatprep.subr.mxu0 0.0
    %1205 = vmatpush1.xpose.msra.mxu0 0.0
    %1206 = vmatprep.subr.mxu0 0.0
    %1207 = vmatpush1.xpose.msra.mxu0 0.0
    %1208 = vmatprep.subr.mxu0 0.0
    %1209 = vmatpush1.xpose.msra.mxu0 0.0
    %1210 = vmatprep.subr.mxu0 0.0
    %1211 = vmatpush1.xpose.msra.mxu0 0.0
    %1212 = vmatprep.subr.mxu0 0.0
    %1213 = vmatpush1.xpose.msra.mxu0 0.0
    %1214 = vmatprep.subr.mxu0 0.0
    %1215 = vmatpush1.xpose.msra.mxu0 0.0
    %1216 = vmatprep.subr.mxu0 0.0
    %1217 = vmatpush1.xpose.msra.mxu0 0.0
    %1218 = vmatprep.subr.mxu0 0.0
    %1219 = vmatpush1.xpose.msra.mxu0 0.0
    %1220 = vmatprep.mubr.f32.mxu0 0.0
    %1221 = vmatmul.mubr.f32.gmra.mrb[0].mxu0 %v1140
    %v1222 = vpop.f32.mrb[0].mxu0
    %v1223 = vadd.f32 0.0, %v1222
    %v1224 = vpop.f32.mrb[0].mxu0
    %1225 = vmatprep.mubr.f32.mxu0 0.0
    %1226 = vmatmul.mubr.f32.gmra.mrb[0].mxu0 %v1142
    %v1227 = vpop.f32.mrb[0].mxu0
    %v1228 = vadd.f32 0.0, %v1227
    %v1229 = vpop.f32.mrb[0].mxu0
    %1230 = vmatprep.mubr.f32.mxu0 0.0
    %1231 = vmatmul.mubr.f32.gmra.mrb[0].mxu0 %v1144
    %v1232 = vpop.f32.mrb[0].mxu0
    %v1233 = vadd.f32 0.0, %v1232
    %v1234 = vpop.f32.mrb[0].mxu0
    %1235 = vmatprep.mubr.f32.mxu0 0.0
    %1236 = vmatmul.mubr.f32.gmra.mrb[0].mxu0 %v1146
    %v1237 = vpop.f32.mrb[0].mxu0
    %v1238 = vadd.f32 0.0, %v1237
    %v1239 = vpop.f32.mrb[0].mxu0
    %1240 = vdwg.mxu0
    %1241 = vrot.lane.b32.xlu0 %v676, 120
    %v1242 = vpop.permute.xlu0 %1241
    %1243 = vrot.lane.b32.xlu0 %v678, 120
    %v1244 = vpop.permute.xlu0 %1243
    %1245 = vrot.lane.b32.xlu0 %v680, 120
    %v1246 = vpop.permute.xlu0 %1245
    %1247 = vrot.lane.b32.xlu0 %v682, 120
    %v1248 = vpop.permute.xlu0 %1247
    %v1249 = vsel %vm703, %v676, 0
    %v1251 = vsel %vm703, %v678, 0
    %v1253 = vsel %vm703, %v680, 0
    %v1255 = vsel %vm703, %v682, 0
    %v1257 = vsel %vm703, %v1242, 0
    %v1259 = vsel %vm703, %v1244, 0
    %v1261 = vsel %vm703, %v1246, 0
    %v1263 = vsel %vm703, %v1248, 0
    %1265 = vmatprep.subr.mxu0 0.0
    %1266 = vmatpush1.xpose.msra.mxu0 %v1257
    %1267 = vmatprep.subr.mxu0 0.0
    %1268 = vmatpush1.xpose.msra.mxu0 %v1259
    %1269 = vmatprep.subr.mxu0 0.0
    %1270 = vmatpush1.xpose.msra.mxu0 %v1261
    %1271 = vmatprep.subr.mxu0 0.0
    %1272 = vmatpush1.xpose.msra.mxu0 %v1263
    %1273 = vmatprep.subr.mxu0 0.0
    %1274 = vmatpush1.xpose.msra.mxu0 0.0
    %1275 = vmatprep.subr.mxu0 0.0
    %1276 = vmatpush1.xpose.msra.mxu0 0.0
    %1277 = vmatprep.subr.mxu0 0.0
    %1278 = vmatpush1.xpose.msra.mxu0 0.0
    %1279 = vmatprep.subr.mxu0 0.0
    %1280 = vmatpush1.xpose.msra.mxu0 0.0
    %1281 = vmatprep.subr.mxu0 0.0
    %1282 = vmatpush1.xpose.msra.mxu0 0.0
    %1283 = vmatprep.subr.mxu0 0.0
    %1284 = vmatpush1.xpose.msra.mxu0 0.0
    %1285 = vmatprep.subr.mxu0 0.0
    %1286 = vmatpush1.xpose.msra.mxu0 0.0
    %1287 = vmatprep.subr.mxu0 0.0
    %1288 = vmatpush1.xpose.msra.mxu0 0.0
    %1289 = vmatprep.subr.mxu0 0.0
    %1290 = vmatpush1.xpose.msra.mxu0 0.0
    %1291 = vmatprep.subr.mxu0 0.0
    %1292 = vmatpush1.xpose.msra.mxu0 0.0
    %1293 = vmatprep.subr.mxu0 0.0
    %1294 = vmatpush1.xpose.msra.mxu0 0.0
    %1295 = vmatprep.subr.mxu0 0.0
    %1296 = vmatpush1.xpose.msra.mxu0 0.0
    %1297 = vmatprep.subr.mxu0 0.0
    %1298 = vmatpush1.xpose.msra.mxu0 0.0
    %1299 = vmatprep.subr.mxu0 0.0
    %1300 = vmatpush1.xpose.msra.mxu0 0.0
    %1301 = vmatprep.subr.mxu0 0.0
    %1302 = vmatpush1.xpose.msra.mxu0 0.0
    %1303 = vmatprep.subr.mxu0 0.0
    %1304 = vmatpush1.xpose.msra.mxu0 0.0
    %1305 = vmatprep.subr.mxu0 0.0
    %1306 = vmatpush1.xpose.msra.mxu0 0.0
    %1307 = vmatprep.subr.mxu0 0.0
    %1308 = vmatpush1.xpose.msra.mxu0 0.0
    %1309 = vmatprep.subr.mxu0 0.0
    %1310 = vmatpush1.xpose.msra.mxu0 0.0
    %1311 = vmatprep.subr.mxu0 0.0
    %1312 = vmatpush1.xpose.msra.mxu0 0.0
    %1313 = vmatprep.subr.mxu0 0.0
    %1314 = vmatpush1.xpose.msra.mxu0 0.0
    %1315 = vmatprep.subr.mxu0 0.0
    %1316 = vmatpush1.xpose.msra.mxu0 0.0
    %1317 = vmatprep.subr.mxu0 0.0
    %1318 = vmatpush1.xpose.msra.mxu0 0.0
    %1319 = vmatprep.subr.mxu0 0.0
    %1320 = vmatpush1.xpose.msra.mxu0 0.0
    %1321 = vmatprep.subr.mxu0 0.0
    %1322 = vmatpush1.xpose.msra.mxu0 0.0
    %1323 = vmatprep.subr.mxu0 0.0
    %1324 = vmatpush1.xpose.msra.mxu0 0.0
    %1325 = vmatprep.subr.mxu0 0.0
    %1326 = vmatpush1.xpose.msra.mxu0 0.0
    %1327 = vmatprep.subr.mxu0 0.0
    %1328 = vmatpush1.xpose.msra.mxu0 0.0
    %1329 = vmatprep.mubr.f32.mxu0 0.0
    %1330 = vmatmul.mubr.f32.gmra.mrb[0].mxu0 %v1249
    %v1331 = vpop.f32.mrb[0].mxu0
    %v1332 = vadd.f32 0.0, %v1331
    %v1333 = vpop.f32.mrb[0].mxu0
    %1334 = vmatprep.mubr.f32.mxu0 0.0
    %1335 = vmatmul.mubr.f32.gmra.mrb[0].mxu0 %v1251
    %v1336 = vpop.f32.mrb[0].mxu0
    %v1337 = vadd.f32 0.0, %v1336
    %v1338 = vpop.f32.mrb[0].mxu0
    %1339 = vmatprep.mubr.f32.mxu0 0.0
    %1340 = vmatmul.mubr.f32.gmra.mrb[0].mxu0 %v1253
    %v1341 = vpop.f32.mrb[0].mxu0
    %v1342 = vadd.f32 0.0, %v1341
    %v1343 = vpop.f32.mrb[0].mxu0
    %1344 = vmatprep.mubr.f32.mxu0 0.0
    %1345 = vmatmul.mubr.f32.gmra.mrb[0].mxu0 %v1255
    %v1346 = vpop.f32.mrb[0].mxu0
    %v1347 = vadd.f32 0.0, %v1346
    %v1348 = vpop.f32.mrb[0].mxu0
    %1349 = vdwg.mxu0
    %1350 = vrot.lane.b32.xlu0 %v629, 120
    %v1351 = vpop.permute.xlu0 %1350
    %1352 = vrot.lane.b32.xlu0 %v634, 120
    %v1353 = vpop.permute.xlu0 %1352
    %1354 = vrot.lane.b32.xlu0 %v639, 120
    %v1355 = vpop.permute.xlu0 %1354
    %1356 = vrot.lane.b32.xlu0 %v644, 120
    %v1357 = vpop.permute.xlu0 %1356
    %v1358 = vsel %vm703, %v629, 0
    %v1360 = vsel %vm703, %v634, 0
    %v1362 = vsel %vm703, %v639, 0
    %v1364 = vsel %vm703, %v644, 0
    %v1366 = vsel %vm703, %v1351, 0
    %v1368 = vsel %vm703, %v1353, 0
    %v1370 = vsel %vm703, %v1355, 0
    %v1372 = vsel %vm703, %v1357, 0
    %1374 = vmatprep.subr.mxu0 0.0
    %1375 = vmatpush1.xpose.msra.mxu0 %v1366
    %1376 = vmatprep.subr.mxu0 0.0
    %1377 = vmatpush1.xpose.msra.mxu0 %v1368
    %1378 = vmatprep.subr.mxu0 0.0
    %1379 = vmatpush1.xpose.msra.mxu0 %v1370
    %1380 = vmatprep.subr.mxu0 0.0
    %1381 = vmatpush1.xpose.msra.mxu0 %v1372
    %1382 = vmatprep.subr.mxu0 0.0
    %1383 = vmatpush1.xpose.msra.mxu0 0.0
    %1384 = vmatprep.subr.mxu0 0.0
    %1385 = vmatpush1.xpose.msra.mxu0 0.0
    %1386 = vmatprep.subr.mxu0 0.0
    %1387 = vmatpush1.xpose.msra.mxu0 0.0
    %1388 = vmatprep.subr.mxu0 0.0
    %1389 = vmatpush1.xpose.msra.mxu0 0.0
    %1390 = vmatprep.subr.mxu0 0.0
    %1391 = vmatpush1.xpose.msra.mxu0 0.0
    %1392 = vmatprep.subr.mxu0 0.0
    %1393 = vmatpush1.xpose.msra.mxu0 0.0
    %1394 = vmatprep.subr.mxu0 0.0
    %1395 = vmatpush1.xpose.msra.mxu0 0.0
    %1396 = vmatprep.subr.mxu0 0.0
    %1397 = vmatpush1.xpose.msra.mxu0 0.0
    %1398 = vmatprep.subr.mxu0 0.0
    %1399 = vmatpush1.xpose.msra.mxu0 0.0
    %1400 = vmatprep.subr.mxu0 0.0
    %1401 = vmatpush1.xpose.msra.mxu0 0.0
    %1402 = vmatprep.subr.mxu0 0.0
    %1403 = vmatpush1.xpose.msra.mxu0 0.0
    %1404 = vmatprep.subr.mxu0 0.0
    %1405 = vmatpush1.xpose.msra.mxu0 0.0
    %1406 = vmatprep.subr.mxu0 0.0
    %1407 = vmatpush1.xpose.msra.mxu0 0.0
    %1408 = vmatprep.subr.mxu0 0.0
    %1409 = vmatpush1.xpose.msra.mxu0 0.0
    %1410 = vmatprep.subr.mxu0 0.0
    %1411 = vmatpush1.xpose.msra.mxu0 0.0
    %1412 = vmatprep.subr.mxu0 0.0
    %1413 = vmatpush1.xpose.msra.mxu0 0.0
    %1414 = vmatprep.subr.mxu0 0.0
    %1415 = vmatpush1.xpose.msra.mxu0 0.0
    %1416 = vmatprep.subr.mxu0 0.0
    %1417 = vmatpush1.xpose.msra.mxu0 0.0
    %1418 = vmatprep.subr.mxu0 0.0
    %1419 = vmatpush1.xpose.msra.mxu0 0.0
    %1420 = vmatprep.subr.mxu0 0.0
    %1421 = vmatpush1.xpose.msra.mxu0 0.0
    %1422 = vmatprep.subr.mxu0 0.0
    %1423 = vmatpush1.xpose.msra.mxu0 0.0
    %1424 = vmatprep.subr.mxu0 0.0
    %1425 = vmatpush1.xpose.msra.mxu0 0.0
    %1426 = vmatprep.subr.mxu0 0.0
    %1427 = vmatpush1.xpose.msra.mxu0 0.0
    %1428 = vmatprep.subr.mxu0 0.0
    %1429 = vmatpush1.xpose.msra.mxu0 0.0
    %1430 = vmatprep.subr.mxu0 0.0
    %1431 = vmatpush1.xpose.msra.mxu0 0.0
    %1432 = vmatprep.subr.mxu0 0.0
    %1433 = vmatpush1.xpose.msra.mxu0 0.0
    %1434 = vmatprep.subr.mxu0 0.0
    %1435 = vmatpush1.xpose.msra.mxu0 0.0
    %1436 = vmatprep.subr.mxu0 0.0
    %1437 = vmatpush1.xpose.msra.mxu0 0.0
    %1438 = vmatprep.mubr.f32.mxu0 0.0
    %1439 = vmatmul.mubr.f32.gmra.mrb[0].mxu0 %v1358
    %v1440 = vpop.f32.mrb[0].mxu0
    %v1441 = vadd.f32 0.0, %v1440
    %v1442 = vpop.f32.mrb[0].mxu0
    %1443 = vmatprep.mubr.f32.mxu0 0.0
    %1444 = vmatmul.mubr.f32.gmra.mrb[0].mxu0 %v1360
    %v1445 = vpop.f32.mrb[0].mxu0
    %v1446 = vadd.f32 0.0, %v1445
    %v1447 = vpop.f32.mrb[0].mxu0
    %1448 = vmatprep.mubr.f32.mxu0 0.0
    %1449 = vmatmul.mubr.f32.gmra.mrb[0].mxu0 %v1362
    %v1450 = vpop.f32.mrb[0].mxu0
    %v1451 = vadd.f32 0.0, %v1450
    %v1452 = vpop.f32.mrb[0].mxu0
    %1453 = vmatprep.mubr.f32.mxu0 0.0
    %1454 = vmatmul.mubr.f32.gmra.mrb[0].mxu0 %v1364
    %v1455 = vpop.f32.mrb[0].mxu0
    %v1456 = vadd.f32 0.0, %v1455
    %v1457 = vpop.f32.mrb[0].mxu0
    %1458 = vdwg.mxu0
    %1459 = vrot.lane.b32.xlu0 %v688, 120
    %v1460 = vpop.permute.xlu0 %1459
    %1461 = vrot.lane.b32.xlu0 %v690, 120
    %v1462 = vpop.permute.xlu0 %1461
    %1463 = vrot.lane.b32.xlu0 %v692, 120
    %v1464 = vpop.permute.xlu0 %1463
    %1465 = vrot.lane.b32.xlu0 %v694, 120
    %v1466 = vpop.permute.xlu0 %1465
    %v1467 = vsel %vm703, %v688, 0
    %v1469 = vsel %vm703, %v690, 0
    %v1471 = vsel %vm703, %v692, 0
    %v1473 = vsel %vm703, %v694, 0
    %v1475 = vsel %vm703, %v1460, 0
    %v1477 = vsel %vm703, %v1462, 0
    %v1479 = vsel %vm703, %v1464, 0
    %v1481 = vsel %vm703, %v1466, 0
    %1483 = vmatprep.subr.mxu0 0.0
    %1484 = vmatpush1.xpose.msra.mxu0 %v1475
    %1485 = vmatprep.subr.mxu0 0.0
    %1486 = vmatpush1.xpose.msra.mxu0 %v1477
    %1487 = vmatprep.subr.mxu0 0.0
    %1488 = vmatpush1.xpose.msra.mxu0 %v1479
    %1489 = vmatprep.subr.mxu0 0.0
    %1490 = vmatpush1.xpose.msra.mxu0 %v1481
    %1491 = vmatprep.subr.mxu0 0.0
    %1492 = vmatpush1.xpose.msra.mxu0 0.0
    %1493 = vmatprep.subr.mxu0 0.0
    %1494 = vmatpush1.xpose.msra.mxu0 0.0
    %1495 = vmatprep.subr.mxu0 0.0
    %1496 = vmatpush1.xpose.msra.mxu0 0.0
    %1497 = vmatprep.subr.mxu0 0.0
    %1498 = vmatpush1.xpose.msra.mxu0 0.0
    %1499 = vmatprep.subr.mxu0 0.0
    %1500 = vmatpush1.xpose.msra.mxu0 0.0
    %1501 = vmatprep.subr.mxu0 0.0
    %1502 = vmatpush1.xpose.msra.mxu0 0.0
    %1503 = vmatprep.subr.mxu0 0.0
    %1504 = vmatpush1.xpose.msra.mxu0 0.0
    %1505 = vmatprep.subr.mxu0 0.0
    %1506 = vmatpush1.xpose.msra.mxu0 0.0
    %1507 = vmatprep.subr.mxu0 0.0
    %1508 = vmatpush1.xpose.msra.mxu0 0.0
    %1509 = vmatprep.subr.mxu0 0.0
    %1510 = vmatpush1.xpose.msra.mxu0 0.0
    %1511 = vmatprep.subr.mxu0 0.0
    %1512 = vmatpush1.xpose.msra.mxu0 0.0
    %1513 = vmatprep.subr.mxu0 0.0
    %1514 = vmatpush1.xpose.msra.mxu0 0.0
    %1515 = vmatprep.subr.mxu0 0.0
    %1516 = vmatpush1.xpose.msra.mxu0 0.0
    %1517 = vmatprep.subr.mxu0 0.0
    %1518 = vmatpush1.xpose.msra.mxu0 0.0
    %1519 = vmatprep.subr.mxu0 0.0
    %1520 = vmatpush1.xpose.msra.mxu0 0.0
    %1521 = vmatprep.subr.mxu0 0.0
    %1522 = vmatpush1.xpose.msra.mxu0 0.0
    %1523 = vmatprep.subr.mxu0 0.0
    %1524 = vmatpush1.xpose.msra.mxu0 0.0
    %1525 = vmatprep.subr.mxu0 0.0
    %1526 = vmatpush1.xpose.msra.mxu0 0.0
    %1527 = vmatprep.subr.mxu0 0.0
    %1528 = vmatpush1.xpose.msra.mxu0 0.0
    %1529 = vmatprep.subr.mxu0 0.0
    %1530 = vmatpush1.xpose.msra.mxu0 0.0
    %1531 = vmatprep.subr.mxu0 0.0
    %1532 = vmatpush1.xpose.msra.mxu0 0.0
    %1533 = vmatprep.subr.mxu0 0.0
    %1534 = vmatpush1.xpose.msra.mxu0 0.0
    %1535 = vmatprep.subr.mxu0 0.0
    %1536 = vmatpush1.xpose.msra.mxu0 0.0
    %1537 = vmatprep.subr.mxu0 0.0
    %1538 = vmatpush1.xpose.msra.mxu0 0.0
    %1539 = vmatprep.subr.mxu0 0.0
    %1540 = vmatpush1.xpose.msra.mxu0 0.0
    %1541 = vmatprep.subr.mxu0 0.0
    %1542 = vmatpush1.xpose.msra.mxu0 0.0
    %1543 = vmatprep.subr.mxu0 0.0
    %1544 = vmatpush1.xpose.msra.mxu0 0.0
    %1545 = vmatprep.subr.mxu0 0.0
    %1546 = vmatpush1.xpose.msra.mxu0 0.0
    %1547 = vmatprep.mubr.f32.mxu0 0.0
    %1548 = vmatmul.mubr.f32.gmra.mrb[0].mxu0 %v1467
    %v1549 = vpop.f32.mrb[0].mxu0
    %v1550 = vadd.f32 0.0, %v1549
    %v1551 = vpop.f32.mrb[0].mxu0
    %1552 = vmatprep.mubr.f32.mxu0 0.0
    %1553 = vmatmul.mubr.f32.gmra.mrb[0].mxu0 %v1469
    %v1554 = vpop.f32.mrb[0].mxu0
    %v1555 = vadd.f32 0.0, %v1554
    %v1556 = vpop.f32.mrb[0].mxu0
    %1557 = vmatprep.mubr.f32.mxu0 0.0
    %1558 = vmatmul.mubr.f32.gmra.mrb[0].mxu0 %v1471
    %v1559 = vpop.f32.mrb[0].mxu0
    %v1560 = vadd.f32 0.0, %v1559
    %v1561 = vpop.f32.mrb[0].mxu0
    %1562 = vmatprep.mubr.f32.mxu0 0.0
    %1563 = vmatmul.mubr.f32.gmra.mrb[0].mxu0 %v1473
    %v1564 = vpop.f32.mrb[0].mxu0
    %v1565 = vadd.f32 0.0, %v1564
    %v1566 = vpop.f32.mrb[0].mxu0
    %1567 = vdwg.mxu0
    %v1568 = vmul.f32 %v787, 0.5
    %v1569 = vmul.f32 %v792, 0.5
    %v1570 = vmul.f32 %v797, 0.5
    %v1571 = vmul.f32 %v802, 0.5
    %v1572 = vmul.f32 %v896, 0.5
    %v1573 = vmul.f32 %v901, 0.5
    %v1574 = vmul.f32 %v906, 0.5
    %v1575 = vmul.f32 %v911, 0.5
    %v1576 = vmul.f32 %v1005, 0.5
    %v1577 = vmul.f32 %v1010, 0.5
    %v1578 = vmul.f32 %v1015, 0.5
    %v1579 = vmul.f32 %v1020, 0.5
    %v1580 = vmul.f32 %v1114, 0.5
    %v1581 = vmul.f32 %v1119, 0.5
    %v1582 = vmul.f32 %v1124, 0.5
    %v1583 = vmul.f32 %v1129, 0.5
    %v1584 = vmul.f32 %v1223, 0.5
    %v1585 = vmul.f32 %v1228, 0.5
    %v1586 = vmul.f32 %v1233, 0.5
    %v1587 = vmul.f32 %v1238, 0.5
    %v1588 = vmul.f32 %v1332, 0.5
    %v1589 = vmul.f32 %v1337, 0.5
    %v1590 = vmul.f32 %v1342, 0.5
    %v1591 = vmul.f32 %v1347, 0.5
    %v1592 = vmul.f32 %v1441, 0.5
    %v1593 = vmul.f32 %v1446, 0.5
    %v1594 = vmul.f32 %v1451, 0.5
    %v1595 = vmul.f32 %v1456, 0.5
    %v1596 = vmul.f32 %v1550, 0.5
    %v1597 = vmul.f32 %v1555, 0.5
    %v1598 = vmul.f32 %v1560, 0.5
    %v1599 = vmul.f32 %v1565, 0.5
    %v1600 = vsel %vm77, %v1568, -inf
    %1601 = vmax.xlane.f32.xlu0 %v1600
    %v1602 = vpop.xlane.xlu0 %1601
    %v1603 = vsel %vm77, %v1569, -inf
    %1604 = vmax.xlane.f32.xlu0 %v1603
    %v1605 = vpop.xlane.xlu0 %1604
    %v1606 = vsel %vm77, %v1570, -inf
    %1607 = vmax.xlane.f32.xlu0 %v1606
    %v1608 = vpop.xlane.xlu0 %1607
    %v1609 = vsel %vm77, %v1571, -inf
    %1610 = vmax.xlane.f32.xlu0 %v1609
    %v1611 = vpop.xlane.xlu0 %1610
    %v1612 = vsel %vm77, %v1572, -inf
    %1613 = vmax.xlane.f32.xlu0 %v1612
    %v1614 = vpop.xlane.xlu0 %1613
    %v1615 = vsel %vm77, %v1573, -inf
    %1616 = vmax.xlane.f32.xlu0 %v1615
    %v1617 = vpop.xlane.xlu0 %1616
    %v1618 = vsel %vm77, %v1574, -inf
    %1619 = vmax.xlane.f32.xlu0 %v1618
    %v1620 = vpop.xlane.xlu0 %1619
    %v1621 = vsel %vm77, %v1575, -inf
    %1622 = vmax.xlane.f32.xlu0 %v1621
    %v1623 = vpop.xlane.xlu0 %1622
    %v1624 = vsel %vm77, %v1576, -inf
    %1625 = vmax.xlane.f32.xlu0 %v1624
    %v1626 = vpop.xlane.xlu0 %1625
    %v1627 = vsel %vm77, %v1577, -inf
    %1628 = vmax.xlane.f32.xlu0 %v1627
    %v1629 = vpop.xlane.xlu0 %1628
    %v1630 = vsel %vm77, %v1578, -inf
    %1631 = vmax.xlane.f32.xlu0 %v1630
    %v1632 = vpop.xlane.xlu0 %1631
    %v1633 = vsel %vm77, %v1579, -inf
    %1634 = vmax.xlane.f32.xlu0 %v1633
    %v1635 = vpop.xlane.xlu0 %1634
    %v1636 = vsel %vm77, %v1580, -inf
    %1637 = vmax.xlane.f32.xlu0 %v1636
    %v1638 = vpop.xlane.xlu0 %1637
    %v1639 = vsel %vm77, %v1581, -inf
    %1640 = vmax.xlane.f32.xlu0 %v1639
    %v1641 = vpop.xlane.xlu0 %1640
    %v1642 = vsel %vm77, %v1582, -inf
    %1643 = vmax.xlane.f32.xlu0 %v1642
    %v1644 = vpop.xlane.xlu0 %1643
    %v1645 = vsel %vm77, %v1583, -inf
    %1646 = vmax.xlane.f32.xlu0 %v1645
    %v1647 = vpop.xlane.xlu0 %1646
    %v1648 = vsel %vm77, %v1584, -inf
    %1649 = vmax.xlane.f32.xlu0 %v1648
    %v1650 = vpop.xlane.xlu0 %1649
    %v1651 = vsel %vm77, %v1585, -inf
    %1652 = vmax.xlane.f32.xlu0 %v1651
    %v1653 = vpop.xlane.xlu0 %1652
    %v1654 = vsel %vm77, %v1586, -inf
    %1655 = vmax.xlane.f32.xlu0 %v1654
    %v1656 = vpop.xlane.xlu0 %1655
    %v1657 = vsel %vm77, %v1587, -inf
    %1658 = vmax.xlane.f32.xlu0 %v1657
    %v1659 = vpop.xlane.xlu0 %1658
    %v1660 = vsel %vm77, %v1588, -inf
    %1661 = vmax.xlane.f32.xlu0 %v1660
    %v1662 = vpop.xlane.xlu0 %1661
    %v1663 = vsel %vm77, %v1589, -inf
    %1664 = vmax.xlane.f32.xlu0 %v1663
    %v1665 = vpop.xlane.xlu0 %1664
    %v1666 = vsel %vm77, %v1590, -inf
    %1667 = vmax.xlane.f32.xlu0 %v1666
    %v1668 = vpop.xlane.xlu0 %1667
    %v1669 = vsel %vm77, %v1591, -inf
    %1670 = vmax.xlane.f32.xlu0 %v1669
    %v1671 = vpop.xlane.xlu0 %1670
    %v1672 = vsel %vm77, %v1592, -inf
    %1673 = vmax.xlane.f32.xlu0 %v1672
    %v1674 = vpop.xlane.xlu0 %1673
    %v1675 = vsel %vm77, %v1593, -inf
    %1676 = vmax.xlane.f32.xlu0 %v1675
    %v1677 = vpop.xlane.xlu0 %1676
    %v1678 = vsel %vm77, %v1594, -inf
    %1679 = vmax.xlane.f32.xlu0 %v1678
    %v1680 = vpop.xlane.xlu0 %1679
    %v1681 = vsel %vm77, %v1595, -inf
    %1682 = vmax.xlane.f32.xlu0 %v1681
    %v1683 = vpop.xlane.xlu0 %1682
    %v1684 = vsel %vm77, %v1596, -inf
    %1685 = vmax.xlane.f32.xlu0 %v1684
    %v1686 = vpop.xlane.xlu0 %1685
    %v1687 = vsel %vm77, %v1597, -inf
    %1688 = vmax.xlane.f32.xlu0 %v1687
    %v1689 = vpop.xlane.xlu0 %1688
    %v1690 = vsel %vm77, %v1598, -inf
    %1691 = vmax.xlane.f32.xlu0 %v1690
    %v1692 = vpop.xlane.xlu0 %1691
    %v1693 = vsel %vm77, %v1599, -inf
    %1694 = vmax.xlane.f32.xlu0 %v1693
    %v1695 = vpop.xlane.xlu0 %1694
    %v1696 = vsub.f32 %v1568, %v1602
    %v1697 = vsub.f32 %v1569, %v1605
    %v1698 = vsub.f32 %v1570, %v1608
    %v1699 = vsub.f32 %v1571, %v1611
    %v1700 = vsub.f32 %v1572, %v1614
    %v1701 = vsub.f32 %v1573, %v1617
    %v1702 = vsub.f32 %v1574, %v1620
    %v1703 = vsub.f32 %v1575, %v1623
    %v1704 = vsub.f32 %v1576, %v1626
    %v1705 = vsub.f32 %v1577, %v1629
    %v1706 = vsub.f32 %v1578, %v1632
    %v1707 = vsub.f32 %v1579, %v1635
    %v1708 = vsub.f32 %v1580, %v1638
    %v1709 = vsub.f32 %v1581, %v1641
    %v1710 = vsub.f32 %v1582, %v1644
    %v1711 = vsub.f32 %v1583, %v1647
    %v1712 = vsub.f32 %v1584, %v1650
    %v1713 = vsub.f32 %v1585, %v1653
    %v1714 = vsub.f32 %v1586, %v1656
    %v1715 = vsub.f32 %v1587, %v1659
    %v1716 = vsub.f32 %v1588, %v1662
    %v1717 = vsub.f32 %v1589, %v1665
    %v1718 = vsub.f32 %v1590, %v1668
    %v1719 = vsub.f32 %v1591, %v1671
    %v1720 = vsub.f32 %v1592, %v1674
    %v1721 = vsub.f32 %v1593, %v1677
    %v1722 = vsub.f32 %v1594, %v1680
    %v1723 = vsub.f32 %v1595, %v1683
    %v1724 = vsub.f32 %v1596, %v1686
    %v1725 = vsub.f32 %v1597, %v1689
    %v1726 = vsub.f32 %v1598, %v1692
    %v1727 = vsub.f32 %v1599, %v1695
    %v1728 = vmul.f32 %v1696, 1.442695
    %v1729 = vpow.pop %v1728
    %v1730 = vmul.f32 %v1697, 1.442695
    %v1731 = vpow.pop %v1730
    %v1732 = vmul.f32 %v1698, 1.442695
    %v1733 = vpow.pop %v1732
    %v1734 = vmul.f32 %v1699, 1.442695
    %v1735 = vpow.pop %v1734
    %v1736 = vmul.f32 %v1700, 1.442695
    %v1737 = vpow.pop %v1736
    %v1738 = vmul.f32 %v1701, 1.442695
    %v1739 = vpow.pop %v1738
    %v1740 = vmul.f32 %v1702, 1.442695
    %v1741 = vpow.pop %v1740
    %v1742 = vmul.f32 %v1703, 1.442695
    %v1743 = vpow.pop %v1742
    %v1744 = vmul.f32 %v1704, 1.442695
    %v1745 = vpow.pop %v1744
    %v1746 = vmul.f32 %v1705, 1.442695
    %v1747 = vpow.pop %v1746
    %v1748 = vmul.f32 %v1706, 1.442695
    %v1749 = vpow.pop %v1748
    %v1750 = vmul.f32 %v1707, 1.442695
    %v1751 = vpow.pop %v1750
    %v1752 = vmul.f32 %v1708, 1.442695
    %v1753 = vpow.pop %v1752
    %v1754 = vmul.f32 %v1709, 1.442695
    %v1755 = vpow.pop %v1754
    %v1756 = vmul.f32 %v1710, 1.442695
    %v1757 = vpow.pop %v1756
    %v1758 = vmul.f32 %v1711, 1.442695
    %v1759 = vpow.pop %v1758
    %v1760 = vmul.f32 %v1712, 1.442695
    %v1761 = vpow.pop %v1760
    %v1762 = vmul.f32 %v1713, 1.442695
    %v1763 = vpow.pop %v1762
    %v1764 = vmul.f32 %v1714, 1.442695
    %v1765 = vpow.pop %v1764
    %v1766 = vmul.f32 %v1715, 1.442695
    %v1767 = vpow.pop %v1766
    %v1768 = vmul.f32 %v1716, 1.442695
    %v1769 = vpow.pop %v1768
    %v1770 = vmul.f32 %v1717, 1.442695
    %v1771 = vpow.pop %v1770
    %v1772 = vmul.f32 %v1718, 1.442695
    %v1773 = vpow.pop %v1772
    %v1774 = vmul.f32 %v1719, 1.442695
    %v1775 = vpow.pop %v1774
    %v1776 = vmul.f32 %v1720, 1.442695
    %v1777 = vpow.pop %v1776
    %v1778 = vmul.f32 %v1721, 1.442695
    %v1779 = vpow.pop %v1778
    %v1780 = vmul.f32 %v1722, 1.442695
    %v1781 = vpow.pop %v1780
    %v1782 = vmul.f32 %v1723, 1.442695
    %v1783 = vpow.pop %v1782
    %v1784 = vmul.f32 %v1724, 1.442695
    %v1785 = vpow.pop %v1784
    %v1786 = vmul.f32 %v1725, 1.442695
    %v1787 = vpow.pop %v1786
    %v1788 = vmul.f32 %v1726, 1.442695
    %v1789 = vpow.pop %v1788
    %v1790 = vmul.f32 %v1727, 1.442695
    %v1791 = vpow.pop %v1790
    %v1792 = vsel %vm77, %v1729, 0.0
    %1793 = vadd.xlane.f32.xlu0 %v1792
    %v1794 = vpop.xlane.xlu0 %1793
    %v1795 = vsel %vm77, %v1731, 0.0
    %1796 = vadd.xlane.f32.xlu0 %v1795
    %v1797 = vpop.xlane.xlu0 %1796
    %v1798 = vsel %vm77, %v1733, 0.0
    %1799 = vadd.xlane.f32.xlu0 %v1798
    %v1800 = vpop.xlane.xlu0 %1799
    %v1801 = vsel %vm77, %v1735, 0.0
    %1802 = vadd.xlane.f32.xlu0 %v1801
    %v1803 = vpop.xlane.xlu0 %1802
    %v1804 = vsel %vm77, %v1737, 0.0
    %1805 = vadd.xlane.f32.xlu0 %v1804
    %v1806 = vpop.xlane.xlu0 %1805
    %v1807 = vsel %vm77, %v1739, 0.0
    %1808 = vadd.xlane.f32.xlu0 %v1807
    %v1809 = vpop.xlane.xlu0 %1808
    %v1810 = vsel %vm77, %v1741, 0.0
    %1811 = vadd.xlane.f32.xlu0 %v1810
    %v1812 = vpop.xlane.xlu0 %1811
    %v1813 = vsel %vm77, %v1743, 0.0
    %1814 = vadd.xlane.f32.xlu0 %v1813
    %v1815 = vpop.xlane.xlu0 %1814
    %v1816 = vsel %vm77, %v1745, 0.0
    %1817 = vadd.xlane.f32.xlu0 %v1816
    %v1818 = vpop.xlane.xlu0 %1817
    %v1819 = vsel %vm77, %v1747, 0.0
    %1820 = vadd.xlane.f32.xlu0 %v1819
    %v1821 = vpop.xlane.xlu0 %1820
    %v1822 = vsel %vm77, %v1749, 0.0
    %1823 = vadd.xlane.f32.xlu0 %v1822
    %v1824 = vpop.xlane.xlu0 %1823
    %v1825 = vsel %vm77, %v1751, 0.0
    %1826 = vadd.xlane.f32.xlu0 %v1825
    %v1827 = vpop.xlane.xlu0 %1826
    %v1828 = vsel %vm77, %v1753, 0.0
    %1829 = vadd.xlane.f32.xlu0 %v1828
    %v1830 = vpop.xlane.xlu0 %1829
    %v1831 = vsel %vm77, %v1755, 0.0
    %1832 = vadd.xlane.f32.xlu0 %v1831
    %v1833 = vpop.xlane.xlu0 %1832
    %v1834 = vsel %vm77, %v1757, 0.0
    %1835 = vadd.xlane.f32.xlu0 %v1834
    %v1836 = vpop.xlane.xlu0 %1835
    %v1837 = vsel %vm77, %v1759, 0.0
    %1838 = vadd.xlane.f32.xlu0 %v1837
    %v1839 = vpop.xlane.xlu0 %1838
    %v1840 = vsel %vm77, %v1761, 0.0
    %1841 = vadd.xlane.f32.xlu0 %v1840
    %v1842 = vpop.xlane.xlu0 %1841
    %v1843 = vsel %vm77, %v1763, 0.0
    %1844 = vadd.xlane.f32.xlu0 %v1843
    %v1845 = vpop.xlane.xlu0 %1844
    %v1846 = vsel %vm77, %v1765, 0.0
    %1847 = vadd.xlane.f32.xlu0 %v1846
    %v1848 = vpop.xlane.xlu0 %1847
    %v1849 = vsel %vm77, %v1767, 0.0
    %1850 = vadd.xlane.f32.xlu0 %v1849
    %v1851 = vpop.xlane.xlu0 %1850
    %v1852 = vsel %vm77, %v1769, 0.0
    %1853 = vadd.xlane.f32.xlu0 %v1852
    %v1854 = vpop.xlane.xlu0 %1853
    %v1855 = vsel %vm77, %v1771, 0.0
    %1856 = vadd.xlane.f32.xlu0 %v1855
    %v1857 = vpop.xlane.xlu0 %1856
    %v1858 = vsel %vm77, %v1773, 0.0
    %1859 = vadd.xlane.f32.xlu0 %v1858
    %v1860 = vpop.xlane.xlu0 %1859
    %v1861 = vsel %vm77, %v1775, 0.0
    %1862 = vadd.xlane.f32.xlu0 %v1861
    %v1863 = vpop.xlane.xlu0 %1862
    %v1864 = vsel %vm77, %v1777, 0.0
    %1865 = vadd.xlane.f32.xlu0 %v1864
    %v1866 = vpop.xlane.xlu0 %1865
    %v1867 = vsel %vm77, %v1779, 0.0
    %1868 = vadd.xlane.f32.xlu0 %v1867
    %v1869 = vpop.xlane.xlu0 %1868
    %v1870 = vsel %vm77, %v1781, 0.0
    %1871 = vadd.xlane.f32.xlu0 %v1870
    %v1872 = vpop.xlane.xlu0 %1871
    %v1873 = vsel %vm77, %v1783, 0.0
    %1874 = vadd.xlane.f32.xlu0 %v1873
    %v1875 = vpop.xlane.xlu0 %1874
    %v1876 = vsel %vm77, %v1785, 0.0
    %1877 = vadd.xlane.f32.xlu0 %v1876
    %v1878 = vpop.xlane.xlu0 %1877
    %v1879 = vsel %vm77, %v1787, 0.0
    %1880 = vadd.xlane.f32.xlu0 %v1879
    %v1881 = vpop.xlane.xlu0 %1880
    %v1882 = vsel %vm77, %v1789, 0.0
    %1883 = vadd.xlane.f32.xlu0 %v1882
    %v1884 = vpop.xlane.xlu0 %1883
    %v1885 = vsel %vm77, %v1791, 0.0
    %1886 = vadd.xlane.f32.xlu0 %v1885
    %v1887 = vpop.xlane.xlu0 %1886
    %v1888 = vrcp.pop %v1794
    %v1889 = vrcp.pop %v1797
    %v1890 = vrcp.pop %v1800
    %v1891 = vrcp.pop %v1803
    %v1892 = vrcp.pop %v1806
    %v1893 = vrcp.pop %v1809
    %v1894 = vrcp.pop %v1812
    %v1895 = vrcp.pop %v1815
    %v1896 = vrcp.pop %v1818
    %v1897 = vrcp.pop %v1821
    %v1898 = vrcp.pop %v1824
    %v1899 = vrcp.pop %v1827
    %v1900 = vrcp.pop %v1830
    %v1901 = vrcp.pop %v1833
    %v1902 = vrcp.pop %v1836
    %v1903 = vrcp.pop %v1839
    %v1904 = vrcp.pop %v1842
    %v1905 = vrcp.pop %v1845
    %v1906 = vrcp.pop %v1848
    %v1907 = vrcp.pop %v1851
    %v1908 = vrcp.pop %v1854
    %v1909 = vrcp.pop %v1857
    %v1910 = vrcp.pop %v1860
    %v1911 = vrcp.pop %v1863
    %v1912 = vrcp.pop %v1866
    %v1913 = vrcp.pop %v1869
    %v1914 = vrcp.pop %v1872
    %v1915 = vrcp.pop %v1875
    %v1916 = vrcp.pop %v1878
    %v1917 = vrcp.pop %v1881
    %v1918 = vrcp.pop %v1884
    %v1919 = vrcp.pop %v1887
    %v1920 = vmul.f32 %v1729, %v1888
    %v1921 = vmul.f32 %v1731, %v1889
    %v1922 = vmul.f32 %v1733, %v1890
    %v1923 = vmul.f32 %v1735, %v1891
    %v1924 = vmul.f32 %v1737, %v1892
    %v1925 = vmul.f32 %v1739, %v1893
    %v1926 = vmul.f32 %v1741, %v1894
    %v1927 = vmul.f32 %v1743, %v1895
    %v1928 = vmul.f32 %v1745, %v1896
    %v1929 = vmul.f32 %v1747, %v1897
    %v1930 = vmul.f32 %v1749, %v1898
    %v1931 = vmul.f32 %v1751, %v1899
    %v1932 = vmul.f32 %v1753, %v1900
    %v1933 = vmul.f32 %v1755, %v1901
    %v1934 = vmul.f32 %v1757, %v1902
    %v1935 = vmul.f32 %v1759, %v1903
    %v1936 = vmul.f32 %v1761, %v1904
    %v1937 = vmul.f32 %v1763, %v1905
    %v1938 = vmul.f32 %v1765, %v1906
    %v1939 = vmul.f32 %v1767, %v1907
    %v1940 = vmul.f32 %v1769, %v1908
    %v1941 = vmul.f32 %v1771, %v1909
    %v1942 = vmul.f32 %v1773, %v1910
    %v1943 = vmul.f32 %v1775, %v1911
    %v1944 = vmul.f32 %v1777, %v1912
    %v1945 = vmul.f32 %v1779, %v1913
    %v1946 = vmul.f32 %v1781, %v1914
    %v1947 = vmul.f32 %v1783, %v1915
    %v1948 = vmul.f32 %v1785, %v1916
    %v1949 = vmul.f32 %v1787, %v1917
    %v1950 = vmul.f32 %v1789, %v1918
    %v1951 = vmul.f32 %v1791, %v1919
    %1952 = vrot.lane.b32.xlu0 %v569, 112
    %v1953 = vpop.permute.xlu0 %1952
    %1954 = vrot.lane.b32.xlu0 %v574, 112
    %v1955 = vpop.permute.xlu0 %1954
    %1956 = vrot.lane.b32.xlu0 %v579, 112
    %v1957 = vpop.permute.xlu0 %1956
    %1958 = vrot.lane.b32.xlu0 %v584, 112
    %v1959 = vpop.permute.xlu0 %1958
    %v1965 = vsel %vm77, %v1920, 0
    %v1968 = vsel %vm77, %v1921, 0
    %v1971 = vsel %vm77, %v1922, 0
    %v1974 = vsel %vm77, %v1923, 0
    %1976 = vmatprep.subr.mxu0 0.0
    %1977 = vmatpush1.msra.mxu0 %v1953
    %1978 = vmatprep.subr.mxu0 0.0
    %1979 = vmatpush1.msra.mxu0 %v1955
    %1980 = vmatprep.subr.mxu0 0.0
    %1981 = vmatpush1.msra.mxu0 %v1957
    %1982 = vmatprep.subr.mxu0 0.0
    %1983 = vmatpush1.msra.mxu0 %v1959
    %1984 = vmatprep.subr.mxu0 0.0
    %1985 = vmatpush1.msra.mxu0 0.0
    %1986 = vmatprep.subr.mxu0 0.0
    %1987 = vmatpush1.msra.mxu0 0.0
    %1988 = vmatprep.subr.mxu0 0.0
    %1989 = vmatpush1.msra.mxu0 0.0
    %1990 = vmatprep.subr.mxu0 0.0
    %1991 = vmatpush1.msra.mxu0 0.0
    %1992 = vmatprep.subr.mxu0 0.0
    %1993 = vmatpush1.msra.mxu0 0.0
    %1994 = vmatprep.subr.mxu0 0.0
    %1995 = vmatpush1.msra.mxu0 0.0
    %1996 = vmatprep.subr.mxu0 0.0
    %1997 = vmatpush1.msra.mxu0 0.0
    %1998 = vmatprep.subr.mxu0 0.0
    %1999 = vmatpush1.msra.mxu0 0.0
    %2000 = vmatprep.subr.mxu0 0.0
    %2001 = vmatpush1.msra.mxu0 0.0
    %2002 = vmatprep.subr.mxu0 0.0
    %2003 = vmatpush1.msra.mxu0 0.0
    %2004 = vmatprep.subr.mxu0 0.0
    %2005 = vmatpush1.msra.mxu0 0.0
    %2006 = vmatprep.subr.mxu0 0.0
    %2007 = vmatpush1.msra.mxu0 0.0
    %2008 = vmatprep.subr.mxu0 0.0
    %2009 = vmatpush1.msra.mxu0 0.0
    %2010 = vmatprep.subr.mxu0 0.0
    %2011 = vmatpush1.msra.mxu0 0.0
    %2012 = vmatprep.subr.mxu0 0.0
    %2013 = vmatpush1.msra.mxu0 0.0
    %2014 = vmatprep.subr.mxu0 0.0
    %2015 = vmatpush1.msra.mxu0 0.0
    %2016 = vmatprep.subr.mxu0 0.0
    %2017 = vmatpush1.msra.mxu0 0.0
    %2018 = vmatprep.subr.mxu0 0.0
    %2019 = vmatpush1.msra.mxu0 0.0
    %2020 = vmatprep.subr.mxu0 0.0
    %2021 = vmatpush1.msra.mxu0 0.0
    %2022 = vmatprep.subr.mxu0 0.0
    %2023 = vmatpush1.msra.mxu0 0.0
    %2024 = vmatprep.subr.mxu0 0.0
    %2025 = vmatpush1.msra.mxu0 0.0
    %2026 = vmatprep.subr.mxu0 0.0
    %2027 = vmatpush1.msra.mxu0 0.0
    %2028 = vmatprep.subr.mxu0 0.0
    %2029 = vmatpush1.msra.mxu0 0.0
    %2030 = vmatprep.subr.mxu0 0.0
    %2031 = vmatpush1.msra.mxu0 0.0
    %2032 = vmatprep.subr.mxu0 0.0
    %2033 = vmatpush1.msra.mxu0 0.0
    %2034 = vmatprep.subr.mxu0 0.0
    %2035 = vmatpush1.msra.mxu0 0.0
    %2036 = vmatprep.subr.mxu0 0.0
    %2037 = vmatpush1.msra.mxu0 0.0
    %2038 = vmatprep.subr.mxu0 0.0
    %2039 = vmatpush1.msra.mxu0 0.0
    %2040 = vmatprep.mubr.f32.mxu0 0.0
    %2041 = vmatmul.mubr.f32.gmra.mrb[0].mxu0 %v1965
    %v2042 = vpop.f32.mrb[0].mxu0
    %v2043 = vadd.f32 0.0, %v2042
    %v2044 = vpop.f32.mrb[0].mxu0
    %2045 = vmatprep.mubr.f32.mxu0 0.0
    %2046 = vmatmul.mubr.f32.gmra.mrb[0].mxu0 %v1968
    %v2047 = vpop.f32.mrb[0].mxu0
    %v2048 = vadd.f32 0.0, %v2047
    %v2049 = vpop.f32.mrb[0].mxu0
    %2050 = vmatprep.mubr.f32.mxu0 0.0
    %2051 = vmatmul.mubr.f32.gmra.mrb[0].mxu0 %v1971
    %v2052 = vpop.f32.mrb[0].mxu0
    %v2053 = vadd.f32 0.0, %v2052
    %v2054 = vpop.f32.mrb[0].mxu0
    %2055 = vmatprep.mubr.f32.mxu0 0.0
    %2056 = vmatmul.mubr.f32.gmra.mrb[0].mxu0 %v1974
    %v2057 = vpop.f32.mrb[0].mxu0
    %v2058 = vadd.f32 0.0, %v2057
    %v2059 = vpop.f32.mrb[0].mxu0
    %2060 = vdwg.mxu0
    %2061 = vrot.lane.b32.xlu0 %v652, 112
    %v2062 = vpop.permute.xlu0 %2061
    %2063 = vrot.lane.b32.xlu0 %v654, 112
    %v2064 = vpop.permute.xlu0 %2063
    %2065 = vrot.lane.b32.xlu0 %v656, 112
    %v2066 = vpop.permute.xlu0 %2065
    %2067 = vrot.lane.b32.xlu0 %v658, 112
    %v2068 = vpop.permute.xlu0 %2067
    %v2074 = vsel %vm77, %v1924, 0
    %v2077 = vsel %vm77, %v1925, 0
    %v2080 = vsel %vm77, %v1926, 0
    %v2083 = vsel %vm77, %v1927, 0
    %2085 = vmatprep.subr.mxu0 0.0
    %2086 = vmatpush1.msra.mxu0 %v2062
    %2087 = vmatprep.subr.mxu0 0.0
    %2088 = vmatpush1.msra.mxu0 %v2064
    %2089 = vmatprep.subr.mxu0 0.0
    %2090 = vmatpush1.msra.mxu0 %v2066
    %2091 = vmatprep.subr.mxu0 0.0
    %2092 = vmatpush1.msra.mxu0 %v2068
    %2093 = vmatprep.subr.mxu0 0.0
    %2094 = vmatpush1.msra.mxu0 0.0
    %2095 = vmatprep.subr.mxu0 0.0
    %2096 = vmatpush1.msra.mxu0 0.0
    %2097 = vmatprep.subr.mxu0 0.0
    %2098 = vmatpush1.msra.mxu0 0.0
    %2099 = vmatprep.subr.mxu0 0.0
    %2100 = vmatpush1.msra.mxu0 0.0
    %2101 = vmatprep.subr.mxu0 0.0
    %2102 = vmatpush1.msra.mxu0 0.0
    %2103 = vmatprep.subr.mxu0 0.0
    %2104 = vmatpush1.msra.mxu0 0.0
    %2105 = vmatprep.subr.mxu0 0.0
    %2106 = vmatpush1.msra.mxu0 0.0
    %2107 = vmatprep.subr.mxu0 0.0
    %2108 = vmatpush1.msra.mxu0 0.0
    %2109 = vmatprep.subr.mxu0 0.0
    %2110 = vmatpush1.msra.mxu0 0.0
    %2111 = vmatprep.subr.mxu0 0.0
    %2112 = vmatpush1.msra.mxu0 0.0
    %2113 = vmatprep.subr.mxu0 0.0
    %2114 = vmatpush1.msra.mxu0 0.0
    %2115 = vmatprep.subr.mxu0 0.0
    %2116 = vmatpush1.msra.mxu0 0.0
    %2117 = vmatprep.subr.mxu0 0.0
    %2118 = vmatpush1.msra.mxu0 0.0
    %2119 = vmatprep.subr.mxu0 0.0
    %2120 = vmatpush1.msra.mxu0 0.0
    %2121 = vmatprep.subr.mxu0 0.0
    %2122 = vmatpush1.msra.mxu0 0.0
    %2123 = vmatprep.subr.mxu0 0.0
    %2124 = vmatpush1.msra.mxu0 0.0
    %2125 = vmatprep.subr.mxu0 0.0
    %2126 = vmatpush1.msra.mxu0 0.0
    %2127 = vmatprep.subr.mxu0 0.0
    %2128 = vmatpush1.msra.mxu0 0.0
    %2129 = vmatprep.subr.mxu0 0.0
    %2130 = vmatpush1.msra.mxu0 0.0
    %2131 = vmatprep.subr.mxu0 0.0
    %2132 = vmatpush1.msra.mxu0 0.0
    %2133 = vmatprep.subr.mxu0 0.0
    %2134 = vmatpush1.msra.mxu0 0.0
    %2135 = vmatprep.subr.mxu0 0.0
    %2136 = vmatpush1.msra.mxu0 0.0
    %2137 = vmatprep.subr.mxu0 0.0
    %2138 = vmatpush1.msra.mxu0 0.0
    %2139 = vmatprep.subr.mxu0 0.0
    %2140 = vmatpush1.msra.mxu0 0.0
    %2141 = vmatprep.subr.mxu0 0.0
    %2142 = vmatpush1.msra.mxu0 0.0
    %2143 = vmatprep.subr.mxu0 0.0
    %2144 = vmatpush1.msra.mxu0 0.0
    %2145 = vmatprep.subr.mxu0 0.0
    %2146 = vmatpush1.msra.mxu0 0.0
    %2147 = vmatprep.subr.mxu0 0.0
    %2148 = vmatpush1.msra.mxu0 0.0
    %2149 = vmatprep.mubr.f32.mxu0 0.0
    %2150 = vmatmul.mubr.f32.gmra.mrb[0].mxu0 %v2074
    %v2151 = vpop.f32.mrb[0].mxu0
    %v2152 = vadd.f32 0.0, %v2151
    %v2153 = vpop.f32.mrb[0].mxu0
    %2154 = vmatprep.mubr.f32.mxu0 0.0
    %2155 = vmatmul.mubr.f32.gmra.mrb[0].mxu0 %v2077
    %v2156 = vpop.f32.mrb[0].mxu0
    %v2157 = vadd.f32 0.0, %v2156
    %v2158 = vpop.f32.mrb[0].mxu0
    %2159 = vmatprep.mubr.f32.mxu0 0.0
    %2160 = vmatmul.mubr.f32.gmra.mrb[0].mxu0 %v2080
    %v2161 = vpop.f32.mrb[0].mxu0
    %v2162 = vadd.f32 0.0, %v2161
    %v2163 = vpop.f32.mrb[0].mxu0
    %2164 = vmatprep.mubr.f32.mxu0 0.0
    %2165 = vmatmul.mubr.f32.gmra.mrb[0].mxu0 %v2083
    %v2166 = vpop.f32.mrb[0].mxu0
    %v2167 = vadd.f32 0.0, %v2166
    %v2168 = vpop.f32.mrb[0].mxu0
    %2169 = vdwg.mxu0
    %2170 = vrot.lane.b32.xlu0 %v589, 112
    %v2171 = vpop.permute.xlu0 %2170
    %2172 = vrot.lane.b32.xlu0 %v594, 112
    %v2173 = vpop.permute.xlu0 %2172
    %2174 = vrot.lane.b32.xlu0 %v599, 112
    %v2175 = vpop.permute.xlu0 %2174
    %2176 = vrot.lane.b32.xlu0 %v604, 112
    %v2177 = vpop.permute.xlu0 %2176
    %v2183 = vsel %vm77, %v1928, 0
    %v2186 = vsel %vm77, %v1929, 0
    %v2189 = vsel %vm77, %v1930, 0
    %v2192 = vsel %vm77, %v1931, 0
    %2194 = vmatprep.subr.mxu0 0.0
    %2195 = vmatpush1.msra.mxu0 %v2171
    %2196 = vmatprep.subr.mxu0 0.0
    %2197 = vmatpush1.msra.mxu0 %v2173
    %2198 = vmatprep.subr.mxu0 0.0
    %2199 = vmatpush1.msra.mxu0 %v2175
    %2200 = vmatprep.subr.mxu0 0.0
    %2201 = vmatpush1.msra.mxu0 %v2177
    %2202 = vmatprep.subr.mxu0 0.0
    %2203 = vmatpush1.msra.mxu0 0.0
    %2204 = vmatprep.subr.mxu0 0.0
    %2205 = vmatpush1.msra.mxu0 0.0
    %2206 = vmatprep.subr.mxu0 0.0
    %2207 = vmatpush1.msra.mxu0 0.0
    %2208 = vmatprep.subr.mxu0 0.0
    %2209 = vmatpush1.msra.mxu0 0.0
    %2210 = vmatprep.subr.mxu0 0.0
    %2211 = vmatpush1.msra.mxu0 0.0
    %2212 = vmatprep.subr.mxu0 0.0
    %2213 = vmatpush1.msra.mxu0 0.0
    %2214 = vmatprep.subr.mxu0 0.0
    %2215 = vmatpush1.msra.mxu0 0.0
    %2216 = vmatprep.subr.mxu0 0.0
    %2217 = vmatpush1.msra.mxu0 0.0
    %2218 = vmatprep.subr.mxu0 0.0
    %2219 = vmatpush1.msra.mxu0 0.0
    %2220 = vmatprep.subr.mxu0 0.0
    %2221 = vmatpush1.msra.mxu0 0.0
    %2222 = vmatprep.subr.mxu0 0.0
    %2223 = vmatpush1.msra.mxu0 0.0
    %2224 = vmatprep.subr.mxu0 0.0
    %2225 = vmatpush1.msra.mxu0 0.0
    %2226 = vmatprep.subr.mxu0 0.0
    %2227 = vmatpush1.msra.mxu0 0.0
    %2228 = vmatprep.subr.mxu0 0.0
    %2229 = vmatpush1.msra.mxu0 0.0
    %2230 = vmatprep.subr.mxu0 0.0
    %2231 = vmatpush1.msra.mxu0 0.0
    %2232 = vmatprep.subr.mxu0 0.0
    %2233 = vmatpush1.msra.mxu0 0.0
    %2234 = vmatprep.subr.mxu0 0.0
    %2235 = vmatpush1.msra.mxu0 0.0
    %2236 = vmatprep.subr.mxu0 0.0
    %2237 = vmatpush1.msra.mxu0 0.0
    %2238 = vmatprep.subr.mxu0 0.0
    %2239 = vmatpush1.msra.mxu0 0.0
    %2240 = vmatprep.subr.mxu0 0.0
    %2241 = vmatpush1.msra.mxu0 0.0
    %2242 = vmatprep.subr.mxu0 0.0
    %2243 = vmatpush1.msra.mxu0 0.0
    %2244 = vmatprep.subr.mxu0 0.0
    %2245 = vmatpush1.msra.mxu0 0.0
    %2246 = vmatprep.subr.mxu0 0.0
    %2247 = vmatpush1.msra.mxu0 0.0
    %2248 = vmatprep.subr.mxu0 0.0
    %2249 = vmatpush1.msra.mxu0 0.0
    %2250 = vmatprep.subr.mxu0 0.0
    %2251 = vmatpush1.msra.mxu0 0.0
    %2252 = vmatprep.subr.mxu0 0.0
    %2253 = vmatpush1.msra.mxu0 0.0
    %2254 = vmatprep.subr.mxu0 0.0
    %2255 = vmatpush1.msra.mxu0 0.0
    %2256 = vmatprep.subr.mxu0 0.0
    %2257 = vmatpush1.msra.mxu0 0.0
    %2258 = vmatprep.mubr.f32.mxu0 0.0
    %2259 = vmatmul.mubr.f32.gmra.mrb[0].mxu0 %v2183
    %v2260 = vpop.f32.mrb[0].mxu0
    %v2261 = vadd.f32 0.0, %v2260
    %v2262 = vpop.f32.mrb[0].mxu0
    %2263 = vmatprep.mubr.f32.mxu0 0.0
    %2264 = vmatmul.mubr.f32.gmra.mrb[0].mxu0 %v2186
    %v2265 = vpop.f32.mrb[0].mxu0
    %v2266 = vadd.f32 0.0, %v2265
    %v2267 = vpop.f32.mrb[0].mxu0
    %2268 = vmatprep.mubr.f32.mxu0 0.0
    %2269 = vmatmul.mubr.f32.gmra.mrb[0].mxu0 %v2189
    %v2270 = vpop.f32.mrb[0].mxu0
    %v2271 = vadd.f32 0.0, %v2270
    %v2272 = vpop.f32.mrb[0].mxu0
    %2273 = vmatprep.mubr.f32.mxu0 0.0
    %2274 = vmatmul.mubr.f32.gmra.mrb[0].mxu0 %v2192
    %v2275 = vpop.f32.mrb[0].mxu0
    %v2276 = vadd.f32 0.0, %v2275
    %v2277 = vpop.f32.mrb[0].mxu0
    %2278 = vdwg.mxu0
    %2279 = vrot.lane.b32.xlu0 %v664, 112
    %v2280 = vpop.permute.xlu0 %2279
    %2281 = vrot.lane.b32.xlu0 %v666, 112
    %v2282 = vpop.permute.xlu0 %2281
    %2283 = vrot.lane.b32.xlu0 %v668, 112
    %v2284 = vpop.permute.xlu0 %2283
    %2285 = vrot.lane.b32.xlu0 %v670, 112
    %v2286 = vpop.permute.xlu0 %2285
    %v2292 = vsel %vm77, %v1932, 0
    %v2295 = vsel %vm77, %v1933, 0
    %v2298 = vsel %vm77, %v1934, 0
    %v2301 = vsel %vm77, %v1935, 0
    %2303 = vmatprep.subr.mxu0 0.0
    %2304 = vmatpush1.msra.mxu0 %v2280
    %2305 = vmatprep.subr.mxu0 0.0
    %2306 = vmatpush1.msra.mxu0 %v2282
    %2307 = vmatprep.subr.mxu0 0.0
    %2308 = vmatpush1.msra.mxu0 %v2284
    %2309 = vmatprep.subr.mxu0 0.0
    %2310 = vmatpush1.msra.mxu0 %v2286
    %2311 = vmatprep.subr.mxu0 0.0
    %2312 = vmatpush1.msra.mxu0 0.0
    %2313 = vmatprep.subr.mxu0 0.0
    %2314 = vmatpush1.msra.mxu0 0.0
    %2315 = vmatprep.subr.mxu0 0.0
    %2316 = vmatpush1.msra.mxu0 0.0
    %2317 = vmatprep.subr.mxu0 0.0
    %2318 = vmatpush1.msra.mxu0 0.0
    %2319 = vmatprep.subr.mxu0 0.0
    %2320 = vmatpush1.msra.mxu0 0.0
    %2321 = vmatprep.subr.mxu0 0.0
    %2322 = vmatpush1.msra.mxu0 0.0
    %2323 = vmatprep.subr.mxu0 0.0
    %2324 = vmatpush1.msra.mxu0 0.0
    %2325 = vmatprep.subr.mxu0 0.0
    %2326 = vmatpush1.msra.mxu0 0.0
    %2327 = vmatprep.subr.mxu0 0.0
    %2328 = vmatpush1.msra.mxu0 0.0
    %2329 = vmatprep.subr.mxu0 0.0
    %2330 = vmatpush1.msra.mxu0 0.0
    %2331 = vmatprep.subr.mxu0 0.0
    %2332 = vmatpush1.msra.mxu0 0.0
    %2333 = vmatprep.subr.mxu0 0.0
    %2334 = vmatpush1.msra.mxu0 0.0
    %2335 = vmatprep.subr.mxu0 0.0
    %2336 = vmatpush1.msra.mxu0 0.0
    %2337 = vmatprep.subr.mxu0 0.0
    %2338 = vmatpush1.msra.mxu0 0.0
    %2339 = vmatprep.subr.mxu0 0.0
    %2340 = vmatpush1.msra.mxu0 0.0
    %2341 = vmatprep.subr.mxu0 0.0
    %2342 = vmatpush1.msra.mxu0 0.0
    %2343 = vmatprep.subr.mxu0 0.0
    %2344 = vmatpush1.msra.mxu0 0.0
    %2345 = vmatprep.subr.mxu0 0.0
    %2346 = vmatpush1.msra.mxu0 0.0
    %2347 = vmatprep.subr.mxu0 0.0
    %2348 = vmatpush1.msra.mxu0 0.0
    %2349 = vmatprep.subr.mxu0 0.0
    %2350 = vmatpush1.msra.mxu0 0.0
    %2351 = vmatprep.subr.mxu0 0.0
    %2352 = vmatpush1.msra.mxu0 0.0
    %2353 = vmatprep.subr.mxu0 0.0
    %2354 = vmatpush1.msra.mxu0 0.0
    %2355 = vmatprep.subr.mxu0 0.0
    %2356 = vmatpush1.msra.mxu0 0.0
    %2357 = vmatprep.subr.mxu0 0.0
    %2358 = vmatpush1.msra.mxu0 0.0
    %2359 = vmatprep.subr.mxu0 0.0
    %2360 = vmatpush1.msra.mxu0 0.0
    %2361 = vmatprep.subr.mxu0 0.0
    %2362 = vmatpush1.msra.mxu0 0.0
    %2363 = vmatprep.subr.mxu0 0.0
    %2364 = vmatpush1.msra.mxu0 0.0
    %2365 = vmatprep.subr.mxu0 0.0
    %2366 = vmatpush1.msra.mxu0 0.0
    %2367 = vmatprep.mubr.f32.mxu0 0.0
    %2368 = vmatmul.mubr.f32.gmra.mrb[0].mxu0 %v2292
    %v2369 = vpop.f32.mrb[0].mxu0
    %v2370 = vadd.f32 0.0, %v2369
    %v2371 = vpop.f32.mrb[0].mxu0
    %2372 = vmatprep.mubr.f32.mxu0 0.0
    %2373 = vmatmul.mubr.f32.gmra.mrb[0].mxu0 %v2295
    %v2374 = vpop.f32.mrb[0].mxu0
    %v2375 = vadd.f32 0.0, %v2374
    %v2376 = vpop.f32.mrb[0].mxu0
    %2377 = vmatprep.mubr.f32.mxu0 0.0
    %2378 = vmatmul.mubr.f32.gmra.mrb[0].mxu0 %v2298
    %v2379 = vpop.f32.mrb[0].mxu0
    %v2380 = vadd.f32 0.0, %v2379
    %v2381 = vpop.f32.mrb[0].mxu0
    %2382 = vmatprep.mubr.f32.mxu0 0.0
    %2383 = vmatmul.mubr.f32.gmra.mrb[0].mxu0 %v2301
    %v2384 = vpop.f32.mrb[0].mxu0
    %v2385 = vadd.f32 0.0, %v2384
    %v2386 = vpop.f32.mrb[0].mxu0
    %2387 = vdwg.mxu0
    %2388 = vrot.lane.b32.xlu0 %v609, 112
    %v2389 = vpop.permute.xlu0 %2388
    %2390 = vrot.lane.b32.xlu0 %v614, 112
    %v2391 = vpop.permute.xlu0 %2390
    %2392 = vrot.lane.b32.xlu0 %v619, 112
    %v2393 = vpop.permute.xlu0 %2392
    %2394 = vrot.lane.b32.xlu0 %v624, 112
    %v2395 = vpop.permute.xlu0 %2394
    %v2401 = vsel %vm77, %v1936, 0
    %v2404 = vsel %vm77, %v1937, 0
    %v2407 = vsel %vm77, %v1938, 0
    %v2410 = vsel %vm77, %v1939, 0
    %2412 = vmatprep.subr.mxu0 0.0
    %2413 = vmatpush1.msra.mxu0 %v2389
    %2414 = vmatprep.subr.mxu0 0.0
    %2415 = vmatpush1.msra.mxu0 %v2391
    %2416 = vmatprep.subr.mxu0 0.0
    %2417 = vmatpush1.msra.mxu0 %v2393
    %2418 = vmatprep.subr.mxu0 0.0
    %2419 = vmatpush1.msra.mxu0 %v2395
    %2420 = vmatprep.subr.mxu0 0.0
    %2421 = vmatpush1.msra.mxu0 0.0
    %2422 = vmatprep.subr.mxu0 0.0
    %2423 = vmatpush1.msra.mxu0 0.0
    %2424 = vmatprep.subr.mxu0 0.0
    %2425 = vmatpush1.msra.mxu0 0.0
    %2426 = vmatprep.subr.mxu0 0.0
    %2427 = vmatpush1.msra.mxu0 0.0
    %2428 = vmatprep.subr.mxu0 0.0
    %2429 = vmatpush1.msra.mxu0 0.0
    %2430 = vmatprep.subr.mxu0 0.0
    %2431 = vmatpush1.msra.mxu0 0.0
    %2432 = vmatprep.subr.mxu0 0.0
    %2433 = vmatpush1.msra.mxu0 0.0
    %2434 = vmatprep.subr.mxu0 0.0
    %2435 = vmatpush1.msra.mxu0 0.0
    %2436 = vmatprep.subr.mxu0 0.0
    %2437 = vmatpush1.msra.mxu0 0.0
    %2438 = vmatprep.subr.mxu0 0.0
    %2439 = vmatpush1.msra.mxu0 0.0
    %2440 = vmatprep.subr.mxu0 0.0
    %2441 = vmatpush1.msra.mxu0 0.0
    %2442 = vmatprep.subr.mxu0 0.0
    %2443 = vmatpush1.msra.mxu0 0.0
    %2444 = vmatprep.subr.mxu0 0.0
    %2445 = vmatpush1.msra.mxu0 0.0
    %2446 = vmatprep.subr.mxu0 0.0
    %2447 = vmatpush1.msra.mxu0 0.0
    %2448 = vmatprep.subr.mxu0 0.0
    %2449 = vmatpush1.msra.mxu0 0.0
    %2450 = vmatprep.subr.mxu0 0.0
    %2451 = vmatpush1.msra.mxu0 0.0
    %2452 = vmatprep.subr.mxu0 0.0
    %2453 = vmatpush1.msra.mxu0 0.0
    %2454 = vmatprep.subr.mxu0 0.0
    %2455 = vmatpush1.msra.mxu0 0.0
    %2456 = vmatprep.subr.mxu0 0.0
    %2457 = vmatpush1.msra.mxu0 0.0
    %2458 = vmatprep.subr.mxu0 0.0
    %2459 = vmatpush1.msra.mxu0 0.0
    %2460 = vmatprep.subr.mxu0 0.0
    %2461 = vmatpush1.msra.mxu0 0.0
    %2462 = vmatprep.subr.mxu0 0.0
    %2463 = vmatpush1.msra.mxu0 0.0
    %2464 = vmatprep.subr.mxu0 0.0
    %2465 = vmatpush1.msra.mxu0 0.0
    %2466 = vmatprep.subr.mxu0 0.0
    %2467 = vmatpush1.msra.mxu0 0.0
    %2468 = vmatprep.subr.mxu0 0.0
    %2469 = vmatpush1.msra.mxu0 0.0
    %2470 = vmatprep.subr.mxu0 0.0
    %2471 = vmatpush1.msra.mxu0 0.0
    %2472 = vmatprep.subr.mxu0 0.0
    %2473 = vmatpush1.msra.mxu0 0.0
    %2474 = vmatprep.subr.mxu0 0.0
    %2475 = vmatpush1.msra.mxu0 0.0
    %2476 = vmatprep.mubr.f32.mxu0 0.0
    %2477 = vmatmul.mubr.f32.gmra.mrb[0].mxu0 %v2401
    %v2478 = vpop.f32.mrb[0].mxu0
    %v2479 = vadd.f32 0.0, %v2478
    %v2480 = vpop.f32.mrb[0].mxu0
    %2481 = vmatprep.mubr.f32.mxu0 0.0
    %2482 = vmatmul.mubr.f32.gmra.mrb[0].mxu0 %v2404
    %v2483 = vpop.f32.mrb[0].mxu0
    %v2484 = vadd.f32 0.0, %v2483
    %v2485 = vpop.f32.mrb[0].mxu0
    %2486 = vmatprep.mubr.f32.mxu0 0.0
    %2487 = vmatmul.mubr.f32.gmra.mrb[0].mxu0 %v2407
    %v2488 = vpop.f32.mrb[0].mxu0
    %v2489 = vadd.f32 0.0, %v2488
    %v2490 = vpop.f32.mrb[0].mxu0
    %2491 = vmatprep.mubr.f32.mxu0 0.0
    %2492 = vmatmul.mubr.f32.gmra.mrb[0].mxu0 %v2410
    %v2493 = vpop.f32.mrb[0].mxu0
    %v2494 = vadd.f32 0.0, %v2493
    %v2495 = vpop.f32.mrb[0].mxu0
    %2496 = vdwg.mxu0
    %2497 = vrot.lane.b32.xlu0 %v676, 112
    %v2498 = vpop.permute.xlu0 %2497
    %2499 = vrot.lane.b32.xlu0 %v678, 112
    %v2500 = vpop.permute.xlu0 %2499
    %2501 = vrot.lane.b32.xlu0 %v680, 112
    %v2502 = vpop.permute.xlu0 %2501
    %2503 = vrot.lane.b32.xlu0 %v682, 112
    %v2504 = vpop.permute.xlu0 %2503
    %v2510 = vsel %vm77, %v1940, 0
    %v2513 = vsel %vm77, %v1941, 0
    %v2516 = vsel %vm77, %v1942, 0
    %v2519 = vsel %vm77, %v1943, 0
    %2521 = vmatprep.subr.mxu0 0.0
    %2522 = vmatpush1.msra.mxu0 %v2498
    %2523 = vmatprep.subr.mxu0 0.0
    %2524 = vmatpush1.msra.mxu0 %v2500
    %2525 = vmatprep.subr.mxu0 0.0
    %2526 = vmatpush1.msra.mxu0 %v2502
    %2527 = vmatprep.subr.mxu0 0.0
    %2528 = vmatpush1.msra.mxu0 %v2504
    %2529 = vmatprep.subr.mxu0 0.0
    %2530 = vmatpush1.msra.mxu0 0.0
    %2531 = vmatprep.subr.mxu0 0.0
    %2532 = vmatpush1.msra.mxu0 0.0
    %2533 = vmatprep.subr.mxu0 0.0
    %2534 = vmatpush1.msra.mxu0 0.0
    %2535 = vmatprep.subr.mxu0 0.0
    %2536 = vmatpush1.msra.mxu0 0.0
    %2537 = vmatprep.subr.mxu0 0.0
    %2538 = vmatpush1.msra.mxu0 0.0
    %2539 = vmatprep.subr.mxu0 0.0
    %2540 = vmatpush1.msra.mxu0 0.0
    %2541 = vmatprep.subr.mxu0 0.0
    %2542 = vmatpush1.msra.mxu0 0.0
    %2543 = vmatprep.subr.mxu0 0.0
    %2544 = vmatpush1.msra.mxu0 0.0
    %2545 = vmatprep.subr.mxu0 0.0
    %2546 = vmatpush1.msra.mxu0 0.0
    %2547 = vmatprep.subr.mxu0 0.0
    %2548 = vmatpush1.msra.mxu0 0.0
    %2549 = vmatprep.subr.mxu0 0.0
    %2550 = vmatpush1.msra.mxu0 0.0
    %2551 = vmatprep.subr.mxu0 0.0
    %2552 = vmatpush1.msra.mxu0 0.0
    %2553 = vmatprep.subr.mxu0 0.0
    %2554 = vmatpush1.msra.mxu0 0.0
    %2555 = vmatprep.subr.mxu0 0.0
    %2556 = vmatpush1.msra.mxu0 0.0
    %2557 = vmatprep.subr.mxu0 0.0
    %2558 = vmatpush1.msra.mxu0 0.0
    %2559 = vmatprep.subr.mxu0 0.0
    %2560 = vmatpush1.msra.mxu0 0.0
    %2561 = vmatprep.subr.mxu0 0.0
    %2562 = vmatpush1.msra.mxu0 0.0
    %2563 = vmatprep.subr.mxu0 0.0
    %2564 = vmatpush1.msra.mxu0 0.0
    %2565 = vmatprep.subr.mxu0 0.0
    %2566 = vmatpush1.msra.mxu0 0.0
    %2567 = vmatprep.subr.mxu0 0.0
    %2568 = vmatpush1.msra.mxu0 0.0
    %2569 = vmatprep.subr.mxu0 0.0
    %2570 = vmatpush1.msra.mxu0 0.0
    %2571 = vmatprep.subr.mxu0 0.0
    %2572 = vmatpush1.msra.mxu0 0.0
    %2573 = vmatprep.subr.mxu0 0.0
    %2574 = vmatpush1.msra.mxu0 0.0
    %2575 = vmatprep.subr.mxu0 0.0
    %2576 = vmatpush1.msra.mxu0 0.0
    %2577 = vmatprep.subr.mxu0 0.0
    %2578 = vmatpush1.msra.mxu0 0.0
    %2579 = vmatprep.subr.mxu0 0.0
    %2580 = vmatpush1.msra.mxu0 0.0
    %2581 = vmatprep.subr.mxu0 0.0
    %2582 = vmatpush1.msra.mxu0 0.0
    %2583 = vmatprep.subr.mxu0 0.0
    %2584 = vmatpush1.msra.mxu0 0.0
    %2585 = vmatprep.mubr.f32.mxu0 0.0
    %2586 = vmatmul.mubr.f32.gmra.mrb[0].mxu0 %v2510
    %v2587 = vpop.f32.mrb[0].mxu0
    %v2588 = vadd.f32 0.0, %v2587
    %v2589 = vpop.f32.mrb[0].mxu0
    %2590 = vmatprep.mubr.f32.mxu0 0.0
    %2591 = vmatmul.mubr.f32.gmra.mrb[0].mxu0 %v2513
    %v2592 = vpop.f32.mrb[0].mxu0
    %v2593 = vadd.f32 0.0, %v2592
    %v2594 = vpop.f32.mrb[0].mxu0
    %2595 = vmatprep.mubr.f32.mxu0 0.0
    %2596 = vmatmul.mubr.f32.gmra.mrb[0].mxu0 %v2516
    %v2597 = vpop.f32.mrb[0].mxu0
    %v2598 = vadd.f32 0.0, %v2597
    %v2599 = vpop.f32.mrb[0].mxu0
    %2600 = vmatprep.mubr.f32.mxu0 0.0
    %2601 = vmatmul.mubr.f32.gmra.mrb[0].mxu0 %v2519
    %v2602 = vpop.f32.mrb[0].mxu0
    %v2603 = vadd.f32 0.0, %v2602
    %v2604 = vpop.f32.mrb[0].mxu0
    %2605 = vdwg.mxu0
    %2606 = vrot.lane.b32.xlu0 %v629, 112
    %v2607 = vpop.permute.xlu0 %2606
    %2608 = vrot.lane.b32.xlu0 %v634, 112
    %v2609 = vpop.permute.xlu0 %2608
    %2610 = vrot.lane.b32.xlu0 %v639, 112
    %v2611 = vpop.permute.xlu0 %2610
    %2612 = vrot.lane.b32.xlu0 %v644, 112
    %v2613 = vpop.permute.xlu0 %2612
    %v2619 = vsel %vm77, %v1944, 0
    %v2622 = vsel %vm77, %v1945, 0
    %v2625 = vsel %vm77, %v1946, 0
    %v2628 = vsel %vm77, %v1947, 0
    %2630 = vmatprep.subr.mxu0 0.0
    %2631 = vmatpush1.msra.mxu0 %v2607
    %2632 = vmatprep.subr.mxu0 0.0
    %2633 = vmatpush1.msra.mxu0 %v2609
    %2634 = vmatprep.subr.mxu0 0.0
    %2635 = vmatpush1.msra.mxu0 %v2611
    %2636 = vmatprep.subr.mxu0 0.0
    %2637 = vmatpush1.msra.mxu0 %v2613
    %2638 = vmatprep.subr.mxu0 0.0
    %2639 = vmatpush1.msra.mxu0 0.0
    %2640 = vmatprep.subr.mxu0 0.0
    %2641 = vmatpush1.msra.mxu0 0.0
    %2642 = vmatprep.subr.mxu0 0.0
    %2643 = vmatpush1.msra.mxu0 0.0
    %2644 = vmatprep.subr.mxu0 0.0
    %2645 = vmatpush1.msra.mxu0 0.0
    %2646 = vmatprep.subr.mxu0 0.0
    %2647 = vmatpush1.msra.mxu0 0.0
    %2648 = vmatprep.subr.mxu0 0.0
    %2649 = vmatpush1.msra.mxu0 0.0
    %2650 = vmatprep.subr.mxu0 0.0
    %2651 = vmatpush1.msra.mxu0 0.0
    %2652 = vmatprep.subr.mxu0 0.0
    %2653 = vmatpush1.msra.mxu0 0.0
    %2654 = vmatprep.subr.mxu0 0.0
    %2655 = vmatpush1.msra.mxu0 0.0
    %2656 = vmatprep.subr.mxu0 0.0
    %2657 = vmatpush1.msra.mxu0 0.0
    %2658 = vmatprep.subr.mxu0 0.0
    %2659 = vmatpush1.msra.mxu0 0.0
    %2660 = vmatprep.subr.mxu0 0.0
    %2661 = vmatpush1.msra.mxu0 0.0
    %2662 = vmatprep.subr.mxu0 0.0
    %2663 = vmatpush1.msra.mxu0 0.0
    %2664 = vmatprep.subr.mxu0 0.0
    %2665 = vmatpush1.msra.mxu0 0.0
    %2666 = vmatprep.subr.mxu0 0.0
    %2667 = vmatpush1.msra.mxu0 0.0
    %2668 = vmatprep.subr.mxu0 0.0
    %2669 = vmatpush1.msra.mxu0 0.0
    %2670 = vmatprep.subr.mxu0 0.0
    %2671 = vmatpush1.msra.mxu0 0.0
    %2672 = vmatprep.subr.mxu0 0.0
    %2673 = vmatpush1.msra.mxu0 0.0
    %2674 = vmatprep.subr.mxu0 0.0
    %2675 = vmatpush1.msra.mxu0 0.0
    %2676 = vmatprep.subr.mxu0 0.0
    %2677 = vmatpush1.msra.mxu0 0.0
    %2678 = vmatprep.subr.mxu0 0.0
    %2679 = vmatpush1.msra.mxu0 0.0
    %2680 = vmatprep.subr.mxu0 0.0
    %2681 = vmatpush1.msra.mxu0 0.0
    %2682 = vmatprep.subr.mxu0 0.0
    %2683 = vmatpush1.msra.mxu0 0.0
    %2684 = vmatprep.subr.mxu0 0.0
    %2685 = vmatpush1.msra.mxu0 0.0
    %2686 = vmatprep.subr.mxu0 0.0
    %2687 = vmatpush1.msra.mxu0 0.0
    %2688 = vmatprep.subr.mxu0 0.0
    %2689 = vmatpush1.msra.mxu0 0.0
    %2690 = vmatprep.subr.mxu0 0.0
    %2691 = vmatpush1.msra.mxu0 0.0
    %2692 = vmatprep.subr.mxu0 0.0
    %2693 = vmatpush1.msra.mxu0 0.0
    %2694 = vmatprep.mubr.f32.mxu0 0.0
    %2695 = vmatmul.mubr.f32.gmra.mrb[0].mxu0 %v2619
    %v2696 = vpop.f32.mrb[0].mxu0
    %v2697 = vadd.f32 0.0, %v2696
    %v2698 = vpop.f32.mrb[0].mxu0
    %2699 = vmatprep.mubr.f32.mxu0 0.0
    %2700 = vmatmul.mubr.f32.gmra.mrb[0].mxu0 %v2622
    %v2701 = vpop.f32.mrb[0].mxu0
    %v2702 = vadd.f32 0.0, %v2701
    %v2703 = vpop.f32.mrb[0].mxu0
    %2704 = vmatprep.mubr.f32.mxu0 0.0
    %2705 = vmatmul.mubr.f32.gmra.mrb[0].mxu0 %v2625
    %v2706 = vpop.f32.mrb[0].mxu0
    %v2707 = vadd.f32 0.0, %v2706
    %v2708 = vpop.f32.mrb[0].mxu0
    %2709 = vmatprep.mubr.f32.mxu0 0.0
    %2710 = vmatmul.mubr.f32.gmra.mrb[0].mxu0 %v2628
    %v2711 = vpop.f32.mrb[0].mxu0
    %v2712 = vadd.f32 0.0, %v2711
    %v2713 = vpop.f32.mrb[0].mxu0
    %2714 = vdwg.mxu0
    %2715 = vrot.lane.b32.xlu0 %v688, 112
    %v2716 = vpop.permute.xlu0 %2715
    %2717 = vrot.lane.b32.xlu0 %v690, 112
    %v2718 = vpop.permute.xlu0 %2717
    %2719 = vrot.lane.b32.xlu0 %v692, 112
    %v2720 = vpop.permute.xlu0 %2719
    %2721 = vrot.lane.b32.xlu0 %v694, 112
    %v2722 = vpop.permute.xlu0 %2721
    %v2728 = vsel %vm77, %v1948, 0
    %v2731 = vsel %vm77, %v1949, 0
    %v2734 = vsel %vm77, %v1950, 0
    %v2737 = vsel %vm77, %v1951, 0
    %2739 = vmatprep.subr.mxu0 0.0
    %2740 = vmatpush1.msra.mxu0 %v2716
    %2741 = vmatprep.subr.mxu0 0.0
    %2742 = vmatpush1.msra.mxu0 %v2718
    %2743 = vmatprep.subr.mxu0 0.0
    %2744 = vmatpush1.msra.mxu0 %v2720
    %2745 = vmatprep.subr.mxu0 0.0
    %2746 = vmatpush1.msra.mxu0 %v2722
    %2747 = vmatprep.subr.mxu0 0.0
    %2748 = vmatpush1.msra.mxu0 0.0
    %2749 = vmatprep.subr.mxu0 0.0
    %2750 = vmatpush1.msra.mxu0 0.0
    %2751 = vmatprep.subr.mxu0 0.0
    %2752 = vmatpush1.msra.mxu0 0.0
    %2753 = vmatprep.subr.mxu0 0.0
    %2754 = vmatpush1.msra.mxu0 0.0
    %2755 = vmatprep.subr.mxu0 0.0
    %2756 = vmatpush1.msra.mxu0 0.0
    %2757 = vmatprep.subr.mxu0 0.0
    %2758 = vmatpush1.msra.mxu0 0.0
    %2759 = vmatprep.subr.mxu0 0.0
    %2760 = vmatpush1.msra.mxu0 0.0
    %2761 = vmatprep.subr.mxu0 0.0
    %2762 = vmatpush1.msra.mxu0 0.0
    %2763 = vmatprep.subr.mxu0 0.0
    %2764 = vmatpush1.msra.mxu0 0.0
    %2765 = vmatprep.subr.mxu0 0.0
    %2766 = vmatpush1.msra.mxu0 0.0
    %2767 = vmatprep.subr.mxu0 0.0
    %2768 = vmatpush1.msra.mxu0 0.0
    %2769 = vmatprep.subr.mxu0 0.0
    %2770 = vmatpush1.msra.mxu0 0.0
    %2771 = vmatprep.subr.mxu0 0.0
    %2772 = vmatpush1.msra.mxu0 0.0
    %2773 = vmatprep.subr.mxu0 0.0
    %2774 = vmatpush1.msra.mxu0 0.0
    %2775 = vmatprep.subr.mxu0 0.0
    %2776 = vmatpush1.msra.mxu0 0.0
    %2777 = vmatprep.subr.mxu0 0.0
    %2778 = vmatpush1.msra.mxu0 0.0
    %2779 = vmatprep.subr.mxu0 0.0
    %2780 = vmatpush1.msra.mxu0 0.0
    %2781 = vmatprep.subr.mxu0 0.0
    %2782 = vmatpush1.msra.mxu0 0.0
    %2783 = vmatprep.subr.mxu0 0.0
    %2784 = vmatpush1.msra.mxu0 0.0
    %2785 = vmatprep.subr.mxu0 0.0
    %2786 = vmatpush1.msra.mxu0 0.0
    %2787 = vmatprep.subr.mxu0 0.0
    %2788 = vmatpush1.msra.mxu0 0.0
    %2789 = vmatprep.subr.mxu0 0.0
    %2790 = vmatpush1.msra.mxu0 0.0
    %2791 = vmatprep.subr.mxu0 0.0
    %2792 = vmatpush1.msra.mxu0 0.0
    %2793 = vmatprep.subr.mxu0 0.0
    %2794 = vmatpush1.msra.mxu0 0.0
    %2795 = vmatprep.subr.mxu0 0.0
    %2796 = vmatpush1.msra.mxu0 0.0
    %2797 = vmatprep.subr.mxu0 0.0
    %2798 = vmatpush1.msra.mxu0 0.0
    %2799 = vmatprep.subr.mxu0 0.0
    %2800 = vmatpush1.msra.mxu0 0.0
    %2801 = vmatprep.subr.mxu0 0.0
    %2802 = vmatpush1.msra.mxu0 0.0
    %2803 = vmatprep.mubr.f32.mxu0 0.0
    %2804 = vmatmul.mubr.f32.gmra.mrb[0].mxu0 %v2728
    %v2805 = vpop.f32.mrb[0].mxu0
    %v2806 = vadd.f32 0.0, %v2805
    %v2807 = vpop.f32.mrb[0].mxu0
    %2808 = vmatprep.mubr.f32.mxu0 0.0
    %2809 = vmatmul.mubr.f32.gmra.mrb[0].mxu0 %v2731
    %v2810 = vpop.f32.mrb[0].mxu0
    %v2811 = vadd.f32 0.0, %v2810
    %v2812 = vpop.f32.mrb[0].mxu0
    %2813 = vmatprep.mubr.f32.mxu0 0.0
    %2814 = vmatmul.mubr.f32.gmra.mrb[0].mxu0 %v2734
    %v2815 = vpop.f32.mrb[0].mxu0
    %v2816 = vadd.f32 0.0, %v2815
    %v2817 = vpop.f32.mrb[0].mxu0
    %2818 = vmatprep.mubr.f32.mxu0 0.0
    %2819 = vmatmul.mubr.f32.gmra.mrb[0].mxu0 %v2737
    %v2820 = vpop.f32.mrb[0].mxu0
    %v2821 = vadd.f32 0.0, %v2820
    %v2822 = vpop.f32.mrb[0].mxu0
    %2823 = vdwg.mxu0
    %2828 = vrot.lane.b32.xlu0 %v2152, 4
    %v2829 = vpop.permute.xlu0 %2828
    %2830 = vrot.lane.b32.xlu0 %v2157, 4
    %v2831 = vpop.permute.xlu0 %2830
    %2832 = vrot.lane.b32.xlu0 %v2162, 4
    %v2833 = vpop.permute.xlu0 %2832
    %2834 = vrot.lane.b32.xlu0 %v2167, 4
    %v2835 = vpop.permute.xlu0 %2834
    %v2840 = vsel %vm703, %v2043, %v2829
    %v2841 = vsel %vm703, %v2048, %v2831
    %v2842 = vsel %vm703, %v2053, %v2833
    %v2843 = vsel %vm703, %v2058, %v2835
    %2848 = vrot.lane.b32.xlu0 %v2370, 4
    %v2849 = vpop.permute.xlu0 %2848
    %2850 = vrot.lane.b32.xlu0 %v2375, 4
    %v2851 = vpop.permute.xlu0 %2850
    %2852 = vrot.lane.b32.xlu0 %v2380, 4
    %v2853 = vpop.permute.xlu0 %2852
    %2854 = vrot.lane.b32.xlu0 %v2385, 4
    %v2855 = vpop.permute.xlu0 %2854
    %v2860 = vsel %vm703, %v2261, %v2849
    %v2861 = vsel %vm703, %v2266, %v2851
    %v2862 = vsel %vm703, %v2271, %v2853
    %v2863 = vsel %vm703, %v2276, %v2855
    %2868 = vrot.lane.b32.xlu0 %v2588, 4
    %v2869 = vpop.permute.xlu0 %2868
    %2870 = vrot.lane.b32.xlu0 %v2593, 4
    %v2871 = vpop.permute.xlu0 %2870
    %2872 = vrot.lane.b32.xlu0 %v2598, 4
    %v2873 = vpop.permute.xlu0 %2872
    %2874 = vrot.lane.b32.xlu0 %v2603, 4
    %v2875 = vpop.permute.xlu0 %2874
    %v2880 = vsel %vm703, %v2479, %v2869
    %v2881 = vsel %vm703, %v2484, %v2871
    %v2882 = vsel %vm703, %v2489, %v2873
    %v2883 = vsel %vm703, %v2494, %v2875
    %2888 = vrot.lane.b32.xlu0 %v2806, 4
    %v2889 = vpop.permute.xlu0 %2888
    %2890 = vrot.lane.b32.xlu0 %v2811, 4
    %v2891 = vpop.permute.xlu0 %2890
    %2892 = vrot.lane.b32.xlu0 %v2816, 4
    %v2893 = vpop.permute.xlu0 %2892
    %2894 = vrot.lane.b32.xlu0 %v2821, 4
    %v2895 = vpop.permute.xlu0 %2894
    %v2900 = vsel %vm703, %v2697, %v2889
    %v2901 = vsel %vm703, %v2702, %v2891
    %v2902 = vsel %vm703, %v2707, %v2893
    %v2903 = vsel %vm703, %v2712, %v2895
    %v2904 = vld [vmem:[%s4] sm:$0xff]
    %2905 = vrot.lane.b32.xlu0 %v451, 104
    %v2906 = vpop.permute.xlu0 %2905
    %v2909 = vsel %vm453, %v2840, 0
    %v2912 = vsel %vm453, %v2841, 0
    %v2915 = vsel %vm453, %v2842, 0
    %v2918 = vsel %vm453, %v2843, 0
    %v2921 = vsel %vm453, %v2860, 0
    %v2924 = vsel %vm453, %v2861, 0
    %v2927 = vsel %vm453, %v2862, 0
    %v2930 = vsel %vm453, %v2863, 0
    %v2933 = vsel %vm453, %v2880, 0
    %v2936 = vsel %vm453, %v2881, 0
    %v2939 = vsel %vm453, %v2882, 0
    %v2942 = vsel %vm453, %v2883, 0
    %v2945 = vsel %vm453, %v2900, 0
    %v2948 = vsel %vm453, %v2901, 0
    %v2951 = vsel %vm453, %v2902, 0
    %v2954 = vsel %vm453, %v2903, 0
    %2956 = vmatprep.subr.mxu0 0.0
    %2957 = vmatpush1.msra.mxu0 %v2904
    %2958 = vmatprep.subr.mxu0 0.0
    %2959 = vmatpush1.msra.mxu0 0.0
    %2960 = vmatprep.subr.mxu0 0.0
    %2961 = vmatpush1.msra.mxu0 0.0
    %2962 = vmatprep.subr.mxu0 0.0
    %2963 = vmatpush1.msra.mxu0 0.0
    %2964 = vmatprep.subr.mxu0 0.0
    %2965 = vmatpush1.msra.mxu0 0.0
    %2966 = vmatprep.subr.mxu0 0.0
    %2967 = vmatpush1.msra.mxu0 0.0
    %2968 = vmatprep.subr.mxu0 0.0
    %2969 = vmatpush1.msra.mxu0 0.0
    %2970 = vmatprep.subr.mxu0 0.0
    %2971 = vmatpush1.msra.mxu0 0.0
    %2972 = vmatprep.subr.mxu0 0.0
    %2973 = vmatpush1.msra.mxu0 0.0
    %2974 = vmatprep.subr.mxu0 0.0
    %2975 = vmatpush1.msra.mxu0 0.0
    %2976 = vmatprep.subr.mxu0 0.0
    %2977 = vmatpush1.msra.mxu0 0.0
    %2978 = vmatprep.subr.mxu0 0.0
    %2979 = vmatpush1.msra.mxu0 0.0
    %2980 = vmatprep.subr.mxu0 0.0
    %2981 = vmatpush1.msra.mxu0 0.0
    %2982 = vmatprep.subr.mxu0 0.0
    %2983 = vmatpush1.msra.mxu0 0.0
    %2984 = vmatprep.subr.mxu0 0.0
    %2985 = vmatpush1.msra.mxu0 0.0
    %2986 = vmatprep.subr.mxu0 0.0
    %2987 = vmatpush1.msra.mxu0 0.0
    %2988 = vmatprep.subr.mxu0 0.0
    %2989 = vmatpush1.msra.mxu0 0.0
    %2990 = vmatprep.subr.mxu0 0.0
    %2991 = vmatpush1.msra.mxu0 0.0
    %2992 = vmatprep.subr.mxu0 0.0
    %2993 = vmatpush1.msra.mxu0 0.0
    %2994 = vmatprep.subr.mxu0 0.0
    %2995 = vmatpush1.msra.mxu0 0.0
    %2996 = vmatprep.subr.mxu0 0.0
    %2997 = vmatpush1.msra.mxu0 0.0
    %2998 = vmatprep.subr.mxu0 0.0
    %2999 = vmatpush1.msra.mxu0 0.0
    %3000 = vmatprep.subr.mxu0 0.0
    %3001 = vmatpush1.msra.mxu0 0.0
    %3002 = vmatprep.subr.mxu0 0.0
    %3003 = vmatpush1.msra.mxu0 0.0
    %3004 = vmatprep.subr.mxu0 0.0
    %3005 = vmatpush1.msra.mxu0 0.0
    %3006 = vmatprep.subr.mxu0 0.0
    %3007 = vmatpush1.msra.mxu0 0.0
    %3008 = vmatprep.subr.mxu0 0.0
    %3009 = vmatpush1.msra.mxu0 0.0
    %3010 = vmatprep.subr.mxu0 0.0
    %3011 = vmatpush1.msra.mxu0 0.0
    %3012 = vmatprep.subr.mxu0 0.0
    %3013 = vmatpush1.msra.mxu0 0.0
    %3014 = vmatprep.subr.mxu0 0.0
    %3015 = vmatpush1.msra.mxu0 0.0
    %3016 = vmatprep.subr.mxu0 0.0
    %3017 = vmatpush1.msra.mxu0 0.0
    %3018 = vmatprep.subr.mxu0 0.0
    %3019 = vmatpush1.msra.mxu0 0.0
    %3020 = vmatprep.mubr.f32.mxu0 0.0
    %3021 = vmatmul.mubr.f32.gmra.mrb[0].mxu0 %v2909
    %v3022 = vpop.f32.mrb[0].mxu0
    %v3023 = vadd.f32 %v2906, %v3022
    %v3024 = vpop.f32.mrb[0].mxu0
    %3025 = vmatprep.mubr.f32.mxu0 0.0
    %3026 = vmatmul.mubr.f32.gmra.mrb[0].mxu0 %v2912
    %v3027 = vpop.f32.mrb[0].mxu0
    %v3028 = vadd.f32 %v2906, %v3027
    %v3029 = vpop.f32.mrb[0].mxu0
    %3030 = vmatprep.mubr.f32.mxu0 0.0
    %3031 = vmatmul.mubr.f32.gmra.mrb[0].mxu0 %v2915
    %v3032 = vpop.f32.mrb[0].mxu0
    %v3033 = vadd.f32 %v2906, %v3032
    %v3034 = vpop.f32.mrb[0].mxu0
    %3035 = vmatprep.mubr.f32.mxu0 0.0
    %3036 = vmatmul.mubr.f32.gmra.mrb[0].mxu0 %v2918
    %v3037 = vpop.f32.mrb[0].mxu0
    %v3038 = vadd.f32 %v2906, %v3037
    %v3039 = vpop.f32.mrb[0].mxu0
    %3040 = vmatprep.mubr.f32.mxu0 0.0
    %3041 = vmatmul.mubr.f32.gmra.mrb[0].mxu0 %v2921
    %v3042 = vpop.f32.mrb[0].mxu0
    %v3043 = vadd.f32 %v2906, %v3042
    %v3044 = vpop.f32.mrb[0].mxu0
    %3045 = vmatprep.mubr.f32.mxu0 0.0
    %3046 = vmatmul.mubr.f32.gmra.mrb[0].mxu0 %v2924
    %v3047 = vpop.f32.mrb[0].mxu0
    %v3048 = vadd.f32 %v2906, %v3047
    %v3049 = vpop.f32.mrb[0].mxu0
    %3050 = vmatprep.mubr.f32.mxu0 0.0
    %3051 = vmatmul.mubr.f32.gmra.mrb[0].mxu0 %v2927
    %v3052 = vpop.f32.mrb[0].mxu0
    %v3053 = vadd.f32 %v2906, %v3052
    %v3054 = vpop.f32.mrb[0].mxu0
    %3055 = vmatprep.mubr.f32.mxu0 0.0
    %3056 = vmatmul.mubr.f32.gmra.mrb[0].mxu0 %v2930
    %v3057 = vpop.f32.mrb[0].mxu0
    %v3058 = vadd.f32 %v2906, %v3057
    %v3059 = vpop.f32.mrb[0].mxu0
    %3060 = vmatprep.mubr.f32.mxu0 0.0
    %3061 = vmatmul.mubr.f32.gmra.mrb[0].mxu0 %v2933
    %v3062 = vpop.f32.mrb[0].mxu0
    %v3063 = vadd.f32 %v2906, %v3062
    %v3064 = vpop.f32.mrb[0].mxu0
    %3065 = vmatprep.mubr.f32.mxu0 0.0
    %3066 = vmatmul.mubr.f32.gmra.mrb[0].mxu0 %v2936
    %v3067 = vpop.f32.mrb[0].mxu0
    %v3068 = vadd.f32 %v2906, %v3067
    %v3069 = vpop.f32.mrb[0].mxu0
    %3070 = vmatprep.mubr.f32.mxu0 0.0
    %3071 = vmatmul.mubr.f32.gmra.mrb[0].mxu0 %v2939
    %v3072 = vpop.f32.mrb[0].mxu0
    %v3073 = vadd.f32 %v2906, %v3072
    %v3074 = vpop.f32.mrb[0].mxu0
    %3075 = vmatprep.mubr.f32.mxu0 0.0
    %3076 = vmatmul.mubr.f32.gmra.mrb[0].mxu0 %v2942
    %v3077 = vpop.f32.mrb[0].mxu0
    %v3078 = vadd.f32 %v2906, %v3077
    %v3079 = vpop.f32.mrb[0].mxu0
    %3080 = vmatprep.mubr.f32.mxu0 0.0
    %3081 = vmatmul.mubr.f32.gmra.mrb[0].mxu0 %v2945
    %v3082 = vpop.f32.mrb[0].mxu0
    %v3083 = vadd.f32 %v2906, %v3082
    %v3084 = vpop.f32.mrb[0].mxu0
    %3085 = vmatprep.mubr.f32.mxu0 0.0
    %3086 = vmatmul.mubr.f32.gmra.mrb[0].mxu0 %v2948
    %v3087 = vpop.f32.mrb[0].mxu0
    %v3088 = vadd.f32 %v2906, %v3087
    %v3089 = vpop.f32.mrb[0].mxu0
    %3090 = vmatprep.mubr.f32.mxu0 0.0
    %3091 = vmatmul.mubr.f32.gmra.mrb[0].mxu0 %v2951
    %v3092 = vpop.f32.mrb[0].mxu0
    %v3093 = vadd.f32 %v2906, %v3092
    %v3094 = vpop.f32.mrb[0].mxu0
    %3095 = vmatprep.mubr.f32.mxu0 0.0
    %3096 = vmatmul.mubr.f32.gmra.mrb[0].mxu0 %v2954
    %v3097 = vpop.f32.mrb[0].mxu0
    %v3098 = vadd.f32 %v2906, %v3097
    %v3099 = vpop.f32.mrb[0].mxu0
    %3100 = vdwg.mxu0
    %v3101 = vadd.f32 %v157, %v3023
    %v3102 = vadd.f32 %v162, %v3028
    %v3103 = vadd.f32 %v167, %v3033
    %v3104 = vadd.f32 %v172, %v3038
    %v3105 = vadd.f32 %v247, %v3043
    %v3106 = vadd.f32 %v252, %v3048
    %v3107 = vadd.f32 %v257, %v3053
    %v3108 = vadd.f32 %v262, %v3058
    %v3109 = vadd.f32 %v337, %v3063
    %v3110 = vadd.f32 %v342, %v3068
    %v3111 = vadd.f32 %v347, %v3073
    %v3112 = vadd.f32 %v352, %v3078
    %v3113 = vadd.f32 %v427, %v3083
    %v3114 = vadd.f32 %v432, %v3088
    %v3115 = vadd.f32 %v437, %v3093
    %v3116 = vadd.f32 %v442, %v3098
    %v3117 = vsel %vm453, %v3101, 0.0
    %3118 = vadd.xlane.f32.xlu0 %v3117
    %v3119 = vpop.xlane.xlu0 %3118
    %v3120 = vsel %vm453, %v3102, 0.0
    %3121 = vadd.xlane.f32.xlu0 %v3120
    %v3122 = vpop.xlane.xlu0 %3121
    %v3123 = vsel %vm453, %v3103, 0.0
    %3124 = vadd.xlane.f32.xlu0 %v3123
    %v3125 = vpop.xlane.xlu0 %3124
    %v3126 = vsel %vm453, %v3104, 0.0
    %3127 = vadd.xlane.f32.xlu0 %v3126
    %v3128 = vpop.xlane.xlu0 %3127
    %v3129 = vsel %vm453, %v3105, 0.0
    %3130 = vadd.xlane.f32.xlu0 %v3129
    %v3131 = vpop.xlane.xlu0 %3130
    %v3132 = vsel %vm453, %v3106, 0.0
    %3133 = vadd.xlane.f32.xlu0 %v3132
    %v3134 = vpop.xlane.xlu0 %3133
    %v3135 = vsel %vm453, %v3107, 0.0
    %3136 = vadd.xlane.f32.xlu0 %v3135
    %v3137 = vpop.xlane.xlu0 %3136
    %v3138 = vsel %vm453, %v3108, 0.0
    %3139 = vadd.xlane.f32.xlu0 %v3138
    %v3140 = vpop.xlane.xlu0 %3139
    %v3141 = vsel %vm453, %v3109, 0.0
    %3142 = vadd.xlane.f32.xlu0 %v3141
    %v3143 = vpop.xlane.xlu0 %3142
    %v3144 = vsel %vm453, %v3110, 0.0
    %3145 = vadd.xlane.f32.xlu0 %v3144
    %v3146 = vpop.xlane.xlu0 %3145
    %v3147 = vsel %vm453, %v3111, 0.0
    %3148 = vadd.xlane.f32.xlu0 %v3147
    %v3149 = vpop.xlane.xlu0 %3148
    %v3150 = vsel %vm453, %v3112, 0.0
    %3151 = vadd.xlane.f32.xlu0 %v3150
    %v3152 = vpop.xlane.xlu0 %3151
    %v3153 = vsel %vm453, %v3113, 0.0
    %3154 = vadd.xlane.f32.xlu0 %v3153
    %v3155 = vpop.xlane.xlu0 %3154
    %v3156 = vsel %vm453, %v3114, 0.0
    %3157 = vadd.xlane.f32.xlu0 %v3156
    %v3158 = vpop.xlane.xlu0 %3157
    %v3159 = vsel %vm453, %v3115, 0.0
    %3160 = vadd.xlane.f32.xlu0 %v3159
    %v3161 = vpop.xlane.xlu0 %3160
    %v3162 = vsel %vm453, %v3116, 0.0
    %3163 = vadd.xlane.f32.xlu0 %v3162
    %v3164 = vpop.xlane.xlu0 %3163
    %v3165 = vrcp.pop 8.0
    %v3166 = vmul.f32 %v3119, %v3165
    %v3167 = vmul.f32 %v3122, %v3165
    %v3168 = vmul.f32 %v3125, %v3165
    %v3169 = vmul.f32 %v3128, %v3165
    %v3170 = vmul.f32 %v3131, %v3165
    %v3171 = vmul.f32 %v3134, %v3165
    %v3172 = vmul.f32 %v3137, %v3165
    %v3173 = vmul.f32 %v3140, %v3165
    %v3174 = vmul.f32 %v3143, %v3165
    %v3175 = vmul.f32 %v3146, %v3165
    %v3176 = vmul.f32 %v3149, %v3165
    %v3177 = vmul.f32 %v3152, %v3165
    %v3178 = vmul.f32 %v3155, %v3165
    %v3179 = vmul.f32 %v3158, %v3165
    %v3180 = vmul.f32 %v3161, %v3165
    %v3181 = vmul.f32 %v3164, %v3165
    %v3182 = vsub.f32 %v3101, %v3166
    %v3183 = vsub.f32 %v3102, %v3167
    %v3184 = vsub.f32 %v3103, %v3168
    %v3185 = vsub.f32 %v3104, %v3169
    %v3186 = vsub.f32 %v3105, %v3170
    %v3187 = vsub.f32 %v3106, %v3171
    %v3188 = vsub.f32 %v3107, %v3172
    %v3189 = vsub.f32 %v3108, %v3173
    %v3190 = vsub.f32 %v3109, %v3174
    %v3191 = vsub.f32 %v3110, %v3175
    %v3192 = vsub.f32 %v3111, %v3176
    %v3193 = vsub.f32 %v3112, %v3177
    %v3194 = vsub.f32 %v3113, %v3178
    %v3195 = vsub.f32 %v3114, %v3179
    %v3196 = vsub.f32 %v3115, %v3180
    %v3197 = vsub.f32 %v3116, %v3181
    %v3198 = vmul.f32 %v3182, %v3182
    %v3199 = vmul.f32 %v3183, %v3183
    %v3200 = vmul.f32 %v3184, %v3184
    %v3201 = vmul.f32 %v3185, %v3185
    %v3202 = vmul.f32 %v3186, %v3186
    %v3203 = vmul.f32 %v3187, %v3187
    %v3204 = vmul.f32 %v3188, %v3188
    %v3205 = vmul.f32 %v3189, %v3189
    %v3206 = vmul.f32 %v3190, %v3190
    %v3207 = vmul.f32 %v3191, %v3191
    %v3208 = vmul.f32 %v3192, %v3192
    %v3209 = vmul.f32 %v3193, %v3193
    %v3210 = vmul.f32 %v3194, %v3194
    %v3211 = vmul.f32 %v3195, %v3195
    %v3212 = vmul.f32 %v3196, %v3196
    %v3213 = vmul.f32 %v3197, %v3197
    %v3214 = vsel %vm453, %v3198, 0.0
    %3215 = vadd.xlane.f32.xlu0 %v3214
    %v3216 = vpop.xlane.xlu0 %3215
    %v3217 = vsel %vm453, %v3199, 0.0
    %3218 = vadd.xlane.f32.xlu0 %v3217
    %v3219 = vpop.xlane.xlu0 %3218
    %v3220 = vsel %vm453, %v3200, 0.0
    %3221 = vadd.xlane.f32.xlu0 %v3220
    %v3222 = vpop.xlane.xlu0 %3221
    %v3223 = vsel %vm453, %v3201, 0.0
    %3224 = vadd.xlane.f32.xlu0 %v3223
    %v3225 = vpop.xlane.xlu0 %3224
    %v3226 = vsel %vm453, %v3202, 0.0
    %3227 = vadd.xlane.f32.xlu0 %v3226
    %v3228 = vpop.xlane.xlu0 %3227
    %v3229 = vsel %vm453, %v3203, 0.0
    %3230 = vadd.xlane.f32.xlu0 %v3229
    %v3231 = vpop.xlane.xlu0 %3230
    %v3232 = vsel %vm453, %v3204, 0.0
    %3233 = vadd.xlane.f32.xlu0 %v3232
    %v3234 = vpop.xlane.xlu0 %3233
    %v3235 = vsel %vm453, %v3205, 0.0
    %3236 = vadd.xlane.f32.xlu0 %v3235
    %v3237 = vpop.xlane.xlu0 %3236
    %v3238 = vsel %vm453, %v3206, 0.0
    %3239 = vadd.xlane.f32.xlu0 %v3238
    %v3240 = vpop.xlane.xlu0 %3239
    %v3241 = vsel %vm453, %v3207, 0.0
    %3242 = vadd.xlane.f32.xlu0 %v3241
    %v3243 = vpop.xlane.xlu0 %3242
    %v3244 = vsel %vm453, %v3208, 0.0
    %3245 = vadd.xlane.f32.xlu0 %v3244
    %v3246 = vpop.xlane.xlu0 %3245
    %v3247 = vsel %vm453, %v3209, 0.0
    %3248 = vadd.xlane.f32.xlu0 %v3247
    %v3249 = vpop.xlane.xlu0 %3248
    %v3250 = vsel %vm453, %v3210, 0.0
    %3251 = vadd.xlane.f32.xlu0 %v3250
    %v3252 = vpop.xlane.xlu0 %3251
    %v3253 = vsel %vm453, %v3211, 0.0
    %3254 = vadd.xlane.f32.xlu0 %v3253
    %v3255 = vpop.xlane.xlu0 %3254
    %v3256 = vsel %vm453, %v3212, 0.0
    %3257 = vadd.xlane.f32.xlu0 %v3256
    %v3258 = vpop.xlane.xlu0 %3257
    %v3259 = vsel %vm453, %v3213, 0.0
    %3260 = vadd.xlane.f32.xlu0 %v3259
    %v3261 = vpop.xlane.xlu0 %3260
    %v3262 = vmul.f32 %v3216, %v3165
    %v3263 = vmul.f32 %v3219, %v3165
    %v3264 = vmul.f32 %v3222, %v3165
    %v3265 = vmul.f32 %v3225, %v3165
    %v3266 = vmul.f32 %v3228, %v3165
    %v3267 = vmul.f32 %v3231, %v3165
    %v3268 = vmul.f32 %v3234, %v3165
    %v3269 = vmul.f32 %v3237, %v3165
    %v3270 = vmul.f32 %v3240, %v3165
    %v3271 = vmul.f32 %v3243, %v3165
    %v3272 = vmul.f32 %v3246, %v3165
    %v3273 = vmul.f32 %v3249, %v3165
    %v3274 = vmul.f32 %v3252, %v3165
    %v3275 = vmul.f32 %v3255, %v3165
    %v3276 = vmul.f32 %v3258, %v3165
    %v3277 = vmul.f32 %v3261, %v3165
    %v3278 = vadd.f32 %v3262, 1e-05
    %v3279 = vadd.f32 %v3263, 1e-05
    %v3280 = vadd.f32 %v3264, 1e-05
    %v3281 = vadd.f32 %v3265, 1e-05
    %v3282 = vadd.f32 %v3266, 1e-05
    %v3283 = vadd.f32 %v3267, 1e-05
    %v3284 = vadd.f32 %v3268, 1e-05
    %v3285 = vadd.f32 %v3269, 1e-05
    %v3286 = vadd.f32 %v3270, 1e-05
    %v3287 = vadd.f32 %v3271, 1e-05
    %v3288 = vadd.f32 %v3272, 1e-05
    %v3289 = vadd.f32 %v3273, 1e-05
    %v3290 = vadd.f32 %v3274, 1e-05
    %v3291 = vadd.f32 %v3275, 1e-05
    %v3292 = vadd.f32 %v3276, 1e-05
    %v3293 = vadd.f32 %v3277, 1e-05
    %v3294 = vrsqrt.pop %v3278
    %v3295 = vrsqrt.pop %v3279
    %v3296 = vrsqrt.pop %v3280
    %v3297 = vrsqrt.pop %v3281
    %v3298 = vrsqrt.pop %v3282
    %v3299 = vrsqrt.pop %v3283
    %v3300 = vrsqrt.pop %v3284
    %v3301 = vrsqrt.pop %v3285
    %v3302 = vrsqrt.pop %v3286
    %v3303 = vrsqrt.pop %v3287
    %v3304 = vrsqrt.pop %v3288
    %v3305 = vrsqrt.pop %v3289
    %v3306 = vrsqrt.pop %v3290
    %v3307 = vrsqrt.pop %v3291
    %v3308 = vrsqrt.pop %v3292
    %v3309 = vrsqrt.pop %v3293
    %v3310 = vmul.f32 %v3182, %v3294
    %v3311 = vmul.f32 %v3183, %v3295
    %v3312 = vmul.f32 %v3184, %v3296
    %v3313 = vmul.f32 %v3185, %v3297
    %v3314 = vmul.f32 %v3186, %v3298
    %v3315 = vmul.f32 %v3187, %v3299
    %v3316 = vmul.f32 %v3188, %v3300
    %v3317 = vmul.f32 %v3189, %v3301
    %v3318 = vmul.f32 %v3190, %v3302
    %v3319 = vmul.f32 %v3191, %v3303
    %v3320 = vmul.f32 %v3192, %v3304
    %v3321 = vmul.f32 %v3193, %v3305
    %v3322 = vmul.f32 %v3194, %v3306
    %v3323 = vmul.f32 %v3195, %v3307
    %v3324 = vmul.f32 %v3196, %v3308
    %v3325 = vmul.f32 %v3197, %v3309
    %3326 = vrot.lane.b32.xlu0 %v451, 96
    %v3327 = vpop.permute.xlu0 %3326
    %v3329 = vmul.f32 %v3310, %v3327
    %v3330 = vmul.f32 %v3311, %v3327
    %v3331 = vmul.f32 %v3312, %v3327
    %v3332 = vmul.f32 %v3313, %v3327
    %v3333 = vmul.f32 %v3314, %v3327
    %v3334 = vmul.f32 %v3315, %v3327
    %v3335 = vmul.f32 %v3316, %v3327
    %v3336 = vmul.f32 %v3317, %v3327
    %v3337 = vmul.f32 %v3318, %v3327
    %v3338 = vmul.f32 %v3319, %v3327
    %v3339 = vmul.f32 %v3320, %v3327
    %v3340 = vmul.f32 %v3321, %v3327
    %v3341 = vmul.f32 %v3322, %v3327
    %v3342 = vmul.f32 %v3323, %v3327
    %v3343 = vmul.f32 %v3324, %v3327
    %v3344 = vmul.f32 %v3325, %v3327
    %3345 = vrot.lane.b32.xlu0 %v451, 88
    %v3346 = vpop.permute.xlu0 %3345
    %v3348 = vadd.f32 %v3329, %v3346
    %v3349 = vadd.f32 %v3330, %v3346
    %v3350 = vadd.f32 %v3331, %v3346
    %v3351 = vadd.f32 %v3332, %v3346
    %v3352 = vadd.f32 %v3333, %v3346
    %v3353 = vadd.f32 %v3334, %v3346
    %v3354 = vadd.f32 %v3335, %v3346
    %v3355 = vadd.f32 %v3336, %v3346
    %v3356 = vadd.f32 %v3337, %v3346
    %v3357 = vadd.f32 %v3338, %v3346
    %v3358 = vadd.f32 %v3339, %v3346
    %v3359 = vadd.f32 %v3340, %v3346
    %v3360 = vadd.f32 %v3341, %v3346
    %v3361 = vadd.f32 %v3342, %v3346
    %v3362 = vadd.f32 %v3343, %v3346
    %v3363 = vadd.f32 %v3344, %v3346
    %v3364 = vld [vmem:[%s5] sm:$0xff]
    %3365 = vrot.lane.b32.xlu0 %v451, 80
    %v3366 = vpop.permute.xlu0 %3365
    %v3369 = vsel %vm453, %v3348, 0
    %v3372 = vsel %vm453, %v3349, 0
    %v3375 = vsel %vm453, %v3350, 0
    %v3378 = vsel %vm453, %v3351, 0
    %v3381 = vsel %vm453, %v3352, 0
    %v3384 = vsel %vm453, %v3353, 0
    %v3387 = vsel %vm453, %v3354, 0
    %v3390 = vsel %vm453, %v3355, 0
    %v3393 = vsel %vm453, %v3356, 0
    %v3396 = vsel %vm453, %v3357, 0
    %v3399 = vsel %vm453, %v3358, 0
    %v3402 = vsel %vm453, %v3359, 0
    %v3405 = vsel %vm453, %v3360, 0
    %v3408 = vsel %vm453, %v3361, 0
    %v3411 = vsel %vm453, %v3362, 0
    %v3414 = vsel %vm453, %v3363, 0
    %3416 = vmatprep.subr.mxu0 0.0
    %3417 = vmatpush1.msra.mxu0 %v3364
    %3418 = vmatprep.subr.mxu0 0.0
    %3419 = vmatpush1.msra.mxu0 0.0
    %3420 = vmatprep.subr.mxu0 0.0
    %3421 = vmatpush1.msra.mxu0 0.0
    %3422 = vmatprep.subr.mxu0 0.0
    %3423 = vmatpush1.msra.mxu0 0.0
    %3424 = vmatprep.subr.mxu0 0.0
    %3425 = vmatpush1.msra.mxu0 0.0
    %3426 = vmatprep.subr.mxu0 0.0
    %3427 = vmatpush1.msra.mxu0 0.0
    %3428 = vmatprep.subr.mxu0 0.0
    %3429 = vmatpush1.msra.mxu0 0.0
    %3430 = vmatprep.subr.mxu0 0.0
    %3431 = vmatpush1.msra.mxu0 0.0
    %3432 = vmatprep.subr.mxu0 0.0
    %3433 = vmatpush1.msra.mxu0 0.0
    %3434 = vmatprep.subr.mxu0 0.0
    %3435 = vmatpush1.msra.mxu0 0.0
    %3436 = vmatprep.subr.mxu0 0.0
    %3437 = vmatpush1.msra.mxu0 0.0
    %3438 = vmatprep.subr.mxu0 0.0
    %3439 = vmatpush1.msra.mxu0 0.0
    %3440 = vmatprep.subr.mxu0 0.0
    %3441 = vmatpush1.msra.mxu0 0.0
    %3442 = vmatprep.subr.mxu0 0.0
    %3443 = vmatpush1.msra.mxu0 0.0
    %3444 = vmatprep.subr.mxu0 0.0
    %3445 = vmatpush1.msra.mxu0 0.0
    %3446 = vmatprep.subr.mxu0 0.0
    %3447 = vmatpush1.msra.mxu0 0.0
    %3448 = vmatprep.subr.mxu0 0.0
    %3449 = vmatpush1.msra.mxu0 0.0
    %3450 = vmatprep.subr.mxu0 0.0
    %3451 = vmatpush1.msra.mxu0 0.0
    %3452 = vmatprep.subr.mxu0 0.0
    %3453 = vmatpush1.msra.mxu0 0.0
    %3454 = vmatprep.subr.mxu0 0.0
    %3455 = vmatpush1.msra.mxu0 0.0
    %3456 = vmatprep.subr.mxu0 0.0
    %3457 = vmatpush1.msra.mxu0 0.0
    %3458 = vmatprep.subr.mxu0 0.0
    %3459 = vmatpush1.msra.mxu0 0.0
    %3460 = vmatprep.subr.mxu0 0.0
    %3461 = vmatpush1.msra.mxu0 0.0
    %3462 = vmatprep.subr.mxu0 0.0
    %3463 = vmatpush1.msra.mxu0 0.0
    %3464 = vmatprep.subr.mxu0 0.0
    %3465 = vmatpush1.msra.mxu0 0.0
    %3466 = vmatprep.subr.mxu0 0.0
    %3467 = vmatpush1.msra.mxu0 0.0
    %3468 = vmatprep.subr.mxu0 0.0
    %3469 = vmatpush1.msra.mxu0 0.0
    %3470 = vmatprep.subr.mxu0 0.0
    %3471 = vmatpush1.msra.mxu0 0.0
    %3472 = vmatprep.subr.mxu0 0.0
    %3473 = vmatpush1.msra.mxu0 0.0
    %3474 = vmatprep.subr.mxu0 0.0
    %3475 = vmatpush1.msra.mxu0 0.0
    %3476 = vmatprep.subr.mxu0 0.0
    %3477 = vmatpush1.msra.mxu0 0.0
    %3478 = vmatprep.subr.mxu0 0.0
    %3479 = vmatpush1.msra.mxu0 0.0
    %3480 = vmatprep.mubr.f32.mxu0 0.0
    %3481 = vmatmul.mubr.f32.gmra.mrb[0].mxu0 %v3369
    %v3482 = vpop.f32.mrb[0].mxu0
    %v3483 = vadd.f32 %v3366, %v3482
    %v3484 = vpop.f32.mrb[0].mxu0
    %3485 = vmatprep.mubr.f32.mxu0 0.0
    %3486 = vmatmul.mubr.f32.gmra.mrb[0].mxu0 %v3372
    %v3487 = vpop.f32.mrb[0].mxu0
    %v3488 = vadd.f32 %v3366, %v3487
    %v3489 = vpop.f32.mrb[0].mxu0
    %3490 = vmatprep.mubr.f32.mxu0 0.0
    %3491 = vmatmul.mubr.f32.gmra.mrb[0].mxu0 %v3375
    %v3492 = vpop.f32.mrb[0].mxu0
    %v3493 = vadd.f32 %v3366, %v3492
    %v3494 = vpop.f32.mrb[0].mxu0
    %3495 = vmatprep.mubr.f32.mxu0 0.0
    %3496 = vmatmul.mubr.f32.gmra.mrb[0].mxu0 %v3378
    %v3497 = vpop.f32.mrb[0].mxu0
    %v3498 = vadd.f32 %v3366, %v3497
    %v3499 = vpop.f32.mrb[0].mxu0
    %3500 = vmatprep.mubr.f32.mxu0 0.0
    %3501 = vmatmul.mubr.f32.gmra.mrb[0].mxu0 %v3381
    %v3502 = vpop.f32.mrb[0].mxu0
    %v3503 = vadd.f32 %v3366, %v3502
    %v3504 = vpop.f32.mrb[0].mxu0
    %3505 = vmatprep.mubr.f32.mxu0 0.0
    %3506 = vmatmul.mubr.f32.gmra.mrb[0].mxu0 %v3384
    %v3507 = vpop.f32.mrb[0].mxu0
    %v3508 = vadd.f32 %v3366, %v3507
    %v3509 = vpop.f32.mrb[0].mxu0
    %3510 = vmatprep.mubr.f32.mxu0 0.0
    %3511 = vmatmul.mubr.f32.gmra.mrb[0].mxu0 %v3387
    %v3512 = vpop.f32.mrb[0].mxu0
    %v3513 = vadd.f32 %v3366, %v3512
    %v3514 = vpop.f32.mrb[0].mxu0
    %3515 = vmatprep.mubr.f32.mxu0 0.0
    %3516 = vmatmul.mubr.f32.gmra.mrb[0].mxu0 %v3390
    %v3517 = vpop.f32.mrb[0].mxu0
    %v3518 = vadd.f32 %v3366, %v3517
    %v3519 = vpop.f32.mrb[0].mxu0
    %3520 = vmatprep.mubr.f32.mxu0 0.0
    %3521 = vmatmul.mubr.f32.gmra.mrb[0].mxu0 %v3393
    %v3522 = vpop.f32.mrb[0].mxu0
    %v3523 = vadd.f32 %v3366, %v3522
    %v3524 = vpop.f32.mrb[0].mxu0
    %3525 = vmatprep.mubr.f32.mxu0 0.0
    %3526 = vmatmul.mubr.f32.gmra.mrb[0].mxu0 %v3396
    %v3527 = vpop.f32.mrb[0].mxu0
    %v3528 = vadd.f32 %v3366, %v3527
    %v3529 = vpop.f32.mrb[0].mxu0
    %3530 = vmatprep.mubr.f32.mxu0 0.0
    %3531 = vmatmul.mubr.f32.gmra.mrb[0].mxu0 %v3399
    %v3532 = vpop.f32.mrb[0].mxu0
    %v3533 = vadd.f32 %v3366, %v3532
    %v3534 = vpop.f32.mrb[0].mxu0
    %3535 = vmatprep.mubr.f32.mxu0 0.0
    %3536 = vmatmul.mubr.f32.gmra.mrb[0].mxu0 %v3402
    %v3537 = vpop.f32.mrb[0].mxu0
    %v3538 = vadd.f32 %v3366, %v3537
    %v3539 = vpop.f32.mrb[0].mxu0
    %3540 = vmatprep.mubr.f32.mxu0 0.0
    %3541 = vmatmul.mubr.f32.gmra.mrb[0].mxu0 %v3405
    %v3542 = vpop.f32.mrb[0].mxu0
    %v3543 = vadd.f32 %v3366, %v3542
    %v3544 = vpop.f32.mrb[0].mxu0
    %3545 = vmatprep.mubr.f32.mxu0 0.0
    %3546 = vmatmul.mubr.f32.gmra.mrb[0].mxu0 %v3408
    %v3547 = vpop.f32.mrb[0].mxu0
    %v3548 = vadd.f32 %v3366, %v3547
    %v3549 = vpop.f32.mrb[0].mxu0
    %3550 = vmatprep.mubr.f32.mxu0 0.0
    %3551 = vmatmul.mubr.f32.gmra.mrb[0].mxu0 %v3411
    %v3552 = vpop.f32.mrb[0].mxu0
    %v3553 = vadd.f32 %v3366, %v3552
    %v3554 = vpop.f32.mrb[0].mxu0
    %3555 = vmatprep.mubr.f32.mxu0 0.0
    %3556 = vmatmul.mubr.f32.gmra.mrb[0].mxu0 %v3414
    %v3557 = vpop.f32.mrb[0].mxu0
    %v3558 = vadd.f32 %v3366, %v3557
    %v3559 = vpop.f32.mrb[0].mxu0
    %3560 = vdwg.mxu0
    %v3561 = vmax.f32 %v3483, 0.0
    %v3562 = vmax.f32 %v3488, 0.0
    %v3563 = vmax.f32 %v3493, 0.0
    %v3564 = vmax.f32 %v3498, 0.0
    %v3565 = vmax.f32 %v3503, 0.0
    %v3566 = vmax.f32 %v3508, 0.0
    %v3567 = vmax.f32 %v3513, 0.0
    %v3568 = vmax.f32 %v3518, 0.0
    %v3569 = vmax.f32 %v3523, 0.0
    %v3570 = vmax.f32 %v3528, 0.0
    %v3571 = vmax.f32 %v3533, 0.0
    %v3572 = vmax.f32 %v3538, 0.0
    %v3573 = vmax.f32 %v3543, 0.0
    %v3574 = vmax.f32 %v3548, 0.0
    %v3575 = vmax.f32 %v3553, 0.0
    %v3576 = vmax.f32 %v3558, 0.0
    %v3577 = vld [vmem:[%s6] sm:$0xff]
    %v3578 = vld [vmem:[%s6 + $0x8] sm:$0xff]
    %3579 = vrot.lane.b32.xlu0 %v451, 64
    %v3580 = vpop.permute.xlu0 %3579
    %vm3582 = vcmask 130048
    %v3584 = vsel %vm3582, %v3561, 0
    %v3587 = vsel %vm3582, %v3562, 0
    %v3590 = vsel %vm3582, %v3563, 0
    %v3593 = vsel %vm3582, %v3564, 0
    %v3596 = vsel %vm3582, %v3565, 0
    %v3599 = vsel %vm3582, %v3566, 0
    %v3602 = vsel %vm3582, %v3567, 0
    %v3605 = vsel %vm3582, %v3568, 0
    %v3608 = vsel %vm3582, %v3569, 0
    %v3611 = vsel %vm3582, %v3570, 0
    %v3614 = vsel %vm3582, %v3571, 0
    %v3617 = vsel %vm3582, %v3572, 0
    %v3620 = vsel %vm3582, %v3573, 0
    %v3623 = vsel %vm3582, %v3574, 0
    %v3626 = vsel %vm3582, %v3575, 0
    %v3629 = vsel %vm3582, %v3576, 0
    %3631 = vmatprep.subr.mxu0 0.0
    %3632 = vmatpush1.msra.mxu0 %v3577
    %3633 = vmatprep.subr.mxu0 0.0
    %3634 = vmatpush1.msra.mxu0 %v3578
    %3635 = vmatprep.subr.mxu0 0.0
    %3636 = vmatpush1.msra.mxu0 0.0
    %3637 = vmatprep.subr.mxu0 0.0
    %3638 = vmatpush1.msra.mxu0 0.0
    %3639 = vmatprep.subr.mxu0 0.0
    %3640 = vmatpush1.msra.mxu0 0.0
    %3641 = vmatprep.subr.mxu0 0.0
    %3642 = vmatpush1.msra.mxu0 0.0
    %3643 = vmatprep.subr.mxu0 0.0
    %3644 = vmatpush1.msra.mxu0 0.0
    %3645 = vmatprep.subr.mxu0 0.0
    %3646 = vmatpush1.msra.mxu0 0.0
    %3647 = vmatprep.subr.mxu0 0.0
    %3648 = vmatpush1.msra.mxu0 0.0
    %3649 = vmatprep.subr.mxu0 0.0
    %3650 = vmatpush1.msra.mxu0 0.0
    %3651 = vmatprep.subr.mxu0 0.0
    %3652 = vmatpush1.msra.mxu0 0.0
    %3653 = vmatprep.subr.mxu0 0.0
    %3654 = vmatpush1.msra.mxu0 0.0
    %3655 = vmatprep.subr.mxu0 0.0
    %3656 = vmatpush1.msra.mxu0 0.0
    %3657 = vmatprep.subr.mxu0 0.0
    %3658 = vmatpush1.msra.mxu0 0.0
    %3659 = vmatprep.subr.mxu0 0.0
    %3660 = vmatpush1.msra.mxu0 0.0
    %3661 = vmatprep.subr.mxu0 0.0
    %3662 = vmatpush1.msra.mxu0 0.0
    %3663 = vmatprep.subr.mxu0 0.0
    %3664 = vmatpush1.msra.mxu0 0.0
    %3665 = vmatprep.subr.mxu0 0.0
    %3666 = vmatpush1.msra.mxu0 0.0
    %3667 = vmatprep.subr.mxu0 0.0
    %3668 = vmatpush1.msra.mxu0 0.0
    %3669 = vmatprep.subr.mxu0 0.0
    %3670 = vmatpush1.msra.mxu0 0.0
    %3671 = vmatprep.subr.mxu0 0.0
    %3672 = vmatpush1.msra.mxu0 0.0
    %3673 = vmatprep.subr.mxu0 0.0
    %3674 = vmatpush1.msra.mxu0 0.0
    %3675 = vmatprep.subr.mxu0 0.0
    %3676 = vmatpush1.msra.mxu0 0.0
    %3677 = vmatprep.subr.mxu0 0.0
    %3678 = vmatpush1.msra.mxu0 0.0
    %3679 = vmatprep.subr.mxu0 0.0
    %3680 = vmatpush1.msra.mxu0 0.0
    %3681 = vmatprep.subr.mxu0 0.0
    %3682 = vmatpush1.msra.mxu0 0.0
    %3683 = vmatprep.subr.mxu0 0.0
    %3684 = vmatpush1.msra.mxu0 0.0
    %3685 = vmatprep.subr.mxu0 0.0
    %3686 = vmatpush1.msra.mxu0 0.0
    %3687 = vmatprep.subr.mxu0 0.0
    %3688 = vmatpush1.msra.mxu0 0.0
    %3689 = vmatprep.subr.mxu0 0.0
    %3690 = vmatpush1.msra.mxu0 0.0
    %3691 = vmatprep.subr.mxu0 0.0
    %3692 = vmatpush1.msra.mxu0 0.0
    %3693 = vmatprep.subr.mxu0 0.0
    %3694 = vmatpush1.msra.mxu0 0.0
    %3695 = vmatprep.mubr.f32.mxu0 0.0
    %3696 = vmatmul.mubr.f32.gmra.mrb[0].mxu0 %v3584
    %v3697 = vpop.f32.mrb[0].mxu0
    %v3698 = vadd.f32 %v3580, %v3697
    %v3699 = vpop.f32.mrb[0].mxu0
    %3700 = vmatprep.mubr.f32.mxu0 0.0
    %3701 = vmatmul.mubr.f32.gmra.mrb[0].mxu0 %v3587
    %v3702 = vpop.f32.mrb[0].mxu0
    %v3703 = vadd.f32 %v3580, %v3702
    %v3704 = vpop.f32.mrb[0].mxu0
    %3705 = vmatprep.mubr.f32.mxu0 0.0
    %3706 = vmatmul.mubr.f32.gmra.mrb[0].mxu0 %v3590
    %v3707 = vpop.f32.mrb[0].mxu0
    %v3708 = vadd.f32 %v3580, %v3707
    %v3709 = vpop.f32.mrb[0].mxu0
    %3710 = vmatprep.mubr.f32.mxu0 0.0
    %3711 = vmatmul.mubr.f32.gmra.mrb[0].mxu0 %v3593
    %v3712 = vpop.f32.mrb[0].mxu0
    %v3713 = vadd.f32 %v3580, %v3712
    %v3714 = vpop.f32.mrb[0].mxu0
    %3715 = vmatprep.mubr.f32.mxu0 0.0
    %3716 = vmatmul.mubr.f32.gmra.mrb[0].mxu0 %v3596
    %v3717 = vpop.f32.mrb[0].mxu0
    %v3718 = vadd.f32 %v3580, %v3717
    %v3719 = vpop.f32.mrb[0].mxu0
    %3720 = vmatprep.mubr.f32.mxu0 0.0
    %3721 = vmatmul.mubr.f32.gmra.mrb[0].mxu0 %v3599
    %v3722 = vpop.f32.mrb[0].mxu0
    %v3723 = vadd.f32 %v3580, %v3722
    %v3724 = vpop.f32.mrb[0].mxu0
    %3725 = vmatprep.mubr.f32.mxu0 0.0
    %3726 = vmatmul.mubr.f32.gmra.mrb[0].mxu0 %v3602
    %v3727 = vpop.f32.mrb[0].mxu0
    %v3728 = vadd.f32 %v3580, %v3727
    %v3729 = vpop.f32.mrb[0].mxu0
    %3730 = vmatprep.mubr.f32.mxu0 0.0
    %3731 = vmatmul.mubr.f32.gmra.mrb[0].mxu0 %v3605
    %v3732 = vpop.f32.mrb[0].mxu0
    %v3733 = vadd.f32 %v3580, %v3732
    %v3734 = vpop.f32.mrb[0].mxu0
    %3735 = vmatprep.mubr.f32.mxu0 0.0
    %3736 = vmatmul.mubr.f32.gmra.mrb[0].mxu0 %v3608
    %v3737 = vpop.f32.mrb[0].mxu0
    %v3738 = vadd.f32 %v3580, %v3737
    %v3739 = vpop.f32.mrb[0].mxu0
    %3740 = vmatprep.mubr.f32.mxu0 0.0
    %3741 = vmatmul.mubr.f32.gmra.mrb[0].mxu0 %v3611
    %v3742 = vpop.f32.mrb[0].mxu0
    %v3743 = vadd.f32 %v3580, %v3742
    %v3744 = vpop.f32.mrb[0].mxu0
    %3745 = vmatprep.mubr.f32.mxu0 0.0
    %3746 = vmatmul.mubr.f32.gmra.mrb[0].mxu0 %v3614
    %v3747 = vpop.f32.mrb[0].mxu0
    %v3748 = vadd.f32 %v3580, %v3747
    %v3749 = vpop.f32.mrb[0].mxu0
    %3750 = vmatprep.mubr.f32.mxu0 0.0
    %3751 = vmatmul.mubr.f32.gmra.mrb[0].mxu0 %v3617
    %v3752 = vpop.f32.mrb[0].mxu0
    %v3753 = vadd.f32 %v3580, %v3752
    %v3754 = vpop.f32.mrb[0].mxu0
    %3755 = vmatprep.mubr.f32.mxu0 0.0
    %3756 = vmatmul.mubr.f32.gmra.mrb[0].mxu0 %v3620
    %v3757 = vpop.f32.mrb[0].mxu0
    %v3758 = vadd.f32 %v3580, %v3757
    %v3759 = vpop.f32.mrb[0].mxu0
    %3760 = vmatprep.mubr.f32.mxu0 0.0
    %3761 = vmatmul.mubr.f32.gmra.mrb[0].mxu0 %v3623
    %v3762 = vpop.f32.mrb[0].mxu0
    %v3763 = vadd.f32 %v3580, %v3762
    %v3764 = vpop.f32.mrb[0].mxu0
    %3765 = vmatprep.mubr.f32.mxu0 0.0
    %3766 = vmatmul.mubr.f32.gmra.mrb[0].mxu0 %v3626
    %v3767 = vpop.f32.mrb[0].mxu0
    %v3768 = vadd.f32 %v3580, %v3767
    %v3769 = vpop.f32.mrb[0].mxu0
    %3770 = vmatprep.mubr.f32.mxu0 0.0
    %3771 = vmatmul.mubr.f32.gmra.mrb[0].mxu0 %v3629
    %v3772 = vpop.f32.mrb[0].mxu0
    %v3773 = vadd.f32 %v3580, %v3772
    %v3774 = vpop.f32.mrb[0].mxu0
    %3775 = vdwg.mxu0
    %v3776 = vadd.f32 %v3348, %v3698
    %v3777 = vadd.f32 %v3349, %v3703
    %v3778 = vadd.f32 %v3350, %v3708
    %v3779 = vadd.f32 %v3351, %v3713
    %v3780 = vadd.f32 %v3352, %v3718
    %v3781 = vadd.f32 %v3353, %v3723
    %v3782 = vadd.f32 %v3354, %v3728
    %v3783 = vadd.f32 %v3355, %v3733
    %v3784 = vadd.f32 %v3356, %v3738
    %v3785 = vadd.f32 %v3357, %v3743
    %v3786 = vadd.f32 %v3358, %v3748
    %v3787 = vadd.f32 %v3359, %v3753
    %v3788 = vadd.f32 %v3360, %v3758
    %v3789 = vadd.f32 %v3361, %v3763
    %v3790 = vadd.f32 %v3362, %v3768
    %v3791 = vadd.f32 %v3363, %v3773
    %v3792 = vsel %vm453, %v3776, 0.0
    %3793 = vadd.xlane.f32.xlu0 %v3792
    %v3794 = vpop.xlane.xlu0 %3793
    %v3795 = vsel %vm453, %v3777, 0.0
    %3796 = vadd.xlane.f32.xlu0 %v3795
    %v3797 = vpop.xlane.xlu0 %3796
    %v3798 = vsel %vm453, %v3778, 0.0
    %3799 = vadd.xlane.f32.xlu0 %v3798
    %v3800 = vpop.xlane.xlu0 %3799
    %v3801 = vsel %vm453, %v3779, 0.0
    %3802 = vadd.xlane.f32.xlu0 %v3801
    %v3803 = vpop.xlane.xlu0 %3802
    %v3804 = vsel %vm453, %v3780, 0.0
    %3805 = vadd.xlane.f32.xlu0 %v3804
    %v3806 = vpop.xlane.xlu0 %3805
    %v3807 = vsel %vm453, %v3781, 0.0
    %3808 = vadd.xlane.f32.xlu0 %v3807
    %v3809 = vpop.xlane.xlu0 %3808
    %v3810 = vsel %vm453, %v3782, 0.0
    %3811 = vadd.xlane.f32.xlu0 %v3810
    %v3812 = vpop.xlane.xlu0 %3811
    %v3813 = vsel %vm453, %v3783, 0.0
    %3814 = vadd.xlane.f32.xlu0 %v3813
    %v3815 = vpop.xlane.xlu0 %3814
    %v3816 = vsel %vm453, %v3784, 0.0
    %3817 = vadd.xlane.f32.xlu0 %v3816
    %v3818 = vpop.xlane.xlu0 %3817
    %v3819 = vsel %vm453, %v3785, 0.0
    %3820 = vadd.xlane.f32.xlu0 %v3819
    %v3821 = vpop.xlane.xlu0 %3820
    %v3822 = vsel %vm453, %v3786, 0.0
    %3823 = vadd.xlane.f32.xlu0 %v3822
    %v3824 = vpop.xlane.xlu0 %3823
    %v3825 = vsel %vm453, %v3787, 0.0
    %3826 = vadd.xlane.f32.xlu0 %v3825
    %v3827 = vpop.xlane.xlu0 %3826
    %v3828 = vsel %vm453, %v3788, 0.0
    %3829 = vadd.xlane.f32.xlu0 %v3828
    %v3830 = vpop.xlane.xlu0 %3829
    %v3831 = vsel %vm453, %v3789, 0.0
    %3832 = vadd.xlane.f32.xlu0 %v3831
    %v3833 = vpop.xlane.xlu0 %3832
    %v3834 = vsel %vm453, %v3790, 0.0
    %3835 = vadd.xlane.f32.xlu0 %v3834
    %v3836 = vpop.xlane.xlu0 %3835
    %v3837 = vsel %vm453, %v3791, 0.0
    %3838 = vadd.xlane.f32.xlu0 %v3837
    %v3839 = vpop.xlane.xlu0 %3838
    %v3840 = vmul.f32 %v3794, %v3165
    %v3841 = vmul.f32 %v3797, %v3165
    %v3842 = vmul.f32 %v3800, %v3165
    %v3843 = vmul.f32 %v3803, %v3165
    %v3844 = vmul.f32 %v3806, %v3165
    %v3845 = vmul.f32 %v3809, %v3165
    %v3846 = vmul.f32 %v3812, %v3165
    %v3847 = vmul.f32 %v3815, %v3165
    %v3848 = vmul.f32 %v3818, %v3165
    %v3849 = vmul.f32 %v3821, %v3165
    %v3850 = vmul.f32 %v3824, %v3165
    %v3851 = vmul.f32 %v3827, %v3165
    %v3852 = vmul.f32 %v3830, %v3165
    %v3853 = vmul.f32 %v3833, %v3165
    %v3854 = vmul.f32 %v3836, %v3165
    %v3855 = vmul.f32 %v3839, %v3165
    %v3856 = vsub.f32 %v3776, %v3840
    %v3857 = vsub.f32 %v3777, %v3841
    %v3858 = vsub.f32 %v3778, %v3842
    %v3859 = vsub.f32 %v3779, %v3843
    %v3860 = vsub.f32 %v3780, %v3844
    %v3861 = vsub.f32 %v3781, %v3845
    %v3862 = vsub.f32 %v3782, %v3846
    %v3863 = vsub.f32 %v3783, %v3847
    %v3864 = vsub.f32 %v3784, %v3848
    %v3865 = vsub.f32 %v3785, %v3849
    %v3866 = vsub.f32 %v3786, %v3850
    %v3867 = vsub.f32 %v3787, %v3851
    %v3868 = vsub.f32 %v3788, %v3852
    %v3869 = vsub.f32 %v3789, %v3853
    %v3870 = vsub.f32 %v3790, %v3854
    %v3871 = vsub.f32 %v3791, %v3855
    %v3872 = vmul.f32 %v3856, %v3856
    %v3873 = vmul.f32 %v3857, %v3857
    %v3874 = vmul.f32 %v3858, %v3858
    %v3875 = vmul.f32 %v3859, %v3859
    %v3876 = vmul.f32 %v3860, %v3860
    %v3877 = vmul.f32 %v3861, %v3861
    %v3878 = vmul.f32 %v3862, %v3862
    %v3879 = vmul.f32 %v3863, %v3863
    %v3880 = vmul.f32 %v3864, %v3864
    %v3881 = vmul.f32 %v3865, %v3865
    %v3882 = vmul.f32 %v3866, %v3866
    %v3883 = vmul.f32 %v3867, %v3867
    %v3884 = vmul.f32 %v3868, %v3868
    %v3885 = vmul.f32 %v3869, %v3869
    %v3886 = vmul.f32 %v3870, %v3870
    %v3887 = vmul.f32 %v3871, %v3871
    %v3888 = vsel %vm453, %v3872, 0.0
    %3889 = vadd.xlane.f32.xlu0 %v3888
    %v3890 = vpop.xlane.xlu0 %3889
    %v3891 = vsel %vm453, %v3873, 0.0
    %3892 = vadd.xlane.f32.xlu0 %v3891
    %v3893 = vpop.xlane.xlu0 %3892
    %v3894 = vsel %vm453, %v3874, 0.0
    %3895 = vadd.xlane.f32.xlu0 %v3894
    %v3896 = vpop.xlane.xlu0 %3895
    %v3897 = vsel %vm453, %v3875, 0.0
    %3898 = vadd.xlane.f32.xlu0 %v3897
    %v3899 = vpop.xlane.xlu0 %3898
    %v3900 = vsel %vm453, %v3876, 0.0
    %3901 = vadd.xlane.f32.xlu0 %v3900
    %v3902 = vpop.xlane.xlu0 %3901
    %v3903 = vsel %vm453, %v3877, 0.0
    %3904 = vadd.xlane.f32.xlu0 %v3903
    %v3905 = vpop.xlane.xlu0 %3904
    %v3906 = vsel %vm453, %v3878, 0.0
    %3907 = vadd.xlane.f32.xlu0 %v3906
    %v3908 = vpop.xlane.xlu0 %3907
    %v3909 = vsel %vm453, %v3879, 0.0
    %3910 = vadd.xlane.f32.xlu0 %v3909
    %v3911 = vpop.xlane.xlu0 %3910
    %v3912 = vsel %vm453, %v3880, 0.0
    %3913 = vadd.xlane.f32.xlu0 %v3912
    %v3914 = vpop.xlane.xlu0 %3913
    %v3915 = vsel %vm453, %v3881, 0.0
    %3916 = vadd.xlane.f32.xlu0 %v3915
    %v3917 = vpop.xlane.xlu0 %3916
    %v3918 = vsel %vm453, %v3882, 0.0
    %3919 = vadd.xlane.f32.xlu0 %v3918
    %v3920 = vpop.xlane.xlu0 %3919
    %v3921 = vsel %vm453, %v3883, 0.0
    %3922 = vadd.xlane.f32.xlu0 %v3921
    %v3923 = vpop.xlane.xlu0 %3922
    %v3924 = vsel %vm453, %v3884, 0.0
    %3925 = vadd.xlane.f32.xlu0 %v3924
    %v3926 = vpop.xlane.xlu0 %3925
    %v3927 = vsel %vm453, %v3885, 0.0
    %3928 = vadd.xlane.f32.xlu0 %v3927
    %v3929 = vpop.xlane.xlu0 %3928
    %v3930 = vsel %vm453, %v3886, 0.0
    %3931 = vadd.xlane.f32.xlu0 %v3930
    %v3932 = vpop.xlane.xlu0 %3931
    %v3933 = vsel %vm453, %v3887, 0.0
    %3934 = vadd.xlane.f32.xlu0 %v3933
    %v3935 = vpop.xlane.xlu0 %3934
    %v3936 = vmul.f32 %v3890, %v3165
    %v3937 = vmul.f32 %v3893, %v3165
    %v3938 = vmul.f32 %v3896, %v3165
    %v3939 = vmul.f32 %v3899, %v3165
    %v3940 = vmul.f32 %v3902, %v3165
    %v3941 = vmul.f32 %v3905, %v3165
    %v3942 = vmul.f32 %v3908, %v3165
    %v3943 = vmul.f32 %v3911, %v3165
    %v3944 = vmul.f32 %v3914, %v3165
    %v3945 = vmul.f32 %v3917, %v3165
    %v3946 = vmul.f32 %v3920, %v3165
    %v3947 = vmul.f32 %v3923, %v3165
    %v3948 = vmul.f32 %v3926, %v3165
    %v3949 = vmul.f32 %v3929, %v3165
    %v3950 = vmul.f32 %v3932, %v3165
    %v3951 = vmul.f32 %v3935, %v3165
    %v3952 = vadd.f32 %v3936, 1e-05
    %v3953 = vadd.f32 %v3937, 1e-05
    %v3954 = vadd.f32 %v3938, 1e-05
    %v3955 = vadd.f32 %v3939, 1e-05
    %v3956 = vadd.f32 %v3940, 1e-05
    %v3957 = vadd.f32 %v3941, 1e-05
    %v3958 = vadd.f32 %v3942, 1e-05
    %v3959 = vadd.f32 %v3943, 1e-05
    %v3960 = vadd.f32 %v3944, 1e-05
    %v3961 = vadd.f32 %v3945, 1e-05
    %v3962 = vadd.f32 %v3946, 1e-05
    %v3963 = vadd.f32 %v3947, 1e-05
    %v3964 = vadd.f32 %v3948, 1e-05
    %v3965 = vadd.f32 %v3949, 1e-05
    %v3966 = vadd.f32 %v3950, 1e-05
    %v3967 = vadd.f32 %v3951, 1e-05
    %v3968 = vrsqrt.pop %v3952
    %v3969 = vrsqrt.pop %v3953
    %v3970 = vrsqrt.pop %v3954
    %v3971 = vrsqrt.pop %v3955
    %v3972 = vrsqrt.pop %v3956
    %v3973 = vrsqrt.pop %v3957
    %v3974 = vrsqrt.pop %v3958
    %v3975 = vrsqrt.pop %v3959
    %v3976 = vrsqrt.pop %v3960
    %v3977 = vrsqrt.pop %v3961
    %v3978 = vrsqrt.pop %v3962
    %v3979 = vrsqrt.pop %v3963
    %v3980 = vrsqrt.pop %v3964
    %v3981 = vrsqrt.pop %v3965
    %v3982 = vrsqrt.pop %v3966
    %v3983 = vrsqrt.pop %v3967
    %v3984 = vmul.f32 %v3856, %v3968
    %v3985 = vmul.f32 %v3857, %v3969
    %v3986 = vmul.f32 %v3858, %v3970
    %v3987 = vmul.f32 %v3859, %v3971
    %v3988 = vmul.f32 %v3860, %v3972
    %v3989 = vmul.f32 %v3861, %v3973
    %v3990 = vmul.f32 %v3862, %v3974
    %v3991 = vmul.f32 %v3863, %v3975
    %v3992 = vmul.f32 %v3864, %v3976
    %v3993 = vmul.f32 %v3865, %v3977
    %v3994 = vmul.f32 %v3866, %v3978
    %v3995 = vmul.f32 %v3867, %v3979
    %v3996 = vmul.f32 %v3868, %v3980
    %v3997 = vmul.f32 %v3869, %v3981
    %v3998 = vmul.f32 %v3870, %v3982
    %v3999 = vmul.f32 %v3871, %v3983
    %4000 = vrot.lane.b32.xlu0 %v451, 56
    %v4001 = vpop.permute.xlu0 %4000
    %v4003 = vmul.f32 %v3984, %v4001
    %v4004 = vmul.f32 %v3985, %v4001
    %v4005 = vmul.f32 %v3986, %v4001
    %v4006 = vmul.f32 %v3987, %v4001
    %v4007 = vmul.f32 %v3988, %v4001
    %v4008 = vmul.f32 %v3989, %v4001
    %v4009 = vmul.f32 %v3990, %v4001
    %v4010 = vmul.f32 %v3991, %v4001
    %v4011 = vmul.f32 %v3992, %v4001
    %v4012 = vmul.f32 %v3993, %v4001
    %v4013 = vmul.f32 %v3994, %v4001
    %v4014 = vmul.f32 %v3995, %v4001
    %v4015 = vmul.f32 %v3996, %v4001
    %v4016 = vmul.f32 %v3997, %v4001
    %v4017 = vmul.f32 %v3998, %v4001
    %v4018 = vmul.f32 %v3999, %v4001
    %4019 = vrot.lane.b32.xlu0 %v451, 48
    %v4020 = vpop.permute.xlu0 %4019
    %v4022 = vadd.f32 %v4003, %v4020
    %v4023 = vadd.f32 %v4004, %v4020
    %v4024 = vadd.f32 %v4005, %v4020
    %v4025 = vadd.f32 %v4006, %v4020
    %v4026 = vadd.f32 %v4007, %v4020
    %v4027 = vadd.f32 %v4008, %v4020
    %v4028 = vadd.f32 %v4009, %v4020
    %v4029 = vadd.f32 %v4010, %v4020
    %v4030 = vadd.f32 %v4011, %v4020
    %v4031 = vadd.f32 %v4012, %v4020
    %v4032 = vadd.f32 %v4013, %v4020
    %v4033 = vadd.f32 %v4014, %v4020
    %v4034 = vadd.f32 %v4015, %v4020
    %v4035 = vadd.f32 %v4016, %v4020
    %v4036 = vadd.f32 %v4017, %v4020
    %v4037 = vadd.f32 %v4018, %v4020
    %s4038 = scalar_lea.vmem %s7, 1
    %v4039 = vld [vmem:[%s4038] sm:$0x1]
    %s4040 = scalar_lea.vmem %s3, 8
    %v4041 = vld [vmem:[%s4040] sm:$0xff]
    %v4043 = vlaneseq
    %v4044 = vshrl.u32 %v4043, 7
    %v4045 = vsub.s32 0, %v4044
    %v4046 = vrot.slane %v4039, %v4045
    %v4049 = vsel %vm453, %v4022, 0
    %v4052 = vsel %vm453, %v4023, 0
    %v4055 = vsel %vm453, %v4024, 0
    %v4058 = vsel %vm453, %v4025, 0
    %v4061 = vsel %vm453, %v4026, 0
    %v4064 = vsel %vm453, %v4027, 0
    %v4067 = vsel %vm453, %v4028, 0
    %v4070 = vsel %vm453, %v4029, 0
    %v4073 = vsel %vm453, %v4030, 0
    %v4076 = vsel %vm453, %v4031, 0
    %v4079 = vsel %vm453, %v4032, 0
    %v4082 = vsel %vm453, %v4033, 0
    %v4085 = vsel %vm453, %v4034, 0
    %v4088 = vsel %vm453, %v4035, 0
    %v4091 = vsel %vm453, %v4036, 0
    %v4094 = vsel %vm453, %v4037, 0
    %4096 = vmatprep.subr.mxu0 0.0
    %4097 = vmatpush1.msra.mxu0 %v4041
    %4098 = vmatprep.subr.mxu0 0.0
    %4099 = vmatpush1.msra.mxu0 0.0
    %4100 = vmatprep.subr.mxu0 0.0
    %4101 = vmatpush1.msra.mxu0 0.0
    %4102 = vmatprep.subr.mxu0 0.0
    %4103 = vmatpush1.msra.mxu0 0.0
    %4104 = vmatprep.subr.mxu0 0.0
    %4105 = vmatpush1.msra.mxu0 0.0
    %4106 = vmatprep.subr.mxu0 0.0
    %4107 = vmatpush1.msra.mxu0 0.0
    %4108 = vmatprep.subr.mxu0 0.0
    %4109 = vmatpush1.msra.mxu0 0.0
    %4110 = vmatprep.subr.mxu0 0.0
    %4111 = vmatpush1.msra.mxu0 0.0
    %4112 = vmatprep.subr.mxu0 0.0
    %4113 = vmatpush1.msra.mxu0 0.0
    %4114 = vmatprep.subr.mxu0 0.0
    %4115 = vmatpush1.msra.mxu0 0.0
    %4116 = vmatprep.subr.mxu0 0.0
    %4117 = vmatpush1.msra.mxu0 0.0
    %4118 = vmatprep.subr.mxu0 0.0
    %4119 = vmatpush1.msra.mxu0 0.0
    %4120 = vmatprep.subr.mxu0 0.0
    %4121 = vmatpush1.msra.mxu0 0.0
    %4122 = vmatprep.subr.mxu0 0.0
    %4123 = vmatpush1.msra.mxu0 0.0
    %4124 = vmatprep.subr.mxu0 0.0
    %4125 = vmatpush1.msra.mxu0 0.0
    %4126 = vmatprep.subr.mxu0 0.0
    %4127 = vmatpush1.msra.mxu0 0.0
    %4128 = vmatprep.subr.mxu0 0.0
    %4129 = vmatpush1.msra.mxu0 0.0
    %4130 = vmatprep.subr.mxu0 0.0
    %4131 = vmatpush1.msra.mxu0 0.0
    %4132 = vmatprep.subr.mxu0 0.0
    %4133 = vmatpush1.msra.mxu0 0.0
    %4134 = vmatprep.subr.mxu0 0.0
    %4135 = vmatpush1.msra.mxu0 0.0
    %4136 = vmatprep.subr.mxu0 0.0
    %4137 = vmatpush1.msra.mxu0 0.0
    %4138 = vmatprep.subr.mxu0 0.0
    %4139 = vmatpush1.msra.mxu0 0.0
    %4140 = vmatprep.subr.mxu0 0.0
    %4141 = vmatpush1.msra.mxu0 0.0
    %4142 = vmatprep.subr.mxu0 0.0
    %4143 = vmatpush1.msra.mxu0 0.0
    %4144 = vmatprep.subr.mxu0 0.0
    %4145 = vmatpush1.msra.mxu0 0.0
    %4146 = vmatprep.subr.mxu0 0.0
    %4147 = vmatpush1.msra.mxu0 0.0
    %4148 = vmatprep.subr.mxu0 0.0
    %4149 = vmatpush1.msra.mxu0 0.0
    %4150 = vmatprep.subr.mxu0 0.0
    %4151 = vmatpush1.msra.mxu0 0.0
    %4152 = vmatprep.subr.mxu0 0.0
    %4153 = vmatpush1.msra.mxu0 0.0
    %4154 = vmatprep.subr.mxu0 0.0
    %4155 = vmatpush1.msra.mxu0 0.0
    %4156 = vmatprep.subr.mxu0 0.0
    %4157 = vmatpush1.msra.mxu0 0.0
    %4158 = vmatprep.subr.mxu0 0.0
    %4159 = vmatpush1.msra.mxu0 0.0
    %4160 = vmatprep.mubr.f32.mxu0 0.0
    %4161 = vmatmul.mubr.f32.gmra.mrb[0].mxu0 %v4049
    %v4162 = vpop.f32.mrb[0].mxu0
    %v4163 = vadd.f32 %v4046, %v4162
    %v4164 = vpop.f32.mrb[0].mxu0
    %4165 = vmatprep.mubr.f32.mxu0 0.0
    %4166 = vmatmul.mubr.f32.gmra.mrb[0].mxu0 %v4052
    %v4167 = vpop.f32.mrb[0].mxu0
    %v4168 = vadd.f32 %v4046, %v4167
    %v4169 = vpop.f32.mrb[0].mxu0
    %4170 = vmatprep.mubr.f32.mxu0 0.0
    %4171 = vmatmul.mubr.f32.gmra.mrb[0].mxu0 %v4055
    %v4172 = vpop.f32.mrb[0].mxu0
    %v4173 = vadd.f32 %v4046, %v4172
    %v4174 = vpop.f32.mrb[0].mxu0
    %4175 = vmatprep.mubr.f32.mxu0 0.0
    %4176 = vmatmul.mubr.f32.gmra.mrb[0].mxu0 %v4058
    %v4177 = vpop.f32.mrb[0].mxu0
    %v4178 = vadd.f32 %v4046, %v4177
    %v4179 = vpop.f32.mrb[0].mxu0
    %4180 = vmatprep.mubr.f32.mxu0 0.0
    %4181 = vmatmul.mubr.f32.gmra.mrb[0].mxu0 %v4061
    %v4182 = vpop.f32.mrb[0].mxu0
    %v4183 = vadd.f32 %v4046, %v4182
    %v4184 = vpop.f32.mrb[0].mxu0
    %4185 = vmatprep.mubr.f32.mxu0 0.0
    %4186 = vmatmul.mubr.f32.gmra.mrb[0].mxu0 %v4064
    %v4187 = vpop.f32.mrb[0].mxu0
    %v4188 = vadd.f32 %v4046, %v4187
    %v4189 = vpop.f32.mrb[0].mxu0
    %4190 = vmatprep.mubr.f32.mxu0 0.0
    %4191 = vmatmul.mubr.f32.gmra.mrb[0].mxu0 %v4067
    %v4192 = vpop.f32.mrb[0].mxu0
    %v4193 = vadd.f32 %v4046, %v4192
    %v4194 = vpop.f32.mrb[0].mxu0
    %4195 = vmatprep.mubr.f32.mxu0 0.0
    %4196 = vmatmul.mubr.f32.gmra.mrb[0].mxu0 %v4070
    %v4197 = vpop.f32.mrb[0].mxu0
    %v4198 = vadd.f32 %v4046, %v4197
    %v4199 = vpop.f32.mrb[0].mxu0
    %4200 = vmatprep.mubr.f32.mxu0 0.0
    %4201 = vmatmul.mubr.f32.gmra.mrb[0].mxu0 %v4073
    %v4202 = vpop.f32.mrb[0].mxu0
    %v4203 = vadd.f32 %v4046, %v4202
    %v4204 = vpop.f32.mrb[0].mxu0
    %4205 = vmatprep.mubr.f32.mxu0 0.0
    %4206 = vmatmul.mubr.f32.gmra.mrb[0].mxu0 %v4076
    %v4207 = vpop.f32.mrb[0].mxu0
    %v4208 = vadd.f32 %v4046, %v4207
    %v4209 = vpop.f32.mrb[0].mxu0
    %4210 = vmatprep.mubr.f32.mxu0 0.0
    %4211 = vmatmul.mubr.f32.gmra.mrb[0].mxu0 %v4079
    %v4212 = vpop.f32.mrb[0].mxu0
    %v4213 = vadd.f32 %v4046, %v4212
    %v4214 = vpop.f32.mrb[0].mxu0
    %4215 = vmatprep.mubr.f32.mxu0 0.0
    %4216 = vmatmul.mubr.f32.gmra.mrb[0].mxu0 %v4082
    %v4217 = vpop.f32.mrb[0].mxu0
    %v4218 = vadd.f32 %v4046, %v4217
    %v4219 = vpop.f32.mrb[0].mxu0
    %4220 = vmatprep.mubr.f32.mxu0 0.0
    %4221 = vmatmul.mubr.f32.gmra.mrb[0].mxu0 %v4085
    %v4222 = vpop.f32.mrb[0].mxu0
    %v4223 = vadd.f32 %v4046, %v4222
    %v4224 = vpop.f32.mrb[0].mxu0
    %4225 = vmatprep.mubr.f32.mxu0 0.0
    %4226 = vmatmul.mubr.f32.gmra.mrb[0].mxu0 %v4088
    %v4227 = vpop.f32.mrb[0].mxu0
    %v4228 = vadd.f32 %v4046, %v4227
    %v4229 = vpop.f32.mrb[0].mxu0
    %4230 = vmatprep.mubr.f32.mxu0 0.0
    %4231 = vmatmul.mubr.f32.gmra.mrb[0].mxu0 %v4091
    %v4232 = vpop.f32.mrb[0].mxu0
    %v4233 = vadd.f32 %v4046, %v4232
    %v4234 = vpop.f32.mrb[0].mxu0
    %4235 = vmatprep.mubr.f32.mxu0 0.0
    %4236 = vmatmul.mubr.f32.gmra.mrb[0].mxu0 %v4094
    %v4237 = vpop.f32.mrb[0].mxu0
    %v4238 = vadd.f32 %v4046, %v4237
    %v4239 = vpop.f32.mrb[0].mxu0
    %4240 = vdwg.mxu0
    %4245 = vrot.lane.b32.xlu0 %v4163, 124
    %v4246 = vpop.permute.xlu0 %4245
    %4247 = vrot.lane.b32.xlu0 %v4168, 124
    %v4248 = vpop.permute.xlu0 %4247
    %4249 = vrot.lane.b32.xlu0 %v4173, 124
    %v4250 = vpop.permute.xlu0 %4249
    %4251 = vrot.lane.b32.xlu0 %v4178, 124
    %v4252 = vpop.permute.xlu0 %4251
    %4257 = vrot.lane.b32.xlu0 %v4183, 124
    %v4258 = vpop.permute.xlu0 %4257
    %4259 = vrot.lane.b32.xlu0 %v4188, 124
    %v4260 = vpop.permute.xlu0 %4259
    %4261 = vrot.lane.b32.xlu0 %v4193, 124
    %v4262 = vpop.permute.xlu0 %4261
    %4263 = vrot.lane.b32.xlu0 %v4198, 124
    %v4264 = vpop.permute.xlu0 %4263
    %4269 = vrot.lane.b32.xlu0 %v4203, 124
    %v4270 = vpop.permute.xlu0 %4269
    %4271 = vrot.lane.b32.xlu0 %v4208, 124
    %v4272 = vpop.permute.xlu0 %4271
    %4273 = vrot.lane.b32.xlu0 %v4213, 124
    %v4274 = vpop.permute.xlu0 %4273
    %4275 = vrot.lane.b32.xlu0 %v4218, 124
    %v4276 = vpop.permute.xlu0 %4275
    %4281 = vrot.lane.b32.xlu0 %v4223, 124
    %v4282 = vpop.permute.xlu0 %4281
    %4283 = vrot.lane.b32.xlu0 %v4228, 124
    %v4284 = vpop.permute.xlu0 %4283
    %4285 = vrot.lane.b32.xlu0 %v4233, 124
    %v4286 = vpop.permute.xlu0 %4285
    %4287 = vrot.lane.b32.xlu0 %v4238, 124
    %v4288 = vpop.permute.xlu0 %4287
    %4289 = vrot.lane.b32.xlu0 %v4163, 120
    %v4290 = vpop.permute.xlu0 %4289
    %4291 = vrot.lane.b32.xlu0 %v4168, 120
    %v4292 = vpop.permute.xlu0 %4291
    %4293 = vrot.lane.b32.xlu0 %v4173, 120
    %v4294 = vpop.permute.xlu0 %4293
    %4295 = vrot.lane.b32.xlu0 %v4178, 120
    %v4296 = vpop.permute.xlu0 %4295
    %v4297 = vsel %vm703, %v4163, 0
    %v4299 = vsel %vm703, %v4168, 0
    %v4301 = vsel %vm703, %v4173, 0
    %v4303 = vsel %vm703, %v4178, 0
    %v4305 = vsel %vm703, %v4290, 0
    %v4307 = vsel %vm703, %v4292, 0
    %v4309 = vsel %vm703, %v4294, 0
    %v4311 = vsel %vm703, %v4296, 0
    %4313 = vmatprep.subr.mxu0 0.0
    %4314 = vmatpush1.xpose.msra.mxu0 %v4305
    %4315 = vmatprep.subr.mxu0 0.0
    %4316 = vmatpush1.xpose.msra.mxu0 %v4307
    %4317 = vmatprep.subr.mxu0 0.0
    %4318 = vmatpush1.xpose.msra.mxu0 %v4309
    %4319 = vmatprep.subr.mxu0 0.0
    %4320 = vmatpush1.xpose.msra.mxu0 %v4311
    %4321 = vmatprep.subr.mxu0 0.0
    %4322 = vmatpush1.xpose.msra.mxu0 0.0
    %4323 = vmatprep.subr.mxu0 0.0
    %4324 = vmatpush1.xpose.msra.mxu0 0.0
    %4325 = vmatprep.subr.mxu0 0.0
    %4326 = vmatpush1.xpose.msra.mxu0 0.0
    %4327 = vmatprep.subr.mxu0 0.0
    %4328 = vmatpush1.xpose.msra.mxu0 0.0
    %4329 = vmatprep.subr.mxu0 0.0
    %4330 = vmatpush1.xpose.msra.mxu0 0.0
    %4331 = vmatprep.subr.mxu0 0.0
    %4332 = vmatpush1.xpose.msra.mxu0 0.0
    %4333 = vmatprep.subr.mxu0 0.0
    %4334 = vmatpush1.xpose.msra.mxu0 0.0
    %4335 = vmatprep.subr.mxu0 0.0
    %4336 = vmatpush1.xpose.msra.mxu0 0.0
    %4337 = vmatprep.subr.mxu0 0.0
    %4338 = vmatpush1.xpose.msra.mxu0 0.0
    %4339 = vmatprep.subr.mxu0 0.0
    %4340 = vmatpush1.xpose.msra.mxu0 0.0
    %4341 = vmatprep.subr.mxu0 0.0
    %4342 = vmatpush1.xpose.msra.mxu0 0.0
    %4343 = vmatprep.subr.mxu0 0.0
    %4344 = vmatpush1.xpose.msra.mxu0 0.0
    %4345 = vmatprep.subr.mxu0 0.0
    %4346 = vmatpush1.xpose.msra.mxu0 0.0
    %4347 = vmatprep.subr.mxu0 0.0
    %4348 = vmatpush1.xpose.msra.mxu0 0.0
    %4349 = vmatprep.subr.mxu0 0.0
    %4350 = vmatpush1.xpose.msra.mxu0 0.0
    %4351 = vmatprep.subr.mxu0 0.0
    %4352 = vmatpush1.xpose.msra.mxu0 0.0
    %4353 = vmatprep.subr.mxu0 0.0
    %4354 = vmatpush1.xpose.msra.mxu0 0.0
    %4355 = vmatprep.subr.mxu0 0.0
    %4356 = vmatpush1.xpose.msra.mxu0 0.0
    %4357 = vmatprep.subr.mxu0 0.0
    %4358 = vmatpush1.xpose.msra.mxu0 0.0
    %4359 = vmatprep.subr.mxu0 0.0
    %4360 = vmatpush1.xpose.msra.mxu0 0.0
    %4361 = vmatprep.subr.mxu0 0.0
    %4362 = vmatpush1.xpose.msra.mxu0 0.0
    %4363 = vmatprep.subr.mxu0 0.0
    %4364 = vmatpush1.xpose.msra.mxu0 0.0
    %4365 = vmatprep.subr.mxu0 0.0
    %4366 = vmatpush1.xpose.msra.mxu0 0.0
    %4367 = vmatprep.subr.mxu0 0.0
    %4368 = vmatpush1.xpose.msra.mxu0 0.0
    %4369 = vmatprep.subr.mxu0 0.0
    %4370 = vmatpush1.xpose.msra.mxu0 0.0
    %4371 = vmatprep.subr.mxu0 0.0
    %4372 = vmatpush1.xpose.msra.mxu0 0.0
    %4373 = vmatprep.subr.mxu0 0.0
    %4374 = vmatpush1.xpose.msra.mxu0 0.0
    %4375 = vmatprep.subr.mxu0 0.0
    %4376 = vmatpush1.xpose.msra.mxu0 0.0
    %4377 = vmatprep.mubr.f32.mxu0 0.0
    %4378 = vmatmul.mubr.f32.gmra.mrb[0].mxu0 %v4297
    %v4379 = vpop.f32.mrb[0].mxu0
    %v4380 = vadd.f32 0.0, %v4379
    %v4381 = vpop.f32.mrb[0].mxu0
    %4382 = vmatprep.mubr.f32.mxu0 0.0
    %4383 = vmatmul.mubr.f32.gmra.mrb[0].mxu0 %v4299
    %v4384 = vpop.f32.mrb[0].mxu0
    %v4385 = vadd.f32 0.0, %v4384
    %v4386 = vpop.f32.mrb[0].mxu0
    %4387 = vmatprep.mubr.f32.mxu0 0.0
    %4388 = vmatmul.mubr.f32.gmra.mrb[0].mxu0 %v4301
    %v4389 = vpop.f32.mrb[0].mxu0
    %v4390 = vadd.f32 0.0, %v4389
    %v4391 = vpop.f32.mrb[0].mxu0
    %4392 = vmatprep.mubr.f32.mxu0 0.0
    %4393 = vmatmul.mubr.f32.gmra.mrb[0].mxu0 %v4303
    %v4394 = vpop.f32.mrb[0].mxu0
    %v4395 = vadd.f32 0.0, %v4394
    %v4396 = vpop.f32.mrb[0].mxu0
    %4397 = vdwg.mxu0
    %4398 = vrot.lane.b32.xlu0 %v4246, 120
    %v4399 = vpop.permute.xlu0 %4398
    %4400 = vrot.lane.b32.xlu0 %v4248, 120
    %v4401 = vpop.permute.xlu0 %4400
    %4402 = vrot.lane.b32.xlu0 %v4250, 120
    %v4403 = vpop.permute.xlu0 %4402
    %4404 = vrot.lane.b32.xlu0 %v4252, 120
    %v4405 = vpop.permute.xlu0 %4404
    %v4406 = vsel %vm703, %v4246, 0
    %v4408 = vsel %vm703, %v4248, 0
    %v4410 = vsel %vm703, %v4250, 0
    %v4412 = vsel %vm703, %v4252, 0
    %v4414 = vsel %vm703, %v4399, 0
    %v4416 = vsel %vm703, %v4401, 0
    %v4418 = vsel %vm703, %v4403, 0
    %v4420 = vsel %vm703, %v4405, 0
    %4422 = vmatprep.subr.mxu0 0.0
    %4423 = vmatpush1.xpose.msra.mxu0 %v4414
    %4424 = vmatprep.subr.mxu0 0.0
    %4425 = vmatpush1.xpose.msra.mxu0 %v4416
    %4426 = vmatprep.subr.mxu0 0.0
    %4427 = vmatpush1.xpose.msra.mxu0 %v4418
    %4428 = vmatprep.subr.mxu0 0.0
    %4429 = vmatpush1.xpose.msra.mxu0 %v4420
    %4430 = vmatprep.subr.mxu0 0.0
    %4431 = vmatpush1.xpose.msra.mxu0 0.0
    %4432 = vmatprep.subr.mxu0 0.0
    %4433 = vmatpush1.xpose.msra.mxu0 0.0
    %4434 = vmatprep.subr.mxu0 0.0
    %4435 = vmatpush1.xpose.msra.mxu0 0.0
    %4436 = vmatprep.subr.mxu0 0.0
    %4437 = vmatpush1.xpose.msra.mxu0 0.0
    %4438 = vmatprep.subr.mxu0 0.0
    %4439 = vmatpush1.xpose.msra.mxu0 0.0
    %4440 = vmatprep.subr.mxu0 0.0
    %4441 = vmatpush1.xpose.msra.mxu0 0.0
    %4442 = vmatprep.subr.mxu0 0.0
    %4443 = vmatpush1.xpose.msra.mxu0 0.0
    %4444 = vmatprep.subr.mxu0 0.0
    %4445 = vmatpush1.xpose.msra.mxu0 0.0
    %4446 = vmatprep.subr.mxu0 0.0
    %4447 = vmatpush1.xpose.msra.mxu0 0.0
    %4448 = vmatprep.subr.mxu0 0.0
    %4449 = vmatpush1.xpose.msra.mxu0 0.0
    %4450 = vmatprep.subr.mxu0 0.0
    %4451 = vmatpush1.xpose.msra.mxu0 0.0
    %4452 = vmatprep.subr.mxu0 0.0
    %4453 = vmatpush1.xpose.msra.mxu0 0.0
    %4454 = vmatprep.subr.mxu0 0.0
    %4455 = vmatpush1.xpose.msra.mxu0 0.0
    %4456 = vmatprep.subr.mxu0 0.0
    %4457 = vmatpush1.xpose.msra.mxu0 0.0
    %4458 = vmatprep.subr.mxu0 0.0
    %4459 = vmatpush1.xpose.msra.mxu0 0.0
    %4460 = vmatprep.subr.mxu0 0.0
    %4461 = vmatpush1.xpose.msra.mxu0 0.0
    %4462 = vmatprep.subr.mxu0 0.0
    %4463 = vmatpush1.xpose.msra.mxu0 0.0
    %4464 = vmatprep.subr.mxu0 0.0
    %4465 = vmatpush1.xpose.msra.mxu0 0.0
    %4466 = vmatprep.subr.mxu0 0.0
    %4467 = vmatpush1.xpose.msra.mxu0 0.0
    %4468 = vmatprep.subr.mxu0 0.0
    %4469 = vmatpush1.xpose.msra.mxu0 0.0
    %4470 = vmatprep.subr.mxu0 0.0
    %4471 = vmatpush1.xpose.msra.mxu0 0.0
    %4472 = vmatprep.subr.mxu0 0.0
    %4473 = vmatpush1.xpose.msra.mxu0 0.0
    %4474 = vmatprep.subr.mxu0 0.0
    %4475 = vmatpush1.xpose.msra.mxu0 0.0
    %4476 = vmatprep.subr.mxu0 0.0
    %4477 = vmatpush1.xpose.msra.mxu0 0.0
    %4478 = vmatprep.subr.mxu0 0.0
    %4479 = vmatpush1.xpose.msra.mxu0 0.0
    %4480 = vmatprep.subr.mxu0 0.0
    %4481 = vmatpush1.xpose.msra.mxu0 0.0
    %4482 = vmatprep.subr.mxu0 0.0
    %4483 = vmatpush1.xpose.msra.mxu0 0.0
    %4484 = vmatprep.subr.mxu0 0.0
    %4485 = vmatpush1.xpose.msra.mxu0 0.0
    %4486 = vmatprep.mubr.f32.mxu0 0.0
    %4487 = vmatmul.mubr.f32.gmra.mrb[0].mxu0 %v4406
    %v4488 = vpop.f32.mrb[0].mxu0
    %v4489 = vadd.f32 0.0, %v4488
    %v4490 = vpop.f32.mrb[0].mxu0
    %4491 = vmatprep.mubr.f32.mxu0 0.0
    %4492 = vmatmul.mubr.f32.gmra.mrb[0].mxu0 %v4408
    %v4493 = vpop.f32.mrb[0].mxu0
    %v4494 = vadd.f32 0.0, %v4493
    %v4495 = vpop.f32.mrb[0].mxu0
    %4496 = vmatprep.mubr.f32.mxu0 0.0
    %4497 = vmatmul.mubr.f32.gmra.mrb[0].mxu0 %v4410
    %v4498 = vpop.f32.mrb[0].mxu0
    %v4499 = vadd.f32 0.0, %v4498
    %v4500 = vpop.f32.mrb[0].mxu0
    %4501 = vmatprep.mubr.f32.mxu0 0.0
    %4502 = vmatmul.mubr.f32.gmra.mrb[0].mxu0 %v4412
    %v4503 = vpop.f32.mrb[0].mxu0
    %v4504 = vadd.f32 0.0, %v4503
    %v4505 = vpop.f32.mrb[0].mxu0
    %4506 = vdwg.mxu0
    %4507 = vrot.lane.b32.xlu0 %v4183, 120
    %v4508 = vpop.permute.xlu0 %4507
    %4509 = vrot.lane.b32.xlu0 %v4188, 120
    %v4510 = vpop.permute.xlu0 %4509
    %4511 = vrot.lane.b32.xlu0 %v4193, 120
    %v4512 = vpop.permute.xlu0 %4511
    %4513 = vrot.lane.b32.xlu0 %v4198, 120
    %v4514 = vpop.permute.xlu0 %4513
    %v4515 = vsel %vm703, %v4183, 0
    %v4517 = vsel %vm703, %v4188, 0
    %v4519 = vsel %vm703, %v4193, 0
    %v4521 = vsel %vm703, %v4198, 0
    %v4523 = vsel %vm703, %v4508, 0
    %v4525 = vsel %vm703, %v4510, 0
    %v4527 = vsel %vm703, %v4512, 0
    %v4529 = vsel %vm703, %v4514, 0
    %4531 = vmatprep.subr.mxu0 0.0
    %4532 = vmatpush1.xpose.msra.mxu0 %v4523
    %4533 = vmatprep.subr.mxu0 0.0
    %4534 = vmatpush1.xpose.msra.mxu0 %v4525
    %4535 = vmatprep.subr.mxu0 0.0
    %4536 = vmatpush1.xpose.msra.mxu0 %v4527
    %4537 = vmatprep.subr.mxu0 0.0
    %4538 = vmatpush1.xpose.msra.mxu0 %v4529
    %4539 = vmatprep.subr.mxu0 0.0
    %4540 = vmatpush1.xpose.msra.mxu0 0.0
    %4541 = vmatprep.subr.mxu0 0.0
    %4542 = vmatpush1.xpose.msra.mxu0 0.0
    %4543 = vmatprep.subr.mxu0 0.0
    %4544 = vmatpush1.xpose.msra.mxu0 0.0
    %4545 = vmatprep.subr.mxu0 0.0
    %4546 = vmatpush1.xpose.msra.mxu0 0.0
    %4547 = vmatprep.subr.mxu0 0.0
    %4548 = vmatpush1.xpose.msra.mxu0 0.0
    %4549 = vmatprep.subr.mxu0 0.0
    %4550 = vmatpush1.xpose.msra.mxu0 0.0
    %4551 = vmatprep.subr.mxu0 0.0
    %4552 = vmatpush1.xpose.msra.mxu0 0.0
    %4553 = vmatprep.subr.mxu0 0.0
    %4554 = vmatpush1.xpose.msra.mxu0 0.0
    %4555 = vmatprep.subr.mxu0 0.0
    %4556 = vmatpush1.xpose.msra.mxu0 0.0
    %4557 = vmatprep.subr.mxu0 0.0
    %4558 = vmatpush1.xpose.msra.mxu0 0.0
    %4559 = vmatprep.subr.mxu0 0.0
    %4560 = vmatpush1.xpose.msra.mxu0 0.0
    %4561 = vmatprep.subr.mxu0 0.0
    %4562 = vmatpush1.xpose.msra.mxu0 0.0
    %4563 = vmatprep.subr.mxu0 0.0
    %4564 = vmatpush1.xpose.msra.mxu0 0.0
    %4565 = vmatprep.subr.mxu0 0.0
    %4566 = vmatpush1.xpose.msra.mxu0 0.0
    %4567 = vmatprep.subr.mxu0 0.0
    %4568 = vmatpush1.xpose.msra.mxu0 0.0
    %4569 = vmatprep.subr.mxu0 0.0
    %4570 = vmatpush1.xpose.msra.mxu0 0.0
    %4571 = vmatprep.subr.mxu0 0.0
    %4572 = vmatpush1.xpose.msra.mxu0 0.0
    %4573 = vmatprep.subr.mxu0 0.0
    %4574 = vmatpush1.xpose.msra.mxu0 0.0
    %4575 = vmatprep.subr.mxu0 0.0
    %4576 = vmatpush1.xpose.msra.mxu0 0.0
    %4577 = vmatprep.subr.mxu0 0.0
    %4578 = vmatpush1.xpose.msra.mxu0 0.0
    %4579 = vmatprep.subr.mxu0 0.0
    %4580 = vmatpush1.xpose.msra.mxu0 0.0
    %4581 = vmatprep.subr.mxu0 0.0
    %4582 = vmatpush1.xpose.msra.mxu0 0.0
    %4583 = vmatprep.subr.mxu0 0.0
    %4584 = vmatpush1.xpose.msra.mxu0 0.0
    %4585 = vmatprep.subr.mxu0 0.0
    %4586 = vmatpush1.xpose.msra.mxu0 0.0
    %4587 = vmatprep.subr.mxu0 0.0
    %4588 = vmatpush1.xpose.msra.mxu0 0.0
    %4589 = vmatprep.subr.mxu0 0.0
    %4590 = vmatpush1.xpose.msra.mxu0 0.0
    %4591 = vmatprep.subr.mxu0 0.0
    %4592 = vmatpush1.xpose.msra.mxu0 0.0
    %4593 = vmatprep.subr.mxu0 0.0
    %4594 = vmatpush1.xpose.msra.mxu0 0.0
    %4595 = vmatprep.mubr.f32.mxu0 0.0
    %4596 = vmatmul.mubr.f32.gmra.mrb[0].mxu0 %v4515
    %v4597 = vpop.f32.mrb[0].mxu0
    %v4598 = vadd.f32 0.0, %v4597
    %v4599 = vpop.f32.mrb[0].mxu0
    %4600 = vmatprep.mubr.f32.mxu0 0.0
    %4601 = vmatmul.mubr.f32.gmra.mrb[0].mxu0 %v4517
    %v4602 = vpop.f32.mrb[0].mxu0
    %v4603 = vadd.f32 0.0, %v4602
    %v4604 = vpop.f32.mrb[0].mxu0
    %4605 = vmatprep.mubr.f32.mxu0 0.0
    %4606 = vmatmul.mubr.f32.gmra.mrb[0].mxu0 %v4519
    %v4607 = vpop.f32.mrb[0].mxu0
    %v4608 = vadd.f32 0.0, %v4607
    %v4609 = vpop.f32.mrb[0].mxu0
    %4610 = vmatprep.mubr.f32.mxu0 0.0
    %4611 = vmatmul.mubr.f32.gmra.mrb[0].mxu0 %v4521
    %v4612 = vpop.f32.mrb[0].mxu0
    %v4613 = vadd.f32 0.0, %v4612
    %v4614 = vpop.f32.mrb[0].mxu0
    %4615 = vdwg.mxu0
    %4616 = vrot.lane.b32.xlu0 %v4258, 120
    %v4617 = vpop.permute.xlu0 %4616
    %4618 = vrot.lane.b32.xlu0 %v4260, 120
    %v4619 = vpop.permute.xlu0 %4618
    %4620 = vrot.lane.b32.xlu0 %v4262, 120
    %v4621 = vpop.permute.xlu0 %4620
    %4622 = vrot.lane.b32.xlu0 %v4264, 120
    %v4623 = vpop.permute.xlu0 %4622
    %v4624 = vsel %vm703, %v4258, 0
    %v4626 = vsel %vm703, %v4260, 0
    %v4628 = vsel %vm703, %v4262, 0
    %v4630 = vsel %vm703, %v4264, 0
    %v4632 = vsel %vm703, %v4617, 0
    %v4634 = vsel %vm703, %v4619, 0
    %v4636 = vsel %vm703, %v4621, 0
    %v4638 = vsel %vm703, %v4623, 0
    %4640 = vmatprep.subr.mxu0 0.0
    %4641 = vmatpush1.xpose.msra.mxu0 %v4632
    %4642 = vmatprep.subr.mxu0 0.0
    %4643 = vmatpush1.xpose.msra.mxu0 %v4634
    %4644 = vmatprep.subr.mxu0 0.0
    %4645 = vmatpush1.xpose.msra.mxu0 %v4636
    %4646 = vmatprep.subr.mxu0 0.0
    %4647 = vmatpush1.xpose.msra.mxu0 %v4638
    %4648 = vmatprep.subr.mxu0 0.0
    %4649 = vmatpush1.xpose.msra.mxu0 0.0
    %4650 = vmatprep.subr.mxu0 0.0
    %4651 = vmatpush1.xpose.msra.mxu0 0.0
    %4652 = vmatprep.subr.mxu0 0.0
    %4653 = vmatpush1.xpose.msra.mxu0 0.0
    %4654 = vmatprep.subr.mxu0 0.0
    %4655 = vmatpush1.xpose.msra.mxu0 0.0
    %4656 = vmatprep.subr.mxu0 0.0
    %4657 = vmatpush1.xpose.msra.mxu0 0.0
    %4658 = vmatprep.subr.mxu0 0.0
    %4659 = vmatpush1.xpose.msra.mxu0 0.0
    %4660 = vmatprep.subr.mxu0 0.0
    %4661 = vmatpush1.xpose.msra.mxu0 0.0
    %4662 = vmatprep.subr.mxu0 0.0
    %4663 = vmatpush1.xpose.msra.mxu0 0.0
    %4664 = vmatprep.subr.mxu0 0.0
    %4665 = vmatpush1.xpose.msra.mxu0 0.0
    %4666 = vmatprep.subr.mxu0 0.0
    %4667 = vmatpush1.xpose.msra.mxu0 0.0
    %4668 = vmatprep.subr.mxu0 0.0
    %4669 = vmatpush1.xpose.msra.mxu0 0.0
    %4670 = vmatprep.subr.mxu0 0.0
    %4671 = vmatpush1.xpose.msra.mxu0 0.0
    %4672 = vmatprep.subr.mxu0 0.0
    %4673 = vmatpush1.xpose.msra.mxu0 0.0
    %4674 = vmatprep.subr.mxu0 0.0
    %4675 = vmatpush1.xpose.msra.mxu0 0.0
    %4676 = vmatprep.subr.mxu0 0.0
    %4677 = vmatpush1.xpose.msra.mxu0 0.0
    %4678 = vmatprep.subr.mxu0 0.0
    %4679 = vmatpush1.xpose.msra.mxu0 0.0
    %4680 = vmatprep.subr.mxu0 0.0
    %4681 = vmatpush1.xpose.msra.mxu0 0.0
    %4682 = vmatprep.subr.mxu0 0.0
    %4683 = vmatpush1.xpose.msra.mxu0 0.0
    %4684 = vmatprep.subr.mxu0 0.0
    %4685 = vmatpush1.xpose.msra.mxu0 0.0
    %4686 = vmatprep.subr.mxu0 0.0
    %4687 = vmatpush1.xpose.msra.mxu0 0.0
    %4688 = vmatprep.subr.mxu0 0.0
    %4689 = vmatpush1.xpose.msra.mxu0 0.0
    %4690 = vmatprep.subr.mxu0 0.0
    %4691 = vmatpush1.xpose.msra.mxu0 0.0
    %4692 = vmatprep.subr.mxu0 0.0
    %4693 = vmatpush1.xpose.msra.mxu0 0.0
    %4694 = vmatprep.subr.mxu0 0.0
    %4695 = vmatpush1.xpose.msra.mxu0 0.0
    %4696 = vmatprep.subr.mxu0 0.0
    %4697 = vmatpush1.xpose.msra.mxu0 0.0
    %4698 = vmatprep.subr.mxu0 0.0
    %4699 = vmatpush1.xpose.msra.mxu0 0.0
    %4700 = vmatprep.subr.mxu0 0.0
    %4701 = vmatpush1.xpose.msra.mxu0 0.0
    %4702 = vmatprep.subr.mxu0 0.0
    %4703 = vmatpush1.xpose.msra.mxu0 0.0
    %4704 = vmatprep.mubr.f32.mxu0 0.0
    %4705 = vmatmul.mubr.f32.gmra.mrb[0].mxu0 %v4624
    %v4706 = vpop.f32.mrb[0].mxu0
    %v4707 = vadd.f32 0.0, %v4706
    %v4708 = vpop.f32.mrb[0].mxu0
    %4709 = vmatprep.mubr.f32.mxu0 0.0
    %4710 = vmatmul.mubr.f32.gmra.mrb[0].mxu0 %v4626
    %v4711 = vpop.f32.mrb[0].mxu0
    %v4712 = vadd.f32 0.0, %v4711
    %v4713 = vpop.f32.mrb[0].mxu0
    %4714 = vmatprep.mubr.f32.mxu0 0.0
    %4715 = vmatmul.mubr.f32.gmra.mrb[0].mxu0 %v4628
    %v4716 = vpop.f32.mrb[0].mxu0
    %v4717 = vadd.f32 0.0, %v4716
    %v4718 = vpop.f32.mrb[0].mxu0
    %4719 = vmatprep.mubr.f32.mxu0 0.0
    %4720 = vmatmul.mubr.f32.gmra.mrb[0].mxu0 %v4630
    %v4721 = vpop.f32.mrb[0].mxu0
    %v4722 = vadd.f32 0.0, %v4721
    %v4723 = vpop.f32.mrb[0].mxu0
    %4724 = vdwg.mxu0
    %4725 = vrot.lane.b32.xlu0 %v4203, 120
    %v4726 = vpop.permute.xlu0 %4725
    %4727 = vrot.lane.b32.xlu0 %v4208, 120
    %v4728 = vpop.permute.xlu0 %4727
    %4729 = vrot.lane.b32.xlu0 %v4213, 120
    %v4730 = vpop.permute.xlu0 %4729
    %4731 = vrot.lane.b32.xlu0 %v4218, 120
    %v4732 = vpop.permute.xlu0 %4731
    %v4733 = vsel %vm703, %v4203, 0
    %v4735 = vsel %vm703, %v4208, 0
    %v4737 = vsel %vm703, %v4213, 0
    %v4739 = vsel %vm703, %v4218, 0
    %v4741 = vsel %vm703, %v4726, 0
    %v4743 = vsel %vm703, %v4728, 0
    %v4745 = vsel %vm703, %v4730, 0
    %v4747 = vsel %vm703, %v4732, 0
    %4749 = vmatprep.subr.mxu0 0.0
    %4750 = vmatpush1.xpose.msra.mxu0 %v4741
    %4751 = vmatprep.subr.mxu0 0.0
    %4752 = vmatpush1.xpose.msra.mxu0 %v4743
    %4753 = vmatprep.subr.mxu0 0.0
    %4754 = vmatpush1.xpose.msra.mxu0 %v4745
    %4755 = vmatprep.subr.mxu0 0.0
    %4756 = vmatpush1.xpose.msra.mxu0 %v4747
    %4757 = vmatprep.subr.mxu0 0.0
    %4758 = vmatpush1.xpose.msra.mxu0 0.0
    %4759 = vmatprep.subr.mxu0 0.0
    %4760 = vmatpush1.xpose.msra.mxu0 0.0
    %4761 = vmatprep.subr.mxu0 0.0
    %4762 = vmatpush1.xpose.msra.mxu0 0.0
    %4763 = vmatprep.subr.mxu0 0.0
    %4764 = vmatpush1.xpose.msra.mxu0 0.0
    %4765 = vmatprep.subr.mxu0 0.0
    %4766 = vmatpush1.xpose.msra.mxu0 0.0
    %4767 = vmatprep.subr.mxu0 0.0
    %4768 = vmatpush1.xpose.msra.mxu0 0.0
    %4769 = vmatprep.subr.mxu0 0.0
    %4770 = vmatpush1.xpose.msra.mxu0 0.0
    %4771 = vmatprep.subr.mxu0 0.0
    %4772 = vmatpush1.xpose.msra.mxu0 0.0
    %4773 = vmatprep.subr.mxu0 0.0
    %4774 = vmatpush1.xpose.msra.mxu0 0.0
    %4775 = vmatprep.subr.mxu0 0.0
    %4776 = vmatpush1.xpose.msra.mxu0 0.0
    %4777 = vmatprep.subr.mxu0 0.0
    %4778 = vmatpush1.xpose.msra.mxu0 0.0
    %4779 = vmatprep.subr.mxu0 0.0
    %4780 = vmatpush1.xpose.msra.mxu0 0.0
    %4781 = vmatprep.subr.mxu0 0.0
    %4782 = vmatpush1.xpose.msra.mxu0 0.0
    %4783 = vmatprep.subr.mxu0 0.0
    %4784 = vmatpush1.xpose.msra.mxu0 0.0
    %4785 = vmatprep.subr.mxu0 0.0
    %4786 = vmatpush1.xpose.msra.mxu0 0.0
    %4787 = vmatprep.subr.mxu0 0.0
    %4788 = vmatpush1.xpose.msra.mxu0 0.0
    %4789 = vmatprep.subr.mxu0 0.0
    %4790 = vmatpush1.xpose.msra.mxu0 0.0
    %4791 = vmatprep.subr.mxu0 0.0
    %4792 = vmatpush1.xpose.msra.mxu0 0.0
    %4793 = vmatprep.subr.mxu0 0.0
    %4794 = vmatpush1.xpose.msra.mxu0 0.0
    %4795 = vmatprep.subr.mxu0 0.0
    %4796 = vmatpush1.xpose.msra.mxu0 0.0
    %4797 = vmatprep.subr.mxu0 0.0
    %4798 = vmatpush1.xpose.msra.mxu0 0.0
    %4799 = vmatprep.subr.mxu0 0.0
    %4800 = vmatpush1.xpose.msra.mxu0 0.0
    %4801 = vmatprep.subr.mxu0 0.0
    %4802 = vmatpush1.xpose.msra.mxu0 0.0
    %4803 = vmatprep.subr.mxu0 0.0
    %4804 = vmatpush1.xpose.msra.mxu0 0.0
    %4805 = vmatprep.subr.mxu0 0.0
    %4806 = vmatpush1.xpose.msra.mxu0 0.0
    %4807 = vmatprep.subr.mxu0 0.0
    %4808 = vmatpush1.xpose.msra.mxu0 0.0
    %4809 = vmatprep.subr.mxu0 0.0
    %4810 = vmatpush1.xpose.msra.mxu0 0.0
    %4811 = vmatprep.subr.mxu0 0.0
    %4812 = vmatpush1.xpose.msra.mxu0 0.0
    %4813 = vmatprep.mubr.f32.mxu0 0.0
    %4814 = vmatmul.mubr.f32.gmra.mrb[0].mxu0 %v4733
    %v4815 = vpop.f32.mrb[0].mxu0
    %v4816 = vadd.f32 0.0, %v4815
    %v4817 = vpop.f32.mrb[0].mxu0
    %4818 = vmatprep.mubr.f32.mxu0 0.0
    %4819 = vmatmul.mubr.f32.gmra.mrb[0].mxu0 %v4735
    %v4820 = vpop.f32.mrb[0].mxu0
    %v4821 = vadd.f32 0.0, %v4820
    %v4822 = vpop.f32.mrb[0].mxu0
    %4823 = vmatprep.mubr.f32.mxu0 0.0
    %4824 = vmatmul.mubr.f32.gmra.mrb[0].mxu0 %v4737
    %v4825 = vpop.f32.mrb[0].mxu0
    %v4826 = vadd.f32 0.0, %v4825
    %v4827 = vpop.f32.mrb[0].mxu0
    %4828 = vmatprep.mubr.f32.mxu0 0.0
    %4829 = vmatmul.mubr.f32.gmra.mrb[0].mxu0 %v4739
    %v4830 = vpop.f32.mrb[0].mxu0
    %v4831 = vadd.f32 0.0, %v4830
    %v4832 = vpop.f32.mrb[0].mxu0
    %4833 = vdwg.mxu0
    %4834 = vrot.lane.b32.xlu0 %v4270, 120
    %v4835 = vpop.permute.xlu0 %4834
    %4836 = vrot.lane.b32.xlu0 %v4272, 120
    %v4837 = vpop.permute.xlu0 %4836
    %4838 = vrot.lane.b32.xlu0 %v4274, 120
    %v4839 = vpop.permute.xlu0 %4838
    %4840 = vrot.lane.b32.xlu0 %v4276, 120
    %v4841 = vpop.permute.xlu0 %4840
    %v4842 = vsel %vm703, %v4270, 0
    %v4844 = vsel %vm703, %v4272, 0
    %v4846 = vsel %vm703, %v4274, 0
    %v4848 = vsel %vm703, %v4276, 0
    %v4850 = vsel %vm703, %v4835, 0
    %v4852 = vsel %vm703, %v4837, 0
    %v4854 = vsel %vm703, %v4839, 0
    %v4856 = vsel %vm703, %v4841, 0
    %4858 = vmatprep.subr.mxu0 0.0
    %4859 = vmatpush1.xpose.msra.mxu0 %v4850
    %4860 = vmatprep.subr.mxu0 0.0
    %4861 = vmatpush1.xpose.msra.mxu0 %v4852
    %4862 = vmatprep.subr.mxu0 0.0
    %4863 = vmatpush1.xpose.msra.mxu0 %v4854
    %4864 = vmatprep.subr.mxu0 0.0
    %4865 = vmatpush1.xpose.msra.mxu0 %v4856
    %4866 = vmatprep.subr.mxu0 0.0
    %4867 = vmatpush1.xpose.msra.mxu0 0.0
    %4868 = vmatprep.subr.mxu0 0.0
    %4869 = vmatpush1.xpose.msra.mxu0 0.0
    %4870 = vmatprep.subr.mxu0 0.0
    %4871 = vmatpush1.xpose.msra.mxu0 0.0
    %4872 = vmatprep.subr.mxu0 0.0
    %4873 = vmatpush1.xpose.msra.mxu0 0.0
    %4874 = vmatprep.subr.mxu0 0.0
    %4875 = vmatpush1.xpose.msra.mxu0 0.0
    %4876 = vmatprep.subr.mxu0 0.0
    %4877 = vmatpush1.xpose.msra.mxu0 0.0
    %4878 = vmatprep.subr.mxu0 0.0
    %4879 = vmatpush1.xpose.msra.mxu0 0.0
    %4880 = vmatprep.subr.mxu0 0.0
    %4881 = vmatpush1.xpose.msra.mxu0 0.0
    %4882 = vmatprep.subr.mxu0 0.0
    %4883 = vmatpush1.xpose.msra.mxu0 0.0
    %4884 = vmatprep.subr.mxu0 0.0
    %4885 = vmatpush1.xpose.msra.mxu0 0.0
    %4886 = vmatprep.subr.mxu0 0.0
    %4887 = vmatpush1.xpose.msra.mxu0 0.0
    %4888 = vmatprep.subr.mxu0 0.0
    %4889 = vmatpush1.xpose.msra.mxu0 0.0
    %4890 = vmatprep.subr.mxu0 0.0
    %4891 = vmatpush1.xpose.msra.mxu0 0.0
    %4892 = vmatprep.subr.mxu0 0.0
    %4893 = vmatpush1.xpose.msra.mxu0 0.0
    %4894 = vmatprep.subr.mxu0 0.0
    %4895 = vmatpush1.xpose.msra.mxu0 0.0
    %4896 = vmatprep.subr.mxu0 0.0
    %4897 = vmatpush1.xpose.msra.mxu0 0.0
    %4898 = vmatprep.subr.mxu0 0.0
    %4899 = vmatpush1.xpose.msra.mxu0 0.0
    %4900 = vmatprep.subr.mxu0 0.0
    %4901 = vmatpush1.xpose.msra.mxu0 0.0
    %4902 = vmatprep.subr.mxu0 0.0
    %4903 = vmatpush1.xpose.msra.mxu0 0.0
    %4904 = vmatprep.subr.mxu0 0.0
    %4905 = vmatpush1.xpose.msra.mxu0 0.0
    %4906 = vmatprep.subr.mxu0 0.0
    %4907 = vmatpush1.xpose.msra.mxu0 0.0
    %4908 = vmatprep.subr.mxu0 0.0
    %4909 = vmatpush1.xpose.msra.mxu0 0.0
    %4910 = vmatprep.subr.mxu0 0.0
    %4911 = vmatpush1.xpose.msra.mxu0 0.0
    %4912 = vmatprep.subr.mxu0 0.0
    %4913 = vmatpush1.xpose.msra.mxu0 0.0
    %4914 = vmatprep.subr.mxu0 0.0
    %4915 = vmatpush1.xpose.msra.mxu0 0.0
    %4916 = vmatprep.subr.mxu0 0.0
    %4917 = vmatpush1.xpose.msra.mxu0 0.0
    %4918 = vmatprep.subr.mxu0 0.0
    %4919 = vmatpush1.xpose.msra.mxu0 0.0
    %4920 = vmatprep.subr.mxu0 0.0
    %4921 = vmatpush1.xpose.msra.mxu0 0.0
    %4922 = vmatprep.mubr.f32.mxu0 0.0
    %4923 = vmatmul.mubr.f32.gmra.mrb[0].mxu0 %v4842
    %v4924 = vpop.f32.mrb[0].mxu0
    %v4925 = vadd.f32 0.0, %v4924
    %v4926 = vpop.f32.mrb[0].mxu0
    %4927 = vmatprep.mubr.f32.mxu0 0.0
    %4928 = vmatmul.mubr.f32.gmra.mrb[0].mxu0 %v4844
    %v4929 = vpop.f32.mrb[0].mxu0
    %v4930 = vadd.f32 0.0, %v4929
    %v4931 = vpop.f32.mrb[0].mxu0
    %4932 = vmatprep.mubr.f32.mxu0 0.0
    %4933 = vmatmul.mubr.f32.gmra.mrb[0].mxu0 %v4846
    %v4934 = vpop.f32.mrb[0].mxu0
    %v4935 = vadd.f32 0.0, %v4934
    %v4936 = vpop.f32.mrb[0].mxu0
    %4937 = vmatprep.mubr.f32.mxu0 0.0
    %4938 = vmatmul.mubr.f32.gmra.mrb[0].mxu0 %v4848
    %v4939 = vpop.f32.mrb[0].mxu0
    %v4940 = vadd.f32 0.0, %v4939
    %v4941 = vpop.f32.mrb[0].mxu0
    %4942 = vdwg.mxu0
    %4943 = vrot.lane.b32.xlu0 %v4223, 120
    %v4944 = vpop.permute.xlu0 %4943
    %4945 = vrot.lane.b32.xlu0 %v4228, 120
    %v4946 = vpop.permute.xlu0 %4945
    %4947 = vrot.lane.b32.xlu0 %v4233, 120
    %v4948 = vpop.permute.xlu0 %4947
    %4949 = vrot.lane.b32.xlu0 %v4238, 120
    %v4950 = vpop.permute.xlu0 %4949
    %v4951 = vsel %vm703, %v4223, 0
    %v4953 = vsel %vm703, %v4228, 0
    %v4955 = vsel %vm703, %v4233, 0
    %v4957 = vsel %vm703, %v4238, 0
    %v4959 = vsel %vm703, %v4944, 0
    %v4961 = vsel %vm703, %v4946, 0
    %v4963 = vsel %vm703, %v4948, 0
    %v4965 = vsel %vm703, %v4950, 0
    %4967 = vmatprep.subr.mxu0 0.0
    %4968 = vmatpush1.xpose.msra.mxu0 %v4959
    %4969 = vmatprep.subr.mxu0 0.0
    %4970 = vmatpush1.xpose.msra.mxu0 %v4961
    %4971 = vmatprep.subr.mxu0 0.0
    %4972 = vmatpush1.xpose.msra.mxu0 %v4963
    %4973 = vmatprep.subr.mxu0 0.0
    %4974 = vmatpush1.xpose.msra.mxu0 %v4965
    %4975 = vmatprep.subr.mxu0 0.0
    %4976 = vmatpush1.xpose.msra.mxu0 0.0
    %4977 = vmatprep.subr.mxu0 0.0
    %4978 = vmatpush1.xpose.msra.mxu0 0.0
    %4979 = vmatprep.subr.mxu0 0.0
    %4980 = vmatpush1.xpose.msra.mxu0 0.0
    %4981 = vmatprep.subr.mxu0 0.0
    %4982 = vmatpush1.xpose.msra.mxu0 0.0
    %4983 = vmatprep.subr.mxu0 0.0
    %4984 = vmatpush1.xpose.msra.mxu0 0.0
    %4985 = vmatprep.subr.mxu0 0.0
    %4986 = vmatpush1.xpose.msra.mxu0 0.0
    %4987 = vmatprep.subr.mxu0 0.0
    %4988 = vmatpush1.xpose.msra.mxu0 0.0
    %4989 = vmatprep.subr.mxu0 0.0
    %4990 = vmatpush1.xpose.msra.mxu0 0.0
    %4991 = vmatprep.subr.mxu0 0.0
    %4992 = vmatpush1.xpose.msra.mxu0 0.0
    %4993 = vmatprep.subr.mxu0 0.0
    %4994 = vmatpush1.xpose.msra.mxu0 0.0
    %4995 = vmatprep.subr.mxu0 0.0
    %4996 = vmatpush1.xpose.msra.mxu0 0.0
    %4997 = vmatprep.subr.mxu0 0.0
    %4998 = vmatpush1.xpose.msra.mxu0 0.0
    %4999 = vmatprep.subr.mxu0 0.0
    %5000 = vmatpush1.xpose.msra.mxu0 0.0
    %5001 = vmatprep.subr.mxu0 0.0
    %5002 = vmatpush1.xpose.msra.mxu0 0.0
    %5003 = vmatprep.subr.mxu0 0.0
    %5004 = vmatpush1.xpose.msra.mxu0 0.0
    %5005 = vmatprep.subr.mxu0 0.0
    %5006 = vmatpush1.xpose.msra.mxu0 0.0
    %5007 = vmatprep.subr.mxu0 0.0
    %5008 = vmatpush1.xpose.msra.mxu0 0.0
    %5009 = vmatprep.subr.mxu0 0.0
    %5010 = vmatpush1.xpose.msra.mxu0 0.0
    %5011 = vmatprep.subr.mxu0 0.0
    %5012 = vmatpush1.xpose.msra.mxu0 0.0
    %5013 = vmatprep.subr.mxu0 0.0
    %5014 = vmatpush1.xpose.msra.mxu0 0.0
    %5015 = vmatprep.subr.mxu0 0.0
    %5016 = vmatpush1.xpose.msra.mxu0 0.0
    %5017 = vmatprep.subr.mxu0 0.0
    %5018 = vmatpush1.xpose.msra.mxu0 0.0
    %5019 = vmatprep.subr.mxu0 0.0
    %5020 = vmatpush1.xpose.msra.mxu0 0.0
    %5021 = vmatprep.subr.mxu0 0.0
    %5022 = vmatpush1.xpose.msra.mxu0 0.0
    %5023 = vmatprep.subr.mxu0 0.0
    %5024 = vmatpush1.xpose.msra.mxu0 0.0
    %5025 = vmatprep.subr.mxu0 0.0
    %5026 = vmatpush1.xpose.msra.mxu0 0.0
    %5027 = vmatprep.subr.mxu0 0.0
    %5028 = vmatpush1.xpose.msra.mxu0 0.0
    %5029 = vmatprep.subr.mxu0 0.0
    %5030 = vmatpush1.xpose.msra.mxu0 0.0
    %5031 = vmatprep.mubr.f32.mxu0 0.0
    %5032 = vmatmul.mubr.f32.gmra.mrb[0].mxu0 %v4951
    %v5033 = vpop.f32.mrb[0].mxu0
    %v5034 = vadd.f32 0.0, %v5033
    %v5035 = vpop.f32.mrb[0].mxu0
    %5036 = vmatprep.mubr.f32.mxu0 0.0
    %5037 = vmatmul.mubr.f32.gmra.mrb[0].mxu0 %v4953
    %v5038 = vpop.f32.mrb[0].mxu0
    %v5039 = vadd.f32 0.0, %v5038
    %v5040 = vpop.f32.mrb[0].mxu0
    %5041 = vmatprep.mubr.f32.mxu0 0.0
    %5042 = vmatmul.mubr.f32.gmra.mrb[0].mxu0 %v4955
    %v5043 = vpop.f32.mrb[0].mxu0
    %v5044 = vadd.f32 0.0, %v5043
    %v5045 = vpop.f32.mrb[0].mxu0
    %5046 = vmatprep.mubr.f32.mxu0 0.0
    %5047 = vmatmul.mubr.f32.gmra.mrb[0].mxu0 %v4957
    %v5048 = vpop.f32.mrb[0].mxu0
    %v5049 = vadd.f32 0.0, %v5048
    %v5050 = vpop.f32.mrb[0].mxu0
    %5051 = vdwg.mxu0
    %5052 = vrot.lane.b32.xlu0 %v4282, 120
    %v5053 = vpop.permute.xlu0 %5052
    %5054 = vrot.lane.b32.xlu0 %v4284, 120
    %v5055 = vpop.permute.xlu0 %5054
    %5056 = vrot.lane.b32.xlu0 %v4286, 120
    %v5057 = vpop.permute.xlu0 %5056
    %5058 = vrot.lane.b32.xlu0 %v4288, 120
    %v5059 = vpop.permute.xlu0 %5058
    %v5060 = vsel %vm703, %v4282, 0
    %v5062 = vsel %vm703, %v4284, 0
    %v5064 = vsel %vm703, %v4286, 0
    %v5066 = vsel %vm703, %v4288, 0
    %v5068 = vsel %vm703, %v5053, 0
    %v5070 = vsel %vm703, %v5055, 0
    %v5072 = vsel %vm703, %v5057, 0
    %v5074 = vsel %vm703, %v5059, 0
    %5076 = vmatprep.subr.mxu0 0.0
    %5077 = vmatpush1.xpose.msra.mxu0 %v5068
    %5078 = vmatprep.subr.mxu0 0.0
    %5079 = vmatpush1.xpose.msra.mxu0 %v5070
    %5080 = vmatprep.subr.mxu0 0.0
    %5081 = vmatpush1.xpose.msra.mxu0 %v5072
    %5082 = vmatprep.subr.mxu0 0.0
    %5083 = vmatpush1.xpose.msra.mxu0 %v5074
    %5084 = vmatprep.subr.mxu0 0.0
    %5085 = vmatpush1.xpose.msra.mxu0 0.0
    %5086 = vmatprep.subr.mxu0 0.0
    %5087 = vmatpush1.xpose.msra.mxu0 0.0
    %5088 = vmatprep.subr.mxu0 0.0
    %5089 = vmatpush1.xpose.msra.mxu0 0.0
    %5090 = vmatprep.subr.mxu0 0.0
    %5091 = vmatpush1.xpose.msra.mxu0 0.0
    %5092 = vmatprep.subr.mxu0 0.0
    %5093 = vmatpush1.xpose.msra.mxu0 0.0
    %5094 = vmatprep.subr.mxu0 0.0
    %5095 = vmatpush1.xpose.msra.mxu0 0.0
    %5096 = vmatprep.subr.mxu0 0.0
    %5097 = vmatpush1.xpose.msra.mxu0 0.0
    %5098 = vmatprep.subr.mxu0 0.0
    %5099 = vmatpush1.xpose.msra.mxu0 0.0
    %5100 = vmatprep.subr.mxu0 0.0
    %5101 = vmatpush1.xpose.msra.mxu0 0.0
    %5102 = vmatprep.subr.mxu0 0.0
    %5103 = vmatpush1.xpose.msra.mxu0 0.0
    %5104 = vmatprep.subr.mxu0 0.0
    %5105 = vmatpush1.xpose.msra.mxu0 0.0
    %5106 = vmatprep.subr.mxu0 0.0
    %5107 = vmatpush1.xpose.msra.mxu0 0.0
    %5108 = vmatprep.subr.mxu0 0.0
    %5109 = vmatpush1.xpose.msra.mxu0 0.0
    %5110 = vmatprep.subr.mxu0 0.0
    %5111 = vmatpush1.xpose.msra.mxu0 0.0
    %5112 = vmatprep.subr.mxu0 0.0
    %5113 = vmatpush1.xpose.msra.mxu0 0.0
    %5114 = vmatprep.subr.mxu0 0.0
    %5115 = vmatpush1.xpose.msra.mxu0 0.0
    %5116 = vmatprep.subr.mxu0 0.0
    %5117 = vmatpush1.xpose.msra.mxu0 0.0
    %5118 = vmatprep.subr.mxu0 0.0
    %5119 = vmatpush1.xpose.msra.mxu0 0.0
    %5120 = vmatprep.subr.mxu0 0.0
    %5121 = vmatpush1.xpose.msra.mxu0 0.0
    %5122 = vmatprep.subr.mxu0 0.0
    %5123 = vmatpush1.xpose.msra.mxu0 0.0
    %5124 = vmatprep.subr.mxu0 0.0
    %5125 = vmatpush1.xpose.msra.mxu0 0.0
    %5126 = vmatprep.subr.mxu0 0.0
    %5127 = vmatpush1.xpose.msra.mxu0 0.0
    %5128 = vmatprep.subr.mxu0 0.0
    %5129 = vmatpush1.xpose.msra.mxu0 0.0
    %5130 = vmatprep.subr.mxu0 0.0
    %5131 = vmatpush1.xpose.msra.mxu0 0.0
    %5132 = vmatprep.subr.mxu0 0.0
    %5133 = vmatpush1.xpose.msra.mxu0 0.0
    %5134 = vmatprep.subr.mxu0 0.0
    %5135 = vmatpush1.xpose.msra.mxu0 0.0
    %5136 = vmatprep.subr.mxu0 0.0
    %5137 = vmatpush1.xpose.msra.mxu0 0.0
    %5138 = vmatprep.subr.mxu0 0.0
    %5139 = vmatpush1.xpose.msra.mxu0 0.0
    %5140 = vmatprep.mubr.f32.mxu0 0.0
    %5141 = vmatmul.mubr.f32.gmra.mrb[0].mxu0 %v5060
    %v5142 = vpop.f32.mrb[0].mxu0
    %v5143 = vadd.f32 0.0, %v5142
    %v5144 = vpop.f32.mrb[0].mxu0
    %5145 = vmatprep.mubr.f32.mxu0 0.0
    %5146 = vmatmul.mubr.f32.gmra.mrb[0].mxu0 %v5062
    %v5147 = vpop.f32.mrb[0].mxu0
    %v5148 = vadd.f32 0.0, %v5147
    %v5149 = vpop.f32.mrb[0].mxu0
    %5150 = vmatprep.mubr.f32.mxu0 0.0
    %5151 = vmatmul.mubr.f32.gmra.mrb[0].mxu0 %v5064
    %v5152 = vpop.f32.mrb[0].mxu0
    %v5153 = vadd.f32 0.0, %v5152
    %v5154 = vpop.f32.mrb[0].mxu0
    %5155 = vmatprep.mubr.f32.mxu0 0.0
    %5156 = vmatmul.mubr.f32.gmra.mrb[0].mxu0 %v5066
    %v5157 = vpop.f32.mrb[0].mxu0
    %v5158 = vadd.f32 0.0, %v5157
    %v5159 = vpop.f32.mrb[0].mxu0
    %5160 = vdwg.mxu0
    %v5161 = vmul.f32 %v4380, 0.5
    %v5162 = vmul.f32 %v4385, 0.5
    %v5163 = vmul.f32 %v4390, 0.5
    %v5164 = vmul.f32 %v4395, 0.5
    %v5165 = vmul.f32 %v4489, 0.5
    %v5166 = vmul.f32 %v4494, 0.5
    %v5167 = vmul.f32 %v4499, 0.5
    %v5168 = vmul.f32 %v4504, 0.5
    %v5169 = vmul.f32 %v4598, 0.5
    %v5170 = vmul.f32 %v4603, 0.5
    %v5171 = vmul.f32 %v4608, 0.5
    %v5172 = vmul.f32 %v4613, 0.5
    %v5173 = vmul.f32 %v4707, 0.5
    %v5174 = vmul.f32 %v4712, 0.5
    %v5175 = vmul.f32 %v4717, 0.5
    %v5176 = vmul.f32 %v4722, 0.5
    %v5177 = vmul.f32 %v4816, 0.5
    %v5178 = vmul.f32 %v4821, 0.5
    %v5179 = vmul.f32 %v4826, 0.5
    %v5180 = vmul.f32 %v4831, 0.5
    %v5181 = vmul.f32 %v4925, 0.5
    %v5182 = vmul.f32 %v4930, 0.5
    %v5183 = vmul.f32 %v4935, 0.5
    %v5184 = vmul.f32 %v4940, 0.5
    %v5185 = vmul.f32 %v5034, 0.5
    %v5186 = vmul.f32 %v5039, 0.5
    %v5187 = vmul.f32 %v5044, 0.5
    %v5188 = vmul.f32 %v5049, 0.5
    %v5189 = vmul.f32 %v5143, 0.5
    %v5190 = vmul.f32 %v5148, 0.5
    %v5191 = vmul.f32 %v5153, 0.5
    %v5192 = vmul.f32 %v5158, 0.5
    %v5193 = vsel %vm77, %v5161, -inf
    %5194 = vmax.xlane.f32.xlu0 %v5193
    %v5195 = vpop.xlane.xlu0 %5194
    %v5196 = vsel %vm77, %v5162, -inf
    %5197 = vmax.xlane.f32.xlu0 %v5196
    %v5198 = vpop.xlane.xlu0 %5197
    %v5199 = vsel %vm77, %v5163, -inf
    %5200 = vmax.xlane.f32.xlu0 %v5199
    %v5201 = vpop.xlane.xlu0 %5200
    %v5202 = vsel %vm77, %v5164, -inf
    %5203 = vmax.xlane.f32.xlu0 %v5202
    %v5204 = vpop.xlane.xlu0 %5203
    %v5205 = vsel %vm77, %v5165, -inf
    %5206 = vmax.xlane.f32.xlu0 %v5205
    %v5207 = vpop.xlane.xlu0 %5206
    %v5208 = vsel %vm77, %v5166, -inf
    %5209 = vmax.xlane.f32.xlu0 %v5208
    %v5210 = vpop.xlane.xlu0 %5209
    %v5211 = vsel %vm77, %v5167, -inf
    %5212 = vmax.xlane.f32.xlu0 %v5211
    %v5213 = vpop.xlane.xlu0 %5212
    %v5214 = vsel %vm77, %v5168, -inf
    %5215 = vmax.xlane.f32.xlu0 %v5214
    %v5216 = vpop.xlane.xlu0 %5215
    %v5217 = vsel %vm77, %v5169, -inf
    %5218 = vmax.xlane.f32.xlu0 %v5217
    %v5219 = vpop.xlane.xlu0 %5218
    %v5220 = vsel %vm77, %v5170, -inf
    %5221 = vmax.xlane.f32.xlu0 %v5220
    %v5222 = vpop.xlane.xlu0 %5221
    %v5223 = vsel %vm77, %v5171, -inf
    %5224 = vmax.xlane.f32.xlu0 %v5223
    %v5225 = vpop.xlane.xlu0 %5224
    %v5226 = vsel %vm77, %v5172, -inf
    %5227 = vmax.xlane.f32.xlu0 %v5226
    %v5228 = vpop.xlane.xlu0 %5227
    %v5229 = vsel %vm77, %v5173, -inf
    %5230 = vmax.xlane.f32.xlu0 %v5229
    %v5231 = vpop.xlane.xlu0 %5230
    %v5232 = vsel %vm77, %v5174, -inf
    %5233 = vmax.xlane.f32.xlu0 %v5232
    %v5234 = vpop.xlane.xlu0 %5233
    %v5235 = vsel %vm77, %v5175, -inf
    %5236 = vmax.xlane.f32.xlu0 %v5235
    %v5237 = vpop.xlane.xlu0 %5236
    %v5238 = vsel %vm77, %v5176, -inf
    %5239 = vmax.xlane.f32.xlu0 %v5238
    %v5240 = vpop.xlane.xlu0 %5239
    %v5241 = vsel %vm77, %v5177, -inf
    %5242 = vmax.xlane.f32.xlu0 %v5241
    %v5243 = vpop.xlane.xlu0 %5242
    %v5244 = vsel %vm77, %v5178, -inf
    %5245 = vmax.xlane.f32.xlu0 %v5244
    %v5246 = vpop.xlane.xlu0 %5245
    %v5247 = vsel %vm77, %v5179, -inf
    %5248 = vmax.xlane.f32.xlu0 %v5247
    %v5249 = vpop.xlane.xlu0 %5248
    %v5250 = vsel %vm77, %v5180, -inf
    %5251 = vmax.xlane.f32.xlu0 %v5250
    %v5252 = vpop.xlane.xlu0 %5251
    %v5253 = vsel %vm77, %v5181, -inf
    %5254 = vmax.xlane.f32.xlu0 %v5253
    %v5255 = vpop.xlane.xlu0 %5254
    %v5256 = vsel %vm77, %v5182, -inf
    %5257 = vmax.xlane.f32.xlu0 %v5256
    %v5258 = vpop.xlane.xlu0 %5257
    %v5259 = vsel %vm77, %v5183, -inf
    %5260 = vmax.xlane.f32.xlu0 %v5259
    %v5261 = vpop.xlane.xlu0 %5260
    %v5262 = vsel %vm77, %v5184, -inf
    %5263 = vmax.xlane.f32.xlu0 %v5262
    %v5264 = vpop.xlane.xlu0 %5263
    %v5265 = vsel %vm77, %v5185, -inf
    %5266 = vmax.xlane.f32.xlu0 %v5265
    %v5267 = vpop.xlane.xlu0 %5266
    %v5268 = vsel %vm77, %v5186, -inf
    %5269 = vmax.xlane.f32.xlu0 %v5268
    %v5270 = vpop.xlane.xlu0 %5269
    %v5271 = vsel %vm77, %v5187, -inf
    %5272 = vmax.xlane.f32.xlu0 %v5271
    %v5273 = vpop.xlane.xlu0 %5272
    %v5274 = vsel %vm77, %v5188, -inf
    %5275 = vmax.xlane.f32.xlu0 %v5274
    %v5276 = vpop.xlane.xlu0 %5275
    %v5277 = vsel %vm77, %v5189, -inf
    %5278 = vmax.xlane.f32.xlu0 %v5277
    %v5279 = vpop.xlane.xlu0 %5278
    %v5280 = vsel %vm77, %v5190, -inf
    %5281 = vmax.xlane.f32.xlu0 %v5280
    %v5282 = vpop.xlane.xlu0 %5281
    %v5283 = vsel %vm77, %v5191, -inf
    %5284 = vmax.xlane.f32.xlu0 %v5283
    %v5285 = vpop.xlane.xlu0 %5284
    %v5286 = vsel %vm77, %v5192, -inf
    %5287 = vmax.xlane.f32.xlu0 %v5286
    %v5288 = vpop.xlane.xlu0 %5287
    %v5289 = vsub.f32 %v5161, %v5195
    %v5290 = vsub.f32 %v5162, %v5198
    %v5291 = vsub.f32 %v5163, %v5201
    %v5292 = vsub.f32 %v5164, %v5204
    %v5293 = vsub.f32 %v5165, %v5207
    %v5294 = vsub.f32 %v5166, %v5210
    %v5295 = vsub.f32 %v5167, %v5213
    %v5296 = vsub.f32 %v5168, %v5216
    %v5297 = vsub.f32 %v5169, %v5219
    %v5298 = vsub.f32 %v5170, %v5222
    %v5299 = vsub.f32 %v5171, %v5225
    %v5300 = vsub.f32 %v5172, %v5228
    %v5301 = vsub.f32 %v5173, %v5231
    %v5302 = vsub.f32 %v5174, %v5234
    %v5303 = vsub.f32 %v5175, %v5237
    %v5304 = vsub.f32 %v5176, %v5240
    %v5305 = vsub.f32 %v5177, %v5243
    %v5306 = vsub.f32 %v5178, %v5246
    %v5307 = vsub.f32 %v5179, %v5249
    %v5308 = vsub.f32 %v5180, %v5252
    %v5309 = vsub.f32 %v5181, %v5255
    %v5310 = vsub.f32 %v5182, %v5258
    %v5311 = vsub.f32 %v5183, %v5261
    %v5312 = vsub.f32 %v5184, %v5264
    %v5313 = vsub.f32 %v5185, %v5267
    %v5314 = vsub.f32 %v5186, %v5270
    %v5315 = vsub.f32 %v5187, %v5273
    %v5316 = vsub.f32 %v5188, %v5276
    %v5317 = vsub.f32 %v5189, %v5279
    %v5318 = vsub.f32 %v5190, %v5282
    %v5319 = vsub.f32 %v5191, %v5285
    %v5320 = vsub.f32 %v5192, %v5288
    %v5321 = vmul.f32 %v5289, 1.442695
    %v5322 = vpow.pop %v5321
    %v5323 = vmul.f32 %v5290, 1.442695
    %v5324 = vpow.pop %v5323
    %v5325 = vmul.f32 %v5291, 1.442695
    %v5326 = vpow.pop %v5325
    %v5327 = vmul.f32 %v5292, 1.442695
    %v5328 = vpow.pop %v5327
    %v5329 = vmul.f32 %v5293, 1.442695
    %v5330 = vpow.pop %v5329
    %v5331 = vmul.f32 %v5294, 1.442695
    %v5332 = vpow.pop %v5331
    %v5333 = vmul.f32 %v5295, 1.442695
    %v5334 = vpow.pop %v5333
    %v5335 = vmul.f32 %v5296, 1.442695
    %v5336 = vpow.pop %v5335
    %v5337 = vmul.f32 %v5297, 1.442695
    %v5338 = vpow.pop %v5337
    %v5339 = vmul.f32 %v5298, 1.442695
    %v5340 = vpow.pop %v5339
    %v5341 = vmul.f32 %v5299, 1.442695
    %v5342 = vpow.pop %v5341
    %v5343 = vmul.f32 %v5300, 1.442695
    %v5344 = vpow.pop %v5343
    %v5345 = vmul.f32 %v5301, 1.442695
    %v5346 = vpow.pop %v5345
    %v5347 = vmul.f32 %v5302, 1.442695
    %v5348 = vpow.pop %v5347
    %v5349 = vmul.f32 %v5303, 1.442695
    %v5350 = vpow.pop %v5349
    %v5351 = vmul.f32 %v5304, 1.442695
    %v5352 = vpow.pop %v5351
    %v5353 = vmul.f32 %v5305, 1.442695
    %v5354 = vpow.pop %v5353
    %v5355 = vmul.f32 %v5306, 1.442695
    %v5356 = vpow.pop %v5355
    %v5357 = vmul.f32 %v5307, 1.442695
    %v5358 = vpow.pop %v5357
    %v5359 = vmul.f32 %v5308, 1.442695
    %v5360 = vpow.pop %v5359
    %v5361 = vmul.f32 %v5309, 1.442695
    %v5362 = vpow.pop %v5361
    %v5363 = vmul.f32 %v5310, 1.442695
    %v5364 = vpow.pop %v5363
    %v5365 = vmul.f32 %v5311, 1.442695
    %v5366 = vpow.pop %v5365
    %v5367 = vmul.f32 %v5312, 1.442695
    %v5368 = vpow.pop %v5367
    %v5369 = vmul.f32 %v5313, 1.442695
    %v5370 = vpow.pop %v5369
    %v5371 = vmul.f32 %v5314, 1.442695
    %v5372 = vpow.pop %v5371
    %v5373 = vmul.f32 %v5315, 1.442695
    %v5374 = vpow.pop %v5373
    %v5375 = vmul.f32 %v5316, 1.442695
    %v5376 = vpow.pop %v5375
    %v5377 = vmul.f32 %v5317, 1.442695
    %v5378 = vpow.pop %v5377
    %v5379 = vmul.f32 %v5318, 1.442695
    %v5380 = vpow.pop %v5379
    %v5381 = vmul.f32 %v5319, 1.442695
    %v5382 = vpow.pop %v5381
    %v5383 = vmul.f32 %v5320, 1.442695
    %v5384 = vpow.pop %v5383
    %v5385 = vsel %vm77, %v5322, 0.0
    %5386 = vadd.xlane.f32.xlu0 %v5385
    %v5387 = vpop.xlane.xlu0 %5386
    %v5388 = vsel %vm77, %v5324, 0.0
    %5389 = vadd.xlane.f32.xlu0 %v5388
    %v5390 = vpop.xlane.xlu0 %5389
    %v5391 = vsel %vm77, %v5326, 0.0
    %5392 = vadd.xlane.f32.xlu0 %v5391
    %v5393 = vpop.xlane.xlu0 %5392
    %v5394 = vsel %vm77, %v5328, 0.0
    %5395 = vadd.xlane.f32.xlu0 %v5394
    %v5396 = vpop.xlane.xlu0 %5395
    %v5397 = vsel %vm77, %v5330, 0.0
    %5398 = vadd.xlane.f32.xlu0 %v5397
    %v5399 = vpop.xlane.xlu0 %5398
    %v5400 = vsel %vm77, %v5332, 0.0
    %5401 = vadd.xlane.f32.xlu0 %v5400
    %v5402 = vpop.xlane.xlu0 %5401
    %v5403 = vsel %vm77, %v5334, 0.0
    %5404 = vadd.xlane.f32.xlu0 %v5403
    %v5405 = vpop.xlane.xlu0 %5404
    %v5406 = vsel %vm77, %v5336, 0.0
    %5407 = vadd.xlane.f32.xlu0 %v5406
    %v5408 = vpop.xlane.xlu0 %5407
    %v5409 = vsel %vm77, %v5338, 0.0
    %5410 = vadd.xlane.f32.xlu0 %v5409
    %v5411 = vpop.xlane.xlu0 %5410
    %v5412 = vsel %vm77, %v5340, 0.0
    %5413 = vadd.xlane.f32.xlu0 %v5412
    %v5414 = vpop.xlane.xlu0 %5413
    %v5415 = vsel %vm77, %v5342, 0.0
    %5416 = vadd.xlane.f32.xlu0 %v5415
    %v5417 = vpop.xlane.xlu0 %5416
    %v5418 = vsel %vm77, %v5344, 0.0
    %5419 = vadd.xlane.f32.xlu0 %v5418
    %v5420 = vpop.xlane.xlu0 %5419
    %v5421 = vsel %vm77, %v5346, 0.0
    %5422 = vadd.xlane.f32.xlu0 %v5421
    %v5423 = vpop.xlane.xlu0 %5422
    %v5424 = vsel %vm77, %v5348, 0.0
    %5425 = vadd.xlane.f32.xlu0 %v5424
    %v5426 = vpop.xlane.xlu0 %5425
    %v5427 = vsel %vm77, %v5350, 0.0
    %5428 = vadd.xlane.f32.xlu0 %v5427
    %v5429 = vpop.xlane.xlu0 %5428
    %v5430 = vsel %vm77, %v5352, 0.0
    %5431 = vadd.xlane.f32.xlu0 %v5430
    %v5432 = vpop.xlane.xlu0 %5431
    %v5433 = vsel %vm77, %v5354, 0.0
    %5434 = vadd.xlane.f32.xlu0 %v5433
    %v5435 = vpop.xlane.xlu0 %5434
    %v5436 = vsel %vm77, %v5356, 0.0
    %5437 = vadd.xlane.f32.xlu0 %v5436
    %v5438 = vpop.xlane.xlu0 %5437
    %v5439 = vsel %vm77, %v5358, 0.0
    %5440 = vadd.xlane.f32.xlu0 %v5439
    %v5441 = vpop.xlane.xlu0 %5440
    %v5442 = vsel %vm77, %v5360, 0.0
    %5443 = vadd.xlane.f32.xlu0 %v5442
    %v5444 = vpop.xlane.xlu0 %5443
    %v5445 = vsel %vm77, %v5362, 0.0
    %5446 = vadd.xlane.f32.xlu0 %v5445
    %v5447 = vpop.xlane.xlu0 %5446
    %v5448 = vsel %vm77, %v5364, 0.0
    %5449 = vadd.xlane.f32.xlu0 %v5448
    %v5450 = vpop.xlane.xlu0 %5449
    %v5451 = vsel %vm77, %v5366, 0.0
    %5452 = vadd.xlane.f32.xlu0 %v5451
    %v5453 = vpop.xlane.xlu0 %5452
    %v5454 = vsel %vm77, %v5368, 0.0
    %5455 = vadd.xlane.f32.xlu0 %v5454
    %v5456 = vpop.xlane.xlu0 %5455
    %v5457 = vsel %vm77, %v5370, 0.0
    %5458 = vadd.xlane.f32.xlu0 %v5457
    %v5459 = vpop.xlane.xlu0 %5458
    %v5460 = vsel %vm77, %v5372, 0.0
    %5461 = vadd.xlane.f32.xlu0 %v5460
    %v5462 = vpop.xlane.xlu0 %5461
    %v5463 = vsel %vm77, %v5374, 0.0
    %5464 = vadd.xlane.f32.xlu0 %v5463
    %v5465 = vpop.xlane.xlu0 %5464
    %v5466 = vsel %vm77, %v5376, 0.0
    %5467 = vadd.xlane.f32.xlu0 %v5466
    %v5468 = vpop.xlane.xlu0 %5467
    %v5469 = vsel %vm77, %v5378, 0.0
    %5470 = vadd.xlane.f32.xlu0 %v5469
    %v5471 = vpop.xlane.xlu0 %5470
    %v5472 = vsel %vm77, %v5380, 0.0
    %5473 = vadd.xlane.f32.xlu0 %v5472
    %v5474 = vpop.xlane.xlu0 %5473
    %v5475 = vsel %vm77, %v5382, 0.0
    %5476 = vadd.xlane.f32.xlu0 %v5475
    %v5477 = vpop.xlane.xlu0 %5476
    %v5478 = vsel %vm77, %v5384, 0.0
    %5479 = vadd.xlane.f32.xlu0 %v5478
    %v5480 = vpop.xlane.xlu0 %5479
    %v5481 = vrcp.pop %v5387
    %v5482 = vrcp.pop %v5390
    %v5483 = vrcp.pop %v5393
    %v5484 = vrcp.pop %v5396
    %v5485 = vrcp.pop %v5399
    %v5486 = vrcp.pop %v5402
    %v5487 = vrcp.pop %v5405
    %v5488 = vrcp.pop %v5408
    %v5489 = vrcp.pop %v5411
    %v5490 = vrcp.pop %v5414
    %v5491 = vrcp.pop %v5417
    %v5492 = vrcp.pop %v5420
    %v5493 = vrcp.pop %v5423
    %v5494 = vrcp.pop %v5426
    %v5495 = vrcp.pop %v5429
    %v5496 = vrcp.pop %v5432
    %v5497 = vrcp.pop %v5435
    %v5498 = vrcp.pop %v5438
    %v5499 = vrcp.pop %v5441
    %v5500 = vrcp.pop %v5444
    %v5501 = vrcp.pop %v5447
    %v5502 = vrcp.pop %v5450
    %v5503 = vrcp.pop %v5453
    %v5504 = vrcp.pop %v5456
    %v5505 = vrcp.pop %v5459
    %v5506 = vrcp.pop %v5462
    %v5507 = vrcp.pop %v5465
    %v5508 = vrcp.pop %v5468
    %v5509 = vrcp.pop %v5471
    %v5510 = vrcp.pop %v5474
    %v5511 = vrcp.pop %v5477
    %v5512 = vrcp.pop %v5480
    %v5513 = vmul.f32 %v5322, %v5481
    %v5514 = vmul.f32 %v5324, %v5482
    %v5515 = vmul.f32 %v5326, %v5483
    %v5516 = vmul.f32 %v5328, %v5484
    %v5517 = vmul.f32 %v5330, %v5485
    %v5518 = vmul.f32 %v5332, %v5486
    %v5519 = vmul.f32 %v5334, %v5487
    %v5520 = vmul.f32 %v5336, %v5488
    %v5521 = vmul.f32 %v5338, %v5489
    %v5522 = vmul.f32 %v5340, %v5490
    %v5523 = vmul.f32 %v5342, %v5491
    %v5524 = vmul.f32 %v5344, %v5492
    %v5525 = vmul.f32 %v5346, %v5493
    %v5526 = vmul.f32 %v5348, %v5494
    %v5527 = vmul.f32 %v5350, %v5495
    %v5528 = vmul.f32 %v5352, %v5496
    %v5529 = vmul.f32 %v5354, %v5497
    %v5530 = vmul.f32 %v5356, %v5498
    %v5531 = vmul.f32 %v5358, %v5499
    %v5532 = vmul.f32 %v5360, %v5500
    %v5533 = vmul.f32 %v5362, %v5501
    %v5534 = vmul.f32 %v5364, %v5502
    %v5535 = vmul.f32 %v5366, %v5503
    %v5536 = vmul.f32 %v5368, %v5504
    %v5537 = vmul.f32 %v5370, %v5505
    %v5538 = vmul.f32 %v5372, %v5506
    %v5539 = vmul.f32 %v5374, %v5507
    %v5540 = vmul.f32 %v5376, %v5508
    %v5541 = vmul.f32 %v5378, %v5509
    %v5542 = vmul.f32 %v5380, %v5510
    %v5543 = vmul.f32 %v5382, %v5511
    %v5544 = vmul.f32 %v5384, %v5512
    %5545 = vrot.lane.b32.xlu0 %v4163, 112
    %v5546 = vpop.permute.xlu0 %5545
    %5547 = vrot.lane.b32.xlu0 %v4168, 112
    %v5548 = vpop.permute.xlu0 %5547
    %5549 = vrot.lane.b32.xlu0 %v4173, 112
    %v5550 = vpop.permute.xlu0 %5549
    %5551 = vrot.lane.b32.xlu0 %v4178, 112
    %v5552 = vpop.permute.xlu0 %5551
    %v5558 = vsel %vm77, %v5513, 0
    %v5561 = vsel %vm77, %v5514, 0
    %v5564 = vsel %vm77, %v5515, 0
    %v5567 = vsel %vm77, %v5516, 0
    %5569 = vmatprep.subr.mxu0 0.0
    %5570 = vmatpush1.msra.mxu0 %v5546
    %5571 = vmatprep.subr.mxu0 0.0
    %5572 = vmatpush1.msra.mxu0 %v5548
    %5573 = vmatprep.subr.mxu0 0.0
    %5574 = vmatpush1.msra.mxu0 %v5550
    %5575 = vmatprep.subr.mxu0 0.0
    %5576 = vmatpush1.msra.mxu0 %v5552
    %5577 = vmatprep.subr.mxu0 0.0
    %5578 = vmatpush1.msra.mxu0 0.0
    %5579 = vmatprep.subr.mxu0 0.0
    %5580 = vmatpush1.msra.mxu0 0.0
    %5581 = vmatprep.subr.mxu0 0.0
    %5582 = vmatpush1.msra.mxu0 0.0
    %5583 = vmatprep.subr.mxu0 0.0
    %5584 = vmatpush1.msra.mxu0 0.0
    %5585 = vmatprep.subr.mxu0 0.0
    %5586 = vmatpush1.msra.mxu0 0.0
    %5587 = vmatprep.subr.mxu0 0.0
    %5588 = vmatpush1.msra.mxu0 0.0
    %5589 = vmatprep.subr.mxu0 0.0
    %5590 = vmatpush1.msra.mxu0 0.0
    %5591 = vmatprep.subr.mxu0 0.0
    %5592 = vmatpush1.msra.mxu0 0.0
    %5593 = vmatprep.subr.mxu0 0.0
    %5594 = vmatpush1.msra.mxu0 0.0
    %5595 = vmatprep.subr.mxu0 0.0
    %5596 = vmatpush1.msra.mxu0 0.0
    %5597 = vmatprep.subr.mxu0 0.0
    %5598 = vmatpush1.msra.mxu0 0.0
    %5599 = vmatprep.subr.mxu0 0.0
    %5600 = vmatpush1.msra.mxu0 0.0
    %5601 = vmatprep.subr.mxu0 0.0
    %5602 = vmatpush1.msra.mxu0 0.0
    %5603 = vmatprep.subr.mxu0 0.0
    %5604 = vmatpush1.msra.mxu0 0.0
    %5605 = vmatprep.subr.mxu0 0.0
    %5606 = vmatpush1.msra.mxu0 0.0
    %5607 = vmatprep.subr.mxu0 0.0
    %5608 = vmatpush1.msra.mxu0 0.0
    %5609 = vmatprep.subr.mxu0 0.0
    %5610 = vmatpush1.msra.mxu0 0.0
    %5611 = vmatprep.subr.mxu0 0.0
    %5612 = vmatpush1.msra.mxu0 0.0
    %5613 = vmatprep.subr.mxu0 0.0
    %5614 = vmatpush1.msra.mxu0 0.0
    %5615 = vmatprep.subr.mxu0 0.0
    %5616 = vmatpush1.msra.mxu0 0.0
    %5617 = vmatprep.subr.mxu0 0.0
    %5618 = vmatpush1.msra.mxu0 0.0
    %5619 = vmatprep.subr.mxu0 0.0
    %5620 = vmatpush1.msra.mxu0 0.0
    %5621 = vmatprep.subr.mxu0 0.0
    %5622 = vmatpush1.msra.mxu0 0.0
    %5623 = vmatprep.subr.mxu0 0.0
    %5624 = vmatpush1.msra.mxu0 0.0
    %5625 = vmatprep.subr.mxu0 0.0
    %5626 = vmatpush1.msra.mxu0 0.0
    %5627 = vmatprep.subr.mxu0 0.0
    %5628 = vmatpush1.msra.mxu0 0.0
    %5629 = vmatprep.subr.mxu0 0.0
    %5630 = vmatpush1.msra.mxu0 0.0
    %5631 = vmatprep.subr.mxu0 0.0
    %5632 = vmatpush1.msra.mxu0 0.0
    %5633 = vmatprep.mubr.f32.mxu0 0.0
    %5634 = vmatmul.mubr.f32.gmra.mrb[0].mxu0 %v5558
    %v5635 = vpop.f32.mrb[0].mxu0
    %v5636 = vadd.f32 0.0, %v5635
    %v5637 = vpop.f32.mrb[0].mxu0
    %5638 = vmatprep.mubr.f32.mxu0 0.0
    %5639 = vmatmul.mubr.f32.gmra.mrb[0].mxu0 %v5561
    %v5640 = vpop.f32.mrb[0].mxu0
    %v5641 = vadd.f32 0.0, %v5640
    %v5642 = vpop.f32.mrb[0].mxu0
    %5643 = vmatprep.mubr.f32.mxu0 0.0
    %5644 = vmatmul.mubr.f32.gmra.mrb[0].mxu0 %v5564
    %v5645 = vpop.f32.mrb[0].mxu0
    %v5646 = vadd.f32 0.0, %v5645
    %v5647 = vpop.f32.mrb[0].mxu0
    %5648 = vmatprep.mubr.f32.mxu0 0.0
    %5649 = vmatmul.mubr.f32.gmra.mrb[0].mxu0 %v5567
    %v5650 = vpop.f32.mrb[0].mxu0
    %v5651 = vadd.f32 0.0, %v5650
    %v5652 = vpop.f32.mrb[0].mxu0
    %5653 = vdwg.mxu0
    %5654 = vrot.lane.b32.xlu0 %v4246, 112
    %v5655 = vpop.permute.xlu0 %5654
    %5656 = vrot.lane.b32.xlu0 %v4248, 112
    %v5657 = vpop.permute.xlu0 %5656
    %5658 = vrot.lane.b32.xlu0 %v4250, 112
    %v5659 = vpop.permute.xlu0 %5658
    %5660 = vrot.lane.b32.xlu0 %v4252, 112
    %v5661 = vpop.permute.xlu0 %5660
    %v5667 = vsel %vm77, %v5517, 0
    %v5670 = vsel %vm77, %v5518, 0
    %v5673 = vsel %vm77, %v5519, 0
    %v5676 = vsel %vm77, %v5520, 0
    %5678 = vmatprep.subr.mxu0 0.0
    %5679 = vmatpush1.msra.mxu0 %v5655
    %5680 = vmatprep.subr.mxu0 0.0
    %5681 = vmatpush1.msra.mxu0 %v5657
    %5682 = vmatprep.subr.mxu0 0.0
    %5683 = vmatpush1.msra.mxu0 %v5659
    %5684 = vmatprep.subr.mxu0 0.0
    %5685 = vmatpush1.msra.mxu0 %v5661
    %5686 = vmatprep.subr.mxu0 0.0
    %5687 = vmatpush1.msra.mxu0 0.0
    %5688 = vmatprep.subr.mxu0 0.0
    %5689 = vmatpush1.msra.mxu0 0.0
    %5690 = vmatprep.subr.mxu0 0.0
    %5691 = vmatpush1.msra.mxu0 0.0
    %5692 = vmatprep.subr.mxu0 0.0
    %5693 = vmatpush1.msra.mxu0 0.0
    %5694 = vmatprep.subr.mxu0 0.0
    %5695 = vmatpush1.msra.mxu0 0.0
    %5696 = vmatprep.subr.mxu0 0.0
    %5697 = vmatpush1.msra.mxu0 0.0
    %5698 = vmatprep.subr.mxu0 0.0
    %5699 = vmatpush1.msra.mxu0 0.0
    %5700 = vmatprep.subr.mxu0 0.0
    %5701 = vmatpush1.msra.mxu0 0.0
    %5702 = vmatprep.subr.mxu0 0.0
    %5703 = vmatpush1.msra.mxu0 0.0
    %5704 = vmatprep.subr.mxu0 0.0
    %5705 = vmatpush1.msra.mxu0 0.0
    %5706 = vmatprep.subr.mxu0 0.0
    %5707 = vmatpush1.msra.mxu0 0.0
    %5708 = vmatprep.subr.mxu0 0.0
    %5709 = vmatpush1.msra.mxu0 0.0
    %5710 = vmatprep.subr.mxu0 0.0
    %5711 = vmatpush1.msra.mxu0 0.0
    %5712 = vmatprep.subr.mxu0 0.0
    %5713 = vmatpush1.msra.mxu0 0.0
    %5714 = vmatprep.subr.mxu0 0.0
    %5715 = vmatpush1.msra.mxu0 0.0
    %5716 = vmatprep.subr.mxu0 0.0
    %5717 = vmatpush1.msra.mxu0 0.0
    %5718 = vmatprep.subr.mxu0 0.0
    %5719 = vmatpush1.msra.mxu0 0.0
    %5720 = vmatprep.subr.mxu0 0.0
    %5721 = vmatpush1.msra.mxu0 0.0
    %5722 = vmatprep.subr.mxu0 0.0
    %5723 = vmatpush1.msra.mxu0 0.0
    %5724 = vmatprep.subr.mxu0 0.0
    %5725 = vmatpush1.msra.mxu0 0.0
    %5726 = vmatprep.subr.mxu0 0.0
    %5727 = vmatpush1.msra.mxu0 0.0
    %5728 = vmatprep.subr.mxu0 0.0
    %5729 = vmatpush1.msra.mxu0 0.0
    %5730 = vmatprep.subr.mxu0 0.0
    %5731 = vmatpush1.msra.mxu0 0.0
    %5732 = vmatprep.subr.mxu0 0.0
    %5733 = vmatpush1.msra.mxu0 0.0
    %5734 = vmatprep.subr.mxu0 0.0
    %5735 = vmatpush1.msra.mxu0 0.0
    %5736 = vmatprep.subr.mxu0 0.0
    %5737 = vmatpush1.msra.mxu0 0.0
    %5738 = vmatprep.subr.mxu0 0.0
    %5739 = vmatpush1.msra.mxu0 0.0
    %5740 = vmatprep.subr.mxu0 0.0
    %5741 = vmatpush1.msra.mxu0 0.0
    %5742 = vmatprep.mubr.f32.mxu0 0.0
    %5743 = vmatmul.mubr.f32.gmra.mrb[0].mxu0 %v5667
    %v5744 = vpop.f32.mrb[0].mxu0
    %v5745 = vadd.f32 0.0, %v5744
    %v5746 = vpop.f32.mrb[0].mxu0
    %5747 = vmatprep.mubr.f32.mxu0 0.0
    %5748 = vmatmul.mubr.f32.gmra.mrb[0].mxu0 %v5670
    %v5749 = vpop.f32.mrb[0].mxu0
    %v5750 = vadd.f32 0.0, %v5749
    %v5751 = vpop.f32.mrb[0].mxu0
    %5752 = vmatprep.mubr.f32.mxu0 0.0
    %5753 = vmatmul.mubr.f32.gmra.mrb[0].mxu0 %v5673
    %v5754 = vpop.f32.mrb[0].mxu0
    %v5755 = vadd.f32 0.0, %v5754
    %v5756 = vpop.f32.mrb[0].mxu0
    %5757 = vmatprep.mubr.f32.mxu0 0.0
    %5758 = vmatmul.mubr.f32.gmra.mrb[0].mxu0 %v5676
    %v5759 = vpop.f32.mrb[0].mxu0
    %v5760 = vadd.f32 0.0, %v5759
    %v5761 = vpop.f32.mrb[0].mxu0
    %5762 = vdwg.mxu0
    %5763 = vrot.lane.b32.xlu0 %v4183, 112
    %v5764 = vpop.permute.xlu0 %5763
    %5765 = vrot.lane.b32.xlu0 %v4188, 112
    %v5766 = vpop.permute.xlu0 %5765
    %5767 = vrot.lane.b32.xlu0 %v4193, 112
    %v5768 = vpop.permute.xlu0 %5767
    %5769 = vrot.lane.b32.xlu0 %v4198, 112
    %v5770 = vpop.permute.xlu0 %5769
    %v5776 = vsel %vm77, %v5521, 0
    %v5779 = vsel %vm77, %v5522, 0
    %v5782 = vsel %vm77, %v5523, 0
    %v5785 = vsel %vm77, %v5524, 0
    %5787 = vmatprep.subr.mxu0 0.0
    %5788 = vmatpush1.msra.mxu0 %v5764
    %5789 = vmatprep.subr.mxu0 0.0
    %5790 = vmatpush1.msra.mxu0 %v5766
    %5791 = vmatprep.subr.mxu0 0.0
    %5792 = vmatpush1.msra.mxu0 %v5768
    %5793 = vmatprep.subr.mxu0 0.0
    %5794 = vmatpush1.msra.mxu0 %v5770
    %5795 = vmatprep.subr.mxu0 0.0
    %5796 = vmatpush1.msra.mxu0 0.0
    %5797 = vmatprep.subr.mxu0 0.0
    %5798 = vmatpush1.msra.mxu0 0.0
    %5799 = vmatprep.subr.mxu0 0.0
    %5800 = vmatpush1.msra.mxu0 0.0
    %5801 = vmatprep.subr.mxu0 0.0
    %5802 = vmatpush1.msra.mxu0 0.0
    %5803 = vmatprep.subr.mxu0 0.0
    %5804 = vmatpush1.msra.mxu0 0.0
    %5805 = vmatprep.subr.mxu0 0.0
    %5806 = vmatpush1.msra.mxu0 0.0
    %5807 = vmatprep.subr.mxu0 0.0
    %5808 = vmatpush1.msra.mxu0 0.0
    %5809 = vmatprep.subr.mxu0 0.0
    %5810 = vmatpush1.msra.mxu0 0.0
    %5811 = vmatprep.subr.mxu0 0.0
    %5812 = vmatpush1.msra.mxu0 0.0
    %5813 = vmatprep.subr.mxu0 0.0
    %5814 = vmatpush1.msra.mxu0 0.0
    %5815 = vmatprep.subr.mxu0 0.0
    %5816 = vmatpush1.msra.mxu0 0.0
    %5817 = vmatprep.subr.mxu0 0.0
    %5818 = vmatpush1.msra.mxu0 0.0
    %5819 = vmatprep.subr.mxu0 0.0
    %5820 = vmatpush1.msra.mxu0 0.0
    %5821 = vmatprep.subr.mxu0 0.0
    %5822 = vmatpush1.msra.mxu0 0.0
    %5823 = vmatprep.subr.mxu0 0.0
    %5824 = vmatpush1.msra.mxu0 0.0
    %5825 = vmatprep.subr.mxu0 0.0
    %5826 = vmatpush1.msra.mxu0 0.0
    %5827 = vmatprep.subr.mxu0 0.0
    %5828 = vmatpush1.msra.mxu0 0.0
    %5829 = vmatprep.subr.mxu0 0.0
    %5830 = vmatpush1.msra.mxu0 0.0
    %5831 = vmatprep.subr.mxu0 0.0
    %5832 = vmatpush1.msra.mxu0 0.0
    %5833 = vmatprep.subr.mxu0 0.0
    %5834 = vmatpush1.msra.mxu0 0.0
    %5835 = vmatprep.subr.mxu0 0.0
    %5836 = vmatpush1.msra.mxu0 0.0
    %5837 = vmatprep.subr.mxu0 0.0
    %5838 = vmatpush1.msra.mxu0 0.0
    %5839 = vmatprep.subr.mxu0 0.0
    %5840 = vmatpush1.msra.mxu0 0.0
    %5841 = vmatprep.subr.mxu0 0.0
    %5842 = vmatpush1.msra.mxu0 0.0
    %5843 = vmatprep.subr.mxu0 0.0
    %5844 = vmatpush1.msra.mxu0 0.0
    %5845 = vmatprep.subr.mxu0 0.0
    %5846 = vmatpush1.msra.mxu0 0.0
    %5847 = vmatprep.subr.mxu0 0.0
    %5848 = vmatpush1.msra.mxu0 0.0
    %5849 = vmatprep.subr.mxu0 0.0
    %5850 = vmatpush1.msra.mxu0 0.0
    %5851 = vmatprep.mubr.f32.mxu0 0.0
    %5852 = vmatmul.mubr.f32.gmra.mrb[0].mxu0 %v5776
    %v5853 = vpop.f32.mrb[0].mxu0
    %v5854 = vadd.f32 0.0, %v5853
    %v5855 = vpop.f32.mrb[0].mxu0
    %5856 = vmatprep.mubr.f32.mxu0 0.0
    %5857 = vmatmul.mubr.f32.gmra.mrb[0].mxu0 %v5779
    %v5858 = vpop.f32.mrb[0].mxu0
    %v5859 = vadd.f32 0.0, %v5858
    %v5860 = vpop.f32.mrb[0].mxu0
    %5861 = vmatprep.mubr.f32.mxu0 0.0
    %5862 = vmatmul.mubr.f32.gmra.mrb[0].mxu0 %v5782
    %v5863 = vpop.f32.mrb[0].mxu0
    %v5864 = vadd.f32 0.0, %v5863
    %v5865 = vpop.f32.mrb[0].mxu0
    %5866 = vmatprep.mubr.f32.mxu0 0.0
    %5867 = vmatmul.mubr.f32.gmra.mrb[0].mxu0 %v5785
    %v5868 = vpop.f32.mrb[0].mxu0
    %v5869 = vadd.f32 0.0, %v5868
    %v5870 = vpop.f32.mrb[0].mxu0
    %5871 = vdwg.mxu0
    %5872 = vrot.lane.b32.xlu0 %v4258, 112
    %v5873 = vpop.permute.xlu0 %5872
    %5874 = vrot.lane.b32.xlu0 %v4260, 112
    %v5875 = vpop.permute.xlu0 %5874
    %5876 = vrot.lane.b32.xlu0 %v4262, 112
    %v5877 = vpop.permute.xlu0 %5876
    %5878 = vrot.lane.b32.xlu0 %v4264, 112
    %v5879 = vpop.permute.xlu0 %5878
    %v5885 = vsel %vm77, %v5525, 0
    %v5888 = vsel %vm77, %v5526, 0
    %v5891 = vsel %vm77, %v5527, 0
    %v5894 = vsel %vm77, %v5528, 0
    %5896 = vmatprep.subr.mxu0 0.0
    %5897 = vmatpush1.msra.mxu0 %v5873
    %5898 = vmatprep.subr.mxu0 0.0
    %5899 = vmatpush1.msra.mxu0 %v5875
    %5900 = vmatprep.subr.mxu0 0.0
    %5901 = vmatpush1.msra.mxu0 %v5877
    %5902 = vmatprep.subr.mxu0 0.0
    %5903 = vmatpush1.msra.mxu0 %v5879
    %5904 = vmatprep.subr.mxu0 0.0
    %5905 = vmatpush1.msra.mxu0 0.0
    %5906 = vmatprep.subr.mxu0 0.0
    %5907 = vmatpush1.msra.mxu0 0.0
    %5908 = vmatprep.subr.mxu0 0.0
    %5909 = vmatpush1.msra.mxu0 0.0
    %5910 = vmatprep.subr.mxu0 0.0
    %5911 = vmatpush1.msra.mxu0 0.0
    %5912 = vmatprep.subr.mxu0 0.0
    %5913 = vmatpush1.msra.mxu0 0.0
    %5914 = vmatprep.subr.mxu0 0.0
    %5915 = vmatpush1.msra.mxu0 0.0
    %5916 = vmatprep.subr.mxu0 0.0
    %5917 = vmatpush1.msra.mxu0 0.0
    %5918 = vmatprep.subr.mxu0 0.0
    %5919 = vmatpush1.msra.mxu0 0.0
    %5920 = vmatprep.subr.mxu0 0.0
    %5921 = vmatpush1.msra.mxu0 0.0
    %5922 = vmatprep.subr.mxu0 0.0
    %5923 = vmatpush1.msra.mxu0 0.0
    %5924 = vmatprep.subr.mxu0 0.0
    %5925 = vmatpush1.msra.mxu0 0.0
    %5926 = vmatprep.subr.mxu0 0.0
    %5927 = vmatpush1.msra.mxu0 0.0
    %5928 = vmatprep.subr.mxu0 0.0
    %5929 = vmatpush1.msra.mxu0 0.0
    %5930 = vmatprep.subr.mxu0 0.0
    %5931 = vmatpush1.msra.mxu0 0.0
    %5932 = vmatprep.subr.mxu0 0.0
    %5933 = vmatpush1.msra.mxu0 0.0
    %5934 = vmatprep.subr.mxu0 0.0
    %5935 = vmatpush1.msra.mxu0 0.0
    %5936 = vmatprep.subr.mxu0 0.0
    %5937 = vmatpush1.msra.mxu0 0.0
    %5938 = vmatprep.subr.mxu0 0.0
    %5939 = vmatpush1.msra.mxu0 0.0
    %5940 = vmatprep.subr.mxu0 0.0
    %5941 = vmatpush1.msra.mxu0 0.0
    %5942 = vmatprep.subr.mxu0 0.0
    %5943 = vmatpush1.msra.mxu0 0.0
    %5944 = vmatprep.subr.mxu0 0.0
    %5945 = vmatpush1.msra.mxu0 0.0
    %5946 = vmatprep.subr.mxu0 0.0
    %5947 = vmatpush1.msra.mxu0 0.0
    %5948 = vmatprep.subr.mxu0 0.0
    %5949 = vmatpush1.msra.mxu0 0.0
    %5950 = vmatprep.subr.mxu0 0.0
    %5951 = vmatpush1.msra.mxu0 0.0
    %5952 = vmatprep.subr.mxu0 0.0
    %5953 = vmatpush1.msra.mxu0 0.0
    %5954 = vmatprep.subr.mxu0 0.0
    %5955 = vmatpush1.msra.mxu0 0.0
    %5956 = vmatprep.subr.mxu0 0.0
    %5957 = vmatpush1.msra.mxu0 0.0
    %5958 = vmatprep.subr.mxu0 0.0
    %5959 = vmatpush1.msra.mxu0 0.0
    %5960 = vmatprep.mubr.f32.mxu0 0.0
    %5961 = vmatmul.mubr.f32.gmra.mrb[0].mxu0 %v5885
    %v5962 = vpop.f32.mrb[0].mxu0
    %v5963 = vadd.f32 0.0, %v5962
    %v5964 = vpop.f32.mrb[0].mxu0
    %5965 = vmatprep.mubr.f32.mxu0 0.0
    %5966 = vmatmul.mubr.f32.gmra.mrb[0].mxu0 %v5888
    %v5967 = vpop.f32.mrb[0].mxu0
    %v5968 = vadd.f32 0.0, %v5967
    %v5969 = vpop.f32.mrb[0].mxu0
    %5970 = vmatprep.mubr.f32.mxu0 0.0
    %5971 = vmatmul.mubr.f32.gmra.mrb[0].mxu0 %v5891
    %v5972 = vpop.f32.mrb[0].mxu0
    %v5973 = vadd.f32 0.0, %v5972
    %v5974 = vpop.f32.mrb[0].mxu0
    %5975 = vmatprep.mubr.f32.mxu0 0.0
    %5976 = vmatmul.mubr.f32.gmra.mrb[0].mxu0 %v5894
    %v5977 = vpop.f32.mrb[0].mxu0
    %v5978 = vadd.f32 0.0, %v5977
    %v5979 = vpop.f32.mrb[0].mxu0
    %5980 = vdwg.mxu0
    %5981 = vrot.lane.b32.xlu0 %v4203, 112
    %v5982 = vpop.permute.xlu0 %5981
    %5983 = vrot.lane.b32.xlu0 %v4208, 112
    %v5984 = vpop.permute.xlu0 %5983
    %5985 = vrot.lane.b32.xlu0 %v4213, 112
    %v5986 = vpop.permute.xlu0 %5985
    %5987 = vrot.lane.b32.xlu0 %v4218, 112
    %v5988 = vpop.permute.xlu0 %5987
    %v5994 = vsel %vm77, %v5529, 0
    %v5997 = vsel %vm77, %v5530, 0
    %v6000 = vsel %vm77, %v5531, 0
    %v6003 = vsel %vm77, %v5532, 0
    %6005 = vmatprep.subr.mxu0 0.0
    %6006 = vmatpush1.msra.mxu0 %v5982
    %6007 = vmatprep.subr.mxu0 0.0
    %6008 = vmatpush1.msra.mxu0 %v5984
    %6009 = vmatprep.subr.mxu0 0.0
    %6010 = vmatpush1.msra.mxu0 %v5986
    %6011 = vmatprep.subr.mxu0 0.0
    %6012 = vmatpush1.msra.mxu0 %v5988
    %6013 = vmatprep.subr.mxu0 0.0
    %6014 = vmatpush1.msra.mxu0 0.0
    %6015 = vmatprep.subr.mxu0 0.0
    %6016 = vmatpush1.msra.mxu0 0.0
    %6017 = vmatprep.subr.mxu0 0.0
    %6018 = vmatpush1.msra.mxu0 0.0
    %6019 = vmatprep.subr.mxu0 0.0
    %6020 = vmatpush1.msra.mxu0 0.0
    %6021 = vmatprep.subr.mxu0 0.0
    %6022 = vmatpush1.msra.mxu0 0.0
    %6023 = vmatprep.subr.mxu0 0.0
    %6024 = vmatpush1.msra.mxu0 0.0
    %6025 = vmatprep.subr.mxu0 0.0
    %6026 = vmatpush1.msra.mxu0 0.0
    %6027 = vmatprep.subr.mxu0 0.0
    %6028 = vmatpush1.msra.mxu0 0.0
    %6029 = vmatprep.subr.mxu0 0.0
    %6030 = vmatpush1.msra.mxu0 0.0
    %6031 = vmatprep.subr.mxu0 0.0
    %6032 = vmatpush1.msra.mxu0 0.0
    %6033 = vmatprep.subr.mxu0 0.0
    %6034 = vmatpush1.msra.mxu0 0.0
    %6035 = vmatprep.subr.mxu0 0.0
    %6036 = vmatpush1.msra.mxu0 0.0
    %6037 = vmatprep.subr.mxu0 0.0
    %6038 = vmatpush1.msra.mxu0 0.0
    %6039 = vmatprep.subr.mxu0 0.0
    %6040 = vmatpush1.msra.mxu0 0.0
    %6041 = vmatprep.subr.mxu0 0.0
    %6042 = vmatpush1.msra.mxu0 0.0
    %6043 = vmatprep.subr.mxu0 0.0
    %6044 = vmatpush1.msra.mxu0 0.0
    %6045 = vmatprep.subr.mxu0 0.0
    %6046 = vmatpush1.msra.mxu0 0.0
    %6047 = vmatprep.subr.mxu0 0.0
    %6048 = vmatpush1.msra.mxu0 0.0
    %6049 = vmatprep.subr.mxu0 0.0
    %6050 = vmatpush1.msra.mxu0 0.0
    %6051 = vmatprep.subr.mxu0 0.0
    %6052 = vmatpush1.msra.mxu0 0.0
    %6053 = vmatprep.subr.mxu0 0.0
    %6054 = vmatpush1.msra.mxu0 0.0
    %6055 = vmatprep.subr.mxu0 0.0
    %6056 = vmatpush1.msra.mxu0 0.0
    %6057 = vmatprep.subr.mxu0 0.0
    %6058 = vmatpush1.msra.mxu0 0.0
    %6059 = vmatprep.subr.mxu0 0.0
    %6060 = vmatpush1.msra.mxu0 0.0
    %6061 = vmatprep.subr.mxu0 0.0
    %6062 = vmatpush1.msra.mxu0 0.0
    %6063 = vmatprep.subr.mxu0 0.0
    %6064 = vmatpush1.msra.mxu0 0.0
    %6065 = vmatprep.subr.mxu0 0.0
    %6066 = vmatpush1.msra.mxu0 0.0
    %6067 = vmatprep.subr.mxu0 0.0
    %6068 = vmatpush1.msra.mxu0 0.0
    %6069 = vmatprep.mubr.f32.mxu0 0.0
    %6070 = vmatmul.mubr.f32.gmra.mrb[0].mxu0 %v5994
    %v6071 = vpop.f32.mrb[0].mxu0
    %v6072 = vadd.f32 0.0, %v6071
    %v6073 = vpop.f32.mrb[0].mxu0
    %6074 = vmatprep.mubr.f32.mxu0 0.0
    %6075 = vmatmul.mubr.f32.gmra.mrb[0].mxu0 %v5997
    %v6076 = vpop.f32.mrb[0].mxu0
    %v6077 = vadd.f32 0.0, %v6076
    %v6078 = vpop.f32.mrb[0].mxu0
    %6079 = vmatprep.mubr.f32.mxu0 0.0
    %6080 = vmatmul.mubr.f32.gmra.mrb[0].mxu0 %v6000
    %v6081 = vpop.f32.mrb[0].mxu0
    %v6082 = vadd.f32 0.0, %v6081
    %v6083 = vpop.f32.mrb[0].mxu0
    %6084 = vmatprep.mubr.f32.mxu0 0.0
    %6085 = vmatmul.mubr.f32.gmra.mrb[0].mxu0 %v6003
    %v6086 = vpop.f32.mrb[0].mxu0
    %v6087 = vadd.f32 0.0, %v6086
    %v6088 = vpop.f32.mrb[0].mxu0
    %6089 = vdwg.mxu0
    %6090 = vrot.lane.b32.xlu0 %v4270, 112
    %v6091 = vpop.permute.xlu0 %6090
    %6092 = vrot.lane.b32.xlu0 %v4272, 112
    %v6093 = vpop.permute.xlu0 %6092
    %6094 = vrot.lane.b32.xlu0 %v4274, 112
    %v6095 = vpop.permute.xlu0 %6094
    %6096 = vrot.lane.b32.xlu0 %v4276, 112
    %v6097 = vpop.permute.xlu0 %6096
    %v6103 = vsel %vm77, %v5533, 0
    %v6106 = vsel %vm77, %v5534, 0
    %v6109 = vsel %vm77, %v5535, 0
    %v6112 = vsel %vm77, %v5536, 0
    %6114 = vmatprep.subr.mxu0 0.0
    %6115 = vmatpush1.msra.mxu0 %v6091
    %6116 = vmatprep.subr.mxu0 0.0
    %6117 = vmatpush1.msra.mxu0 %v6093
    %6118 = vmatprep.subr.mxu0 0.0
    %6119 = vmatpush1.msra.mxu0 %v6095
    %6120 = vmatprep.subr.mxu0 0.0
    %6121 = vmatpush1.msra.mxu0 %v6097
    %6122 = vmatprep.subr.mxu0 0.0
    %6123 = vmatpush1.msra.mxu0 0.0
    %6124 = vmatprep.subr.mxu0 0.0
    %6125 = vmatpush1.msra.mxu0 0.0
    %6126 = vmatprep.subr.mxu0 0.0
    %6127 = vmatpush1.msra.mxu0 0.0
    %6128 = vmatprep.subr.mxu0 0.0
    %6129 = vmatpush1.msra.mxu0 0.0
    %6130 = vmatprep.subr.mxu0 0.0
    %6131 = vmatpush1.msra.mxu0 0.0
    %6132 = vmatprep.subr.mxu0 0.0
    %6133 = vmatpush1.msra.mxu0 0.0
    %6134 = vmatprep.subr.mxu0 0.0
    %6135 = vmatpush1.msra.mxu0 0.0
    %6136 = vmatprep.subr.mxu0 0.0
    %6137 = vmatpush1.msra.mxu0 0.0
    %6138 = vmatprep.subr.mxu0 0.0
    %6139 = vmatpush1.msra.mxu0 0.0
    %6140 = vmatprep.subr.mxu0 0.0
    %6141 = vmatpush1.msra.mxu0 0.0
    %6142 = vmatprep.subr.mxu0 0.0
    %6143 = vmatpush1.msra.mxu0 0.0
    %6144 = vmatprep.subr.mxu0 0.0
    %6145 = vmatpush1.msra.mxu0 0.0
    %6146 = vmatprep.subr.mxu0 0.0
    %6147 = vmatpush1.msra.mxu0 0.0
    %6148 = vmatprep.subr.mxu0 0.0
    %6149 = vmatpush1.msra.mxu0 0.0
    %6150 = vmatprep.subr.mxu0 0.0
    %6151 = vmatpush1.msra.mxu0 0.0
    %6152 = vmatprep.subr.mxu0 0.0
    %6153 = vmatpush1.msra.mxu0 0.0
    %6154 = vmatprep.subr.mxu0 0.0
    %6155 = vmatpush1.msra.mxu0 0.0
    %6156 = vmatprep.subr.mxu0 0.0
    %6157 = vmatpush1.msra.mxu0 0.0
    %6158 = vmatprep.subr.mxu0 0.0
    %6159 = vmatpush1.msra.mxu0 0.0
    %6160 = vmatprep.subr.mxu0 0.0
    %6161 = vmatpush1.msra.mxu0 0.0
    %6162 = vmatprep.subr.mxu0 0.0
    %6163 = vmatpush1.msra.mxu0 0.0
    %6164 = vmatprep.subr.mxu0 0.0
    %6165 = vmatpush1.msra.mxu0 0.0
    %6166 = vmatprep.subr.mxu0 0.0
    %6167 = vmatpush1.msra.mxu0 0.0
    %6168 = vmatprep.subr.mxu0 0.0
    %6169 = vmatpush1.msra.mxu0 0.0
    %6170 = vmatprep.subr.mxu0 0.0
    %6171 = vmatpush1.msra.mxu0 0.0
    %6172 = vmatprep.subr.mxu0 0.0
    %6173 = vmatpush1.msra.mxu0 0.0
    %6174 = vmatprep.subr.mxu0 0.0
    %6175 = vmatpush1.msra.mxu0 0.0
    %6176 = vmatprep.subr.mxu0 0.0
    %6177 = vmatpush1.msra.mxu0 0.0
    %6178 = vmatprep.mubr.f32.mxu0 0.0
    %6179 = vmatmul.mubr.f32.gmra.mrb[0].mxu0 %v6103
    %v6180 = vpop.f32.mrb[0].mxu0
    %v6181 = vadd.f32 0.0, %v6180
    %v6182 = vpop.f32.mrb[0].mxu0
    %6183 = vmatprep.mubr.f32.mxu0 0.0
    %6184 = vmatmul.mubr.f32.gmra.mrb[0].mxu0 %v6106
    %v6185 = vpop.f32.mrb[0].mxu0
    %v6186 = vadd.f32 0.0, %v6185
    %v6187 = vpop.f32.mrb[0].mxu0
    %6188 = vmatprep.mubr.f32.mxu0 0.0
    %6189 = vmatmul.mubr.f32.gmra.mrb[0].mxu0 %v6109
    %v6190 = vpop.f32.mrb[0].mxu0
    %v6191 = vadd.f32 0.0, %v6190
    %v6192 = vpop.f32.mrb[0].mxu0
    %6193 = vmatprep.mubr.f32.mxu0 0.0
    %6194 = vmatmul.mubr.f32.gmra.mrb[0].mxu0 %v6112
    %v6195 = vpop.f32.mrb[0].mxu0
    %v6196 = vadd.f32 0.0, %v6195
    %v6197 = vpop.f32.mrb[0].mxu0
    %6198 = vdwg.mxu0
    %6199 = vrot.lane.b32.xlu0 %v4223, 112
    %v6200 = vpop.permute.xlu0 %6199
    %6201 = vrot.lane.b32.xlu0 %v4228, 112
    %v6202 = vpop.permute.xlu0 %6201
    %6203 = vrot.lane.b32.xlu0 %v4233, 112
    %v6204 = vpop.permute.xlu0 %6203
    %6205 = vrot.lane.b32.xlu0 %v4238, 112
    %v6206 = vpop.permute.xlu0 %6205
    %v6212 = vsel %vm77, %v5537, 0
    %v6215 = vsel %vm77, %v5538, 0
    %v6218 = vsel %vm77, %v5539, 0
    %v6221 = vsel %vm77, %v5540, 0
    %6223 = vmatprep.subr.mxu0 0.0
    %6224 = vmatpush1.msra.mxu0 %v6200
    %6225 = vmatprep.subr.mxu0 0.0
    %6226 = vmatpush1.msra.mxu0 %v6202
    %6227 = vmatprep.subr.mxu0 0.0
    %6228 = vmatpush1.msra.mxu0 %v6204
    %6229 = vmatprep.subr.mxu0 0.0
    %6230 = vmatpush1.msra.mxu0 %v6206
    %6231 = vmatprep.subr.mxu0 0.0
    %6232 = vmatpush1.msra.mxu0 0.0
    %6233 = vmatprep.subr.mxu0 0.0
    %6234 = vmatpush1.msra.mxu0 0.0
    %6235 = vmatprep.subr.mxu0 0.0
    %6236 = vmatpush1.msra.mxu0 0.0
    %6237 = vmatprep.subr.mxu0 0.0
    %6238 = vmatpush1.msra.mxu0 0.0
    %6239 = vmatprep.subr.mxu0 0.0
    %6240 = vmatpush1.msra.mxu0 0.0
    %6241 = vmatprep.subr.mxu0 0.0
    %6242 = vmatpush1.msra.mxu0 0.0
    %6243 = vmatprep.subr.mxu0 0.0
    %6244 = vmatpush1.msra.mxu0 0.0
    %6245 = vmatprep.subr.mxu0 0.0
    %6246 = vmatpush1.msra.mxu0 0.0
    %6247 = vmatprep.subr.mxu0 0.0
    %6248 = vmatpush1.msra.mxu0 0.0
    %6249 = vmatprep.subr.mxu0 0.0
    %6250 = vmatpush1.msra.mxu0 0.0
    %6251 = vmatprep.subr.mxu0 0.0
    %6252 = vmatpush1.msra.mxu0 0.0
    %6253 = vmatprep.subr.mxu0 0.0
    %6254 = vmatpush1.msra.mxu0 0.0
    %6255 = vmatprep.subr.mxu0 0.0
    %6256 = vmatpush1.msra.mxu0 0.0
    %6257 = vmatprep.subr.mxu0 0.0
    %6258 = vmatpush1.msra.mxu0 0.0
    %6259 = vmatprep.subr.mxu0 0.0
    %6260 = vmatpush1.msra.mxu0 0.0
    %6261 = vmatprep.subr.mxu0 0.0
    %6262 = vmatpush1.msra.mxu0 0.0
    %6263 = vmatprep.subr.mxu0 0.0
    %6264 = vmatpush1.msra.mxu0 0.0
    %6265 = vmatprep.subr.mxu0 0.0
    %6266 = vmatpush1.msra.mxu0 0.0
    %6267 = vmatprep.subr.mxu0 0.0
    %6268 = vmatpush1.msra.mxu0 0.0
    %6269 = vmatprep.subr.mxu0 0.0
    %6270 = vmatpush1.msra.mxu0 0.0
    %6271 = vmatprep.subr.mxu0 0.0
    %6272 = vmatpush1.msra.mxu0 0.0
    %6273 = vmatprep.subr.mxu0 0.0
    %6274 = vmatpush1.msra.mxu0 0.0
    %6275 = vmatprep.subr.mxu0 0.0
    %6276 = vmatpush1.msra.mxu0 0.0
    %6277 = vmatprep.subr.mxu0 0.0
    %6278 = vmatpush1.msra.mxu0 0.0
    %6279 = vmatprep.subr.mxu0 0.0
    %6280 = vmatpush1.msra.mxu0 0.0
    %6281 = vmatprep.subr.mxu0 0.0
    %6282 = vmatpush1.msra.mxu0 0.0
    %6283 = vmatprep.subr.mxu0 0.0
    %6284 = vmatpush1.msra.mxu0 0.0
    %6285 = vmatprep.subr.mxu0 0.0
    %6286 = vmatpush1.msra.mxu0 0.0
    %6287 = vmatprep.mubr.f32.mxu0 0.0
    %6288 = vmatmul.mubr.f32.gmra.mrb[0].mxu0 %v6212
    %v6289 = vpop.f32.mrb[0].mxu0
    %v6290 = vadd.f32 0.0, %v6289
    %v6291 = vpop.f32.mrb[0].mxu0
    %6292 = vmatprep.mubr.f32.mxu0 0.0
    %6293 = vmatmul.mubr.f32.gmra.mrb[0].mxu0 %v6215
    %v6294 = vpop.f32.mrb[0].mxu0
    %v6295 = vadd.f32 0.0, %v6294
    %v6296 = vpop.f32.mrb[0].mxu0
    %6297 = vmatprep.mubr.f32.mxu0 0.0
    %6298 = vmatmul.mubr.f32.gmra.mrb[0].mxu0 %v6218
    %v6299 = vpop.f32.mrb[0].mxu0
    %v6300 = vadd.f32 0.0, %v6299
    %v6301 = vpop.f32.mrb[0].mxu0
    %6302 = vmatprep.mubr.f32.mxu0 0.0
    %6303 = vmatmul.mubr.f32.gmra.mrb[0].mxu0 %v6221
    %v6304 = vpop.f32.mrb[0].mxu0
    %v6305 = vadd.f32 0.0, %v6304
    %v6306 = vpop.f32.mrb[0].mxu0
    %6307 = vdwg.mxu0
    %6308 = vrot.lane.b32.xlu0 %v4282, 112
    %v6309 = vpop.permute.xlu0 %6308
    %6310 = vrot.lane.b32.xlu0 %v4284, 112
    %v6311 = vpop.permute.xlu0 %6310
    %6312 = vrot.lane.b32.xlu0 %v4286, 112
    %v6313 = vpop.permute.xlu0 %6312
    %6314 = vrot.lane.b32.xlu0 %v4288, 112
    %v6315 = vpop.permute.xlu0 %6314
    %v6321 = vsel %vm77, %v5541, 0
    %v6324 = vsel %vm77, %v5542, 0
    %v6327 = vsel %vm77, %v5543, 0
    %v6330 = vsel %vm77, %v5544, 0
    %6332 = vmatprep.subr.mxu0 0.0
    %6333 = vmatpush1.msra.mxu0 %v6309
    %6334 = vmatprep.subr.mxu0 0.0
    %6335 = vmatpush1.msra.mxu0 %v6311
    %6336 = vmatprep.subr.mxu0 0.0
    %6337 = vmatpush1.msra.mxu0 %v6313
    %6338 = vmatprep.subr.mxu0 0.0
    %6339 = vmatpush1.msra.mxu0 %v6315
    %6340 = vmatprep.subr.mxu0 0.0
    %6341 = vmatpush1.msra.mxu0 0.0
    %6342 = vmatprep.subr.mxu0 0.0
    %6343 = vmatpush1.msra.mxu0 0.0
    %6344 = vmatprep.subr.mxu0 0.0
    %6345 = vmatpush1.msra.mxu0 0.0
    %6346 = vmatprep.subr.mxu0 0.0
    %6347 = vmatpush1.msra.mxu0 0.0
    %6348 = vmatprep.subr.mxu0 0.0
    %6349 = vmatpush1.msra.mxu0 0.0
    %6350 = vmatprep.subr.mxu0 0.0
    %6351 = vmatpush1.msra.mxu0 0.0
    %6352 = vmatprep.subr.mxu0 0.0
    %6353 = vmatpush1.msra.mxu0 0.0
    %6354 = vmatprep.subr.mxu0 0.0
    %6355 = vmatpush1.msra.mxu0 0.0
    %6356 = vmatprep.subr.mxu0 0.0
    %6357 = vmatpush1.msra.mxu0 0.0
    %6358 = vmatprep.subr.mxu0 0.0
    %6359 = vmatpush1.msra.mxu0 0.0
    %6360 = vmatprep.subr.mxu0 0.0
    %6361 = vmatpush1.msra.mxu0 0.0
    %6362 = vmatprep.subr.mxu0 0.0
    %6363 = vmatpush1.msra.mxu0 0.0
    %6364 = vmatprep.subr.mxu0 0.0
    %6365 = vmatpush1.msra.mxu0 0.0
    %6366 = vmatprep.subr.mxu0 0.0
    %6367 = vmatpush1.msra.mxu0 0.0
    %6368 = vmatprep.subr.mxu0 0.0
    %6369 = vmatpush1.msra.mxu0 0.0
    %6370 = vmatprep.subr.mxu0 0.0
    %6371 = vmatpush1.msra.mxu0 0.0
    %6372 = vmatprep.subr.mxu0 0.0
    %6373 = vmatpush1.msra.mxu0 0.0
    %6374 = vmatprep.subr.mxu0 0.0
    %6375 = vmatpush1.msra.mxu0 0.0
    %6376 = vmatprep.subr.mxu0 0.0
    %6377 = vmatpush1.msra.mxu0 0.0
    %6378 = vmatprep.subr.mxu0 0.0
    %6379 = vmatpush1.msra.mxu0 0.0
    %6380 = vmatprep.subr.mxu0 0.0
    %6381 = vmatpush1.msra.mxu0 0.0
    %6382 = vmatprep.subr.mxu0 0.0
    %6383 = vmatpush1.msra.mxu0 0.0
    %6384 = vmatprep.subr.mxu0 0.0
    %6385 = vmatpush1.msra.mxu0 0.0
    %6386 = vmatprep.subr.mxu0 0.0
    %6387 = vmatpush1.msra.mxu0 0.0
    %6388 = vmatprep.subr.mxu0 0.0
    %6389 = vmatpush1.msra.mxu0 0.0
    %6390 = vmatprep.subr.mxu0 0.0
    %6391 = vmatpush1.msra.mxu0 0.0
    %6392 = vmatprep.subr.mxu0 0.0
    %6393 = vmatpush1.msra.mxu0 0.0
    %6394 = vmatprep.subr.mxu0 0.0
    %6395 = vmatpush1.msra.mxu0 0.0
    %6396 = vmatprep.mubr.f32.mxu0 0.0
    %6397 = vmatmul.mubr.f32.gmra.mrb[0].mxu0 %v6321
    %v6398 = vpop.f32.mrb[0].mxu0
    %v6399 = vadd.f32 0.0, %v6398
    %v6400 = vpop.f32.mrb[0].mxu0
    %6401 = vmatprep.mubr.f32.mxu0 0.0
    %6402 = vmatmul.mubr.f32.gmra.mrb[0].mxu0 %v6324
    %v6403 = vpop.f32.mrb[0].mxu0
    %v6404 = vadd.f32 0.0, %v6403
    %v6405 = vpop.f32.mrb[0].mxu0
    %6406 = vmatprep.mubr.f32.mxu0 0.0
    %6407 = vmatmul.mubr.f32.gmra.mrb[0].mxu0 %v6327
    %v6408 = vpop.f32.mrb[0].mxu0
    %v6409 = vadd.f32 0.0, %v6408
    %v6410 = vpop.f32.mrb[0].mxu0
    %6411 = vmatprep.mubr.f32.mxu0 0.0
    %6412 = vmatmul.mubr.f32.gmra.mrb[0].mxu0 %v6330
    %v6413 = vpop.f32.mrb[0].mxu0
    %v6414 = vadd.f32 0.0, %v6413
    %v6415 = vpop.f32.mrb[0].mxu0
    %6416 = vdwg.mxu0
    %6421 = vrot.lane.b32.xlu0 %v5745, 4
    %v6422 = vpop.permute.xlu0 %6421
    %6423 = vrot.lane.b32.xlu0 %v5750, 4
    %v6424 = vpop.permute.xlu0 %6423
    %6425 = vrot.lane.b32.xlu0 %v5755, 4
    %v6426 = vpop.permute.xlu0 %6425
    %6427 = vrot.lane.b32.xlu0 %v5760, 4
    %v6428 = vpop.permute.xlu0 %6427
    %v6433 = vsel %vm703, %v5636, %v6422
    %v6434 = vsel %vm703, %v5641, %v6424
    %v6435 = vsel %vm703, %v5646, %v6426
    %v6436 = vsel %vm703, %v5651, %v6428
    %6441 = vrot.lane.b32.xlu0 %v5963, 4
    %v6442 = vpop.permute.xlu0 %6441
    %6443 = vrot.lane.b32.xlu0 %v5968, 4
    %v6444 = vpop.permute.xlu0 %6443
    %6445 = vrot.lane.b32.xlu0 %v5973, 4
    %v6446 = vpop.permute.xlu0 %6445
    %6447 = vrot.lane.b32.xlu0 %v5978, 4
    %v6448 = vpop.permute.xlu0 %6447
    %v6453 = vsel %vm703, %v5854, %v6442
    %v6454 = vsel %vm703, %v5859, %v6444
    %v6455 = vsel %vm703, %v5864, %v6446
    %v6456 = vsel %vm703, %v5869, %v6448
    %6461 = vrot.lane.b32.xlu0 %v6181, 4
    %v6462 = vpop.permute.xlu0 %6461
    %6463 = vrot.lane.b32.xlu0 %v6186, 4
    %v6464 = vpop.permute.xlu0 %6463
    %6465 = vrot.lane.b32.xlu0 %v6191, 4
    %v6466 = vpop.permute.xlu0 %6465
    %6467 = vrot.lane.b32.xlu0 %v6196, 4
    %v6468 = vpop.permute.xlu0 %6467
    %v6473 = vsel %vm703, %v6072, %v6462
    %v6474 = vsel %vm703, %v6077, %v6464
    %v6475 = vsel %vm703, %v6082, %v6466
    %v6476 = vsel %vm703, %v6087, %v6468
    %6481 = vrot.lane.b32.xlu0 %v6399, 4
    %v6482 = vpop.permute.xlu0 %6481
    %6483 = vrot.lane.b32.xlu0 %v6404, 4
    %v6484 = vpop.permute.xlu0 %6483
    %6485 = vrot.lane.b32.xlu0 %v6409, 4
    %v6486 = vpop.permute.xlu0 %6485
    %6487 = vrot.lane.b32.xlu0 %v6414, 4
    %v6488 = vpop.permute.xlu0 %6487
    %v6493 = vsel %vm703, %v6290, %v6482
    %v6494 = vsel %vm703, %v6295, %v6484
    %v6495 = vsel %vm703, %v6300, %v6486
    %v6496 = vsel %vm703, %v6305, %v6488
    %s6497 = scalar_lea.vmem %s4, 8
    %v6498 = vld [vmem:[%s6497] sm:$0xff]
    %6499 = vrot.lane.b32.xlu0 %v4046, 104
    %v6500 = vpop.permute.xlu0 %6499
    %v6503 = vsel %vm453, %v6433, 0
    %v6506 = vsel %vm453, %v6434, 0
    %v6509 = vsel %vm453, %v6435, 0
    %v6512 = vsel %vm453, %v6436, 0
    %v6515 = vsel %vm453, %v6453, 0
    %v6518 = vsel %vm453, %v6454, 0
    %v6521 = vsel %vm453, %v6455, 0
    %v6524 = vsel %vm453, %v6456, 0
    %v6527 = vsel %vm453, %v6473, 0
    %v6530 = vsel %vm453, %v6474, 0
    %v6533 = vsel %vm453, %v6475, 0
    %v6536 = vsel %vm453, %v6476, 0
    %v6539 = vsel %vm453, %v6493, 0
    %v6542 = vsel %vm453, %v6494, 0
    %v6545 = vsel %vm453, %v6495, 0
    %v6548 = vsel %vm453, %v6496, 0
    %6550 = vmatprep.subr.mxu0 0.0
    %6551 = vmatpush1.msra.mxu0 %v6498
    %6552 = vmatprep.subr.mxu0 0.0
    %6553 = vmatpush1.msra.mxu0 0.0
    %6554 = vmatprep.subr.mxu0 0.0
    %6555 = vmatpush1.msra.mxu0 0.0
    %6556 = vmatprep.subr.mxu0 0.0
    %6557 = vmatpush1.msra.mxu0 0.0
    %6558 = vmatprep.subr.mxu0 0.0
    %6559 = vmatpush1.msra.mxu0 0.0
    %6560 = vmatprep.subr.mxu0 0.0
    %6561 = vmatpush1.msra.mxu0 0.0
    %6562 = vmatprep.subr.mxu0 0.0
    %6563 = vmatpush1.msra.mxu0 0.0
    %6564 = vmatprep.subr.mxu0 0.0
    %6565 = vmatpush1.msra.mxu0 0.0
    %6566 = vmatprep.subr.mxu0 0.0
    %6567 = vmatpush1.msra.mxu0 0.0
    %6568 = vmatprep.subr.mxu0 0.0
    %6569 = vmatpush1.msra.mxu0 0.0
    %6570 = vmatprep.subr.mxu0 0.0
    %6571 = vmatpush1.msra.mxu0 0.0
    %6572 = vmatprep.subr.mxu0 0.0
    %6573 = vmatpush1.msra.mxu0 0.0
    %6574 = vmatprep.subr.mxu0 0.0
    %6575 = vmatpush1.msra.mxu0 0.0
    %6576 = vmatprep.subr.mxu0 0.0
    %6577 = vmatpush1.msra.mxu0 0.0
    %6578 = vmatprep.subr.mxu0 0.0
    %6579 = vmatpush1.msra.mxu0 0.0
    %6580 = vmatprep.subr.mxu0 0.0
    %6581 = vmatpush1.msra.mxu0 0.0
    %6582 = vmatprep.subr.mxu0 0.0
    %6583 = vmatpush1.msra.mxu0 0.0
    %6584 = vmatprep.subr.mxu0 0.0
    %6585 = vmatpush1.msra.mxu0 0.0
    %6586 = vmatprep.subr.mxu0 0.0
    %6587 = vmatpush1.msra.mxu0 0.0
    %6588 = vmatprep.subr.mxu0 0.0
    %6589 = vmatpush1.msra.mxu0 0.0
    %6590 = vmatprep.subr.mxu0 0.0
    %6591 = vmatpush1.msra.mxu0 0.0
    %6592 = vmatprep.subr.mxu0 0.0
    %6593 = vmatpush1.msra.mxu0 0.0
    %6594 = vmatprep.subr.mxu0 0.0
    %6595 = vmatpush1.msra.mxu0 0.0
    %6596 = vmatprep.subr.mxu0 0.0
    %6597 = vmatpush1.msra.mxu0 0.0
    %6598 = vmatprep.subr.mxu0 0.0
    %6599 = vmatpush1.msra.mxu0 0.0
    %6600 = vmatprep.subr.mxu0 0.0
    %6601 = vmatpush1.msra.mxu0 0.0
    %6602 = vmatprep.subr.mxu0 0.0
    %6603 = vmatpush1.msra.mxu0 0.0
    %6604 = vmatprep.subr.mxu0 0.0
    %6605 = vmatpush1.msra.mxu0 0.0
    %6606 = vmatprep.subr.mxu0 0.0
    %6607 = vmatpush1.msra.mxu0 0.0
    %6608 = vmatprep.subr.mxu0 0.0
    %6609 = vmatpush1.msra.mxu0 0.0
    %6610 = vmatprep.subr.mxu0 0.0
    %6611 = vmatpush1.msra.mxu0 0.0
    %6612 = vmatprep.subr.mxu0 0.0
    %6613 = vmatpush1.msra.mxu0 0.0
    %6614 = vmatprep.mubr.f32.mxu0 0.0
    %6615 = vmatmul.mubr.f32.gmra.mrb[0].mxu0 %v6503
    %v6616 = vpop.f32.mrb[0].mxu0
    %v6617 = vadd.f32 %v6500, %v6616
    %v6618 = vpop.f32.mrb[0].mxu0
    %6619 = vmatprep.mubr.f32.mxu0 0.0
    %6620 = vmatmul.mubr.f32.gmra.mrb[0].mxu0 %v6506
    %v6621 = vpop.f32.mrb[0].mxu0
    %v6622 = vadd.f32 %v6500, %v6621
    %v6623 = vpop.f32.mrb[0].mxu0
    %6624 = vmatprep.mubr.f32.mxu0 0.0
    %6625 = vmatmul.mubr.f32.gmra.mrb[0].mxu0 %v6509
    %v6626 = vpop.f32.mrb[0].mxu0
    %v6627 = vadd.f32 %v6500, %v6626
    %v6628 = vpop.f32.mrb[0].mxu0
    %6629 = vmatprep.mubr.f32.mxu0 0.0
    %6630 = vmatmul.mubr.f32.gmra.mrb[0].mxu0 %v6512
    %v6631 = vpop.f32.mrb[0].mxu0
    %v6632 = vadd.f32 %v6500, %v6631
    %v6633 = vpop.f32.mrb[0].mxu0
    %6634 = vmatprep.mubr.f32.mxu0 0.0
    %6635 = vmatmul.mubr.f32.gmra.mrb[0].mxu0 %v6515
    %v6636 = vpop.f32.mrb[0].mxu0
    %v6637 = vadd.f32 %v6500, %v6636
    %v6638 = vpop.f32.mrb[0].mxu0
    %6639 = vmatprep.mubr.f32.mxu0 0.0
    %6640 = vmatmul.mubr.f32.gmra.mrb[0].mxu0 %v6518
    %v6641 = vpop.f32.mrb[0].mxu0
    %v6642 = vadd.f32 %v6500, %v6641
    %v6643 = vpop.f32.mrb[0].mxu0
    %6644 = vmatprep.mubr.f32.mxu0 0.0
    %6645 = vmatmul.mubr.f32.gmra.mrb[0].mxu0 %v6521
    %v6646 = vpop.f32.mrb[0].mxu0
    %v6647 = vadd.f32 %v6500, %v6646
    %v6648 = vpop.f32.mrb[0].mxu0
    %6649 = vmatprep.mubr.f32.mxu0 0.0
    %6650 = vmatmul.mubr.f32.gmra.mrb[0].mxu0 %v6524
    %v6651 = vpop.f32.mrb[0].mxu0
    %v6652 = vadd.f32 %v6500, %v6651
    %v6653 = vpop.f32.mrb[0].mxu0
    %6654 = vmatprep.mubr.f32.mxu0 0.0
    %6655 = vmatmul.mubr.f32.gmra.mrb[0].mxu0 %v6527
    %v6656 = vpop.f32.mrb[0].mxu0
    %v6657 = vadd.f32 %v6500, %v6656
    %v6658 = vpop.f32.mrb[0].mxu0
    %6659 = vmatprep.mubr.f32.mxu0 0.0
    %6660 = vmatmul.mubr.f32.gmra.mrb[0].mxu0 %v6530
    %v6661 = vpop.f32.mrb[0].mxu0
    %v6662 = vadd.f32 %v6500, %v6661
    %v6663 = vpop.f32.mrb[0].mxu0
    %6664 = vmatprep.mubr.f32.mxu0 0.0
    %6665 = vmatmul.mubr.f32.gmra.mrb[0].mxu0 %v6533
    %v6666 = vpop.f32.mrb[0].mxu0
    %v6667 = vadd.f32 %v6500, %v6666
    %v6668 = vpop.f32.mrb[0].mxu0
    %6669 = vmatprep.mubr.f32.mxu0 0.0
    %6670 = vmatmul.mubr.f32.gmra.mrb[0].mxu0 %v6536
    %v6671 = vpop.f32.mrb[0].mxu0
    %v6672 = vadd.f32 %v6500, %v6671
    %v6673 = vpop.f32.mrb[0].mxu0
    %6674 = vmatprep.mubr.f32.mxu0 0.0
    %6675 = vmatmul.mubr.f32.gmra.mrb[0].mxu0 %v6539
    %v6676 = vpop.f32.mrb[0].mxu0
    %v6677 = vadd.f32 %v6500, %v6676
    %v6678 = vpop.f32.mrb[0].mxu0
    %6679 = vmatprep.mubr.f32.mxu0 0.0
    %6680 = vmatmul.mubr.f32.gmra.mrb[0].mxu0 %v6542
    %v6681 = vpop.f32.mrb[0].mxu0
    %v6682 = vadd.f32 %v6500, %v6681
    %v6683 = vpop.f32.mrb[0].mxu0
    %6684 = vmatprep.mubr.f32.mxu0 0.0
    %6685 = vmatmul.mubr.f32.gmra.mrb[0].mxu0 %v6545
    %v6686 = vpop.f32.mrb[0].mxu0
    %v6687 = vadd.f32 %v6500, %v6686
    %v6688 = vpop.f32.mrb[0].mxu0
    %6689 = vmatprep.mubr.f32.mxu0 0.0
    %6690 = vmatmul.mubr.f32.gmra.mrb[0].mxu0 %v6548
    %v6691 = vpop.f32.mrb[0].mxu0
    %v6692 = vadd.f32 %v6500, %v6691
    %v6693 = vpop.f32.mrb[0].mxu0
    %6694 = vdwg.mxu0
    %v6695 = vadd.f32 %v4022, %v6617
    %v6696 = vadd.f32 %v4023, %v6622
    %v6697 = vadd.f32 %v4024, %v6627
    %v6698 = vadd.f32 %v4025, %v6632
    %v6699 = vadd.f32 %v4026, %v6637
    %v6700 = vadd.f32 %v4027, %v6642
    %v6701 = vadd.f32 %v4028, %v6647
    %v6702 = vadd.f32 %v4029, %v6652
    %v6703 = vadd.f32 %v4030, %v6657
    %v6704 = vadd.f32 %v4031, %v6662
    %v6705 = vadd.f32 %v4032, %v6667
    %v6706 = vadd.f32 %v4033, %v6672
    %v6707 = vadd.f32 %v4034, %v6677
    %v6708 = vadd.f32 %v4035, %v6682
    %v6709 = vadd.f32 %v4036, %v6687
    %v6710 = vadd.f32 %v4037, %v6692
    %v6711 = vsel %vm453, %v6695, 0.0
    %6712 = vadd.xlane.f32.xlu0 %v6711
    %v6713 = vpop.xlane.xlu0 %6712
    %v6714 = vsel %vm453, %v6696, 0.0
    %6715 = vadd.xlane.f32.xlu0 %v6714
    %v6716 = vpop.xlane.xlu0 %6715
    %v6717 = vsel %vm453, %v6697, 0.0
    %6718 = vadd.xlane.f32.xlu0 %v6717
    %v6719 = vpop.xlane.xlu0 %6718
    %v6720 = vsel %vm453, %v6698, 0.0
    %6721 = vadd.xlane.f32.xlu0 %v6720
    %v6722 = vpop.xlane.xlu0 %6721
    %v6723 = vsel %vm453, %v6699, 0.0
    %6724 = vadd.xlane.f32.xlu0 %v6723
    %v6725 = vpop.xlane.xlu0 %6724
    %v6726 = vsel %vm453, %v6700, 0.0
    %6727 = vadd.xlane.f32.xlu0 %v6726
    %v6728 = vpop.xlane.xlu0 %6727
    %v6729 = vsel %vm453, %v6701, 0.0
    %6730 = vadd.xlane.f32.xlu0 %v6729
    %v6731 = vpop.xlane.xlu0 %6730
    %v6732 = vsel %vm453, %v6702, 0.0
    %6733 = vadd.xlane.f32.xlu0 %v6732
    %v6734 = vpop.xlane.xlu0 %6733
    %v6735 = vsel %vm453, %v6703, 0.0
    %6736 = vadd.xlane.f32.xlu0 %v6735
    %v6737 = vpop.xlane.xlu0 %6736
    %v6738 = vsel %vm453, %v6704, 0.0
    %6739 = vadd.xlane.f32.xlu0 %v6738
    %v6740 = vpop.xlane.xlu0 %6739
    %v6741 = vsel %vm453, %v6705, 0.0
    %6742 = vadd.xlane.f32.xlu0 %v6741
    %v6743 = vpop.xlane.xlu0 %6742
    %v6744 = vsel %vm453, %v6706, 0.0
    %6745 = vadd.xlane.f32.xlu0 %v6744
    %v6746 = vpop.xlane.xlu0 %6745
    %v6747 = vsel %vm453, %v6707, 0.0
    %6748 = vadd.xlane.f32.xlu0 %v6747
    %v6749 = vpop.xlane.xlu0 %6748
    %v6750 = vsel %vm453, %v6708, 0.0
    %6751 = vadd.xlane.f32.xlu0 %v6750
    %v6752 = vpop.xlane.xlu0 %6751
    %v6753 = vsel %vm453, %v6709, 0.0
    %6754 = vadd.xlane.f32.xlu0 %v6753
    %v6755 = vpop.xlane.xlu0 %6754
    %v6756 = vsel %vm453, %v6710, 0.0
    %6757 = vadd.xlane.f32.xlu0 %v6756
    %v6758 = vpop.xlane.xlu0 %6757
    %v6759 = vmul.f32 %v6713, %v3165
    %v6760 = vmul.f32 %v6716, %v3165
    %v6761 = vmul.f32 %v6719, %v3165
    %v6762 = vmul.f32 %v6722, %v3165
    %v6763 = vmul.f32 %v6725, %v3165
    %v6764 = vmul.f32 %v6728, %v3165
    %v6765 = vmul.f32 %v6731, %v3165
    %v6766 = vmul.f32 %v6734, %v3165
    %v6767 = vmul.f32 %v6737, %v3165
    %v6768 = vmul.f32 %v6740, %v3165
    %v6769 = vmul.f32 %v6743, %v3165
    %v6770 = vmul.f32 %v6746, %v3165
    %v6771 = vmul.f32 %v6749, %v3165
    %v6772 = vmul.f32 %v6752, %v3165
    %v6773 = vmul.f32 %v6755, %v3165
    %v6774 = vmul.f32 %v6758, %v3165
    %v6775 = vsub.f32 %v6695, %v6759
    %v6776 = vsub.f32 %v6696, %v6760
    %v6777 = vsub.f32 %v6697, %v6761
    %v6778 = vsub.f32 %v6698, %v6762
    %v6779 = vsub.f32 %v6699, %v6763
    %v6780 = vsub.f32 %v6700, %v6764
    %v6781 = vsub.f32 %v6701, %v6765
    %v6782 = vsub.f32 %v6702, %v6766
    %v6783 = vsub.f32 %v6703, %v6767
    %v6784 = vsub.f32 %v6704, %v6768
    %v6785 = vsub.f32 %v6705, %v6769
    %v6786 = vsub.f32 %v6706, %v6770
    %v6787 = vsub.f32 %v6707, %v6771
    %v6788 = vsub.f32 %v6708, %v6772
    %v6789 = vsub.f32 %v6709, %v6773
    %v6790 = vsub.f32 %v6710, %v6774
    %v6791 = vmul.f32 %v6775, %v6775
    %v6792 = vmul.f32 %v6776, %v6776
    %v6793 = vmul.f32 %v6777, %v6777
    %v6794 = vmul.f32 %v6778, %v6778
    %v6795 = vmul.f32 %v6779, %v6779
    %v6796 = vmul.f32 %v6780, %v6780
    %v6797 = vmul.f32 %v6781, %v6781
    %v6798 = vmul.f32 %v6782, %v6782
    %v6799 = vmul.f32 %v6783, %v6783
    %v6800 = vmul.f32 %v6784, %v6784
    %v6801 = vmul.f32 %v6785, %v6785
    %v6802 = vmul.f32 %v6786, %v6786
    %v6803 = vmul.f32 %v6787, %v6787
    %v6804 = vmul.f32 %v6788, %v6788
    %v6805 = vmul.f32 %v6789, %v6789
    %v6806 = vmul.f32 %v6790, %v6790
    %v6807 = vsel %vm453, %v6791, 0.0
    %6808 = vadd.xlane.f32.xlu0 %v6807
    %v6809 = vpop.xlane.xlu0 %6808
    %v6810 = vsel %vm453, %v6792, 0.0
    %6811 = vadd.xlane.f32.xlu0 %v6810
    %v6812 = vpop.xlane.xlu0 %6811
    %v6813 = vsel %vm453, %v6793, 0.0
    %6814 = vadd.xlane.f32.xlu0 %v6813
    %v6815 = vpop.xlane.xlu0 %6814
    %v6816 = vsel %vm453, %v6794, 0.0
    %6817 = vadd.xlane.f32.xlu0 %v6816
    %v6818 = vpop.xlane.xlu0 %6817
    %v6819 = vsel %vm453, %v6795, 0.0
    %6820 = vadd.xlane.f32.xlu0 %v6819
    %v6821 = vpop.xlane.xlu0 %6820
    %v6822 = vsel %vm453, %v6796, 0.0
    %6823 = vadd.xlane.f32.xlu0 %v6822
    %v6824 = vpop.xlane.xlu0 %6823
    %v6825 = vsel %vm453, %v6797, 0.0
    %6826 = vadd.xlane.f32.xlu0 %v6825
    %v6827 = vpop.xlane.xlu0 %6826
    %v6828 = vsel %vm453, %v6798, 0.0
    %6829 = vadd.xlane.f32.xlu0 %v6828
    %v6830 = vpop.xlane.xlu0 %6829
    %v6831 = vsel %vm453, %v6799, 0.0
    %6832 = vadd.xlane.f32.xlu0 %v6831
    %v6833 = vpop.xlane.xlu0 %6832
    %v6834 = vsel %vm453, %v6800, 0.0
    %6835 = vadd.xlane.f32.xlu0 %v6834
    %v6836 = vpop.xlane.xlu0 %6835
    %v6837 = vsel %vm453, %v6801, 0.0
    %6838 = vadd.xlane.f32.xlu0 %v6837
    %v6839 = vpop.xlane.xlu0 %6838
    %v6840 = vsel %vm453, %v6802, 0.0
    %6841 = vadd.xlane.f32.xlu0 %v6840
    %v6842 = vpop.xlane.xlu0 %6841
    %v6843 = vsel %vm453, %v6803, 0.0
    %6844 = vadd.xlane.f32.xlu0 %v6843
    %v6845 = vpop.xlane.xlu0 %6844
    %v6846 = vsel %vm453, %v6804, 0.0
    %6847 = vadd.xlane.f32.xlu0 %v6846
    %v6848 = vpop.xlane.xlu0 %6847
    %v6849 = vsel %vm453, %v6805, 0.0
    %6850 = vadd.xlane.f32.xlu0 %v6849
    %v6851 = vpop.xlane.xlu0 %6850
    %v6852 = vsel %vm453, %v6806, 0.0
    %6853 = vadd.xlane.f32.xlu0 %v6852
    %v6854 = vpop.xlane.xlu0 %6853
    %v6855 = vmul.f32 %v6809, %v3165
    %v6856 = vmul.f32 %v6812, %v3165
    %v6857 = vmul.f32 %v6815, %v3165
    %v6858 = vmul.f32 %v6818, %v3165
    %v6859 = vmul.f32 %v6821, %v3165
    %v6860 = vmul.f32 %v6824, %v3165
    %v6861 = vmul.f32 %v6827, %v3165
    %v6862 = vmul.f32 %v6830, %v3165
    %v6863 = vmul.f32 %v6833, %v3165
    %v6864 = vmul.f32 %v6836, %v3165
    %v6865 = vmul.f32 %v6839, %v3165
    %v6866 = vmul.f32 %v6842, %v3165
    %v6867 = vmul.f32 %v6845, %v3165
    %v6868 = vmul.f32 %v6848, %v3165
    %v6869 = vmul.f32 %v6851, %v3165
    %v6870 = vmul.f32 %v6854, %v3165
    %v6871 = vadd.f32 %v6855, 1e-05
    %v6872 = vadd.f32 %v6856, 1e-05
    %v6873 = vadd.f32 %v6857, 1e-05
    %v6874 = vadd.f32 %v6858, 1e-05
    %v6875 = vadd.f32 %v6859, 1e-05
    %v6876 = vadd.f32 %v6860, 1e-05
    %v6877 = vadd.f32 %v6861, 1e-05
    %v6878 = vadd.f32 %v6862, 1e-05
    %v6879 = vadd.f32 %v6863, 1e-05
    %v6880 = vadd.f32 %v6864, 1e-05
    %v6881 = vadd.f32 %v6865, 1e-05
    %v6882 = vadd.f32 %v6866, 1e-05
    %v6883 = vadd.f32 %v6867, 1e-05
    %v6884 = vadd.f32 %v6868, 1e-05
    %v6885 = vadd.f32 %v6869, 1e-05
    %v6886 = vadd.f32 %v6870, 1e-05
    %v6887 = vrsqrt.pop %v6871
    %v6888 = vrsqrt.pop %v6872
    %v6889 = vrsqrt.pop %v6873
    %v6890 = vrsqrt.pop %v6874
    %v6891 = vrsqrt.pop %v6875
    %v6892 = vrsqrt.pop %v6876
    %v6893 = vrsqrt.pop %v6877
    %v6894 = vrsqrt.pop %v6878
    %v6895 = vrsqrt.pop %v6879
    %v6896 = vrsqrt.pop %v6880
    %v6897 = vrsqrt.pop %v6881
    %v6898 = vrsqrt.pop %v6882
    %v6899 = vrsqrt.pop %v6883
    %v6900 = vrsqrt.pop %v6884
    %v6901 = vrsqrt.pop %v6885
    %v6902 = vrsqrt.pop %v6886
    %v6903 = vmul.f32 %v6775, %v6887
    %v6904 = vmul.f32 %v6776, %v6888
    %v6905 = vmul.f32 %v6777, %v6889
    %v6906 = vmul.f32 %v6778, %v6890
    %v6907 = vmul.f32 %v6779, %v6891
    %v6908 = vmul.f32 %v6780, %v6892
    %v6909 = vmul.f32 %v6781, %v6893
    %v6910 = vmul.f32 %v6782, %v6894
    %v6911 = vmul.f32 %v6783, %v6895
    %v6912 = vmul.f32 %v6784, %v6896
    %v6913 = vmul.f32 %v6785, %v6897
    %v6914 = vmul.f32 %v6786, %v6898
    %v6915 = vmul.f32 %v6787, %v6899
    %v6916 = vmul.f32 %v6788, %v6900
    %v6917 = vmul.f32 %v6789, %v6901
    %v6918 = vmul.f32 %v6790, %v6902
    %6919 = vrot.lane.b32.xlu0 %v4046, 96
    %v6920 = vpop.permute.xlu0 %6919
    %v6922 = vmul.f32 %v6903, %v6920
    %v6923 = vmul.f32 %v6904, %v6920
    %v6924 = vmul.f32 %v6905, %v6920
    %v6925 = vmul.f32 %v6906, %v6920
    %v6926 = vmul.f32 %v6907, %v6920
    %v6927 = vmul.f32 %v6908, %v6920
    %v6928 = vmul.f32 %v6909, %v6920
    %v6929 = vmul.f32 %v6910, %v6920
    %v6930 = vmul.f32 %v6911, %v6920
    %v6931 = vmul.f32 %v6912, %v6920
    %v6932 = vmul.f32 %v6913, %v6920
    %v6933 = vmul.f32 %v6914, %v6920
    %v6934 = vmul.f32 %v6915, %v6920
    %v6935 = vmul.f32 %v6916, %v6920
    %v6936 = vmul.f32 %v6917, %v6920
    %v6937 = vmul.f32 %v6918, %v6920
    %6938 = vrot.lane.b32.xlu0 %v4046, 88
    %v6939 = vpop.permute.xlu0 %6938
    %v6941 = vadd.f32 %v6922, %v6939
    %v6942 = vadd.f32 %v6923, %v6939
    %v6943 = vadd.f32 %v6924, %v6939
    %v6944 = vadd.f32 %v6925, %v6939
    %v6945 = vadd.f32 %v6926, %v6939
    %v6946 = vadd.f32 %v6927, %v6939
    %v6947 = vadd.f32 %v6928, %v6939
    %v6948 = vadd.f32 %v6929, %v6939
    %v6949 = vadd.f32 %v6930, %v6939
    %v6950 = vadd.f32 %v6931, %v6939
    %v6951 = vadd.f32 %v6932, %v6939
    %v6952 = vadd.f32 %v6933, %v6939
    %v6953 = vadd.f32 %v6934, %v6939
    %v6954 = vadd.f32 %v6935, %v6939
    %v6955 = vadd.f32 %v6936, %v6939
    %v6956 = vadd.f32 %v6937, %v6939
    %s6957 = scalar_lea.vmem %s5, 8
    %v6958 = vld [vmem:[%s6957] sm:$0xff]
    %6959 = vrot.lane.b32.xlu0 %v4046, 80
    %v6960 = vpop.permute.xlu0 %6959
    %v6963 = vsel %vm453, %v6941, 0
    %v6966 = vsel %vm453, %v6942, 0
    %v6969 = vsel %vm453, %v6943, 0
    %v6972 = vsel %vm453, %v6944, 0
    %v6975 = vsel %vm453, %v6945, 0
    %v6978 = vsel %vm453, %v6946, 0
    %v6981 = vsel %vm453, %v6947, 0
    %v6984 = vsel %vm453, %v6948, 0
    %v6987 = vsel %vm453, %v6949, 0
    %v6990 = vsel %vm453, %v6950, 0
    %v6993 = vsel %vm453, %v6951, 0
    %v6996 = vsel %vm453, %v6952, 0
    %v6999 = vsel %vm453, %v6953, 0
    %v7002 = vsel %vm453, %v6954, 0
    %v7005 = vsel %vm453, %v6955, 0
    %v7008 = vsel %vm453, %v6956, 0
    %7010 = vmatprep.subr.mxu0 0.0
    %7011 = vmatpush1.msra.mxu0 %v6958
    %7012 = vmatprep.subr.mxu0 0.0
    %7013 = vmatpush1.msra.mxu0 0.0
    %7014 = vmatprep.subr.mxu0 0.0
    %7015 = vmatpush1.msra.mxu0 0.0
    %7016 = vmatprep.subr.mxu0 0.0
    %7017 = vmatpush1.msra.mxu0 0.0
    %7018 = vmatprep.subr.mxu0 0.0
    %7019 = vmatpush1.msra.mxu0 0.0
    %7020 = vmatprep.subr.mxu0 0.0
    %7021 = vmatpush1.msra.mxu0 0.0
    %7022 = vmatprep.subr.mxu0 0.0
    %7023 = vmatpush1.msra.mxu0 0.0
    %7024 = vmatprep.subr.mxu0 0.0
    %7025 = vmatpush1.msra.mxu0 0.0
    %7026 = vmatprep.subr.mxu0 0.0
    %7027 = vmatpush1.msra.mxu0 0.0
    %7028 = vmatprep.subr.mxu0 0.0
    %7029 = vmatpush1.msra.mxu0 0.0
    %7030 = vmatprep.subr.mxu0 0.0
    %7031 = vmatpush1.msra.mxu0 0.0
    %7032 = vmatprep.subr.mxu0 0.0
    %7033 = vmatpush1.msra.mxu0 0.0
    %7034 = vmatprep.subr.mxu0 0.0
    %7035 = vmatpush1.msra.mxu0 0.0
    %7036 = vmatprep.subr.mxu0 0.0
    %7037 = vmatpush1.msra.mxu0 0.0
    %7038 = vmatprep.subr.mxu0 0.0
    %7039 = vmatpush1.msra.mxu0 0.0
    %7040 = vmatprep.subr.mxu0 0.0
    %7041 = vmatpush1.msra.mxu0 0.0
    %7042 = vmatprep.subr.mxu0 0.0
    %7043 = vmatpush1.msra.mxu0 0.0
    %7044 = vmatprep.subr.mxu0 0.0
    %7045 = vmatpush1.msra.mxu0 0.0
    %7046 = vmatprep.subr.mxu0 0.0
    %7047 = vmatpush1.msra.mxu0 0.0
    %7048 = vmatprep.subr.mxu0 0.0
    %7049 = vmatpush1.msra.mxu0 0.0
    %7050 = vmatprep.subr.mxu0 0.0
    %7051 = vmatpush1.msra.mxu0 0.0
    %7052 = vmatprep.subr.mxu0 0.0
    %7053 = vmatpush1.msra.mxu0 0.0
    %7054 = vmatprep.subr.mxu0 0.0
    %7055 = vmatpush1.msra.mxu0 0.0
    %7056 = vmatprep.subr.mxu0 0.0
    %7057 = vmatpush1.msra.mxu0 0.0
    %7058 = vmatprep.subr.mxu0 0.0
    %7059 = vmatpush1.msra.mxu0 0.0
    %7060 = vmatprep.subr.mxu0 0.0
    %7061 = vmatpush1.msra.mxu0 0.0
    %7062 = vmatprep.subr.mxu0 0.0
    %7063 = vmatpush1.msra.mxu0 0.0
    %7064 = vmatprep.subr.mxu0 0.0
    %7065 = vmatpush1.msra.mxu0 0.0
    %7066 = vmatprep.subr.mxu0 0.0
    %7067 = vmatpush1.msra.mxu0 0.0
    %7068 = vmatprep.subr.mxu0 0.0
    %7069 = vmatpush1.msra.mxu0 0.0
    %7070 = vmatprep.subr.mxu0 0.0
    %7071 = vmatpush1.msra.mxu0 0.0
    %7072 = vmatprep.subr.mxu0 0.0
    %7073 = vmatpush1.msra.mxu0 0.0
    %7074 = vmatprep.mubr.f32.mxu0 0.0
    %7075 = vmatmul.mubr.f32.gmra.mrb[0].mxu0 %v6963
    %v7076 = vpop.f32.mrb[0].mxu0
    %v7077 = vadd.f32 %v6960, %v7076
    %v7078 = vpop.f32.mrb[0].mxu0
    %7079 = vmatprep.mubr.f32.mxu0 0.0
    %7080 = vmatmul.mubr.f32.gmra.mrb[0].mxu0 %v6966
    %v7081 = vpop.f32.mrb[0].mxu0
    %v7082 = vadd.f32 %v6960, %v7081
    %v7083 = vpop.f32.mrb[0].mxu0
    %7084 = vmatprep.mubr.f32.mxu0 0.0
    %7085 = vmatmul.mubr.f32.gmra.mrb[0].mxu0 %v6969
    %v7086 = vpop.f32.mrb[0].mxu0
    %v7087 = vadd.f32 %v6960, %v7086
    %v7088 = vpop.f32.mrb[0].mxu0
    %7089 = vmatprep.mubr.f32.mxu0 0.0
    %7090 = vmatmul.mubr.f32.gmra.mrb[0].mxu0 %v6972
    %v7091 = vpop.f32.mrb[0].mxu0
    %v7092 = vadd.f32 %v6960, %v7091
    %v7093 = vpop.f32.mrb[0].mxu0
    %7094 = vmatprep.mubr.f32.mxu0 0.0
    %7095 = vmatmul.mubr.f32.gmra.mrb[0].mxu0 %v6975
    %v7096 = vpop.f32.mrb[0].mxu0
    %v7097 = vadd.f32 %v6960, %v7096
    %v7098 = vpop.f32.mrb[0].mxu0
    %7099 = vmatprep.mubr.f32.mxu0 0.0
    %7100 = vmatmul.mubr.f32.gmra.mrb[0].mxu0 %v6978
    %v7101 = vpop.f32.mrb[0].mxu0
    %v7102 = vadd.f32 %v6960, %v7101
    %v7103 = vpop.f32.mrb[0].mxu0
    %7104 = vmatprep.mubr.f32.mxu0 0.0
    %7105 = vmatmul.mubr.f32.gmra.mrb[0].mxu0 %v6981
    %v7106 = vpop.f32.mrb[0].mxu0
    %v7107 = vadd.f32 %v6960, %v7106
    %v7108 = vpop.f32.mrb[0].mxu0
    %7109 = vmatprep.mubr.f32.mxu0 0.0
    %7110 = vmatmul.mubr.f32.gmra.mrb[0].mxu0 %v6984
    %v7111 = vpop.f32.mrb[0].mxu0
    %v7112 = vadd.f32 %v6960, %v7111
    %v7113 = vpop.f32.mrb[0].mxu0
    %7114 = vmatprep.mubr.f32.mxu0 0.0
    %7115 = vmatmul.mubr.f32.gmra.mrb[0].mxu0 %v6987
    %v7116 = vpop.f32.mrb[0].mxu0
    %v7117 = vadd.f32 %v6960, %v7116
    %v7118 = vpop.f32.mrb[0].mxu0
    %7119 = vmatprep.mubr.f32.mxu0 0.0
    %7120 = vmatmul.mubr.f32.gmra.mrb[0].mxu0 %v6990
    %v7121 = vpop.f32.mrb[0].mxu0
    %v7122 = vadd.f32 %v6960, %v7121
    %v7123 = vpop.f32.mrb[0].mxu0
    %7124 = vmatprep.mubr.f32.mxu0 0.0
    %7125 = vmatmul.mubr.f32.gmra.mrb[0].mxu0 %v6993
    %v7126 = vpop.f32.mrb[0].mxu0
    %v7127 = vadd.f32 %v6960, %v7126
    %v7128 = vpop.f32.mrb[0].mxu0
    %7129 = vmatprep.mubr.f32.mxu0 0.0
    %7130 = vmatmul.mubr.f32.gmra.mrb[0].mxu0 %v6996
    %v7131 = vpop.f32.mrb[0].mxu0
    %v7132 = vadd.f32 %v6960, %v7131
    %v7133 = vpop.f32.mrb[0].mxu0
    %7134 = vmatprep.mubr.f32.mxu0 0.0
    %7135 = vmatmul.mubr.f32.gmra.mrb[0].mxu0 %v6999
    %v7136 = vpop.f32.mrb[0].mxu0
    %v7137 = vadd.f32 %v6960, %v7136
    %v7138 = vpop.f32.mrb[0].mxu0
    %7139 = vmatprep.mubr.f32.mxu0 0.0
    %7140 = vmatmul.mubr.f32.gmra.mrb[0].mxu0 %v7002
    %v7141 = vpop.f32.mrb[0].mxu0
    %v7142 = vadd.f32 %v6960, %v7141
    %v7143 = vpop.f32.mrb[0].mxu0
    %7144 = vmatprep.mubr.f32.mxu0 0.0
    %7145 = vmatmul.mubr.f32.gmra.mrb[0].mxu0 %v7005
    %v7146 = vpop.f32.mrb[0].mxu0
    %v7147 = vadd.f32 %v6960, %v7146
    %v7148 = vpop.f32.mrb[0].mxu0
    %7149 = vmatprep.mubr.f32.mxu0 0.0
    %7150 = vmatmul.mubr.f32.gmra.mrb[0].mxu0 %v7008
    %v7151 = vpop.f32.mrb[0].mxu0
    %v7152 = vadd.f32 %v6960, %v7151
    %v7153 = vpop.f32.mrb[0].mxu0
    %7154 = vdwg.mxu0
    %v7155 = vmax.f32 %v7077, 0.0
    %v7156 = vmax.f32 %v7082, 0.0
    %v7157 = vmax.f32 %v7087, 0.0
    %v7158 = vmax.f32 %v7092, 0.0
    %v7159 = vmax.f32 %v7097, 0.0
    %v7160 = vmax.f32 %v7102, 0.0
    %v7161 = vmax.f32 %v7107, 0.0
    %v7162 = vmax.f32 %v7112, 0.0
    %v7163 = vmax.f32 %v7117, 0.0
    %v7164 = vmax.f32 %v7122, 0.0
    %v7165 = vmax.f32 %v7127, 0.0
    %v7166 = vmax.f32 %v7132, 0.0
    %v7167 = vmax.f32 %v7137, 0.0
    %v7168 = vmax.f32 %v7142, 0.0
    %v7169 = vmax.f32 %v7147, 0.0
    %v7170 = vmax.f32 %v7152, 0.0
    %s7171 = scalar_lea.vmem %s6, 16
    %v7172 = vld [vmem:[%s7171] sm:$0xff]
    %v7173 = vld [vmem:[%s7171 + $0x8] sm:$0xff]
    %7174 = vrot.lane.b32.xlu0 %v4046, 64
    %v7175 = vpop.permute.xlu0 %7174
    %v7178 = vsel %vm3582, %v7155, 0
    %v7181 = vsel %vm3582, %v7156, 0
    %v7184 = vsel %vm3582, %v7157, 0
    %v7187 = vsel %vm3582, %v7158, 0
    %v7190 = vsel %vm3582, %v7159, 0
    %v7193 = vsel %vm3582, %v7160, 0
    %v7196 = vsel %vm3582, %v7161, 0
    %v7199 = vsel %vm3582, %v7162, 0
    %v7202 = vsel %vm3582, %v7163, 0
    %v7205 = vsel %vm3582, %v7164, 0
    %v7208 = vsel %vm3582, %v7165, 0
    %v7211 = vsel %vm3582, %v7166, 0
    %v7214 = vsel %vm3582, %v7167, 0
    %v7217 = vsel %vm3582, %v7168, 0
    %v7220 = vsel %vm3582, %v7169, 0
    %v7223 = vsel %vm3582, %v7170, 0
    %7225 = vmatprep.subr.mxu0 0.0
    %7226 = vmatpush1.msra.mxu0 %v7172
    %7227 = vmatprep.subr.mxu0 0.0
    %7228 = vmatpush1.msra.mxu0 %v7173
    %7229 = vmatprep.subr.mxu0 0.0
    %7230 = vmatpush1.msra.mxu0 0.0
    %7231 = vmatprep.subr.mxu0 0.0
    %7232 = vmatpush1.msra.mxu0 0.0
    %7233 = vmatprep.subr.mxu0 0.0
    %7234 = vmatpush1.msra.mxu0 0.0
    %7235 = vmatprep.subr.mxu0 0.0
    %7236 = vmatpush1.msra.mxu0 0.0
    %7237 = vmatprep.subr.mxu0 0.0
    %7238 = vmatpush1.msra.mxu0 0.0
    %7239 = vmatprep.subr.mxu0 0.0
    %7240 = vmatpush1.msra.mxu0 0.0
    %7241 = vmatprep.subr.mxu0 0.0
    %7242 = vmatpush1.msra.mxu0 0.0
    %7243 = vmatprep.subr.mxu0 0.0
    %7244 = vmatpush1.msra.mxu0 0.0
    %7245 = vmatprep.subr.mxu0 0.0
    %7246 = vmatpush1.msra.mxu0 0.0
    %7247 = vmatprep.subr.mxu0 0.0
    %7248 = vmatpush1.msra.mxu0 0.0
    %7249 = vmatprep.subr.mxu0 0.0
    %7250 = vmatpush1.msra.mxu0 0.0
    %7251 = vmatprep.subr.mxu0 0.0
    %7252 = vmatpush1.msra.mxu0 0.0
    %7253 = vmatprep.subr.mxu0 0.0
    %7254 = vmatpush1.msra.mxu0 0.0
    %7255 = vmatprep.subr.mxu0 0.0
    %7256 = vmatpush1.msra.mxu0 0.0
    %7257 = vmatprep.subr.mxu0 0.0
    %7258 = vmatpush1.msra.mxu0 0.0
    %7259 = vmatprep.subr.mxu0 0.0
    %7260 = vmatpush1.msra.mxu0 0.0
    %7261 = vmatprep.subr.mxu0 0.0
    %7262 = vmatpush1.msra.mxu0 0.0
    %7263 = vmatprep.subr.mxu0 0.0
    %7264 = vmatpush1.msra.mxu0 0.0
    %7265 = vmatprep.subr.mxu0 0.0
    %7266 = vmatpush1.msra.mxu0 0.0
    %7267 = vmatprep.subr.mxu0 0.0
    %7268 = vmatpush1.msra.mxu0 0.0
    %7269 = vmatprep.subr.mxu0 0.0
    %7270 = vmatpush1.msra.mxu0 0.0
    %7271 = vmatprep.subr.mxu0 0.0
    %7272 = vmatpush1.msra.mxu0 0.0
    %7273 = vmatprep.subr.mxu0 0.0
    %7274 = vmatpush1.msra.mxu0 0.0
    %7275 = vmatprep.subr.mxu0 0.0
    %7276 = vmatpush1.msra.mxu0 0.0
    %7277 = vmatprep.subr.mxu0 0.0
    %7278 = vmatpush1.msra.mxu0 0.0
    %7279 = vmatprep.subr.mxu0 0.0
    %7280 = vmatpush1.msra.mxu0 0.0
    %7281 = vmatprep.subr.mxu0 0.0
    %7282 = vmatpush1.msra.mxu0 0.0
    %7283 = vmatprep.subr.mxu0 0.0
    %7284 = vmatpush1.msra.mxu0 0.0
    %7285 = vmatprep.subr.mxu0 0.0
    %7286 = vmatpush1.msra.mxu0 0.0
    %7287 = vmatprep.subr.mxu0 0.0
    %7288 = vmatpush1.msra.mxu0 0.0
    %7289 = vmatprep.mubr.f32.mxu0 0.0
    %7290 = vmatmul.mubr.f32.gmra.mrb[0].mxu0 %v7178
    %v7291 = vpop.f32.mrb[0].mxu0
    %v7292 = vadd.f32 %v7175, %v7291
    %v7293 = vpop.f32.mrb[0].mxu0
    %7294 = vmatprep.mubr.f32.mxu0 0.0
    %7295 = vmatmul.mubr.f32.gmra.mrb[0].mxu0 %v7181
    %v7296 = vpop.f32.mrb[0].mxu0
    %v7297 = vadd.f32 %v7175, %v7296
    %v7298 = vpop.f32.mrb[0].mxu0
    %7299 = vmatprep.mubr.f32.mxu0 0.0
    %7300 = vmatmul.mubr.f32.gmra.mrb[0].mxu0 %v7184
    %v7301 = vpop.f32.mrb[0].mxu0
    %v7302 = vadd.f32 %v7175, %v7301
    %v7303 = vpop.f32.mrb[0].mxu0
    %7304 = vmatprep.mubr.f32.mxu0 0.0
    %7305 = vmatmul.mubr.f32.gmra.mrb[0].mxu0 %v7187
    %v7306 = vpop.f32.mrb[0].mxu0
    %v7307 = vadd.f32 %v7175, %v7306
    %v7308 = vpop.f32.mrb[0].mxu0
    %7309 = vmatprep.mubr.f32.mxu0 0.0
    %7310 = vmatmul.mubr.f32.gmra.mrb[0].mxu0 %v7190
    %v7311 = vpop.f32.mrb[0].mxu0
    %v7312 = vadd.f32 %v7175, %v7311
    %v7313 = vpop.f32.mrb[0].mxu0
    %7314 = vmatprep.mubr.f32.mxu0 0.0
    %7315 = vmatmul.mubr.f32.gmra.mrb[0].mxu0 %v7193
    %v7316 = vpop.f32.mrb[0].mxu0
    %v7317 = vadd.f32 %v7175, %v7316
    %v7318 = vpop.f32.mrb[0].mxu0
    %7319 = vmatprep.mubr.f32.mxu0 0.0
    %7320 = vmatmul.mubr.f32.gmra.mrb[0].mxu0 %v7196
    %v7321 = vpop.f32.mrb[0].mxu0
    %v7322 = vadd.f32 %v7175, %v7321
    %v7323 = vpop.f32.mrb[0].mxu0
    %7324 = vmatprep.mubr.f32.mxu0 0.0
    %7325 = vmatmul.mubr.f32.gmra.mrb[0].mxu0 %v7199
    %v7326 = vpop.f32.mrb[0].mxu0
    %v7327 = vadd.f32 %v7175, %v7326
    %v7328 = vpop.f32.mrb[0].mxu0
    %7329 = vmatprep.mubr.f32.mxu0 0.0
    %7330 = vmatmul.mubr.f32.gmra.mrb[0].mxu0 %v7202
    %v7331 = vpop.f32.mrb[0].mxu0
    %v7332 = vadd.f32 %v7175, %v7331
    %v7333 = vpop.f32.mrb[0].mxu0
    %7334 = vmatprep.mubr.f32.mxu0 0.0
    %7335 = vmatmul.mubr.f32.gmra.mrb[0].mxu0 %v7205
    %v7336 = vpop.f32.mrb[0].mxu0
    %v7337 = vadd.f32 %v7175, %v7336
    %v7338 = vpop.f32.mrb[0].mxu0
    %7339 = vmatprep.mubr.f32.mxu0 0.0
    %7340 = vmatmul.mubr.f32.gmra.mrb[0].mxu0 %v7208
    %v7341 = vpop.f32.mrb[0].mxu0
    %v7342 = vadd.f32 %v7175, %v7341
    %v7343 = vpop.f32.mrb[0].mxu0
    %7344 = vmatprep.mubr.f32.mxu0 0.0
    %7345 = vmatmul.mubr.f32.gmra.mrb[0].mxu0 %v7211
    %v7346 = vpop.f32.mrb[0].mxu0
    %v7347 = vadd.f32 %v7175, %v7346
    %v7348 = vpop.f32.mrb[0].mxu0
    %7349 = vmatprep.mubr.f32.mxu0 0.0
    %7350 = vmatmul.mubr.f32.gmra.mrb[0].mxu0 %v7214
    %v7351 = vpop.f32.mrb[0].mxu0
    %v7352 = vadd.f32 %v7175, %v7351
    %v7353 = vpop.f32.mrb[0].mxu0
    %7354 = vmatprep.mubr.f32.mxu0 0.0
    %7355 = vmatmul.mubr.f32.gmra.mrb[0].mxu0 %v7217
    %v7356 = vpop.f32.mrb[0].mxu0
    %v7357 = vadd.f32 %v7175, %v7356
    %v7358 = vpop.f32.mrb[0].mxu0
    %7359 = vmatprep.mubr.f32.mxu0 0.0
    %7360 = vmatmul.mubr.f32.gmra.mrb[0].mxu0 %v7220
    %v7361 = vpop.f32.mrb[0].mxu0
    %v7362 = vadd.f32 %v7175, %v7361
    %v7363 = vpop.f32.mrb[0].mxu0
    %7364 = vmatprep.mubr.f32.mxu0 0.0
    %7365 = vmatmul.mubr.f32.gmra.mrb[0].mxu0 %v7223
    %v7366 = vpop.f32.mrb[0].mxu0
    %v7367 = vadd.f32 %v7175, %v7366
    %v7368 = vpop.f32.mrb[0].mxu0
    %7369 = vdwg.mxu0
    %v7370 = vadd.f32 %v6941, %v7292
    %v7371 = vadd.f32 %v6942, %v7297
    %v7372 = vadd.f32 %v6943, %v7302
    %v7373 = vadd.f32 %v6944, %v7307
    %v7374 = vadd.f32 %v6945, %v7312
    %v7375 = vadd.f32 %v6946, %v7317
    %v7376 = vadd.f32 %v6947, %v7322
    %v7377 = vadd.f32 %v6948, %v7327
    %v7378 = vadd.f32 %v6949, %v7332
    %v7379 = vadd.f32 %v6950, %v7337
    %v7380 = vadd.f32 %v6951, %v7342
    %v7381 = vadd.f32 %v6952, %v7347
    %v7382 = vadd.f32 %v6953, %v7352
    %v7383 = vadd.f32 %v6954, %v7357
    %v7384 = vadd.f32 %v6955, %v7362
    %v7385 = vadd.f32 %v6956, %v7367
    %v7386 = vsel %vm453, %v7370, 0.0
    %7387 = vadd.xlane.f32.xlu0 %v7386
    %v7388 = vpop.xlane.xlu0 %7387
    %v7389 = vsel %vm453, %v7371, 0.0
    %7390 = vadd.xlane.f32.xlu0 %v7389
    %v7391 = vpop.xlane.xlu0 %7390
    %v7392 = vsel %vm453, %v7372, 0.0
    %7393 = vadd.xlane.f32.xlu0 %v7392
    %v7394 = vpop.xlane.xlu0 %7393
    %v7395 = vsel %vm453, %v7373, 0.0
    %7396 = vadd.xlane.f32.xlu0 %v7395
    %v7397 = vpop.xlane.xlu0 %7396
    %v7398 = vsel %vm453, %v7374, 0.0
    %7399 = vadd.xlane.f32.xlu0 %v7398
    %v7400 = vpop.xlane.xlu0 %7399
    %v7401 = vsel %vm453, %v7375, 0.0
    %7402 = vadd.xlane.f32.xlu0 %v7401
    %v7403 = vpop.xlane.xlu0 %7402
    %v7404 = vsel %vm453, %v7376, 0.0
    %7405 = vadd.xlane.f32.xlu0 %v7404
    %v7406 = vpop.xlane.xlu0 %7405
    %v7407 = vsel %vm453, %v7377, 0.0
    %7408 = vadd.xlane.f32.xlu0 %v7407
    %v7409 = vpop.xlane.xlu0 %7408
    %v7410 = vsel %vm453, %v7378, 0.0
    %7411 = vadd.xlane.f32.xlu0 %v7410
    %v7412 = vpop.xlane.xlu0 %7411
    %v7413 = vsel %vm453, %v7379, 0.0
    %7414 = vadd.xlane.f32.xlu0 %v7413
    %v7415 = vpop.xlane.xlu0 %7414
    %v7416 = vsel %vm453, %v7380, 0.0
    %7417 = vadd.xlane.f32.xlu0 %v7416
    %v7418 = vpop.xlane.xlu0 %7417
    %v7419 = vsel %vm453, %v7381, 0.0
    %7420 = vadd.xlane.f32.xlu0 %v7419
    %v7421 = vpop.xlane.xlu0 %7420
    %v7422 = vsel %vm453, %v7382, 0.0
    %7423 = vadd.xlane.f32.xlu0 %v7422
    %v7424 = vpop.xlane.xlu0 %7423
    %v7425 = vsel %vm453, %v7383, 0.0
    %7426 = vadd.xlane.f32.xlu0 %v7425
    %v7427 = vpop.xlane.xlu0 %7426
    %v7428 = vsel %vm453, %v7384, 0.0
    %7429 = vadd.xlane.f32.xlu0 %v7428
    %v7430 = vpop.xlane.xlu0 %7429
    %v7431 = vsel %vm453, %v7385, 0.0
    %7432 = vadd.xlane.f32.xlu0 %v7431
    %v7433 = vpop.xlane.xlu0 %7432
    %v7434 = vmul.f32 %v7388, %v3165
    %v7435 = vmul.f32 %v7391, %v3165
    %v7436 = vmul.f32 %v7394, %v3165
    %v7437 = vmul.f32 %v7397, %v3165
    %v7438 = vmul.f32 %v7400, %v3165
    %v7439 = vmul.f32 %v7403, %v3165
    %v7440 = vmul.f32 %v7406, %v3165
    %v7441 = vmul.f32 %v7409, %v3165
    %v7442 = vmul.f32 %v7412, %v3165
    %v7443 = vmul.f32 %v7415, %v3165
    %v7444 = vmul.f32 %v7418, %v3165
    %v7445 = vmul.f32 %v7421, %v3165
    %v7446 = vmul.f32 %v7424, %v3165
    %v7447 = vmul.f32 %v7427, %v3165
    %v7448 = vmul.f32 %v7430, %v3165
    %v7449 = vmul.f32 %v7433, %v3165
    %v7450 = vsub.f32 %v7370, %v7434
    %v7451 = vsub.f32 %v7371, %v7435
    %v7452 = vsub.f32 %v7372, %v7436
    %v7453 = vsub.f32 %v7373, %v7437
    %v7454 = vsub.f32 %v7374, %v7438
    %v7455 = vsub.f32 %v7375, %v7439
    %v7456 = vsub.f32 %v7376, %v7440
    %v7457 = vsub.f32 %v7377, %v7441
    %v7458 = vsub.f32 %v7378, %v7442
    %v7459 = vsub.f32 %v7379, %v7443
    %v7460 = vsub.f32 %v7380, %v7444
    %v7461 = vsub.f32 %v7381, %v7445
    %v7462 = vsub.f32 %v7382, %v7446
    %v7463 = vsub.f32 %v7383, %v7447
    %v7464 = vsub.f32 %v7384, %v7448
    %v7465 = vsub.f32 %v7385, %v7449
    %v7466 = vmul.f32 %v7450, %v7450
    %v7467 = vmul.f32 %v7451, %v7451
    %v7468 = vmul.f32 %v7452, %v7452
    %v7469 = vmul.f32 %v7453, %v7453
    %v7470 = vmul.f32 %v7454, %v7454
    %v7471 = vmul.f32 %v7455, %v7455
    %v7472 = vmul.f32 %v7456, %v7456
    %v7473 = vmul.f32 %v7457, %v7457
    %v7474 = vmul.f32 %v7458, %v7458
    %v7475 = vmul.f32 %v7459, %v7459
    %v7476 = vmul.f32 %v7460, %v7460
    %v7477 = vmul.f32 %v7461, %v7461
    %v7478 = vmul.f32 %v7462, %v7462
    %v7479 = vmul.f32 %v7463, %v7463
    %v7480 = vmul.f32 %v7464, %v7464
    %v7481 = vmul.f32 %v7465, %v7465
    %v7482 = vsel %vm453, %v7466, 0.0
    %7483 = vadd.xlane.f32.xlu0 %v7482
    %v7484 = vpop.xlane.xlu0 %7483
    %v7485 = vsel %vm453, %v7467, 0.0
    %7486 = vadd.xlane.f32.xlu0 %v7485
    %v7487 = vpop.xlane.xlu0 %7486
    %v7488 = vsel %vm453, %v7468, 0.0
    %7489 = vadd.xlane.f32.xlu0 %v7488
    %v7490 = vpop.xlane.xlu0 %7489
    %v7491 = vsel %vm453, %v7469, 0.0
    %7492 = vadd.xlane.f32.xlu0 %v7491
    %v7493 = vpop.xlane.xlu0 %7492
    %v7494 = vsel %vm453, %v7470, 0.0
    %7495 = vadd.xlane.f32.xlu0 %v7494
    %v7496 = vpop.xlane.xlu0 %7495
    %v7497 = vsel %vm453, %v7471, 0.0
    %7498 = vadd.xlane.f32.xlu0 %v7497
    %v7499 = vpop.xlane.xlu0 %7498
    %v7500 = vsel %vm453, %v7472, 0.0
    %7501 = vadd.xlane.f32.xlu0 %v7500
    %v7502 = vpop.xlane.xlu0 %7501
    %v7503 = vsel %vm453, %v7473, 0.0
    %7504 = vadd.xlane.f32.xlu0 %v7503
    %v7505 = vpop.xlane.xlu0 %7504
    %v7506 = vsel %vm453, %v7474, 0.0
    %7507 = vadd.xlane.f32.xlu0 %v7506
    %v7508 = vpop.xlane.xlu0 %7507
    %v7509 = vsel %vm453, %v7475, 0.0
    %7510 = vadd.xlane.f32.xlu0 %v7509
    %v7511 = vpop.xlane.xlu0 %7510
    %v7512 = vsel %vm453, %v7476, 0.0
    %7513 = vadd.xlane.f32.xlu0 %v7512
    %v7514 = vpop.xlane.xlu0 %7513
    %v7515 = vsel %vm453, %v7477, 0.0
    %7516 = vadd.xlane.f32.xlu0 %v7515
    %v7517 = vpop.xlane.xlu0 %7516
    %v7518 = vsel %vm453, %v7478, 0.0
    %7519 = vadd.xlane.f32.xlu0 %v7518
    %v7520 = vpop.xlane.xlu0 %7519
    %v7521 = vsel %vm453, %v7479, 0.0
    %7522 = vadd.xlane.f32.xlu0 %v7521
    %v7523 = vpop.xlane.xlu0 %7522
    %v7524 = vsel %vm453, %v7480, 0.0
    %7525 = vadd.xlane.f32.xlu0 %v7524
    %v7526 = vpop.xlane.xlu0 %7525
    %v7527 = vsel %vm453, %v7481, 0.0
    %7528 = vadd.xlane.f32.xlu0 %v7527
    %v7529 = vpop.xlane.xlu0 %7528
    %v7530 = vmul.f32 %v7484, %v3165
    %v7531 = vmul.f32 %v7487, %v3165
    %v7532 = vmul.f32 %v7490, %v3165
    %v7533 = vmul.f32 %v7493, %v3165
    %v7534 = vmul.f32 %v7496, %v3165
    %v7535 = vmul.f32 %v7499, %v3165
    %v7536 = vmul.f32 %v7502, %v3165
    %v7537 = vmul.f32 %v7505, %v3165
    %v7538 = vmul.f32 %v7508, %v3165
    %v7539 = vmul.f32 %v7511, %v3165
    %v7540 = vmul.f32 %v7514, %v3165
    %v7541 = vmul.f32 %v7517, %v3165
    %v7542 = vmul.f32 %v7520, %v3165
    %v7543 = vmul.f32 %v7523, %v3165
    %v7544 = vmul.f32 %v7526, %v3165
    %v7545 = vmul.f32 %v7529, %v3165
    %v7546 = vadd.f32 %v7530, 1e-05
    %v7547 = vadd.f32 %v7531, 1e-05
    %v7548 = vadd.f32 %v7532, 1e-05
    %v7549 = vadd.f32 %v7533, 1e-05
    %v7550 = vadd.f32 %v7534, 1e-05
    %v7551 = vadd.f32 %v7535, 1e-05
    %v7552 = vadd.f32 %v7536, 1e-05
    %v7553 = vadd.f32 %v7537, 1e-05
    %v7554 = vadd.f32 %v7538, 1e-05
    %v7555 = vadd.f32 %v7539, 1e-05
    %v7556 = vadd.f32 %v7540, 1e-05
    %v7557 = vadd.f32 %v7541, 1e-05
    %v7558 = vadd.f32 %v7542, 1e-05
    %v7559 = vadd.f32 %v7543, 1e-05
    %v7560 = vadd.f32 %v7544, 1e-05
    %v7561 = vadd.f32 %v7545, 1e-05
    %v7562 = vrsqrt.pop %v7546
    %v7563 = vrsqrt.pop %v7547
    %v7564 = vrsqrt.pop %v7548
    %v7565 = vrsqrt.pop %v7549
    %v7566 = vrsqrt.pop %v7550
    %v7567 = vrsqrt.pop %v7551
    %v7568 = vrsqrt.pop %v7552
    %v7569 = vrsqrt.pop %v7553
    %v7570 = vrsqrt.pop %v7554
    %v7571 = vrsqrt.pop %v7555
    %v7572 = vrsqrt.pop %v7556
    %v7573 = vrsqrt.pop %v7557
    %v7574 = vrsqrt.pop %v7558
    %v7575 = vrsqrt.pop %v7559
    %v7576 = vrsqrt.pop %v7560
    %v7577 = vrsqrt.pop %v7561
    %v7578 = vmul.f32 %v7450, %v7562
    %v7579 = vmul.f32 %v7451, %v7563
    %v7580 = vmul.f32 %v7452, %v7564
    %v7581 = vmul.f32 %v7453, %v7565
    %v7582 = vmul.f32 %v7454, %v7566
    %v7583 = vmul.f32 %v7455, %v7567
    %v7584 = vmul.f32 %v7456, %v7568
    %v7585 = vmul.f32 %v7457, %v7569
    %v7586 = vmul.f32 %v7458, %v7570
    %v7587 = vmul.f32 %v7459, %v7571
    %v7588 = vmul.f32 %v7460, %v7572
    %v7589 = vmul.f32 %v7461, %v7573
    %v7590 = vmul.f32 %v7462, %v7574
    %v7591 = vmul.f32 %v7463, %v7575
    %v7592 = vmul.f32 %v7464, %v7576
    %v7593 = vmul.f32 %v7465, %v7577
    %7594 = vrot.lane.b32.xlu0 %v4046, 56
    %v7595 = vpop.permute.xlu0 %7594
    %v7597 = vmul.f32 %v7578, %v7595
    %v7598 = vmul.f32 %v7579, %v7595
    %v7599 = vmul.f32 %v7580, %v7595
    %v7600 = vmul.f32 %v7581, %v7595
    %v7601 = vmul.f32 %v7582, %v7595
    %v7602 = vmul.f32 %v7583, %v7595
    %v7603 = vmul.f32 %v7584, %v7595
    %v7604 = vmul.f32 %v7585, %v7595
    %v7605 = vmul.f32 %v7586, %v7595
    %v7606 = vmul.f32 %v7587, %v7595
    %v7607 = vmul.f32 %v7588, %v7595
    %v7608 = vmul.f32 %v7589, %v7595
    %v7609 = vmul.f32 %v7590, %v7595
    %v7610 = vmul.f32 %v7591, %v7595
    %v7611 = vmul.f32 %v7592, %v7595
    %v7612 = vmul.f32 %v7593, %v7595
    %7613 = vrot.lane.b32.xlu0 %v4046, 48
    %v7614 = vpop.permute.xlu0 %7613
    %v7616 = vadd.f32 %v7597, %v7614
    %v7617 = vadd.f32 %v7598, %v7614
    %v7618 = vadd.f32 %v7599, %v7614
    %v7619 = vadd.f32 %v7600, %v7614
    %v7620 = vadd.f32 %v7601, %v7614
    %v7621 = vadd.f32 %v7602, %v7614
    %v7622 = vadd.f32 %v7603, %v7614
    %v7623 = vadd.f32 %v7604, %v7614
    %v7624 = vadd.f32 %v7605, %v7614
    %v7625 = vadd.f32 %v7606, %v7614
    %v7626 = vadd.f32 %v7607, %v7614
    %v7627 = vadd.f32 %v7608, %v7614
    %v7628 = vadd.f32 %v7609, %v7614
    %v7629 = vadd.f32 %v7610, %v7614
    %v7630 = vadd.f32 %v7611, %v7614
    %v7631 = vadd.f32 %v7612, %v7614
    %v7632 = vld [vmem:[%s8] sm:$0xff]
    %v7633 = vld [vmem:[%s9] sm:$0x3]
    %v7635 = vsel %vm77, %v7632, 0
    %7637 = vmatprep.subr.mxu0 0.0
    %7638 = vmatpush1.msra.mxu0 %v7616
    %7639 = vmatprep.subr.mxu0 0.0
    %7640 = vmatpush1.msra.mxu0 %v7617
    %7641 = vmatprep.subr.mxu0 0.0
    %7642 = vmatpush1.msra.mxu0 %v7618
    %7643 = vmatprep.subr.mxu0 0.0
    %7644 = vmatpush1.msra.mxu0 %v7619
    %7645 = vmatprep.subr.mxu0 0.0
    %7646 = vmatpush1.msra.mxu0 0.0
    %7647 = vmatprep.subr.mxu0 0.0
    %7648 = vmatpush1.msra.mxu0 0.0
    %7649 = vmatprep.subr.mxu0 0.0
    %7650 = vmatpush1.msra.mxu0 0.0
    %7651 = vmatprep.subr.mxu0 0.0
    %7652 = vmatpush1.msra.mxu0 0.0
    %7653 = vmatprep.subr.mxu0 0.0
    %7654 = vmatpush1.msra.mxu0 0.0
    %7655 = vmatprep.subr.mxu0 0.0
    %7656 = vmatpush1.msra.mxu0 0.0
    %7657 = vmatprep.subr.mxu0 0.0
    %7658 = vmatpush1.msra.mxu0 0.0
    %7659 = vmatprep.subr.mxu0 0.0
    %7660 = vmatpush1.msra.mxu0 0.0
    %7661 = vmatprep.subr.mxu0 0.0
    %7662 = vmatpush1.msra.mxu0 0.0
    %7663 = vmatprep.subr.mxu0 0.0
    %7664 = vmatpush1.msra.mxu0 0.0
    %7665 = vmatprep.subr.mxu0 0.0
    %7666 = vmatpush1.msra.mxu0 0.0
    %7667 = vmatprep.subr.mxu0 0.0
    %7668 = vmatpush1.msra.mxu0 0.0
    %7669 = vmatprep.subr.mxu0 0.0
    %7670 = vmatpush1.msra.mxu0 0.0
    %7671 = vmatprep.subr.mxu0 0.0
    %7672 = vmatpush1.msra.mxu0 0.0
    %7673 = vmatprep.subr.mxu0 0.0
    %7674 = vmatpush1.msra.mxu0 0.0
    %7675 = vmatprep.subr.mxu0 0.0
    %7676 = vmatpush1.msra.mxu0 0.0
    %7677 = vmatprep.subr.mxu0 0.0
    %7678 = vmatpush1.msra.mxu0 0.0
    %7679 = vmatprep.subr.mxu0 0.0
    %7680 = vmatpush1.msra.mxu0 0.0
    %7681 = vmatprep.subr.mxu0 0.0
    %7682 = vmatpush1.msra.mxu0 0.0
    %7683 = vmatprep.subr.mxu0 0.0
    %7684 = vmatpush1.msra.mxu0 0.0
    %7685 = vmatprep.subr.mxu0 0.0
    %7686 = vmatpush1.msra.mxu0 0.0
    %7687 = vmatprep.subr.mxu0 0.0
    %7688 = vmatpush1.msra.mxu0 0.0
    %7689 = vmatprep.subr.mxu0 0.0
    %7690 = vmatpush1.msra.mxu0 0.0
    %7691 = vmatprep.subr.mxu0 0.0
    %7692 = vmatpush1.msra.mxu0 0.0
    %7693 = vmatprep.subr.mxu0 0.0
    %7694 = vmatpush1.msra.mxu0 0.0
    %7695 = vmatprep.subr.mxu0 0.0
    %7696 = vmatpush1.msra.mxu0 0.0
    %7697 = vmatprep.subr.mxu0 0.0
    %7698 = vmatpush1.msra.mxu0 0.0
    %7699 = vmatprep.subr.mxu0 0.0
    %7700 = vmatpush1.msra.mxu0 0.0
    %7701 = vmatprep.mubr.f32.mxu0 0.0
    %7702 = vmatmul.mubr.f32.gmra.mrb[0].mxu0 %v7635
    %v7703 = vpop.f32.mrb[0].mxu0
    %v7704 = vadd.f32 0.0, %v7703
    %v7705 = vpop.f32.mrb[0].mxu0
    %7706 = vdwg.mxu0
    %v7707 = vmax.f32 %v7704, 0.0
    %v7709 = vsel %vm453, %v7633, 0
    %7711 = vmatprep.subr.mxu0 0.0
    %7712 = vmatpush1.msra.mxu0 %v7707
    %7713 = vmatprep.subr.mxu0 0.0
    %7714 = vmatpush1.msra.mxu0 0.0
    %7715 = vmatprep.subr.mxu0 0.0
    %7716 = vmatpush1.msra.mxu0 0.0
    %7717 = vmatprep.subr.mxu0 0.0
    %7718 = vmatpush1.msra.mxu0 0.0
    %7719 = vmatprep.subr.mxu0 0.0
    %7720 = vmatpush1.msra.mxu0 0.0
    %7721 = vmatprep.subr.mxu0 0.0
    %7722 = vmatpush1.msra.mxu0 0.0
    %7723 = vmatprep.subr.mxu0 0.0
    %7724 = vmatpush1.msra.mxu0 0.0
    %7725 = vmatprep.subr.mxu0 0.0
    %7726 = vmatpush1.msra.mxu0 0.0
    %7727 = vmatprep.subr.mxu0 0.0
    %7728 = vmatpush1.msra.mxu0 0.0
    %7729 = vmatprep.subr.mxu0 0.0
    %7730 = vmatpush1.msra.mxu0 0.0
    %7731 = vmatprep.subr.mxu0 0.0
    %7732 = vmatpush1.msra.mxu0 0.0
    %7733 = vmatprep.subr.mxu0 0.0
    %7734 = vmatpush1.msra.mxu0 0.0
    %7735 = vmatprep.subr.mxu0 0.0
    %7736 = vmatpush1.msra.mxu0 0.0
    %7737 = vmatprep.subr.mxu0 0.0
    %7738 = vmatpush1.msra.mxu0 0.0
    %7739 = vmatprep.subr.mxu0 0.0
    %7740 = vmatpush1.msra.mxu0 0.0
    %7741 = vmatprep.subr.mxu0 0.0
    %7742 = vmatpush1.msra.mxu0 0.0
    %7743 = vmatprep.subr.mxu0 0.0
    %7744 = vmatpush1.msra.mxu0 0.0
    %7745 = vmatprep.subr.mxu0 0.0
    %7746 = vmatpush1.msra.mxu0 0.0
    %7747 = vmatprep.subr.mxu0 0.0
    %7748 = vmatpush1.msra.mxu0 0.0
    %7749 = vmatprep.subr.mxu0 0.0
    %7750 = vmatpush1.msra.mxu0 0.0
    %7751 = vmatprep.subr.mxu0 0.0
    %7752 = vmatpush1.msra.mxu0 0.0
    %7753 = vmatprep.subr.mxu0 0.0
    %7754 = vmatpush1.msra.mxu0 0.0
    %7755 = vmatprep.subr.mxu0 0.0
    %7756 = vmatpush1.msra.mxu0 0.0
    %7757 = vmatprep.subr.mxu0 0.0
    %7758 = vmatpush1.msra.mxu0 0.0
    %7759 = vmatprep.subr.mxu0 0.0
    %7760 = vmatpush1.msra.mxu0 0.0
    %7761 = vmatprep.subr.mxu0 0.0
    %7762 = vmatpush1.msra.mxu0 0.0
    %7763 = vmatprep.subr.mxu0 0.0
    %7764 = vmatpush1.msra.mxu0 0.0
    %7765 = vmatprep.subr.mxu0 0.0
    %7766 = vmatpush1.msra.mxu0 0.0
    %7767 = vmatprep.subr.mxu0 0.0
    %7768 = vmatpush1.msra.mxu0 0.0
    %7769 = vmatprep.subr.mxu0 0.0
    %7770 = vmatpush1.msra.mxu0 0.0
    %7771 = vmatprep.subr.mxu0 0.0
    %7772 = vmatpush1.msra.mxu0 0.0
    %7773 = vmatprep.subr.mxu0 0.0
    %7774 = vmatpush1.msra.mxu0 0.0
    %7775 = vmatprep.mubr.f32.mxu0 0.0
    %7776 = vmatmul.mubr.f32.gmra.mrb[0].mxu0 %v7709
    %v7777 = vpop.f32.mrb[0].mxu0
    %v7778 = vadd.f32 0.0, %v7777
    %v7779 = vpop.f32.mrb[0].mxu0
    %7780 = vdwg.mxu0
    %v7781 = vmax.f32 %v7778, 0.0
    %v7783 = vrot.slane %v7781, 1
    %7784 = vrot.lane.b32.xlu0 %v7783, 8
    %v7785 = vpop.permute.xlu0 %7784
    %v7787 = vsel %vm453, %v7781, %v7785
    %7788 = vmatprep.subr.mxu0 0.0
    %7789 = vmatpush1.msra.mxu0 %v7620
    %7790 = vmatprep.subr.mxu0 0.0
    %7791 = vmatpush1.msra.mxu0 %v7621
    %7792 = vmatprep.subr.mxu0 0.0
    %7793 = vmatpush1.msra.mxu0 %v7622
    %7794 = vmatprep.subr.mxu0 0.0
    %7795 = vmatpush1.msra.mxu0 %v7623
    %7796 = vmatprep.subr.mxu0 0.0
    %7797 = vmatpush1.msra.mxu0 0.0
    %7798 = vmatprep.subr.mxu0 0.0
    %7799 = vmatpush1.msra.mxu0 0.0
    %7800 = vmatprep.subr.mxu0 0.0
    %7801 = vmatpush1.msra.mxu0 0.0
    %7802 = vmatprep.subr.mxu0 0.0
    %7803 = vmatpush1.msra.mxu0 0.0
    %7804 = vmatprep.subr.mxu0 0.0
    %7805 = vmatpush1.msra.mxu0 0.0
    %7806 = vmatprep.subr.mxu0 0.0
    %7807 = vmatpush1.msra.mxu0 0.0
    %7808 = vmatprep.subr.mxu0 0.0
    %7809 = vmatpush1.msra.mxu0 0.0
    %7810 = vmatprep.subr.mxu0 0.0
    %7811 = vmatpush1.msra.mxu0 0.0
    %7812 = vmatprep.subr.mxu0 0.0
    %7813 = vmatpush1.msra.mxu0 0.0
    %7814 = vmatprep.subr.mxu0 0.0
    %7815 = vmatpush1.msra.mxu0 0.0
    %7816 = vmatprep.subr.mxu0 0.0
    %7817 = vmatpush1.msra.mxu0 0.0
    %7818 = vmatprep.subr.mxu0 0.0
    %7819 = vmatpush1.msra.mxu0 0.0
    %7820 = vmatprep.subr.mxu0 0.0
    %7821 = vmatpush1.msra.mxu0 0.0
    %7822 = vmatprep.subr.mxu0 0.0
    %7823 = vmatpush1.msra.mxu0 0.0
    %7824 = vmatprep.subr.mxu0 0.0
    %7825 = vmatpush1.msra.mxu0 0.0
    %7826 = vmatprep.subr.mxu0 0.0
    %7827 = vmatpush1.msra.mxu0 0.0
    %7828 = vmatprep.subr.mxu0 0.0
    %7829 = vmatpush1.msra.mxu0 0.0
    %7830 = vmatprep.subr.mxu0 0.0
    %7831 = vmatpush1.msra.mxu0 0.0
    %7832 = vmatprep.subr.mxu0 0.0
    %7833 = vmatpush1.msra.mxu0 0.0
    %7834 = vmatprep.subr.mxu0 0.0
    %7835 = vmatpush1.msra.mxu0 0.0
    %7836 = vmatprep.subr.mxu0 0.0
    %7837 = vmatpush1.msra.mxu0 0.0
    %7838 = vmatprep.subr.mxu0 0.0
    %7839 = vmatpush1.msra.mxu0 0.0
    %7840 = vmatprep.subr.mxu0 0.0
    %7841 = vmatpush1.msra.mxu0 0.0
    %7842 = vmatprep.subr.mxu0 0.0
    %7843 = vmatpush1.msra.mxu0 0.0
    %7844 = vmatprep.subr.mxu0 0.0
    %7845 = vmatpush1.msra.mxu0 0.0
    %7846 = vmatprep.subr.mxu0 0.0
    %7847 = vmatpush1.msra.mxu0 0.0
    %7848 = vmatprep.subr.mxu0 0.0
    %7849 = vmatpush1.msra.mxu0 0.0
    %7850 = vmatprep.subr.mxu0 0.0
    %7851 = vmatpush1.msra.mxu0 0.0
    %7852 = vmatprep.mubr.f32.mxu0 0.0
    %7853 = vmatmul.mubr.f32.gmra.mrb[0].mxu0 %v7635
    %v7854 = vpop.f32.mrb[0].mxu0
    %v7855 = vadd.f32 0.0, %v7854
    %v7856 = vpop.f32.mrb[0].mxu0
    %7857 = vdwg.mxu0
    %v7858 = vmax.f32 %v7855, 0.0
    %7859 = vmatprep.subr.mxu0 0.0
    %7860 = vmatpush1.msra.mxu0 %v7858
    %7861 = vmatprep.subr.mxu0 0.0
    %7862 = vmatpush1.msra.mxu0 0.0
    %7863 = vmatprep.subr.mxu0 0.0
    %7864 = vmatpush1.msra.mxu0 0.0
    %7865 = vmatprep.subr.mxu0 0.0
    %7866 = vmatpush1.msra.mxu0 0.0
    %7867 = vmatprep.subr.mxu0 0.0
    %7868 = vmatpush1.msra.mxu0 0.0
    %7869 = vmatprep.subr.mxu0 0.0
    %7870 = vmatpush1.msra.mxu0 0.0
    %7871 = vmatprep.subr.mxu0 0.0
    %7872 = vmatpush1.msra.mxu0 0.0
    %7873 = vmatprep.subr.mxu0 0.0
    %7874 = vmatpush1.msra.mxu0 0.0
    %7875 = vmatprep.subr.mxu0 0.0
    %7876 = vmatpush1.msra.mxu0 0.0
    %7877 = vmatprep.subr.mxu0 0.0
    %7878 = vmatpush1.msra.mxu0 0.0
    %7879 = vmatprep.subr.mxu0 0.0
    %7880 = vmatpush1.msra.mxu0 0.0
    %7881 = vmatprep.subr.mxu0 0.0
    %7882 = vmatpush1.msra.mxu0 0.0
    %7883 = vmatprep.subr.mxu0 0.0
    %7884 = vmatpush1.msra.mxu0 0.0
    %7885 = vmatprep.subr.mxu0 0.0
    %7886 = vmatpush1.msra.mxu0 0.0
    %7887 = vmatprep.subr.mxu0 0.0
    %7888 = vmatpush1.msra.mxu0 0.0
    %7889 = vmatprep.subr.mxu0 0.0
    %7890 = vmatpush1.msra.mxu0 0.0
    %7891 = vmatprep.subr.mxu0 0.0
    %7892 = vmatpush1.msra.mxu0 0.0
    %7893 = vmatprep.subr.mxu0 0.0
    %7894 = vmatpush1.msra.mxu0 0.0
    %7895 = vmatprep.subr.mxu0 0.0
    %7896 = vmatpush1.msra.mxu0 0.0
    %7897 = vmatprep.subr.mxu0 0.0
    %7898 = vmatpush1.msra.mxu0 0.0
    %7899 = vmatprep.subr.mxu0 0.0
    %7900 = vmatpush1.msra.mxu0 0.0
    %7901 = vmatprep.subr.mxu0 0.0
    %7902 = vmatpush1.msra.mxu0 0.0
    %7903 = vmatprep.subr.mxu0 0.0
    %7904 = vmatpush1.msra.mxu0 0.0
    %7905 = vmatprep.subr.mxu0 0.0
    %7906 = vmatpush1.msra.mxu0 0.0
    %7907 = vmatprep.subr.mxu0 0.0
    %7908 = vmatpush1.msra.mxu0 0.0
    %7909 = vmatprep.subr.mxu0 0.0
    %7910 = vmatpush1.msra.mxu0 0.0
    %7911 = vmatprep.subr.mxu0 0.0
    %7912 = vmatpush1.msra.mxu0 0.0
    %7913 = vmatprep.subr.mxu0 0.0
    %7914 = vmatpush1.msra.mxu0 0.0
    %7915 = vmatprep.subr.mxu0 0.0
    %7916 = vmatpush1.msra.mxu0 0.0
    %7917 = vmatprep.subr.mxu0 0.0
    %7918 = vmatpush1.msra.mxu0 0.0
    %7919 = vmatprep.subr.mxu0 0.0
    %7920 = vmatpush1.msra.mxu0 0.0
    %7921 = vmatprep.subr.mxu0 0.0
    %7922 = vmatpush1.msra.mxu0 0.0
    %7923 = vmatprep.mubr.f32.mxu0 0.0
    %7924 = vmatmul.mubr.f32.gmra.mrb[0].mxu0 %v7709
    %v7925 = vpop.f32.mrb[0].mxu0
    %v7926 = vadd.f32 0.0, %v7925
    %v7927 = vpop.f32.mrb[0].mxu0
    %7928 = vdwg.mxu0
    %v7929 = vmax.f32 %v7926, 0.0
    %v7931 = vrot.slane %v7929, 1
    %7932 = vrot.lane.b32.xlu0 %v7931, 8
    %v7933 = vpop.permute.xlu0 %7932
    %v7935 = vsel %vm453, %v7929, %v7933
    %7936 = vmatprep.subr.mxu0 0.0
    %7937 = vmatpush1.msra.mxu0 %v7624
    %7938 = vmatprep.subr.mxu0 0.0
    %7939 = vmatpush1.msra.mxu0 %v7625
    %7940 = vmatprep.subr.mxu0 0.0
    %7941 = vmatpush1.msra.mxu0 %v7626
    %7942 = vmatprep.subr.mxu0 0.0
    %7943 = vmatpush1.msra.mxu0 %v7627
    %7944 = vmatprep.subr.mxu0 0.0
    %7945 = vmatpush1.msra.mxu0 0.0
    %7946 = vmatprep.subr.mxu0 0.0
    %7947 = vmatpush1.msra.mxu0 0.0
    %7948 = vmatprep.subr.mxu0 0.0
    %7949 = vmatpush1.msra.mxu0 0.0
    %7950 = vmatprep.subr.mxu0 0.0
    %7951 = vmatpush1.msra.mxu0 0.0
    %7952 = vmatprep.subr.mxu0 0.0
    %7953 = vmatpush1.msra.mxu0 0.0
    %7954 = vmatprep.subr.mxu0 0.0
    %7955 = vmatpush1.msra.mxu0 0.0
    %7956 = vmatprep.subr.mxu0 0.0
    %7957 = vmatpush1.msra.mxu0 0.0
    %7958 = vmatprep.subr.mxu0 0.0
    %7959 = vmatpush1.msra.mxu0 0.0
    %7960 = vmatprep.subr.mxu0 0.0
    %7961 = vmatpush1.msra.mxu0 0.0
    %7962 = vmatprep.subr.mxu0 0.0
    %7963 = vmatpush1.msra.mxu0 0.0
    %7964 = vmatprep.subr.mxu0 0.0
    %7965 = vmatpush1.msra.mxu0 0.0
    %7966 = vmatprep.subr.mxu0 0.0
    %7967 = vmatpush1.msra.mxu0 0.0
    %7968 = vmatprep.subr.mxu0 0.0
    %7969 = vmatpush1.msra.mxu0 0.0
    %7970 = vmatprep.subr.mxu0 0.0
    %7971 = vmatpush1.msra.mxu0 0.0
    %7972 = vmatprep.subr.mxu0 0.0
    %7973 = vmatpush1.msra.mxu0 0.0
    %7974 = vmatprep.subr.mxu0 0.0
    %7975 = vmatpush1.msra.mxu0 0.0
    %7976 = vmatprep.subr.mxu0 0.0
    %7977 = vmatpush1.msra.mxu0 0.0
    %7978 = vmatprep.subr.mxu0 0.0
    %7979 = vmatpush1.msra.mxu0 0.0
    %7980 = vmatprep.subr.mxu0 0.0
    %7981 = vmatpush1.msra.mxu0 0.0
    %7982 = vmatprep.subr.mxu0 0.0
    %7983 = vmatpush1.msra.mxu0 0.0
    %7984 = vmatprep.subr.mxu0 0.0
    %7985 = vmatpush1.msra.mxu0 0.0
    %7986 = vmatprep.subr.mxu0 0.0
    %7987 = vmatpush1.msra.mxu0 0.0
    %7988 = vmatprep.subr.mxu0 0.0
    %7989 = vmatpush1.msra.mxu0 0.0
    %7990 = vmatprep.subr.mxu0 0.0
    %7991 = vmatpush1.msra.mxu0 0.0
    %7992 = vmatprep.subr.mxu0 0.0
    %7993 = vmatpush1.msra.mxu0 0.0
    %7994 = vmatprep.subr.mxu0 0.0
    %7995 = vmatpush1.msra.mxu0 0.0
    %7996 = vmatprep.subr.mxu0 0.0
    %7997 = vmatpush1.msra.mxu0 0.0
    %7998 = vmatprep.subr.mxu0 0.0
    %7999 = vmatpush1.msra.mxu0 0.0
    %8000 = vmatprep.mubr.f32.mxu0 0.0
    %8001 = vmatmul.mubr.f32.gmra.mrb[0].mxu0 %v7635
    %v8002 = vpop.f32.mrb[0].mxu0
    %v8003 = vadd.f32 0.0, %v8002
    %v8004 = vpop.f32.mrb[0].mxu0
    %8005 = vdwg.mxu0
    %v8006 = vmax.f32 %v8003, 0.0
    %8007 = vmatprep.subr.mxu0 0.0
    %8008 = vmatpush1.msra.mxu0 %v8006
    %8009 = vmatprep.subr.mxu0 0.0
    %8010 = vmatpush1.msra.mxu0 0.0
    %8011 = vmatprep.subr.mxu0 0.0
    %8012 = vmatpush1.msra.mxu0 0.0
    %8013 = vmatprep.subr.mxu0 0.0
    %8014 = vmatpush1.msra.mxu0 0.0
    %8015 = vmatprep.subr.mxu0 0.0
    %8016 = vmatpush1.msra.mxu0 0.0
    %8017 = vmatprep.subr.mxu0 0.0
    %8018 = vmatpush1.msra.mxu0 0.0
    %8019 = vmatprep.subr.mxu0 0.0
    %8020 = vmatpush1.msra.mxu0 0.0
    %8021 = vmatprep.subr.mxu0 0.0
    %8022 = vmatpush1.msra.mxu0 0.0
    %8023 = vmatprep.subr.mxu0 0.0
    %8024 = vmatpush1.msra.mxu0 0.0
    %8025 = vmatprep.subr.mxu0 0.0
    %8026 = vmatpush1.msra.mxu0 0.0
    %8027 = vmatprep.subr.mxu0 0.0
    %8028 = vmatpush1.msra.mxu0 0.0
    %8029 = vmatprep.subr.mxu0 0.0
    %8030 = vmatpush1.msra.mxu0 0.0
    %8031 = vmatprep.subr.mxu0 0.0
    %8032 = vmatpush1.msra.mxu0 0.0
    %8033 = vmatprep.subr.mxu0 0.0
    %8034 = vmatpush1.msra.mxu0 0.0
    %8035 = vmatprep.subr.mxu0 0.0
    %8036 = vmatpush1.msra.mxu0 0.0
    %8037 = vmatprep.subr.mxu0 0.0
    %8038 = vmatpush1.msra.mxu0 0.0
    %8039 = vmatprep.subr.mxu0 0.0
    %8040 = vmatpush1.msra.mxu0 0.0
    %8041 = vmatprep.subr.mxu0 0.0
    %8042 = vmatpush1.msra.mxu0 0.0
    %8043 = vmatprep.subr.mxu0 0.0
    %8044 = vmatpush1.msra.mxu0 0.0
    %8045 = vmatprep.subr.mxu0 0.0
    %8046 = vmatpush1.msra.mxu0 0.0
    %8047 = vmatprep.subr.mxu0 0.0
    %8048 = vmatpush1.msra.mxu0 0.0
    %8049 = vmatprep.subr.mxu0 0.0
    %8050 = vmatpush1.msra.mxu0 0.0
    %8051 = vmatprep.subr.mxu0 0.0
    %8052 = vmatpush1.msra.mxu0 0.0
    %8053 = vmatprep.subr.mxu0 0.0
    %8054 = vmatpush1.msra.mxu0 0.0
    %8055 = vmatprep.subr.mxu0 0.0
    %8056 = vmatpush1.msra.mxu0 0.0
    %8057 = vmatprep.subr.mxu0 0.0
    %8058 = vmatpush1.msra.mxu0 0.0
    %8059 = vmatprep.subr.mxu0 0.0
    %8060 = vmatpush1.msra.mxu0 0.0
    %8061 = vmatprep.subr.mxu0 0.0
    %8062 = vmatpush1.msra.mxu0 0.0
    %8063 = vmatprep.subr.mxu0 0.0
    %8064 = vmatpush1.msra.mxu0 0.0
    %8065 = vmatprep.subr.mxu0 0.0
    %8066 = vmatpush1.msra.mxu0 0.0
    %8067 = vmatprep.subr.mxu0 0.0
    %8068 = vmatpush1.msra.mxu0 0.0
    %8069 = vmatprep.subr.mxu0 0.0
    %8070 = vmatpush1.msra.mxu0 0.0
    %8071 = vmatprep.mubr.f32.mxu0 0.0
    %8072 = vmatmul.mubr.f32.gmra.mrb[0].mxu0 %v7709
    %v8073 = vpop.f32.mrb[0].mxu0
    %v8074 = vadd.f32 0.0, %v8073
    %v8075 = vpop.f32.mrb[0].mxu0
    %8076 = vdwg.mxu0
    %v8077 = vmax.f32 %v8074, 0.0
    %v8079 = vrot.slane %v8077, 1
    %8080 = vrot.lane.b32.xlu0 %v8079, 8
    %v8081 = vpop.permute.xlu0 %8080
    %v8083 = vsel %vm453, %v8077, %v8081
    %8084 = vmatprep.subr.mxu0 0.0
    %8085 = vmatpush1.msra.mxu0 %v7628
    %8086 = vmatprep.subr.mxu0 0.0
    %8087 = vmatpush1.msra.mxu0 %v7629
    %8088 = vmatprep.subr.mxu0 0.0
    %8089 = vmatpush1.msra.mxu0 %v7630
    %8090 = vmatprep.subr.mxu0 0.0
    %8091 = vmatpush1.msra.mxu0 %v7631
    %8092 = vmatprep.subr.mxu0 0.0
    %8093 = vmatpush1.msra.mxu0 0.0
    %8094 = vmatprep.subr.mxu0 0.0
    %8095 = vmatpush1.msra.mxu0 0.0
    %8096 = vmatprep.subr.mxu0 0.0
    %8097 = vmatpush1.msra.mxu0 0.0
    %8098 = vmatprep.subr.mxu0 0.0
    %8099 = vmatpush1.msra.mxu0 0.0
    %8100 = vmatprep.subr.mxu0 0.0
    %8101 = vmatpush1.msra.mxu0 0.0
    %8102 = vmatprep.subr.mxu0 0.0
    %8103 = vmatpush1.msra.mxu0 0.0
    %8104 = vmatprep.subr.mxu0 0.0
    %8105 = vmatpush1.msra.mxu0 0.0
    %8106 = vmatprep.subr.mxu0 0.0
    %8107 = vmatpush1.msra.mxu0 0.0
    %8108 = vmatprep.subr.mxu0 0.0
    %8109 = vmatpush1.msra.mxu0 0.0
    %8110 = vmatprep.subr.mxu0 0.0
    %8111 = vmatpush1.msra.mxu0 0.0
    %8112 = vmatprep.subr.mxu0 0.0
    %8113 = vmatpush1.msra.mxu0 0.0
    %8114 = vmatprep.subr.mxu0 0.0
    %8115 = vmatpush1.msra.mxu0 0.0
    %8116 = vmatprep.subr.mxu0 0.0
    %8117 = vmatpush1.msra.mxu0 0.0
    %8118 = vmatprep.subr.mxu0 0.0
    %8119 = vmatpush1.msra.mxu0 0.0
    %8120 = vmatprep.subr.mxu0 0.0
    %8121 = vmatpush1.msra.mxu0 0.0
    %8122 = vmatprep.subr.mxu0 0.0
    %8123 = vmatpush1.msra.mxu0 0.0
    %8124 = vmatprep.subr.mxu0 0.0
    %8125 = vmatpush1.msra.mxu0 0.0
    %8126 = vmatprep.subr.mxu0 0.0
    %8127 = vmatpush1.msra.mxu0 0.0
    %8128 = vmatprep.subr.mxu0 0.0
    %8129 = vmatpush1.msra.mxu0 0.0
    %8130 = vmatprep.subr.mxu0 0.0
    %8131 = vmatpush1.msra.mxu0 0.0
    %8132 = vmatprep.subr.mxu0 0.0
    %8133 = vmatpush1.msra.mxu0 0.0
    %8134 = vmatprep.subr.mxu0 0.0
    %8135 = vmatpush1.msra.mxu0 0.0
    %8136 = vmatprep.subr.mxu0 0.0
    %8137 = vmatpush1.msra.mxu0 0.0
    %8138 = vmatprep.subr.mxu0 0.0
    %8139 = vmatpush1.msra.mxu0 0.0
    %8140 = vmatprep.subr.mxu0 0.0
    %8141 = vmatpush1.msra.mxu0 0.0
    %8142 = vmatprep.subr.mxu0 0.0
    %8143 = vmatpush1.msra.mxu0 0.0
    %8144 = vmatprep.subr.mxu0 0.0
    %8145 = vmatpush1.msra.mxu0 0.0
    %8146 = vmatprep.subr.mxu0 0.0
    %8147 = vmatpush1.msra.mxu0 0.0
    %8148 = vmatprep.mubr.f32.mxu0 0.0
    %8149 = vmatmul.mubr.f32.gmra.mrb[0].mxu0 %v7635
    %v8150 = vpop.f32.mrb[0].mxu0
    %v8151 = vadd.f32 0.0, %v8150
    %v8152 = vpop.f32.mrb[0].mxu0
    %8153 = vdwg.mxu0
    %v8154 = vmax.f32 %v8151, 0.0
    %8155 = vmatprep.subr.mxu0 0.0
    %8156 = vmatpush1.msra.mxu0 %v8154
    %8157 = vmatprep.subr.mxu0 0.0
    %8158 = vmatpush1.msra.mxu0 0.0
    %8159 = vmatprep.subr.mxu0 0.0
    %8160 = vmatpush1.msra.mxu0 0.0
    %8161 = vmatprep.subr.mxu0 0.0
    %8162 = vmatpush1.msra.mxu0 0.0
    %8163 = vmatprep.subr.mxu0 0.0
    %8164 = vmatpush1.msra.mxu0 0.0
    %8165 = vmatprep.subr.mxu0 0.0
    %8166 = vmatpush1.msra.mxu0 0.0
    %8167 = vmatprep.subr.mxu0 0.0
    %8168 = vmatpush1.msra.mxu0 0.0
    %8169 = vmatprep.subr.mxu0 0.0
    %8170 = vmatpush1.msra.mxu0 0.0
    %8171 = vmatprep.subr.mxu0 0.0
    %8172 = vmatpush1.msra.mxu0 0.0
    %8173 = vmatprep.subr.mxu0 0.0
    %8174 = vmatpush1.msra.mxu0 0.0
    %8175 = vmatprep.subr.mxu0 0.0
    %8176 = vmatpush1.msra.mxu0 0.0
    %8177 = vmatprep.subr.mxu0 0.0
    %8178 = vmatpush1.msra.mxu0 0.0
    %8179 = vmatprep.subr.mxu0 0.0
    %8180 = vmatpush1.msra.mxu0 0.0
    %8181 = vmatprep.subr.mxu0 0.0
    %8182 = vmatpush1.msra.mxu0 0.0
    %8183 = vmatprep.subr.mxu0 0.0
    %8184 = vmatpush1.msra.mxu0 0.0
    %8185 = vmatprep.subr.mxu0 0.0
    %8186 = vmatpush1.msra.mxu0 0.0
    %8187 = vmatprep.subr.mxu0 0.0
    %8188 = vmatpush1.msra.mxu0 0.0
    %8189 = vmatprep.subr.mxu0 0.0
    %8190 = vmatpush1.msra.mxu0 0.0
    %8191 = vmatprep.subr.mxu0 0.0
    %8192 = vmatpush1.msra.mxu0 0.0
    %8193 = vmatprep.subr.mxu0 0.0
    %8194 = vmatpush1.msra.mxu0 0.0
    %8195 = vmatprep.subr.mxu0 0.0
    %8196 = vmatpush1.msra.mxu0 0.0
    %8197 = vmatprep.subr.mxu0 0.0
    %8198 = vmatpush1.msra.mxu0 0.0
    %8199 = vmatprep.subr.mxu0 0.0
    %8200 = vmatpush1.msra.mxu0 0.0
    %8201 = vmatprep.subr.mxu0 0.0
    %8202 = vmatpush1.msra.mxu0 0.0
    %8203 = vmatprep.subr.mxu0 0.0
    %8204 = vmatpush1.msra.mxu0 0.0
    %8205 = vmatprep.subr.mxu0 0.0
    %8206 = vmatpush1.msra.mxu0 0.0
    %8207 = vmatprep.subr.mxu0 0.0
    %8208 = vmatpush1.msra.mxu0 0.0
    %8209 = vmatprep.subr.mxu0 0.0
    %8210 = vmatpush1.msra.mxu0 0.0
    %8211 = vmatprep.subr.mxu0 0.0
    %8212 = vmatpush1.msra.mxu0 0.0
    %8213 = vmatprep.subr.mxu0 0.0
    %8214 = vmatpush1.msra.mxu0 0.0
    %8215 = vmatprep.subr.mxu0 0.0
    %8216 = vmatpush1.msra.mxu0 0.0
    %8217 = vmatprep.subr.mxu0 0.0
    %8218 = vmatpush1.msra.mxu0 0.0
    %8219 = vmatprep.mubr.f32.mxu0 0.0
    %8220 = vmatmul.mubr.f32.gmra.mrb[0].mxu0 %v7709
    %v8221 = vpop.f32.mrb[0].mxu0
    %v8222 = vadd.f32 0.0, %v8221
    %v8223 = vpop.f32.mrb[0].mxu0
    %8224 = vdwg.mxu0
    %v8225 = vmax.f32 %v8222, 0.0
    %v8227 = vrot.slane %v8225, 1
    %8228 = vrot.lane.b32.xlu0 %v8227, 8
    %v8229 = vpop.permute.xlu0 %8228
    %v8231 = vsel %vm453, %v8225, %v8229
    %v8233 = vrot.slane %v7935, 7
    %v8236 = vrot.slane %v8083, 6
    %v8239 = vrot.slane %v8231, 5
    %vm8241 = vcmask 1040384
    %v8242 = vsel %vm8241, %v7787, %v8233
    %vm8243 = vcmask 1041408
    %v8244 = vsel %vm8243, %v8242, %v8236
    %vm8245 = vcmask 1042432
    %v8246 = vsel %vm8245, %v8244, %v8239
    %v8247 = vld [vmem:[%s13] sm:$0x1]
    %v8248 = vld [vmem:[%s10] sm:$0xff]
    %v8249 = vld [vmem:[%s10 + $0x8] sm:$0xff]
    %v8251 = vlaneseq
    %v8252 = vshrl.u32 %v8251, 7
    %v8253 = vsub.s32 0, %v8252
    %v8254 = vrot.slane %v8247, %v8253
    %v8257 = vsel %vm3582, %v8246, 0
    %8259 = vmatprep.subr.mxu0 0.0
    %8260 = vmatpush1.msra.mxu0 %v8248
    %8261 = vmatprep.subr.mxu0 0.0
    %8262 = vmatpush1.msra.mxu0 %v8249
    %8263 = vmatprep.subr.mxu0 0.0
    %8264 = vmatpush1.msra.mxu0 0.0
    %8265 = vmatprep.subr.mxu0 0.0
    %8266 = vmatpush1.msra.mxu0 0.0
    %8267 = vmatprep.subr.mxu0 0.0
    %8268 = vmatpush1.msra.mxu0 0.0
    %8269 = vmatprep.subr.mxu0 0.0
    %8270 = vmatpush1.msra.mxu0 0.0
    %8271 = vmatprep.subr.mxu0 0.0
    %8272 = vmatpush1.msra.mxu0 0.0
    %8273 = vmatprep.subr.mxu0 0.0
    %8274 = vmatpush1.msra.mxu0 0.0
    %8275 = vmatprep.subr.mxu0 0.0
    %8276 = vmatpush1.msra.mxu0 0.0
    %8277 = vmatprep.subr.mxu0 0.0
    %8278 = vmatpush1.msra.mxu0 0.0
    %8279 = vmatprep.subr.mxu0 0.0
    %8280 = vmatpush1.msra.mxu0 0.0
    %8281 = vmatprep.subr.mxu0 0.0
    %8282 = vmatpush1.msra.mxu0 0.0
    %8283 = vmatprep.subr.mxu0 0.0
    %8284 = vmatpush1.msra.mxu0 0.0
    %8285 = vmatprep.subr.mxu0 0.0
    %8286 = vmatpush1.msra.mxu0 0.0
    %8287 = vmatprep.subr.mxu0 0.0
    %8288 = vmatpush1.msra.mxu0 0.0
    %8289 = vmatprep.subr.mxu0 0.0
    %8290 = vmatpush1.msra.mxu0 0.0
    %8291 = vmatprep.subr.mxu0 0.0
    %8292 = vmatpush1.msra.mxu0 0.0
    %8293 = vmatprep.subr.mxu0 0.0
    %8294 = vmatpush1.msra.mxu0 0.0
    %8295 = vmatprep.subr.mxu0 0.0
    %8296 = vmatpush1.msra.mxu0 0.0
    %8297 = vmatprep.subr.mxu0 0.0
    %8298 = vmatpush1.msra.mxu0 0.0
    %8299 = vmatprep.subr.mxu0 0.0
    %8300 = vmatpush1.msra.mxu0 0.0
    %8301 = vmatprep.subr.mxu0 0.0
    %8302 = vmatpush1.msra.mxu0 0.0
    %8303 = vmatprep.subr.mxu0 0.0
    %8304 = vmatpush1.msra.mxu0 0.0
    %8305 = vmatprep.subr.mxu0 0.0
    %8306 = vmatpush1.msra.mxu0 0.0
    %8307 = vmatprep.subr.mxu0 0.0
    %8308 = vmatpush1.msra.mxu0 0.0
    %8309 = vmatprep.subr.mxu0 0.0
    %8310 = vmatpush1.msra.mxu0 0.0
    %8311 = vmatprep.subr.mxu0 0.0
    %8312 = vmatpush1.msra.mxu0 0.0
    %8313 = vmatprep.subr.mxu0 0.0
    %8314 = vmatpush1.msra.mxu0 0.0
    %8315 = vmatprep.subr.mxu0 0.0
    %8316 = vmatpush1.msra.mxu0 0.0
    %8317 = vmatprep.subr.mxu0 0.0
    %8318 = vmatpush1.msra.mxu0 0.0
    %8319 = vmatprep.subr.mxu0 0.0
    %8320 = vmatpush1.msra.mxu0 0.0
    %8321 = vmatprep.subr.mxu0 0.0
    %8322 = vmatpush1.msra.mxu0 0.0
    %8323 = vmatprep.mubr.f32.mxu0 0.0
    %8324 = vmatmul.mubr.f32.gmra.mrb[0].mxu0 %v8257
    %v8325 = vpop.f32.mrb[0].mxu0
    %v8326 = vadd.f32 %v8254, %v8325
    %v8327 = vpop.f32.mrb[0].mxu0
    %8328 = vdwg.mxu0
    %vm8329 = vcmask 125952
    %v8330 = vsel %vm8329, %v8326, 0.0
    %8331 = vadd.xlane.f32.xlu0 %v8330
    %v8332 = vpop.xlane.xlu0 %8331
    %v8333 = vrcp.pop 16.0
    %v8334 = vmul.f32 %v8332, %v8333
    %v8335 = vsub.f32 %v8326, %v8334
    %v8336 = vmul.f32 %v8335, %v8335
    %v8337 = vsel %vm8329, %v8336, 0.0
    %8338 = vadd.xlane.f32.xlu0 %v8337
    %v8339 = vpop.xlane.xlu0 %8338
    %v8340 = vmul.f32 %v8339, %v8333
    %v8341 = vadd.f32 %v8340, 1e-05
    %v8342 = vrsqrt.pop %v8341
    %v8343 = vmul.f32 %v8335, %v8342
    %8344 = vrot.lane.b32.xlu0 %v8254, 112
    %v8345 = vpop.permute.xlu0 %8344
    %v8347 = vmul.f32 %v8343, %v8345
    %8348 = vrot.lane.b32.xlu0 %v8254, 96
    %v8349 = vpop.permute.xlu0 %8348
    %v8351 = vadd.f32 %v8347, %v8349
    %v8352 = vmax.f32 %v8351, 0.0
    %v8353 = vld [vmem:[%s11] sm:$0xff]
    %v8354 = vld [vmem:[%s11 + $0x8] sm:$0xff]
    %8355 = vrot.lane.b32.xlu0 %v8254, 80
    %v8356 = vpop.permute.xlu0 %8355
    %v8359 = vsel %vm3582, %v8352, 0
    %8361 = vmatprep.subr.mxu0 0.0
    %8362 = vmatpush1.msra.mxu0 %v8353
    %8363 = vmatprep.subr.mxu0 0.0
    %8364 = vmatpush1.msra.mxu0 %v8354
    %8365 = vmatprep.subr.mxu0 0.0
    %8366 = vmatpush1.msra.mxu0 0.0
    %8367 = vmatprep.subr.mxu0 0.0
    %8368 = vmatpush1.msra.mxu0 0.0
    %8369 = vmatprep.subr.mxu0 0.0
    %8370 = vmatpush1.msra.mxu0 0.0
    %8371 = vmatprep.subr.mxu0 0.0
    %8372 = vmatpush1.msra.mxu0 0.0
    %8373 = vmatprep.subr.mxu0 0.0
    %8374 = vmatpush1.msra.mxu0 0.0
    %8375 = vmatprep.subr.mxu0 0.0
    %8376 = vmatpush1.msra.mxu0 0.0
    %8377 = vmatprep.subr.mxu0 0.0
    %8378 = vmatpush1.msra.mxu0 0.0
    %8379 = vmatprep.subr.mxu0 0.0
    %8380 = vmatpush1.msra.mxu0 0.0
    %8381 = vmatprep.subr.mxu0 0.0
    %8382 = vmatpush1.msra.mxu0 0.0
    %8383 = vmatprep.subr.mxu0 0.0
    %8384 = vmatpush1.msra.mxu0 0.0
    %8385 = vmatprep.subr.mxu0 0.0
    %8386 = vmatpush1.msra.mxu0 0.0
    %8387 = vmatprep.subr.mxu0 0.0
    %8388 = vmatpush1.msra.mxu0 0.0
    %8389 = vmatprep.subr.mxu0 0.0
    %8390 = vmatpush1.msra.mxu0 0.0
    %8391 = vmatprep.subr.mxu0 0.0
    %8392 = vmatpush1.msra.mxu0 0.0
    %8393 = vmatprep.subr.mxu0 0.0
    %8394 = vmatpush1.msra.mxu0 0.0
    %8395 = vmatprep.subr.mxu0 0.0
    %8396 = vmatpush1.msra.mxu0 0.0
    %8397 = vmatprep.subr.mxu0 0.0
    %8398 = vmatpush1.msra.mxu0 0.0
    %8399 = vmatprep.subr.mxu0 0.0
    %8400 = vmatpush1.msra.mxu0 0.0
    %8401 = vmatprep.subr.mxu0 0.0
    %8402 = vmatpush1.msra.mxu0 0.0
    %8403 = vmatprep.subr.mxu0 0.0
    %8404 = vmatpush1.msra.mxu0 0.0
    %8405 = vmatprep.subr.mxu0 0.0
    %8406 = vmatpush1.msra.mxu0 0.0
    %8407 = vmatprep.subr.mxu0 0.0
    %8408 = vmatpush1.msra.mxu0 0.0
    %8409 = vmatprep.subr.mxu0 0.0
    %8410 = vmatpush1.msra.mxu0 0.0
    %8411 = vmatprep.subr.mxu0 0.0
    %8412 = vmatpush1.msra.mxu0 0.0
    %8413 = vmatprep.subr.mxu0 0.0
    %8414 = vmatpush1.msra.mxu0 0.0
    %8415 = vmatprep.subr.mxu0 0.0
    %8416 = vmatpush1.msra.mxu0 0.0
    %8417 = vmatprep.subr.mxu0 0.0
    %8418 = vmatpush1.msra.mxu0 0.0
    %8419 = vmatprep.subr.mxu0 0.0
    %8420 = vmatpush1.msra.mxu0 0.0
    %8421 = vmatprep.subr.mxu0 0.0
    %8422 = vmatpush1.msra.mxu0 0.0
    %8423 = vmatprep.subr.mxu0 0.0
    %8424 = vmatpush1.msra.mxu0 0.0
    %8425 = vmatprep.mubr.f32.mxu0 0.0
    %8426 = vmatmul.mubr.f32.gmra.mrb[0].mxu0 %v8359
    %v8427 = vpop.f32.mrb[0].mxu0
    %v8428 = vadd.f32 %v8356, %v8427
    %v8429 = vpop.f32.mrb[0].mxu0
    %8430 = vdwg.mxu0
    %vm8431 = vcmask 60416
    %v8432 = vsel %vm8431, %v8428, 0.0
    %8433 = vadd.xlane.f32.xlu0 %v8432
    %v8434 = vpop.xlane.xlu0 %8433
    %v8435 = vmul.f32 %v8434, %v3165
    %v8436 = vsub.f32 %v8428, %v8435
    %v8437 = vmul.f32 %v8436, %v8436
    %v8438 = vsel %vm8431, %v8437, 0.0
    %8439 = vadd.xlane.f32.xlu0 %v8438
    %v8440 = vpop.xlane.xlu0 %8439
    %v8441 = vmul.f32 %v8440, %v3165
    %v8442 = vadd.f32 %v8441, 1e-05
    %v8443 = vrsqrt.pop %v8442
    %v8444 = vmul.f32 %v8436, %v8443
    %8445 = vrot.lane.b32.xlu0 %v8254, 72
    %v8446 = vpop.permute.xlu0 %8445
    %v8448 = vmul.f32 %v8444, %v8446
    %8449 = vrot.lane.b32.xlu0 %v8254, 64
    %v8450 = vpop.permute.xlu0 %8449
    %v8452 = vadd.f32 %v8448, %v8450
    %v8453 = vmax.f32 %v8452, 0.0
    %v8454 = vld [vmem:[%s12] sm:$0xff]
    %8455 = vrot.lane.b32.xlu0 %v8254, 56
    %v8456 = vpop.permute.xlu0 %8455
    %v8459 = vsel %vm453, %v8453, 0
    %8461 = vmatprep.subr.mxu0 0.0
    %8462 = vmatpush1.msra.mxu0 %v8454
    %8463 = vmatprep.subr.mxu0 0.0
    %8464 = vmatpush1.msra.mxu0 0.0
    %8465 = vmatprep.subr.mxu0 0.0
    %8466 = vmatpush1.msra.mxu0 0.0
    %8467 = vmatprep.subr.mxu0 0.0
    %8468 = vmatpush1.msra.mxu0 0.0
    %8469 = vmatprep.subr.mxu0 0.0
    %8470 = vmatpush1.msra.mxu0 0.0
    %8471 = vmatprep.subr.mxu0 0.0
    %8472 = vmatpush1.msra.mxu0 0.0
    %8473 = vmatprep.subr.mxu0 0.0
    %8474 = vmatpush1.msra.mxu0 0.0
    %8475 = vmatprep.subr.mxu0 0.0
    %8476 = vmatpush1.msra.mxu0 0.0
    %8477 = vmatprep.subr.mxu0 0.0
    %8478 = vmatpush1.msra.mxu0 0.0
    %8479 = vmatprep.subr.mxu0 0.0
    %8480 = vmatpush1.msra.mxu0 0.0
    %8481 = vmatprep.subr.mxu0 0.0
    %8482 = vmatpush1.msra.mxu0 0.0
    %8483 = vmatprep.subr.mxu0 0.0
    %8484 = vmatpush1.msra.mxu0 0.0
    %8485 = vmatprep.subr.mxu0 0.0
    %8486 = vmatpush1.msra.mxu0 0.0
    %8487 = vmatprep.subr.mxu0 0.0
    %8488 = vmatpush1.msra.mxu0 0.0
    %8489 = vmatprep.subr.mxu0 0.0
    %8490 = vmatpush1.msra.mxu0 0.0
    %8491 = vmatprep.subr.mxu0 0.0
    %8492 = vmatpush1.msra.mxu0 0.0
    %8493 = vmatprep.subr.mxu0 0.0
    %8494 = vmatpush1.msra.mxu0 0.0
    %8495 = vmatprep.subr.mxu0 0.0
    %8496 = vmatpush1.msra.mxu0 0.0
    %8497 = vmatprep.subr.mxu0 0.0
    %8498 = vmatpush1.msra.mxu0 0.0
    %8499 = vmatprep.subr.mxu0 0.0
    %8500 = vmatpush1.msra.mxu0 0.0
    %8501 = vmatprep.subr.mxu0 0.0
    %8502 = vmatpush1.msra.mxu0 0.0
    %8503 = vmatprep.subr.mxu0 0.0
    %8504 = vmatpush1.msra.mxu0 0.0
    %8505 = vmatprep.subr.mxu0 0.0
    %8506 = vmatpush1.msra.mxu0 0.0
    %8507 = vmatprep.subr.mxu0 0.0
    %8508 = vmatpush1.msra.mxu0 0.0
    %8509 = vmatprep.subr.mxu0 0.0
    %8510 = vmatpush1.msra.mxu0 0.0
    %8511 = vmatprep.subr.mxu0 0.0
    %8512 = vmatpush1.msra.mxu0 0.0
    %8513 = vmatprep.subr.mxu0 0.0
    %8514 = vmatpush1.msra.mxu0 0.0
    %8515 = vmatprep.subr.mxu0 0.0
    %8516 = vmatpush1.msra.mxu0 0.0
    %8517 = vmatprep.subr.mxu0 0.0
    %8518 = vmatpush1.msra.mxu0 0.0
    %8519 = vmatprep.subr.mxu0 0.0
    %8520 = vmatpush1.msra.mxu0 0.0
    %8521 = vmatprep.subr.mxu0 0.0
    %8522 = vmatpush1.msra.mxu0 0.0
    %8523 = vmatprep.subr.mxu0 0.0
    %8524 = vmatpush1.msra.mxu0 0.0
    %8525 = vmatprep.mubr.f32.mxu0 0.0
    %8526 = vmatmul.mubr.f32.gmra.mrb[0].mxu0 %v8459
    %v8527 = vpop.f32.mrb[0].mxu0
    %v8528 = vadd.f32 %v8456, %v8527
    %v8529 = vpop.f32.mrb[0].mxu0
    %8530 = vdwg.mxu0
    %vm8531 = vcmask 19456
    %v8532 = vsel %vm8531, %v8528, -inf
    %8533 = vmax.xlane.f32.xlu0 %v8532
    %v8534 = vpop.xlane.xlu0 %8533
    %v8535 = vsub.f32 %v8528, %v8534
    %v8536 = vmul.f32 %v8535, 1.442695
    %v8537 = vpow.pop %v8536
    %v8538 = vsel %vm8531, %v8537, 0.0
    %8539 = vadd.xlane.f32.xlu0 %v8538
    %v8540 = vpop.xlane.xlu0 %8539
    %v8541 = vrcp.pop %v8540
    %v8542 = vmul.f32 %v8537, %v8541
    %8543 = vst.msk [vmem:[%s19] sm:$0xf] %vm8531, %v8542
    %8544 = vrot.lane.b32.xlu0 %v8083, 16
    %v8545 = vpop.permute.xlu0 %8544
    %v8547 = vsel %vm3582, %v7787, %v8545
    %8548 = vrot.lane.b32.xlu0 %v8231, 16
    %v8549 = vpop.permute.xlu0 %8548
    %v8551 = vsel %vm3582, %v7935, %v8549
    %v8553 = vrot.slane %v8551, 7
    %v8555 = vsel %vm8241, %v8547, %v8553
    %v8556 = vld [vmem:[%s18] sm:$0x1]
    %v8557 = vld [vmem:[%s14] sm:$0xff]
    %v8558 = vld [vmem:[%s14 + $0x8] sm:$0xff]
    %v8559 = vld [vmem:[%s14 + $0x10] sm:$0xff]
    %v8560 = vld [vmem:[%s14 + $0x18] sm:$0xff]
    %v8562 = vlaneseq
    %v8563 = vshrl.u32 %v8562, 7
    %v8564 = vsub.s32 0, %v8563
    %v8565 = vrot.slane %v8556, %v8564
    %v8568 = vsel %vm77, %v8555, 0
    %8570 = vmatprep.subr.mxu0 0.0
    %8571 = vmatpush1.msra.mxu0 %v8557
    %8572 = vmatprep.subr.mxu0 0.0
    %8573 = vmatpush1.msra.mxu0 %v8558
    %8574 = vmatprep.subr.mxu0 0.0
    %8575 = vmatpush1.msra.mxu0 %v8559
    %8576 = vmatprep.subr.mxu0 0.0
    %8577 = vmatpush1.msra.mxu0 %v8560
    %8578 = vmatprep.subr.mxu0 0.0
    %8579 = vmatpush1.msra.mxu0 0.0
    %8580 = vmatprep.subr.mxu0 0.0
    %8581 = vmatpush1.msra.mxu0 0.0
    %8582 = vmatprep.subr.mxu0 0.0
    %8583 = vmatpush1.msra.mxu0 0.0
    %8584 = vmatprep.subr.mxu0 0.0
    %8585 = vmatpush1.msra.mxu0 0.0
    %8586 = vmatprep.subr.mxu0 0.0
    %8587 = vmatpush1.msra.mxu0 0.0
    %8588 = vmatprep.subr.mxu0 0.0
    %8589 = vmatpush1.msra.mxu0 0.0
    %8590 = vmatprep.subr.mxu0 0.0
    %8591 = vmatpush1.msra.mxu0 0.0
    %8592 = vmatprep.subr.mxu0 0.0
    %8593 = vmatpush1.msra.mxu0 0.0
    %8594 = vmatprep.subr.mxu0 0.0
    %8595 = vmatpush1.msra.mxu0 0.0
    %8596 = vmatprep.subr.mxu0 0.0
    %8597 = vmatpush1.msra.mxu0 0.0
    %8598 = vmatprep.subr.mxu0 0.0
    %8599 = vmatpush1.msra.mxu0 0.0
    %8600 = vmatprep.subr.mxu0 0.0
    %8601 = vmatpush1.msra.mxu0 0.0
    %8602 = vmatprep.subr.mxu0 0.0
    %8603 = vmatpush1.msra.mxu0 0.0
    %8604 = vmatprep.subr.mxu0 0.0
    %8605 = vmatpush1.msra.mxu0 0.0
    %8606 = vmatprep.subr.mxu0 0.0
    %8607 = vmatpush1.msra.mxu0 0.0
    %8608 = vmatprep.subr.mxu0 0.0
    %8609 = vmatpush1.msra.mxu0 0.0
    %8610 = vmatprep.subr.mxu0 0.0
    %8611 = vmatpush1.msra.mxu0 0.0
    %8612 = vmatprep.subr.mxu0 0.0
    %8613 = vmatpush1.msra.mxu0 0.0
    %8614 = vmatprep.subr.mxu0 0.0
    %8615 = vmatpush1.msra.mxu0 0.0
    %8616 = vmatprep.subr.mxu0 0.0
    %8617 = vmatpush1.msra.mxu0 0.0
    %8618 = vmatprep.subr.mxu0 0.0
    %8619 = vmatpush1.msra.mxu0 0.0
    %8620 = vmatprep.subr.mxu0 0.0
    %8621 = vmatpush1.msra.mxu0 0.0
    %8622 = vmatprep.subr.mxu0 0.0
    %8623 = vmatpush1.msra.mxu0 0.0
    %8624 = vmatprep.subr.mxu0 0.0
    %8625 = vmatpush1.msra.mxu0 0.0
    %8626 = vmatprep.subr.mxu0 0.0
    %8627 = vmatpush1.msra.mxu0 0.0
    %8628 = vmatprep.subr.mxu0 0.0
    %8629 = vmatpush1.msra.mxu0 0.0
    %8630 = vmatprep.subr.mxu0 0.0
    %8631 = vmatpush1.msra.mxu0 0.0
    %8632 = vmatprep.subr.mxu0 0.0
    %8633 = vmatpush1.msra.mxu0 0.0
    %8634 = vmatprep.mubr.f32.mxu0 0.0
    %8635 = vmatmul.mubr.f32.gmra.mrb[0].mxu0 %v8568
    %v8636 = vpop.f32.mrb[0].mxu0
    %v8637 = vadd.f32 %v8565, %v8636
    %v8638 = vpop.f32.mrb[0].mxu0
    %8639 = vdwg.mxu0
    %vm8640 = vcmask 123904
    %v8641 = vsel %vm8640, %v8637, 0.0
    %8642 = vadd.xlane.f32.xlu0 %v8641
    %v8643 = vpop.xlane.xlu0 %8642
    %v8644 = vmul.f32 %v8643, %v8333
    %v8645 = vsub.f32 %v8637, %v8644
    %v8646 = vmul.f32 %v8645, %v8645
    %v8647 = vsel %vm8640, %v8646, 0.0
    %8648 = vadd.xlane.f32.xlu0 %v8647
    %v8649 = vpop.xlane.xlu0 %8648
    %v8650 = vmul.f32 %v8649, %v8333
    %v8651 = vadd.f32 %v8650, 1e-05
    %v8652 = vrsqrt.pop %v8651
    %v8653 = vmul.f32 %v8645, %v8652
    %8654 = vrot.lane.b32.xlu0 %v8565, 112
    %v8655 = vpop.permute.xlu0 %8654
    %v8657 = vmul.f32 %v8653, %v8655
    %8658 = vrot.lane.b32.xlu0 %v8565, 96
    %v8659 = vpop.permute.xlu0 %8658
    %v8661 = vadd.f32 %v8657, %v8659
    %v8662 = vmax.f32 %v8661, 0.0
    %v8663 = vld [vmem:[%s15] sm:$0xff]
    %v8664 = vld [vmem:[%s15 + $0x8] sm:$0xff]
    %8665 = vrot.lane.b32.xlu0 %v8565, 80
    %v8666 = vpop.permute.xlu0 %8665
    %v8669 = vsel %vm3582, %v8662, 0
    %8671 = vmatprep.subr.mxu0 0.0
    %8672 = vmatpush1.msra.mxu0 %v8663
    %8673 = vmatprep.subr.mxu0 0.0
    %8674 = vmatpush1.msra.mxu0 %v8664
    %8675 = vmatprep.subr.mxu0 0.0
    %8676 = vmatpush1.msra.mxu0 0.0
    %8677 = vmatprep.subr.mxu0 0.0
    %8678 = vmatpush1.msra.mxu0 0.0
    %8679 = vmatprep.subr.mxu0 0.0
    %8680 = vmatpush1.msra.mxu0 0.0
    %8681 = vmatprep.subr.mxu0 0.0
    %8682 = vmatpush1.msra.mxu0 0.0
    %8683 = vmatprep.subr.mxu0 0.0
    %8684 = vmatpush1.msra.mxu0 0.0
    %8685 = vmatprep.subr.mxu0 0.0
    %8686 = vmatpush1.msra.mxu0 0.0
    %8687 = vmatprep.subr.mxu0 0.0
    %8688 = vmatpush1.msra.mxu0 0.0
    %8689 = vmatprep.subr.mxu0 0.0
    %8690 = vmatpush1.msra.mxu0 0.0
    %8691 = vmatprep.subr.mxu0 0.0
    %8692 = vmatpush1.msra.mxu0 0.0
    %8693 = vmatprep.subr.mxu0 0.0
    %8694 = vmatpush1.msra.mxu0 0.0
    %8695 = vmatprep.subr.mxu0 0.0
    %8696 = vmatpush1.msra.mxu0 0.0
    %8697 = vmatprep.subr.mxu0 0.0
    %8698 = vmatpush1.msra.mxu0 0.0
    %8699 = vmatprep.subr.mxu0 0.0
    %8700 = vmatpush1.msra.mxu0 0.0
    %8701 = vmatprep.subr.mxu0 0.0
    %8702 = vmatpush1.msra.mxu0 0.0
    %8703 = vmatprep.subr.mxu0 0.0
    %8704 = vmatpush1.msra.mxu0 0.0
    %8705 = vmatprep.subr.mxu0 0.0
    %8706 = vmatpush1.msra.mxu0 0.0
    %8707 = vmatprep.subr.mxu0 0.0
    %8708 = vmatpush1.msra.mxu0 0.0
    %8709 = vmatprep.subr.mxu0 0.0
    %8710 = vmatpush1.msra.mxu0 0.0
    %8711 = vmatprep.subr.mxu0 0.0
    %8712 = vmatpush1.msra.mxu0 0.0
    %8713 = vmatprep.subr.mxu0 0.0
    %8714 = vmatpush1.msra.mxu0 0.0
    %8715 = vmatprep.subr.mxu0 0.0
    %8716 = vmatpush1.msra.mxu0 0.0
    %8717 = vmatprep.subr.mxu0 0.0
    %8718 = vmatpush1.msra.mxu0 0.0
    %8719 = vmatprep.subr.mxu0 0.0
    %8720 = vmatpush1.msra.mxu0 0.0
    %8721 = vmatprep.subr.mxu0 0.0
    %8722 = vmatpush1.msra.mxu0 0.0
    %8723 = vmatprep.subr.mxu0 0.0
    %8724 = vmatpush1.msra.mxu0 0.0
    %8725 = vmatprep.subr.mxu0 0.0
    %8726 = vmatpush1.msra.mxu0 0.0
    %8727 = vmatprep.subr.mxu0 0.0
    %8728 = vmatpush1.msra.mxu0 0.0
    %8729 = vmatprep.subr.mxu0 0.0
    %8730 = vmatpush1.msra.mxu0 0.0
    %8731 = vmatprep.subr.mxu0 0.0
    %8732 = vmatpush1.msra.mxu0 0.0
    %8733 = vmatprep.subr.mxu0 0.0
    %8734 = vmatpush1.msra.mxu0 0.0
    %8735 = vmatprep.mubr.f32.mxu0 0.0
    %8736 = vmatmul.mubr.f32.gmra.mrb[0].mxu0 %v8669
    %v8737 = vpop.f32.mrb[0].mxu0
    %v8738 = vadd.f32 %v8666, %v8737
    %v8739 = vpop.f32.mrb[0].mxu0
    %8740 = vdwg.mxu0
    %vm8741 = vcmask 58368
    %v8742 = vsel %vm8741, %v8738, 0.0
    %8743 = vadd.xlane.f32.xlu0 %v8742
    %v8744 = vpop.xlane.xlu0 %8743
    %v8745 = vmul.f32 %v8744, %v3165
    %v8746 = vsub.f32 %v8738, %v8745
    %v8747 = vmul.f32 %v8746, %v8746
    %v8748 = vsel %vm8741, %v8747, 0.0
    %8749 = vadd.xlane.f32.xlu0 %v8748
    %v8750 = vpop.xlane.xlu0 %8749
    %v8751 = vmul.f32 %v8750, %v3165
    %v8752 = vadd.f32 %v8751, 1e-05
    %v8753 = vrsqrt.pop %v8752
    %v8754 = vmul.f32 %v8746, %v8753
    %8755 = vrot.lane.b32.xlu0 %v8565, 72
    %v8756 = vpop.permute.xlu0 %8755
    %v8758 = vmul.f32 %v8754, %v8756
    %8759 = vrot.lane.b32.xlu0 %v8565, 64
    %v8760 = vpop.permute.xlu0 %8759
    %v8762 = vadd.f32 %v8758, %v8760
    %v8763 = vmax.f32 %v8762, 0.0
    %v8764 = vld [vmem:[%s16] sm:$0xff]
    %8765 = vrot.lane.b32.xlu0 %v8565, 56
    %v8766 = vpop.permute.xlu0 %8765
    %v8769 = vsel %vm453, %v8763, 0
    %8771 = vmatprep.subr.mxu0 0.0
    %8772 = vmatpush1.msra.mxu0 %v8764
    %8773 = vmatprep.subr.mxu0 0.0
    %8774 = vmatpush1.msra.mxu0 0.0
    %8775 = vmatprep.subr.mxu0 0.0
    %8776 = vmatpush1.msra.mxu0 0.0
    %8777 = vmatprep.subr.mxu0 0.0
    %8778 = vmatpush1.msra.mxu0 0.0
    %8779 = vmatprep.subr.mxu0 0.0
    %8780 = vmatpush1.msra.mxu0 0.0
    %8781 = vmatprep.subr.mxu0 0.0
    %8782 = vmatpush1.msra.mxu0 0.0
    %8783 = vmatprep.subr.mxu0 0.0
    %8784 = vmatpush1.msra.mxu0 0.0
    %8785 = vmatprep.subr.mxu0 0.0
    %8786 = vmatpush1.msra.mxu0 0.0
    %8787 = vmatprep.subr.mxu0 0.0
    %8788 = vmatpush1.msra.mxu0 0.0
    %8789 = vmatprep.subr.mxu0 0.0
    %8790 = vmatpush1.msra.mxu0 0.0
    %8791 = vmatprep.subr.mxu0 0.0
    %8792 = vmatpush1.msra.mxu0 0.0
    %8793 = vmatprep.subr.mxu0 0.0
    %8794 = vmatpush1.msra.mxu0 0.0
    %8795 = vmatprep.subr.mxu0 0.0
    %8796 = vmatpush1.msra.mxu0 0.0
    %8797 = vmatprep.subr.mxu0 0.0
    %8798 = vmatpush1.msra.mxu0 0.0
    %8799 = vmatprep.subr.mxu0 0.0
    %8800 = vmatpush1.msra.mxu0 0.0
    %8801 = vmatprep.subr.mxu0 0.0
    %8802 = vmatpush1.msra.mxu0 0.0
    %8803 = vmatprep.subr.mxu0 0.0
    %8804 = vmatpush1.msra.mxu0 0.0
    %8805 = vmatprep.subr.mxu0 0.0
    %8806 = vmatpush1.msra.mxu0 0.0
    %8807 = vmatprep.subr.mxu0 0.0
    %8808 = vmatpush1.msra.mxu0 0.0
    %8809 = vmatprep.subr.mxu0 0.0
    %8810 = vmatpush1.msra.mxu0 0.0
    %8811 = vmatprep.subr.mxu0 0.0
    %8812 = vmatpush1.msra.mxu0 0.0
    %8813 = vmatprep.subr.mxu0 0.0
    %8814 = vmatpush1.msra.mxu0 0.0
    %8815 = vmatprep.subr.mxu0 0.0
    %8816 = vmatpush1.msra.mxu0 0.0
    %8817 = vmatprep.subr.mxu0 0.0
    %8818 = vmatpush1.msra.mxu0 0.0
    %8819 = vmatprep.subr.mxu0 0.0
    %8820 = vmatpush1.msra.mxu0 0.0
    %8821 = vmatprep.subr.mxu0 0.0
    %8822 = vmatpush1.msra.mxu0 0.0
    %8823 = vmatprep.subr.mxu0 0.0
    %8824 = vmatpush1.msra.mxu0 0.0
    %8825 = vmatprep.subr.mxu0 0.0
    %8826 = vmatpush1.msra.mxu0 0.0
    %8827 = vmatprep.subr.mxu0 0.0
    %8828 = vmatpush1.msra.mxu0 0.0
    %8829 = vmatprep.subr.mxu0 0.0
    %8830 = vmatpush1.msra.mxu0 0.0
    %8831 = vmatprep.subr.mxu0 0.0
    %8832 = vmatpush1.msra.mxu0 0.0
    %8833 = vmatprep.subr.mxu0 0.0
    %8834 = vmatpush1.msra.mxu0 0.0
    %8835 = vmatprep.mubr.f32.mxu0 0.0
    %8836 = vmatmul.mubr.f32.gmra.mrb[0].mxu0 %v8769
    %v8837 = vpop.f32.mrb[0].mxu0
    %v8838 = vadd.f32 %v8766, %v8837
    %v8839 = vpop.f32.mrb[0].mxu0
    %8840 = vdwg.mxu0
    %vm8841 = vcmask 25600
    %v8842 = vsel %vm8841, %v8838, 0.0
    %8843 = vadd.xlane.f32.xlu0 %v8842
    %v8844 = vpop.xlane.xlu0 %8843
    %v8845 = vrcp.pop 4.0
    %v8846 = vmul.f32 %v8844, %v8845
    %v8847 = vsub.f32 %v8838, %v8846
    %v8848 = vmul.f32 %v8847, %v8847
    %v8849 = vsel %vm8841, %v8848, 0.0
    %8850 = vadd.xlane.f32.xlu0 %v8849
    %v8851 = vpop.xlane.xlu0 %8850
    %v8852 = vmul.f32 %v8851, %v8845
    %v8853 = vadd.f32 %v8852, 1e-05
    %v8854 = vrsqrt.pop %v8853
    %v8855 = vmul.f32 %v8847, %v8854
    %8856 = vrot.lane.b32.xlu0 %v8565, 52
    %v8857 = vpop.permute.xlu0 %8856
    %v8859 = vmul.f32 %v8855, %v8857
    %8860 = vrot.lane.b32.xlu0 %v8565, 48
    %v8861 = vpop.permute.xlu0 %8860
    %v8863 = vadd.f32 %v8859, %v8861
    %v8864 = vmax.f32 %v8863, 0.0
    %v8865 = vld [vmem:[%s17] sm:$0xf]
    %v8867 = vsel %vm703, %v8864, 0
    %vm8869 = vcmask 1043456
    %v8871 = vsel %vm8869, %v8865, 0
    %8873 = vmatprep.subr.mxu0 0.0
    %8874 = vmatpush1.msra.mxu0 %v8871
    %8875 = vmatprep.subr.mxu0 0.0
    %8876 = vmatpush1.msra.mxu0 0.0
    %8877 = vmatprep.subr.mxu0 0.0
    %8878 = vmatpush1.msra.mxu0 0.0
    %8879 = vmatprep.subr.mxu0 0.0
    %8880 = vmatpush1.msra.mxu0 0.0
    %8881 = vmatprep.subr.mxu0 0.0
    %8882 = vmatpush1.msra.mxu0 0.0
    %8883 = vmatprep.subr.mxu0 0.0
    %8884 = vmatpush1.msra.mxu0 0.0
    %8885 = vmatprep.subr.mxu0 0.0
    %8886 = vmatpush1.msra.mxu0 0.0
    %8887 = vmatprep.subr.mxu0 0.0
    %8888 = vmatpush1.msra.mxu0 0.0
    %8889 = vmatprep.subr.mxu0 0.0
    %8890 = vmatpush1.msra.mxu0 0.0
    %8891 = vmatprep.subr.mxu0 0.0
    %8892 = vmatpush1.msra.mxu0 0.0
    %8893 = vmatprep.subr.mxu0 0.0
    %8894 = vmatpush1.msra.mxu0 0.0
    %8895 = vmatprep.subr.mxu0 0.0
    %8896 = vmatpush1.msra.mxu0 0.0
    %8897 = vmatprep.subr.mxu0 0.0
    %8898 = vmatpush1.msra.mxu0 0.0
    %8899 = vmatprep.subr.mxu0 0.0
    %8900 = vmatpush1.msra.mxu0 0.0
    %8901 = vmatprep.subr.mxu0 0.0
    %8902 = vmatpush1.msra.mxu0 0.0
    %8903 = vmatprep.subr.mxu0 0.0
    %8904 = vmatpush1.msra.mxu0 0.0
    %8905 = vmatprep.subr.mxu0 0.0
    %8906 = vmatpush1.msra.mxu0 0.0
    %8907 = vmatprep.subr.mxu0 0.0
    %8908 = vmatpush1.msra.mxu0 0.0
    %8909 = vmatprep.subr.mxu0 0.0
    %8910 = vmatpush1.msra.mxu0 0.0
    %8911 = vmatprep.subr.mxu0 0.0
    %8912 = vmatpush1.msra.mxu0 0.0
    %8913 = vmatprep.subr.mxu0 0.0
    %8914 = vmatpush1.msra.mxu0 0.0
    %8915 = vmatprep.subr.mxu0 0.0
    %8916 = vmatpush1.msra.mxu0 0.0
    %8917 = vmatprep.subr.mxu0 0.0
    %8918 = vmatpush1.msra.mxu0 0.0
    %8919 = vmatprep.subr.mxu0 0.0
    %8920 = vmatpush1.msra.mxu0 0.0
    %8921 = vmatprep.subr.mxu0 0.0
    %8922 = vmatpush1.msra.mxu0 0.0
    %8923 = vmatprep.subr.mxu0 0.0
    %8924 = vmatpush1.msra.mxu0 0.0
    %8925 = vmatprep.subr.mxu0 0.0
    %8926 = vmatpush1.msra.mxu0 0.0
    %8927 = vmatprep.subr.mxu0 0.0
    %8928 = vmatpush1.msra.mxu0 0.0
    %8929 = vmatprep.subr.mxu0 0.0
    %8930 = vmatpush1.msra.mxu0 0.0
    %8931 = vmatprep.subr.mxu0 0.0
    %8932 = vmatpush1.msra.mxu0 0.0
    %8933 = vmatprep.subr.mxu0 0.0
    %8934 = vmatpush1.msra.mxu0 0.0
    %8935 = vmatprep.subr.mxu0 0.0
    %8936 = vmatpush1.msra.mxu0 0.0
    %8937 = vmatprep.mubr.f32.mxu0 0.0
    %8938 = vmatmul.mubr.f32.gmra.mrb[0].mxu0 %v8867
    %v8939 = vpop.f32.mrb[0].mxu0
    %v8940 = vadd.f32 0.0, %v8939
    %v8941 = vpop.f32.mrb[0].mxu0
    %8942 = vdwg.mxu0
    %vm8943 = vcmask 17408
    %v8944 = vsel %vm8943, %v8940, -inf
    %8945 = vmax.xlane.f32.xlu0 %v8944
    %v8946 = vpop.xlane.xlu0 %8945
    %v8947 = vsub.f32 %v8940, %v8946
    %v8948 = vmul.f32 %v8947, 1.442695
    %v8949 = vpow.pop %v8948
    %v8950 = vsel %vm8943, %v8949, 0.0
    %8951 = vadd.xlane.f32.xlu0 %v8950
    %v8952 = vpop.xlane.xlu0 %8951
    %v8953 = vrcp.pop %v8952
    %v8954 = vmul.f32 %v8949, %v8953
    %8955 = vst.msk [vmem:[#allocation2] sm:$0x3] %vm8943, %v8954
    // Predicated region
    $region78: #{_lambda_.1} parent=1 // pred_check
      _
    $region79: #{_lambda_.1} parent=1 // pred_check_branch
      %8957 = sbr.rel (0) target = $region81
    $region80: #{_lambda_.1} parent=1 // pred_region
      _
    $region81: #{_lambda_.1} parent=1 // pred_fallthru
      _
    // Predicated region
    $region82: #{_lambda_.1} parent=1 // pred_check
      _
    $region83: #{_lambda_.1} parent=1 // pred_check_branch
      %8959 = sbr.rel (0) target = $region85
    $region84: #{_lambda_.1} parent=1 // pred_region
      %s8961 = ssub.s32 32, 32
      %8962 = vsyncadd [#allocation3], %s8961
      %s8964 = sshll.u32 [#allocation2], 4
      %s8965 = int_to_ptr.vmem [resolvable:$true] %s8964
      %8967 = dma.vmem_to_hbm [thread:$0]  %s8965, 32, %s20, [#allocation3]
    $region85: #{_lambda_.1} parent=1 // pred_fallthru
      _
    // Predicated region
    $region86: #{_lambda_.1} parent=1 // pred_check
      _
    $region87: #{_lambda_.1} parent=1 // pred_check_branch
      %8969 = sbr.rel (0) target = $region89
    $region88: #{_lambda_.1} parent=1 // pred_region
      _
    $region89: #{_lambda_.1} parent=1 // pred_fallthru
      _
    // Predicated region
    $region90: #{_lambda_.1} parent=1 // pred_check
      _
    $region91: #{_lambda_.1} parent=1 // pred_check_branch
      %8971 = sbr.rel (0) target = $region93
    $region92: #{_lambda_.1} parent=1 // pred_region
      %8972 = dma.done [#allocation3], 32
    $region93: #{_lambda_.1} parent=1 // pred_fallthru
      _
    %8973 = vsyncpa [#allocation3], 1

</llo_original>
